<compile_context>
chip_gen: v6e
topology: v6e:2x2x1
jax: 0.10.0
libtpu: 0.0.40
codegen_flags: <defaults>
</compile_context>

<pallas_src>
import functools

import jax
import jax.numpy as jnp
from jax import lax
from jax.experimental import pallas as pl
from jax.experimental.pallas import tpu as pltpu


_MXU_DTYPE = jnp.bfloat16               # MXU operand dtype (accumulation f32)
_BN_EPS = 1e-5
_NEG_LARGE = float(jnp.finfo(jnp.float32).min)   # -inf stand-in for max-pool pad


# ------------------------------ small helpers -------------------------------

def _cdiv(a, b):
    return -(-a // b)


def _round_up(a, b):
    return _cdiv(a, b) * b


def _vmem_caps():
    """Generation-aware (budget for the per-step working set, vmem limit)."""
    try:
        cap = int(pltpu.get_tpu_info().vmem_capacity_bytes)
    except Exception:
        cap = 64 << 20                      # conservative fallback (v7x-sized)
    budget = max(cap // 4, 8 << 20)         # v5e/v6e: ~32 MiB, v7x: ~16 MiB
    limit = min(max((cap * 3) // 4, 32 << 20), 112 << 20)
    return budget, limit


def _step_vmem_bytes(th, *, wc, wh, cin, c1, c2r, c3r, c3, c5, pp):
    """Rough per-grid-step VMEM working set for a TH-row block."""
    hh = th + 4
    cred = c1 + c2r + c3r
    ct = c1 + c3 + c5 + pp
    x_blk = hh * wh * cin * 4                       # f32 halo input block
    out_blk = th * wc * ct * 4                      # output block
    live = hh * wh * (cred * 4 + cin * 4 + cin * 2)         # red + pool + bf16 x
    live += th * wc * (c3 + c5 + ct + 2 * cred) * 4          # accs + concat + patches
    wts = 2 * (cin * cred + 9 * c2r * c3 + 25 * c3r * c5 + cin * pp)
    wts += 8 * (cred + c3 + c5 + pp)
    return 2 * (x_blk + out_blk) + live + wts + (2 << 20)    # 2 MiB slack


def _pick_tile_rows(h, n_batch, step_bytes_fn, budget, target_steps=4):
    """Largest row tile that fits the budget, prefers >= target_steps grid
    steps (pipelining + v7x 2-TC sharding) and no padded rows."""
    feasible = [t for t in range(1, h + 1) if step_bytes_fn(t) <= budget]
    if not feasible:
        return 1

    def rank(t):
        steps = n_batch * _cdiv(h, t)
        return (min(steps, target_steps), h % t == 0, t)

    return max(feasible, key=rank)


def _bn_scale_bias(p):
    """Eval-mode BatchNorm2d as per-channel f32 (scale, bias) row vectors."""
    scale = p["g"] / jnp.sqrt(p["rv"] + _BN_EPS)
    bias = p["b"] - p["rm"] * scale
    return (scale.astype(jnp.float32).reshape(1, -1),
            bias.astype(jnp.float32).reshape(1, -1))


def _pack_1x1(w_oihw):
    """(O, I, 1, 1) -> (I, O) bf16 (BN scale is NOT folded in; f32 epilogue)."""
    return jnp.transpose(w_oihw[:, :, 0, 0], (1, 0)).astype(_MXU_DTYPE)


def _pack_kxk(w_oihw):
    """(O, I, k, k) -> (k*k, I, O) bf16, tap index = i*k + j."""
    o, i, kh, kw = w_oihw.shape
    return jnp.transpose(w_oihw, (2, 3, 1, 0)).reshape(kh * kw, i, o).astype(_MXU_DTYPE)


def _full_spec(shape):
    """Whole-array BlockSpec (block index constant across the grid)."""
    if len(shape) == 2:
        return pl.BlockSpec(shape, lambda g: (0, 0))
    return pl.BlockSpec(shape, lambda g: (0, 0, 0))


# ------------------------------- fused kernel -------------------------------

def _make_inception_kernel(*, H, W, TH, HB, Wc, Wh, cin, c1, c2r, c3r, c3, c5, pp):
    Hh = TH + 4

    def kernel(x_ref,                    # (1, Hh, Wh, cin) f32 halo block
               wr_ref, sr_ref, br_ref,   # fused 1x1 reduces: (cin, c1+c2r+c3r)
               w3_ref, s3_ref, b3_ref,   # 3x3: (9, c2r, c3) + BN scale/bias
               w5_ref, s5_ref, b5_ref,   # 5x5: (25, c3r, c5) + BN scale/bias
               wp_ref, sp_ref, bp_ref,   # pool proj: (cin, pp) + BN scale/bias
               o_ref):                   # (1, TH, Wc, c1+c3+c5+pp)
        if HB > 1:
            row0 = (pl.program_id(0) % HB) * TH       # first output row of block
        else:
            row0 = 0

        xh = x_ref[0]                                  # (Hh, Wh, cin) f32

        # Validity of each halo position w.r.t. the un-padded image.
        r_img = row0 - 2 + lax.broadcasted_iota(jnp.int32, (Hh, Wh, 1), 0)
        c_img = lax.broadcasted_iota(jnp.int32, (Hh, Wh, 1), 1) - 2
        valid = (r_img >= 0) & (r_img < H) & (c_img >= 0) & (c_img < W)

        # ---- fused 1x1 reduces (branch1 | branch2-reduce | branch3-reduce) --
        xh_bf = xh.astype(_MXU_DTYPE)
        red = jnp.dot(xh_bf.reshape(Hh * Wh, cin), wr_ref[...],
                      preferred_element_type=jnp.float32)
        red = jnp.maximum(red * sr_ref[...] + br_ref[...], 0.0)
        red = red.reshape(Hh, Wh, c1 + c2r + c3r)
        # Zero positions outside the image: this IS the zero-padding of the
        # 3x3 / 5x5 convolutions applied to the reduced features.
        red = jnp.where(valid, red, 0.0)

        # ---- branch 1: 1x1 (central region) ---------------------------------
        y1 = red[2:2 + TH, 2:2 + Wc, 0:c1]             # (TH, Wc, c1)

        # ---- branch 2: 3x3 conv on halo-1 reduced features -------------------
        red2 = red[1:1 + TH + 2, 1:1 + Wc + 2, c1:c1 + c2r].astype(_MXU_DTYPE)
        acc2 = jnp.zeros((TH * Wc, c3), jnp.float32)
        for di in range(3):
            for dj in range(3):
                patch = red2[di:di + TH, dj:dj + Wc, :].reshape(TH * Wc, c2r)
                acc2 = acc2 + jnp.dot(patch, w3_ref[di * 3 + dj],
                                      preferred_element_type=jnp.float32)
        y2 = jnp.maximum(acc2 * s3_ref[...] + b3_ref[...], 0.0)
        y2 = y2.reshape(TH, Wc, c3)

        # ---- branch 3: 5x5 conv on halo-2 reduced features -------------------
        red3 = red[:, 0:Wc + 4, c1 + c2r:].astype(_MXU_DTYPE)
        acc3 = jnp.zeros((TH * Wc, c5), jnp.float32)
        for di in range(5):
            for dj in range(5):
                patch = red3[di:di + TH, dj:dj + Wc, :].reshape(TH * Wc, c3r)
                acc3 = acc3 + jnp.dot(patch, w5_ref[di * 5 + dj],
                                      preferred_element_type=jnp.float32)
        y3 = jnp.maximum(acc3 * s5_ref[...] + b5_ref[...], 0.0)
        y3 = y3.reshape(TH, Wc, c5)

        # ---- branch 4: f32 3x3 max-pool (-inf padding) + 1x1 projection ------
        pool_in = jnp.where(valid, xh, _NEG_LARGE)     # f32, running max in vregs
        pooled = pool_in[1:1 + TH, 1:1 + Wc, :]
        for di in range(3):
            for dj in range(3):
                if di == 0 and dj == 0:
                    continue
                pooled = jnp.maximum(
                    pooled, pool_in[1 + di:1 + di + TH, 1 + dj:1 + dj + Wc, :])
        y4 = jnp.dot(pooled.astype(_MXU_DTYPE).reshape(TH * Wc, cin), wp_ref[...],
                     preferred_element_type=jnp.float32)
        y4 = jnp.maximum(y4 * sp_ref[...] + bp_ref[...], 0.0)
        y4 = y4.reshape(TH, Wc, pp)

        # ---- single lane-dense store of the channel-concatenated block -------
        o_ref[0] = jnp.concatenate([y1, y2, y3, y4], axis=-1).astype(o_ref.dtype)

    return kernel


# ---------------------------- InceptionBlock model ---------------------------

def init_inception_params(key, in_channels, ch1x1, ch3x3red, ch3x3,
                          ch5x5red, ch5x5, pool_proj):
    def conv_block(k, cout, cin, ks):
        kw_, kg_, kb_ = jax.random.split(k, 3)
        return {
            "w": 0.1 * jax.random.normal(kw_, (cout, cin, ks, ks), jnp.float32),
            "g": 1.0 + 0.1 * jax.random.normal(kg_, (cout,), jnp.float32),
            "b": 0.1 * jax.random.normal(kb_, (cout,), jnp.float32),
            "rm": jnp.zeros((cout,), jnp.float32),   # BN running_mean
            "rv": jnp.ones((cout,), jnp.float32),    # BN running_var
        }

    keys = jax.random.split(key, 6)
    return {
        "b1": conv_block(keys[0], ch1x1, in_channels, 1),
        "b2a": conv_block(keys[1], ch3x3red, in_channels, 1),
        "b2b": conv_block(keys[2], ch3x3, ch3x3red, 3),
        "b3a": conv_block(keys[3], ch5x5red, in_channels, 1),
        "b3b": conv_block(keys[4], ch5x5, ch5x5red, 5),
        "b4": conv_block(keys[5], pool_proj, in_channels, 1),
    }


def inception_block(x_nchw, params):
    n, cin, h, w = x_nchw.shape
    p1, p2a, p2b = params["b1"], params["b2a"], params["b2b"]
    p3a, p3b, p4 = params["b3a"], params["b3b"], params["b4"]
    c1, c2r, c3 = p1["w"].shape[0], p2a["w"].shape[0], p2b["w"].shape[0]
    c3r, c5, pp = p3a["w"].shape[0], p3b["w"].shape[0], p4["w"].shape[0]
    ct = c1 + c3 + c5 + pp

    # ---- geometry: row-block tiling with a 2-row / 2-col halo ---------------
    wc = _round_up(w, 8)            # compute width (sublane-aligned slices)
    wh = _round_up(wc + 4, 8)       # halo width held in VMEM
    budget, vmem_limit = _vmem_caps()
    step_bytes = functools.partial(_step_vmem_bytes, wc=wc, wh=wh, cin=cin,
                                   c1=c1, c2r=c2r, c3r=c3r, c3=c3, c5=c5, pp=pp)
    th = _pick_tile_rows(h, n, step_bytes, budget)
    hb = _cdiv(h, th)
    hpad = hb * th
    hh = th + 4

    # ---- wrapper prep: NCHW->NHWC, spatial zero-pad, overlapping row windows.
    # Only the 4 halo rows per block are duplicated bytes; no im2col slabs.
    x = jnp.transpose(x_nchw, (0, 2, 3, 1)).astype(jnp.float32)
    xp = jnp.pad(x, ((0, 0), (2, hpad - h + 2), (2, wh - w - 2), (0, 0)))
    if hb > 1:
        xhalo = jnp.stack([xp[:, i * th:i * th + hh] for i in range(hb)], axis=1)
        xhalo = xhalo.reshape(n * hb, hh, wh, cin)
    else:
        xhalo = xp                                       # (n, hh, wh, cin)

    # ---- weights (bf16, un-scaled) + BN scale/bias (f32 epilogue) -----------
    wred = jnp.concatenate(
        [_pack_1x1(p1["w"]), _pack_1x1(p2a["w"]), _pack_1x1(p3a["w"])], axis=1)
    sc1, bi1 = _bn_scale_bias(p1)
    sc2a, bi2a = _bn_scale_bias(p2a)
    sc3a, bi3a = _bn_scale_bias(p3a)
    sred = jnp.concatenate([sc1, sc2a, sc3a], axis=1)
    bred = jnp.concatenate([bi1, bi2a, bi3a], axis=1)
    w3 = _pack_kxk(p2b["w"]); sc3b, bi3b = _bn_scale_bias(p2b)
    w5 = _pack_kxk(p3b["w"]); sc5b, bi5b = _bn_scale_bias(p3b)
    wp = _pack_1x1(p4["w"]);  scp, bip = _bn_scale_bias(p4)

    kernel = _make_inception_kernel(H=h, W=w, TH=th, HB=hb, Wc=wc, Wh=wh,
                                    cin=cin, c1=c1, c2r=c2r, c3r=c3r,
                                    c3=c3, c5=c5, pp=pp)

    flops = 2 * n * hpad * wc * (cin * (c1 + c2r + c3r) + 9 * c2r * c3 +
                                 25 * c3r * c5 + cin * pp)
    bytes_accessed = (xhalo.size * 4 + n * hpad * wc * ct * x_nchw.dtype.itemsize +
                      2 * (wred.size + w3.size + w5.size + wp.size))

    out = pl.pallas_call(
        kernel,
        out_shape=jax.ShapeDtypeStruct((n * hb, th, wc, ct), x_nchw.dtype),
        grid_spec=pltpu.PrefetchScalarGridSpec(
            num_scalar_prefetch=0,
            grid=(n * hb,),
            in_specs=[
                pl.BlockSpec((1, hh, wh, cin), lambda g: (g, 0, 0, 0)),
                _full_spec(wred.shape), _full_spec(sred.shape), _full_spec(bred.shape),
                _full_spec(w3.shape), _full_spec(sc3b.shape), _full_spec(bi3b.shape),
                _full_spec(w5.shape), _full_spec(sc5b.shape), _full_spec(bi5b.shape),
                _full_spec(wp.shape), _full_spec(scp.shape), _full_spec(bip.shape),
            ],
            out_specs=pl.BlockSpec((1, th, wc, ct), lambda g: (g, 0, 0, 0)),
        ),
        compiler_params=pltpu.CompilerParams(
            dimension_semantics=("parallel",),
            vmem_limit_bytes=vmem_limit),
        cost_estimate=pl.CostEstimate(flops=flops, transcendentals=0,
                                      bytes_accessed=bytes_accessed),
    )(xhalo, wred, sred, bred, w3, sc3b, bi3b, w5, sc5b, bi5b, wp, scp, bip)

    out = out.reshape(n, hpad, wc, ct)[:, :h, :w, :]     # drop alignment pad
    return jnp.transpose(out, (0, 3, 1, 2))              # NHWC -> NCHW


# -------------------------- plain-JAX reference check ------------------------

def _ref_conv_bn_relu(x_nchw, p, pad):
    y = lax.conv_general_dilated(
        x_nchw, p["w"], window_strides=(1, 1),
        padding=[(pad, pad), (pad, pad)],
        dimension_numbers=("NCHW", "OIHW", "NCHW"))
    scale = p["g"] / jnp.sqrt(p["rv"] + _BN_EPS)
    bias = p["b"] - p["rm"] * scale
    return jnp.maximum(y * scale.reshape(1, -1, 1, 1)
                       + bias.reshape(1, -1, 1, 1), 0.0)


def _ref_maxpool3(x_nchw):
    return lax.reduce_window(x_nchw, -jnp.inf, lax.max,
                             (1, 1, 3, 3), (1, 1, 1, 1),
                             [(0, 0), (0, 0), (1, 1), (1, 1)])


def _ref_inception(x, p):
    b1 = _ref_conv_bn_relu(x, p["b1"], 0)
    b2 = _ref_conv_bn_relu(_ref_conv_bn_relu(x, p["b2a"], 0), p["b2b"], 1)
    b3 = _ref_conv_bn_relu(_ref_conv_bn_relu(x, p["b3a"], 0), p["b3b"], 2)
    b4 = _ref_conv_bn_relu(_ref_maxpool3(x), p["b4"], 0)
    return jnp.concatenate([b1, b2, b3, b4], axis=1)


# ------------------------------------ main -----------------------------------

if __name__ == "__main__":
    key = jax.random.PRNGKey(0)
    kx, kp = jax.random.split(key)

    N, Cin, H, W = 2, 4, 16, 16
    ch1x1, ch3x3red, ch3x3, ch5x5red, ch5x5, pool_proj = 4, 4, 8, 4, 4, 4

    x = jax.random.normal(kx, (N, Cin, H, W), jnp.float32)
    params = init_inception_params(kp, Cin, ch1x1, ch3x3red, ch3x3,
                                   ch5x5red, ch5x5, pool_proj)

    fwd = jax.jit(inception_block)
    out = jax.block_until_ready(fwd(x, params))
    assert out.shape == (N, ch1x1 + ch3x3 + ch5x5 + pool_proj, H, W), out.shape

    ref = jax.block_until_ready(_ref_inception(x, params))
    # bf16 MXU operands (f32 accumulation / f32 BN epilogue) -> loose tolerance.
    max_err = float(jnp.max(jnp.abs(out - ref)))
    assert jnp.allclose(out, ref, rtol=3e-2, atol=3e-2), max_err

    print("KERNEL_OK")
</pallas_src>

<mosaic_0001>
module attributes {stable_mosaic.version = 11 : i64} {
  func.func @kernel(%arg0: i32, %arg1: memref<1x12x24x4xf32, #tpu.memory_space<vmem>>, %arg2: memref<4x12xbf16, #tpu.memory_space<vmem>>, %arg3: memref<1x12xf32, #tpu.memory_space<vmem>>, %arg4: memref<1x12xf32, #tpu.memory_space<vmem>>, %arg5: memref<9x4x8xbf16, #tpu.memory_space<vmem>>, %arg6: memref<1x8xf32, #tpu.memory_space<vmem>>, %arg7: memref<1x8xf32, #tpu.memory_space<vmem>>, %arg8: memref<25x4x4xbf16, #tpu.memory_space<vmem>>, %arg9: memref<1x4xf32, #tpu.memory_space<vmem>>, %arg10: memref<1x4xf32, #tpu.memory_space<vmem>>, %arg11: memref<4x4xbf16, #tpu.memory_space<vmem>>, %arg12: memref<1x4xf32, #tpu.memory_space<vmem>>, %arg13: memref<1x4xf32, #tpu.memory_space<vmem>>, %arg14: memref<1x8x16x20xf32, #tpu.memory_space<vmem>>) attributes {dimension_semantics = [#tpu.dimension_semantics<parallel>], iteration_bounds = array<i64: 4>, scalar_prefetch = 0 : i64, scratch_operands = 0 : i64, tpu.core_type = #tpu.core_type<tc>, window_params = [{transform_indices = @transform_0, window_bounds = array<i64: 1, 12, 24, 4>}, {pipeline_mode = #tpu.pipeline_mode<synchronous>, transform_indices = @transform_1, window_bounds = array<i64: 4, 12>}, {pipeline_mode = #tpu.pipeline_mode<synchronous>, transform_indices = @transform_2, window_bounds = array<i64: 1, 12>}, {pipeline_mode = #tpu.pipeline_mode<synchronous>, transform_indices = @transform_3, window_bounds = array<i64: 1, 12>}, {pipeline_mode = #tpu.pipeline_mode<synchronous>, transform_indices = @transform_4, window_bounds = array<i64: 9, 4, 8>}, {pipeline_mode = #tpu.pipeline_mode<synchronous>, transform_indices = @transform_5, window_bounds = array<i64: 1, 8>}, {pipeline_mode = #tpu.pipeline_mode<synchronous>, transform_indices = @transform_6, window_bounds = array<i64: 1, 8>}, {pipeline_mode = #tpu.pipeline_mode<synchronous>, transform_indices = @transform_7, window_bounds = array<i64: 25, 4, 4>}, {pipeline_mode = #tpu.pipeline_mode<synchronous>, transform_indices = @transform_8, window_bounds = array<i64: 1, 4>}, {pipeline_mode = #tpu.pipeline_mode<synchronous>, transform_indices = @transform_9, window_bounds = array<i64: 1, 4>}, {pipeline_mode = #tpu.pipeline_mode<synchronous>, transform_indices = @transform_10, window_bounds = array<i64: 4, 4>}, {pipeline_mode = #tpu.pipeline_mode<synchronous>, transform_indices = @transform_11, window_bounds = array<i64: 1, 4>}, {pipeline_mode = #tpu.pipeline_mode<synchronous>, transform_indices = @transform_12, window_bounds = array<i64: 1, 4>}, {transform_indices = @transform_13, window_bounds = array<i64: 1, 8, 16, 20>}]} {
    %c2_i32 = arith.constant 2 : i32
    %c0_i32 = arith.constant 0 : i32
    %0 = arith.cmpi eq, %c2_i32, %c0_i32 : i32
    %c1_i32 = arith.constant 1 : i32
    %1 = arith.select %0, %c1_i32, %c2_i32 : i32
    %2 = arith.remsi %arg0, %1 : i32
    %c0_i32_0 = arith.constant 0 : i32
    %3 = arith.cmpi ne, %2, %c0_i32_0 : i32
    %c0_i32_1 = arith.constant 0 : i32
    %4 = arith.cmpi slt, %2, %c0_i32_1 : i32
    %c0_i32_2 = arith.constant 0 : i32
    %5 = arith.cmpi slt, %1, %c0_i32_2 : i32
    %6 = arith.xori %4, %5 : i1
    %7 = arith.andi %6, %3 : i1
    %8 = arith.addi %2, %1 : i32
    %9 = arith.select %7, %8, %2 : i32
    %c8_i32 = arith.constant 8 : i32
    %10 = arith.muli %9, %c8_i32 : i32
    %c0 = arith.constant 0 : index
    %c0_3 = arith.constant 0 : index
    %c0_4 = arith.constant 0 : index
    %c0_5 = arith.constant 0 : index
    %11 = vector.load %arg1[%c0, %c0_3, %c0_4, %c0_5] : memref<1x12x24x4xf32, #tpu.memory_space<vmem>>, vector<1x12x24x4xf32>
    %12 = vector.shape_cast %11 : vector<1x12x24x4xf32> to vector<12x24x4xf32>
    %c2_i32_6 = arith.constant 2 : i32
    %13 = arith.subi %10, %c2_i32_6 : i32
    %14 = tpu.iota {dimensions = array<i32: 0>} : vector<12x24x1xi32>
    %15 = vector.broadcast %13 : i32 to vector<12x24x1xi32>
    %16 = arith.addi %15, %14 : vector<12x24x1xi32>
    %17 = tpu.iota {dimensions = array<i32: 1>} : vector<12x24x1xi32>
    %c2_i32_7 = arith.constant 2 : i32
    %18 = vector.broadcast %c2_i32_7 : i32 to vector<12x24x1xi32>
    %19 = arith.subi %17, %18 : vector<12x24x1xi32>
    %c0_i32_8 = arith.constant 0 : i32
    %20 = vector.broadcast %c0_i32_8 : i32 to vector<12x24x1xi32>
    %21 = arith.cmpi sge, %16, %20 : vector<12x24x1xi32>
    %c16_i32 = arith.constant 16 : i32
    %22 = vector.broadcast %c16_i32 : i32 to vector<12x24x1xi32>
    %23 = arith.cmpi slt, %16, %22 : vector<12x24x1xi32>
    %24 = arith.andi %21, %23 : vector<12x24x1xi1>
    %c0_i32_9 = arith.constant 0 : i32
    %25 = vector.broadcast %c0_i32_9 : i32 to vector<12x24x1xi32>
    %26 = arith.cmpi sge, %19, %25 : vector<12x24x1xi32>
    %27 = arith.andi %24, %26 : vector<12x24x1xi1>
    %c16_i32_10 = arith.constant 16 : i32
    %28 = vector.broadcast %c16_i32_10 : i32 to vector<12x24x1xi32>
    %29 = arith.cmpi slt, %19, %28 : vector<12x24x1xi32>
    %30 = arith.andi %27, %29 : vector<12x24x1xi1>
    %31 = arith.truncf %12 : vector<12x24x4xf32> to vector<12x24x4xbf16>
    %32 = vector.shape_cast %31 : vector<12x24x4xbf16> to vector<288x4xbf16>
    %c0_11 = arith.constant 0 : index
    %c0_12 = arith.constant 0 : index
    %33 = vector.load %arg2[%c0_11, %c0_12] : memref<4x12xbf16, #tpu.memory_space<vmem>>, vector<4x12xbf16>
    %cst = arith.constant dense<0.000000e+00> : vector<288x12xf32>
    %34 = tpu.matmul %32, %33, %cst {dimension_numbers = #tpu.dot_dimension_numbers<[1], [0], [0], [1], [0, 0, 1, 1], [], []>} : vector<288x4xbf16>, vector<4x12xbf16>, vector<288x12xf32> -> vector<288x12xf32>
    %c0_13 = arith.constant 0 : index
    %c0_14 = arith.constant 0 : index
    %35 = vector.load %arg3[%c0_13, %c0_14] : memref<1x12xf32, #tpu.memory_space<vmem>>, vector<1x12xf32>
    %36 = vector.broadcast %35 : vector<1x12xf32> to vector<288x12xf32>
    %37 = arith.mulf %34, %36 : vector<288x12xf32>
    %c0_15 = arith.constant 0 : index
    %c0_16 = arith.constant 0 : index
    %38 = vector.load %arg4[%c0_15, %c0_16] : memref<1x12xf32, #tpu.memory_space<vmem>>, vector<1x12xf32>
    %39 = vector.broadcast %38 : vector<1x12xf32> to vector<288x12xf32>
    %40 = arith.addf %37, %39 : vector<288x12xf32>
    %cst_17 = arith.constant 0.000000e+00 : f32
    %41 = vector.broadcast %cst_17 : f32 to vector<288x12xf32>
    %42 = arith.maximumf %40, %41 : vector<288x12xf32>
    %43 = vector.shape_cast %42 : vector<288x12xf32> to vector<12x24x12xf32>
    %cst_18 = arith.constant 0.000000e+00 : f32
    %44 = vector.shape_cast %30 : vector<12x24x1xi1> to vector<12x24x1xi1>
    %45 = vector.broadcast %44 : vector<12x24x1xi1> to vector<12x24x12xi1>
    %46 = vector.broadcast %cst_18 : f32 to vector<12x24x12xf32>
    %47 = arith.select %45, %43, %46 : vector<12x24x12xi1>, vector<12x24x12xf32>
    %48 = vector.extract_strided_slice %47 {offsets = [2, 2, 0], sizes = [8, 16, 4], strides = [1, 1, 1]} : vector<12x24x12xf32> to vector<8x16x4xf32>
    %49 = vector.extract_strided_slice %47 {offsets = [1, 1, 4], sizes = [10, 18, 4], strides = [1, 1, 1]} : vector<12x24x12xf32> to vector<10x18x4xf32>
    %50 = arith.truncf %49 : vector<10x18x4xf32> to vector<10x18x4xbf16>
    %cst_19 = arith.constant 0.000000e+00 : f32
    %51 = vector.broadcast %cst_19 : f32 to vector<128x8xf32>
    %52 = vector.extract_strided_slice %50 {offsets = [0, 0, 0], sizes = [8, 16, 4], strides = [1, 1, 1]} : vector<10x18x4xbf16> to vector<8x16x4xbf16>
    %53 = vector.shape_cast %52 : vector<8x16x4xbf16> to vector<128x4xbf16>
    %c0_20 = arith.constant 0 : index
    %c0_21 = arith.constant 0 : index
    %c0_22 = arith.constant 0 : index
    %54 = vector.load %arg5[%c0_20, %c0_21, %c0_22] : memref<9x4x8xbf16, #tpu.memory_space<vmem>>, vector<1x4x8xbf16>
    %55 = vector.shape_cast %54 : vector<1x4x8xbf16> to vector<4x8xbf16>
    %cst_23 = arith.constant dense<0.000000e+00> : vector<128x8xf32>
    %56 = tpu.matmul %53, %55, %cst_23 {dimension_numbers = #tpu.dot_dimension_numbers<[1], [0], [0], [1], [0, 0, 1, 1], [], []>} : vector<128x4xbf16>, vector<4x8xbf16>, vector<128x8xf32> -> vector<128x8xf32>
    %57 = arith.addf %51, %56 : vector<128x8xf32>
    %58 = vector.extract_strided_slice %50 {offsets = [0, 1, 0], sizes = [8, 16, 4], strides = [1, 1, 1]} : vector<10x18x4xbf16> to vector<8x16x4xbf16>
    %59 = vector.shape_cast %58 : vector<8x16x4xbf16> to vector<128x4xbf16>
    %c1 = arith.constant 1 : index
    %c0_24 = arith.constant 0 : index
    %c0_25 = arith.constant 0 : index
    %60 = vector.load %arg5[%c1, %c0_24, %c0_25] : memref<9x4x8xbf16, #tpu.memory_space<vmem>>, vector<1x4x8xbf16>
    %61 = vector.shape_cast %60 : vector<1x4x8xbf16> to vector<4x8xbf16>
    %cst_26 = arith.constant dense<0.000000e+00> : vector<128x8xf32>
    %62 = tpu.matmul %59, %61, %cst_26 {dimension_numbers = #tpu.dot_dimension_numbers<[1], [0], [0], [1], [0, 0, 1, 1], [], []>} : vector<128x4xbf16>, vector<4x8xbf16>, vector<128x8xf32> -> vector<128x8xf32>
    %63 = arith.addf %57, %62 : vector<128x8xf32>
    %64 = vector.extract_strided_slice %50 {offsets = [0, 2, 0], sizes = [8, 16, 4], strides = [1, 1, 1]} : vector<10x18x4xbf16> to vector<8x16x4xbf16>
    %65 = vector.shape_cast %64 : vector<8x16x4xbf16> to vector<128x4xbf16>
    %c2 = arith.constant 2 : index
    %c0_27 = arith.constant 0 : index
    %c0_28 = arith.constant 0 : index
    %66 = vector.load %arg5[%c2, %c0_27, %c0_28] : memref<9x4x8xbf16, #tpu.memory_space<vmem>>, vector<1x4x8xbf16>
    %67 = vector.shape_cast %66 : vector<1x4x8xbf16> to vector<4x8xbf16>
    %cst_29 = arith.constant dense<0.000000e+00> : vector<128x8xf32>
    %68 = tpu.matmul %65, %67, %cst_29 {dimension_numbers = #tpu.dot_dimension_numbers<[1], [0], [0], [1], [0, 0, 1, 1], [], []>} : vector<128x4xbf16>, vector<4x8xbf16>, vector<128x8xf32> -> vector<128x8xf32>
    %69 = arith.addf %63, %68 : vector<128x8xf32>
    %70 = vector.extract_strided_slice %50 {offsets = [1, 0, 0], sizes = [8, 16, 4], strides = [1, 1, 1]} : vector<10x18x4xbf16> to vector<8x16x4xbf16>
    %71 = vector.shape_cast %70 : vector<8x16x4xbf16> to vector<128x4xbf16>
    %c3 = arith.constant 3 : index
    %c0_30 = arith.constant 0 : index
    %c0_31 = arith.constant 0 : index
    %72 = vector.load %arg5[%c3, %c0_30, %c0_31] : memref<9x4x8xbf16, #tpu.memory_space<vmem>>, vector<1x4x8xbf16>
    %73 = vector.shape_cast %72 : vector<1x4x8xbf16> to vector<4x8xbf16>
    %cst_32 = arith.constant dense<0.000000e+00> : vector<128x8xf32>
    %74 = tpu.matmul %71, %73, %cst_32 {dimension_numbers = #tpu.dot_dimension_numbers<[1], [0], [0], [1], [0, 0, 1, 1], [], []>} : vector<128x4xbf16>, vector<4x8xbf16>, vector<128x8xf32> -> vector<128x8xf32>
    %75 = arith.addf %69, %74 : vector<128x8xf32>
    %76 = vector.extract_strided_slice %50 {offsets = [1, 1, 0], sizes = [8, 16, 4], strides = [1, 1, 1]} : vector<10x18x4xbf16> to vector<8x16x4xbf16>
    %77 = vector.shape_cast %76 : vector<8x16x4xbf16> to vector<128x4xbf16>
    %c4 = arith.constant 4 : index
    %c0_33 = arith.constant 0 : index
    %c0_34 = arith.constant 0 : index
    %78 = vector.load %arg5[%c4, %c0_33, %c0_34] : memref<9x4x8xbf16, #tpu.memory_space<vmem>>, vector<1x4x8xbf16>
    %79 = vector.shape_cast %78 : vector<1x4x8xbf16> to vector<4x8xbf16>
    %cst_35 = arith.constant dense<0.000000e+00> : vector<128x8xf32>
    %80 = tpu.matmul %77, %79, %cst_35 {dimension_numbers = #tpu.dot_dimension_numbers<[1], [0], [0], [1], [0, 0, 1, 1], [], []>} : vector<128x4xbf16>, vector<4x8xbf16>, vector<128x8xf32> -> vector<128x8xf32>
    %81 = arith.addf %75, %80 : vector<128x8xf32>
    %82 = vector.extract_strided_slice %50 {offsets = [1, 2, 0], sizes = [8, 16, 4], strides = [1, 1, 1]} : vector<10x18x4xbf16> to vector<8x16x4xbf16>
    %83 = vector.shape_cast %82 : vector<8x16x4xbf16> to vector<128x4xbf16>
    %c5 = arith.constant 5 : index
    %c0_36 = arith.constant 0 : index
    %c0_37 = arith.constant 0 : index
    %84 = vector.load %arg5[%c5, %c0_36, %c0_37] : memref<9x4x8xbf16, #tpu.memory_space<vmem>>, vector<1x4x8xbf16>
    %85 = vector.shape_cast %84 : vector<1x4x8xbf16> to vector<4x8xbf16>
    %cst_38 = arith.constant dense<0.000000e+00> : vector<128x8xf32>
    %86 = tpu.matmul %83, %85, %cst_38 {dimension_numbers = #tpu.dot_dimension_numbers<[1], [0], [0], [1], [0, 0, 1, 1], [], []>} : vector<128x4xbf16>, vector<4x8xbf16>, vector<128x8xf32> -> vector<128x8xf32>
    %87 = arith.addf %81, %86 : vector<128x8xf32>
    %88 = vector.extract_strided_slice %50 {offsets = [2, 0, 0], sizes = [8, 16, 4], strides = [1, 1, 1]} : vector<10x18x4xbf16> to vector<8x16x4xbf16>
    %89 = vector.shape_cast %88 : vector<8x16x4xbf16> to vector<128x4xbf16>
    %c6 = arith.constant 6 : index
    %c0_39 = arith.constant 0 : index
    %c0_40 = arith.constant 0 : index
    %90 = vector.load %arg5[%c6, %c0_39, %c0_40] : memref<9x4x8xbf16, #tpu.memory_space<vmem>>, vector<1x4x8xbf16>
    %91 = vector.shape_cast %90 : vector<1x4x8xbf16> to vector<4x8xbf16>
    %cst_41 = arith.constant dense<0.000000e+00> : vector<128x8xf32>
    %92 = tpu.matmul %89, %91, %cst_41 {dimension_numbers = #tpu.dot_dimension_numbers<[1], [0], [0], [1], [0, 0, 1, 1], [], []>} : vector<128x4xbf16>, vector<4x8xbf16>, vector<128x8xf32> -> vector<128x8xf32>
    %93 = arith.addf %87, %92 : vector<128x8xf32>
    %94 = vector.extract_strided_slice %50 {offsets = [2, 1, 0], sizes = [8, 16, 4], strides = [1, 1, 1]} : vector<10x18x4xbf16> to vector<8x16x4xbf16>
    %95 = vector.shape_cast %94 : vector<8x16x4xbf16> to vector<128x4xbf16>
    %c7 = arith.constant 7 : index
    %c0_42 = arith.constant 0 : index
    %c0_43 = arith.constant 0 : index
    %96 = vector.load %arg5[%c7, %c0_42, %c0_43] : memref<9x4x8xbf16, #tpu.memory_space<vmem>>, vector<1x4x8xbf16>
    %97 = vector.shape_cast %96 : vector<1x4x8xbf16> to vector<4x8xbf16>
    %cst_44 = arith.constant dense<0.000000e+00> : vector<128x8xf32>
    %98 = tpu.matmul %95, %97, %cst_44 {dimension_numbers = #tpu.dot_dimension_numbers<[1], [0], [0], [1], [0, 0, 1, 1], [], []>} : vector<128x4xbf16>, vector<4x8xbf16>, vector<128x8xf32> -> vector<128x8xf32>
    %99 = arith.addf %93, %98 : vector<128x8xf32>
    %100 = vector.extract_strided_slice %50 {offsets = [2, 2, 0], sizes = [8, 16, 4], strides = [1, 1, 1]} : vector<10x18x4xbf16> to vector<8x16x4xbf16>
    %101 = vector.shape_cast %100 : vector<8x16x4xbf16> to vector<128x4xbf16>
    %c8 = arith.constant 8 : index
    %c0_45 = arith.constant 0 : index
    %c0_46 = arith.constant 0 : index
    %102 = vector.load %arg5[%c8, %c0_45, %c0_46] : memref<9x4x8xbf16, #tpu.memory_space<vmem>>, vector<1x4x8xbf16>
    %103 = vector.shape_cast %102 : vector<1x4x8xbf16> to vector<4x8xbf16>
    %cst_47 = arith.constant dense<0.000000e+00> : vector<128x8xf32>
    %104 = tpu.matmul %101, %103, %cst_47 {dimension_numbers = #tpu.dot_dimension_numbers<[1], [0], [0], [1], [0, 0, 1, 1], [], []>} : vector<128x4xbf16>, vector<4x8xbf16>, vector<128x8xf32> -> vector<128x8xf32>
    %105 = arith.addf %99, %104 : vector<128x8xf32>
    %c0_48 = arith.constant 0 : index
    %c0_49 = arith.constant 0 : index
    %106 = vector.load %arg6[%c0_48, %c0_49] : memref<1x8xf32, #tpu.memory_space<vmem>>, vector<1x8xf32>
    %107 = vector.broadcast %106 : vector<1x8xf32> to vector<128x8xf32>
    %108 = arith.mulf %105, %107 : vector<128x8xf32>
    %c0_50 = arith.constant 0 : index
    %c0_51 = arith.constant 0 : index
    %109 = vector.load %arg7[%c0_50, %c0_51] : memref<1x8xf32, #tpu.memory_space<vmem>>, vector<1x8xf32>
    %110 = vector.broadcast %109 : vector<1x8xf32> to vector<128x8xf32>
    %111 = arith.addf %108, %110 : vector<128x8xf32>
    %cst_52 = arith.constant 0.000000e+00 : f32
    %112 = vector.broadcast %cst_52 : f32 to vector<128x8xf32>
    %113 = arith.maximumf %111, %112 : vector<128x8xf32>
    %114 = vector.shape_cast %113 : vector<128x8xf32> to vector<8x16x8xf32>
    %115 = vector.extract_strided_slice %47 {offsets = [0, 0, 8], sizes = [12, 20, 4], strides = [1, 1, 1]} : vector<12x24x12xf32> to vector<12x20x4xf32>
    %116 = arith.truncf %115 : vector<12x20x4xf32> to vector<12x20x4xbf16>
    %cst_53 = arith.constant 0.000000e+00 : f32
    %117 = vector.broadcast %cst_53 : f32 to vector<128x4xf32>
    %118 = vector.extract_strided_slice %116 {offsets = [0, 0, 0], sizes = [8, 16, 4], strides = [1, 1, 1]} : vector<12x20x4xbf16> to vector<8x16x4xbf16>
    %119 = vector.shape_cast %118 : vector<8x16x4xbf16> to vector<128x4xbf16>
    %c0_54 = arith.constant 0 : index
    %c0_55 = arith.constant 0 : index
    %c0_56 = arith.constant 0 : index
    %120 = vector.load %arg8[%c0_54, %c0_55, %c0_56] : memref<25x4x4xbf16, #tpu.memory_space<vmem>>, vector<1x4x4xbf16>
    %121 = vector.shape_cast %120 : vector<1x4x4xbf16> to vector<4x4xbf16>
    %cst_57 = arith.constant dense<0.000000e+00> : vector<128x4xf32>
    %122 = tpu.matmul %119, %121, %cst_57 {dimension_numbers = #tpu.dot_dimension_numbers<[1], [0], [0], [1], [0, 0, 1, 1], [], []>} : vector<128x4xbf16>, vector<4x4xbf16>, vector<128x4xf32> -> vector<128x4xf32>
    %123 = arith.addf %117, %122 : vector<128x4xf32>
    %124 = vector.extract_strided_slice %116 {offsets = [0, 1, 0], sizes = [8, 16, 4], strides = [1, 1, 1]} : vector<12x20x4xbf16> to vector<8x16x4xbf16>
    %125 = vector.shape_cast %124 : vector<8x16x4xbf16> to vector<128x4xbf16>
    %c1_58 = arith.constant 1 : index
    %c0_59 = arith.constant 0 : index
    %c0_60 = arith.constant 0 : index
    %126 = vector.load %arg8[%c1_58, %c0_59, %c0_60] : memref<25x4x4xbf16, #tpu.memory_space<vmem>>, vector<1x4x4xbf16>
    %127 = vector.shape_cast %126 : vector<1x4x4xbf16> to vector<4x4xbf16>
    %cst_61 = arith.constant dense<0.000000e+00> : vector<128x4xf32>
    %128 = tpu.matmul %125, %127, %cst_61 {dimension_numbers = #tpu.dot_dimension_numbers<[1], [0], [0], [1], [0, 0, 1, 1], [], []>} : vector<128x4xbf16>, vector<4x4xbf16>, vector<128x4xf32> -> vector<128x4xf32>
    %129 = arith.addf %123, %128 : vector<128x4xf32>
    %130 = vector.extract_strided_slice %116 {offsets = [0, 2, 0], sizes = [8, 16, 4], strides = [1, 1, 1]} : vector<12x20x4xbf16> to vector<8x16x4xbf16>
    %131 = vector.shape_cast %130 : vector<8x16x4xbf16> to vector<128x4xbf16>
    %c2_62 = arith.constant 2 : index
    %c0_63 = arith.constant 0 : index
    %c0_64 = arith.constant 0 : index
    %132 = vector.load %arg8[%c2_62, %c0_63, %c0_64] : memref<25x4x4xbf16, #tpu.memory_space<vmem>>, vector<1x4x4xbf16>
    %133 = vector.shape_cast %132 : vector<1x4x4xbf16> to vector<4x4xbf16>
    %cst_65 = arith.constant dense<0.000000e+00> : vector<128x4xf32>
    %134 = tpu.matmul %131, %133, %cst_65 {dimension_numbers = #tpu.dot_dimension_numbers<[1], [0], [0], [1], [0, 0, 1, 1], [], []>} : vector<128x4xbf16>, vector<4x4xbf16>, vector<128x4xf32> -> vector<128x4xf32>
    %135 = arith.addf %129, %134 : vector<128x4xf32>
    %136 = vector.extract_strided_slice %116 {offsets = [0, 3, 0], sizes = [8, 16, 4], strides = [1, 1, 1]} : vector<12x20x4xbf16> to vector<8x16x4xbf16>
    %137 = vector.shape_cast %136 : vector<8x16x4xbf16> to vector<128x4xbf16>
    %c3_66 = arith.constant 3 : index
    %c0_67 = arith.constant 0 : index
    %c0_68 = arith.constant 0 : index
    %138 = vector.load %arg8[%c3_66, %c0_67, %c0_68] : memref<25x4x4xbf16, #tpu.memory_space<vmem>>, vector<1x4x4xbf16>
    %139 = vector.shape_cast %138 : vector<1x4x4xbf16> to vector<4x4xbf16>
    %cst_69 = arith.constant dense<0.000000e+00> : vector<128x4xf32>
    %140 = tpu.matmul %137, %139, %cst_69 {dimension_numbers = #tpu.dot_dimension_numbers<[1], [0], [0], [1], [0, 0, 1, 1], [], []>} : vector<128x4xbf16>, vector<4x4xbf16>, vector<128x4xf32> -> vector<128x4xf32>
    %141 = arith.addf %135, %140 : vector<128x4xf32>
    %142 = vector.extract_strided_slice %116 {offsets = [0, 4, 0], sizes = [8, 16, 4], strides = [1, 1, 1]} : vector<12x20x4xbf16> to vector<8x16x4xbf16>
    %143 = vector.shape_cast %142 : vector<8x16x4xbf16> to vector<128x4xbf16>
    %c4_70 = arith.constant 4 : index
    %c0_71 = arith.constant 0 : index
    %c0_72 = arith.constant 0 : index
    %144 = vector.load %arg8[%c4_70, %c0_71, %c0_72] : memref<25x4x4xbf16, #tpu.memory_space<vmem>>, vector<1x4x4xbf16>
    %145 = vector.shape_cast %144 : vector<1x4x4xbf16> to vector<4x4xbf16>
    %cst_73 = arith.constant dense<0.000000e+00> : vector<128x4xf32>
    %146 = tpu.matmul %143, %145, %cst_73 {dimension_numbers = #tpu.dot_dimension_numbers<[1], [0], [0], [1], [0, 0, 1, 1], [], []>} : vector<128x4xbf16>, vector<4x4xbf16>, vector<128x4xf32> -> vector<128x4xf32>
    %147 = arith.addf %141, %146 : vector<128x4xf32>
    %148 = vector.extract_strided_slice %116 {offsets = [1, 0, 0], sizes = [8, 16, 4], strides = [1, 1, 1]} : vector<12x20x4xbf16> to vector<8x16x4xbf16>
    %149 = vector.shape_cast %148 : vector<8x16x4xbf16> to vector<128x4xbf16>
    %c5_74 = arith.constant 5 : index
    %c0_75 = arith.constant 0 : index
    %c0_76 = arith.constant 0 : index
    %150 = vector.load %arg8[%c5_74, %c0_75, %c0_76] : memref<25x4x4xbf16, #tpu.memory_space<vmem>>, vector<1x4x4xbf16>
    %151 = vector.shape_cast %150 : vector<1x4x4xbf16> to vector<4x4xbf16>
    %cst_77 = arith.constant dense<0.000000e+00> : vector<128x4xf32>
    %152 = tpu.matmul %149, %151, %cst_77 {dimension_numbers = #tpu.dot_dimension_numbers<[1], [0], [0], [1], [0, 0, 1, 1], [], []>} : vector<128x4xbf16>, vector<4x4xbf16>, vector<128x4xf32> -> vector<128x4xf32>
    %153 = arith.addf %147, %152 : vector<128x4xf32>
    %154 = vector.extract_strided_slice %116 {offsets = [1, 1, 0], sizes = [8, 16, 4], strides = [1, 1, 1]} : vector<12x20x4xbf16> to vector<8x16x4xbf16>
    %155 = vector.shape_cast %154 : vector<8x16x4xbf16> to vector<128x4xbf16>
    %c6_78 = arith.constant 6 : index
    %c0_79 = arith.constant 0 : index
    %c0_80 = arith.constant 0 : index
    %156 = vector.load %arg8[%c6_78, %c0_79, %c0_80] : memref<25x4x4xbf16, #tpu.memory_space<vmem>>, vector<1x4x4xbf16>
    %157 = vector.shape_cast %156 : vector<1x4x4xbf16> to vector<4x4xbf16>
    %cst_81 = arith.constant dense<0.000000e+00> : vector<128x4xf32>
    %158 = tpu.matmul %155, %157, %cst_81 {dimension_numbers = #tpu.dot_dimension_numbers<[1], [0], [0], [1], [0, 0, 1, 1], [], []>} : vector<128x4xbf16>, vector<4x4xbf16>, vector<128x4xf32> -> vector<128x4xf32>
    %159 = arith.addf %153, %158 : vector<128x4xf32>
    %160 = vector.extract_strided_slice %116 {offsets = [1, 2, 0], sizes = [8, 16, 4], strides = [1, 1, 1]} : vector<12x20x4xbf16> to vector<8x16x4xbf16>
    %161 = vector.shape_cast %160 : vector<8x16x4xbf16> to vector<128x4xbf16>
    %c7_82 = arith.constant 7 : index
    %c0_83 = arith.constant 0 : index
    %c0_84 = arith.constant 0 : index
    %162 = vector.load %arg8[%c7_82, %c0_83, %c0_84] : memref<25x4x4xbf16, #tpu.memory_space<vmem>>, vector<1x4x4xbf16>
    %163 = vector.shape_cast %162 : vector<1x4x4xbf16> to vector<4x4xbf16>
    %cst_85 = arith.constant dense<0.000000e+00> : vector<128x4xf32>
    %164 = tpu.matmul %161, %163, %cst_85 {dimension_numbers = #tpu.dot_dimension_numbers<[1], [0], [0], [1], [0, 0, 1, 1], [], []>} : vector<128x4xbf16>, vector<4x4xbf16>, vector<128x4xf32> -> vector<128x4xf32>
    %165 = arith.addf %159, %164 : vector<128x4xf32>
    %166 = vector.extract_strided_slice %116 {offsets = [1, 3, 0], sizes = [8, 16, 4], strides = [1, 1, 1]} : vector<12x20x4xbf16> to vector<8x16x4xbf16>
    %167 = vector.shape_cast %166 : vector<8x16x4xbf16> to vector<128x4xbf16>
    %c8_86 = arith.constant 8 : index
    %c0_87 = arith.constant 0 : index
    %c0_88 = arith.constant 0 : index
    %168 = vector.load %arg8[%c8_86, %c0_87, %c0_88] : memref<25x4x4xbf16, #tpu.memory_space<vmem>>, vector<1x4x4xbf16>
    %169 = vector.shape_cast %168 : vector<1x4x4xbf16> to vector<4x4xbf16>
    %cst_89 = arith.constant dense<0.000000e+00> : vector<128x4xf32>
    %170 = tpu.matmul %167, %169, %cst_89 {dimension_numbers = #tpu.dot_dimension_numbers<[1], [0], [0], [1], [0, 0, 1, 1], [], []>} : vector<128x4xbf16>, vector<4x4xbf16>, vector<128x4xf32> -> vector<128x4xf32>
    %171 = arith.addf %165, %170 : vector<128x4xf32>
    %172 = vector.extract_strided_slice %116 {offsets = [1, 4, 0], sizes = [8, 16, 4], strides = [1, 1, 1]} : vector<12x20x4xbf16> to vector<8x16x4xbf16>
    %173 = vector.shape_cast %172 : vector<8x16x4xbf16> to vector<128x4xbf16>
    %c9 = arith.constant 9 : index
    %c0_90 = arith.constant 0 : index
    %c0_91 = arith.constant 0 : index
    %174 = vector.load %arg8[%c9, %c0_90, %c0_91] : memref<25x4x4xbf16, #tpu.memory_space<vmem>>, vector<1x4x4xbf16>
    %175 = vector.shape_cast %174 : vector<1x4x4xbf16> to vector<4x4xbf16>
    %cst_92 = arith.constant dense<0.000000e+00> : vector<128x4xf32>
    %176 = tpu.matmul %173, %175, %cst_92 {dimension_numbers = #tpu.dot_dimension_numbers<[1], [0], [0], [1], [0, 0, 1, 1], [], []>} : vector<128x4xbf16>, vector<4x4xbf16>, vector<128x4xf32> -> vector<128x4xf32>
    %177 = arith.addf %171, %176 : vector<128x4xf32>
    %178 = vector.extract_strided_slice %116 {offsets = [2, 0, 0], sizes = [8, 16, 4], strides = [1, 1, 1]} : vector<12x20x4xbf16> to vector<8x16x4xbf16>
    %179 = vector.shape_cast %178 : vector<8x16x4xbf16> to vector<128x4xbf16>
    %c10 = arith.constant 10 : index
    %c0_93 = arith.constant 0 : index
    %c0_94 = arith.constant 0 : index
    %180 = vector.load %arg8[%c10, %c0_93, %c0_94] : memref<25x4x4xbf16, #tpu.memory_space<vmem>>, vector<1x4x4xbf16>
    %181 = vector.shape_cast %180 : vector<1x4x4xbf16> to vector<4x4xbf16>
    %cst_95 = arith.constant dense<0.000000e+00> : vector<128x4xf32>
    %182 = tpu.matmul %179, %181, %cst_95 {dimension_numbers = #tpu.dot_dimension_numbers<[1], [0], [0], [1], [0, 0, 1, 1], [], []>} : vector<128x4xbf16>, vector<4x4xbf16>, vector<128x4xf32> -> vector<128x4xf32>
    %183 = arith.addf %177, %182 : vector<128x4xf32>
    %184 = vector.extract_strided_slice %116 {offsets = [2, 1, 0], sizes = [8, 16, 4], strides = [1, 1, 1]} : vector<12x20x4xbf16> to vector<8x16x4xbf16>
    %185 = vector.shape_cast %184 : vector<8x16x4xbf16> to vector<128x4xbf16>
    %c11 = arith.constant 11 : index
    %c0_96 = arith.constant 0 : index
    %c0_97 = arith.constant 0 : index
    %186 = vector.load %arg8[%c11, %c0_96, %c0_97] : memref<25x4x4xbf16, #tpu.memory_space<vmem>>, vector<1x4x4xbf16>
    %187 = vector.shape_cast %186 : vector<1x4x4xbf16> to vector<4x4xbf16>
    %cst_98 = arith.constant dense<0.000000e+00> : vector<128x4xf32>
    %188 = tpu.matmul %185, %187, %cst_98 {dimension_numbers = #tpu.dot_dimension_numbers<[1], [0], [0], [1], [0, 0, 1, 1], [], []>} : vector<128x4xbf16>, vector<4x4xbf16>, vector<128x4xf32> -> vector<128x4xf32>
    %189 = arith.addf %183, %188 : vector<128x4xf32>
    %190 = vector.extract_strided_slice %116 {offsets = [2, 2, 0], sizes = [8, 16, 4], strides = [1, 1, 1]} : vector<12x20x4xbf16> to vector<8x16x4xbf16>
    %191 = vector.shape_cast %190 : vector<8x16x4xbf16> to vector<128x4xbf16>
    %c12 = arith.constant 12 : index
    %c0_99 = arith.constant 0 : index
    %c0_100 = arith.constant 0 : index
    %192 = vector.load %arg8[%c12, %c0_99, %c0_100] : memref<25x4x4xbf16, #tpu.memory_space<vmem>>, vector<1x4x4xbf16>
    %193 = vector.shape_cast %192 : vector<1x4x4xbf16> to vector<4x4xbf16>
    %cst_101 = arith.constant dense<0.000000e+00> : vector<128x4xf32>
    %194 = tpu.matmul %191, %193, %cst_101 {dimension_numbers = #tpu.dot_dimension_numbers<[1], [0], [0], [1], [0, 0, 1, 1], [], []>} : vector<128x4xbf16>, vector<4x4xbf16>, vector<128x4xf32> -> vector<128x4xf32>
    %195 = arith.addf %189, %194 : vector<128x4xf32>
    %196 = vector.extract_strided_slice %116 {offsets = [2, 3, 0], sizes = [8, 16, 4], strides = [1, 1, 1]} : vector<12x20x4xbf16> to vector<8x16x4xbf16>
    %197 = vector.shape_cast %196 : vector<8x16x4xbf16> to vector<128x4xbf16>
    %c13 = arith.constant 13 : index
    %c0_102 = arith.constant 0 : index
    %c0_103 = arith.constant 0 : index
    %198 = vector.load %arg8[%c13, %c0_102, %c0_103] : memref<25x4x4xbf16, #tpu.memory_space<vmem>>, vector<1x4x4xbf16>
    %199 = vector.shape_cast %198 : vector<1x4x4xbf16> to vector<4x4xbf16>
    %cst_104 = arith.constant dense<0.000000e+00> : vector<128x4xf32>
    %200 = tpu.matmul %197, %199, %cst_104 {dimension_numbers = #tpu.dot_dimension_numbers<[1], [0], [0], [1], [0, 0, 1, 1], [], []>} : vector<128x4xbf16>, vector<4x4xbf16>, vector<128x4xf32> -> vector<128x4xf32>
    %201 = arith.addf %195, %200 : vector<128x4xf32>
    %202 = vector.extract_strided_slice %116 {offsets = [2, 4, 0], sizes = [8, 16, 4], strides = [1, 1, 1]} : vector<12x20x4xbf16> to vector<8x16x4xbf16>
    %203 = vector.shape_cast %202 : vector<8x16x4xbf16> to vector<128x4xbf16>
    %c14 = arith.constant 14 : index
    %c0_105 = arith.constant 0 : index
    %c0_106 = arith.constant 0 : index
    %204 = vector.load %arg8[%c14, %c0_105, %c0_106] : memref<25x4x4xbf16, #tpu.memory_space<vmem>>, vector<1x4x4xbf16>
    %205 = vector.shape_cast %204 : vector<1x4x4xbf16> to vector<4x4xbf16>
    %cst_107 = arith.constant dense<0.000000e+00> : vector<128x4xf32>
    %206 = tpu.matmul %203, %205, %cst_107 {dimension_numbers = #tpu.dot_dimension_numbers<[1], [0], [0], [1], [0, 0, 1, 1], [], []>} : vector<128x4xbf16>, vector<4x4xbf16>, vector<128x4xf32> -> vector<128x4xf32>
    %207 = arith.addf %201, %206 : vector<128x4xf32>
    %208 = vector.extract_strided_slice %116 {offsets = [3, 0, 0], sizes = [8, 16, 4], strides = [1, 1, 1]} : vector<12x20x4xbf16> to vector<8x16x4xbf16>
    %209 = vector.shape_cast %208 : vector<8x16x4xbf16> to vector<128x4xbf16>
    %c15 = arith.constant 15 : index
    %c0_108 = arith.constant 0 : index
    %c0_109 = arith.constant 0 : index
    %210 = vector.load %arg8[%c15, %c0_108, %c0_109] : memref<25x4x4xbf16, #tpu.memory_space<vmem>>, vector<1x4x4xbf16>
    %211 = vector.shape_cast %210 : vector<1x4x4xbf16> to vector<4x4xbf16>
    %cst_110 = arith.constant dense<0.000000e+00> : vector<128x4xf32>
    %212 = tpu.matmul %209, %211, %cst_110 {dimension_numbers = #tpu.dot_dimension_numbers<[1], [0], [0], [1], [0, 0, 1, 1], [], []>} : vector<128x4xbf16>, vector<4x4xbf16>, vector<128x4xf32> -> vector<128x4xf32>
    %213 = arith.addf %207, %212 : vector<128x4xf32>
    %214 = vector.extract_strided_slice %116 {offsets = [3, 1, 0], sizes = [8, 16, 4], strides = [1, 1, 1]} : vector<12x20x4xbf16> to vector<8x16x4xbf16>
    %215 = vector.shape_cast %214 : vector<8x16x4xbf16> to vector<128x4xbf16>
    %c16 = arith.constant 16 : index
    %c0_111 = arith.constant 0 : index
    %c0_112 = arith.constant 0 : index
    %216 = vector.load %arg8[%c16, %c0_111, %c0_112] : memref<25x4x4xbf16, #tpu.memory_space<vmem>>, vector<1x4x4xbf16>
    %217 = vector.shape_cast %216 : vector<1x4x4xbf16> to vector<4x4xbf16>
    %cst_113 = arith.constant dense<0.000000e+00> : vector<128x4xf32>
    %218 = tpu.matmul %215, %217, %cst_113 {dimension_numbers = #tpu.dot_dimension_numbers<[1], [0], [0], [1], [0, 0, 1, 1], [], []>} : vector<128x4xbf16>, vector<4x4xbf16>, vector<128x4xf32> -> vector<128x4xf32>
    %219 = arith.addf %213, %218 : vector<128x4xf32>
    %220 = vector.extract_strided_slice %116 {offsets = [3, 2, 0], sizes = [8, 16, 4], strides = [1, 1, 1]} : vector<12x20x4xbf16> to vector<8x16x4xbf16>
    %221 = vector.shape_cast %220 : vector<8x16x4xbf16> to vector<128x4xbf16>
    %c17 = arith.constant 17 : index
    %c0_114 = arith.constant 0 : index
    %c0_115 = arith.constant 0 : index
    %222 = vector.load %arg8[%c17, %c0_114, %c0_115] : memref<25x4x4xbf16, #tpu.memory_space<vmem>>, vector<1x4x4xbf16>
    %223 = vector.shape_cast %222 : vector<1x4x4xbf16> to vector<4x4xbf16>
    %cst_116 = arith.constant dense<0.000000e+00> : vector<128x4xf32>
    %224 = tpu.matmul %221, %223, %cst_116 {dimension_numbers = #tpu.dot_dimension_numbers<[1], [0], [0], [1], [0, 0, 1, 1], [], []>} : vector<128x4xbf16>, vector<4x4xbf16>, vector<128x4xf32> -> vector<128x4xf32>
    %225 = arith.addf %219, %224 : vector<128x4xf32>
    %226 = vector.extract_strided_slice %116 {offsets = [3, 3, 0], sizes = [8, 16, 4], strides = [1, 1, 1]} : vector<12x20x4xbf16> to vector<8x16x4xbf16>
    %227 = vector.shape_cast %226 : vector<8x16x4xbf16> to vector<128x4xbf16>
    %c18 = arith.constant 18 : index
    %c0_117 = arith.constant 0 : index
    %c0_118 = arith.constant 0 : index
    %228 = vector.load %arg8[%c18, %c0_117, %c0_118] : memref<25x4x4xbf16, #tpu.memory_space<vmem>>, vector<1x4x4xbf16>
    %229 = vector.shape_cast %228 : vector<1x4x4xbf16> to vector<4x4xbf16>
    %cst_119 = arith.constant dense<0.000000e+00> : vector<128x4xf32>
    %230 = tpu.matmul %227, %229, %cst_119 {dimension_numbers = #tpu.dot_dimension_numbers<[1], [0], [0], [1], [0, 0, 1, 1], [], []>} : vector<128x4xbf16>, vector<4x4xbf16>, vector<128x4xf32> -> vector<128x4xf32>
    %231 = arith.addf %225, %230 : vector<128x4xf32>
    %232 = vector.extract_strided_slice %116 {offsets = [3, 4, 0], sizes = [8, 16, 4], strides = [1, 1, 1]} : vector<12x20x4xbf16> to vector<8x16x4xbf16>
    %233 = vector.shape_cast %232 : vector<8x16x4xbf16> to vector<128x4xbf16>
    %c19 = arith.constant 19 : index
    %c0_120 = arith.constant 0 : index
    %c0_121 = arith.constant 0 : index
    %234 = vector.load %arg8[%c19, %c0_120, %c0_121] : memref<25x4x4xbf16, #tpu.memory_space<vmem>>, vector<1x4x4xbf16>
    %235 = vector.shape_cast %234 : vector<1x4x4xbf16> to vector<4x4xbf16>
    %cst_122 = arith.constant dense<0.000000e+00> : vector<128x4xf32>
    %236 = tpu.matmul %233, %235, %cst_122 {dimension_numbers = #tpu.dot_dimension_numbers<[1], [0], [0], [1], [0, 0, 1, 1], [], []>} : vector<128x4xbf16>, vector<4x4xbf16>, vector<128x4xf32> -> vector<128x4xf32>
    %237 = arith.addf %231, %236 : vector<128x4xf32>
    %238 = vector.extract_strided_slice %116 {offsets = [4, 0, 0], sizes = [8, 16, 4], strides = [1, 1, 1]} : vector<12x20x4xbf16> to vector<8x16x4xbf16>
    %239 = vector.shape_cast %238 : vector<8x16x4xbf16> to vector<128x4xbf16>
    %c20 = arith.constant 20 : index
    %c0_123 = arith.constant 0 : index
    %c0_124 = arith.constant 0 : index
    %240 = vector.load %arg8[%c20, %c0_123, %c0_124] : memref<25x4x4xbf16, #tpu.memory_space<vmem>>, vector<1x4x4xbf16>
    %241 = vector.shape_cast %240 : vector<1x4x4xbf16> to vector<4x4xbf16>
    %cst_125 = arith.constant dense<0.000000e+00> : vector<128x4xf32>
    %242 = tpu.matmul %239, %241, %cst_125 {dimension_numbers = #tpu.dot_dimension_numbers<[1], [0], [0], [1], [0, 0, 1, 1], [], []>} : vector<128x4xbf16>, vector<4x4xbf16>, vector<128x4xf32> -> vector<128x4xf32>
    %243 = arith.addf %237, %242 : vector<128x4xf32>
    %244 = vector.extract_strided_slice %116 {offsets = [4, 1, 0], sizes = [8, 16, 4], strides = [1, 1, 1]} : vector<12x20x4xbf16> to vector<8x16x4xbf16>
    %245 = vector.shape_cast %244 : vector<8x16x4xbf16> to vector<128x4xbf16>
    %c21 = arith.constant 21 : index
    %c0_126 = arith.constant 0 : index
    %c0_127 = arith.constant 0 : index
    %246 = vector.load %arg8[%c21, %c0_126, %c0_127] : memref<25x4x4xbf16, #tpu.memory_space<vmem>>, vector<1x4x4xbf16>
    %247 = vector.shape_cast %246 : vector<1x4x4xbf16> to vector<4x4xbf16>
    %cst_128 = arith.constant dense<0.000000e+00> : vector<128x4xf32>
    %248 = tpu.matmul %245, %247, %cst_128 {dimension_numbers = #tpu.dot_dimension_numbers<[1], [0], [0], [1], [0, 0, 1, 1], [], []>} : vector<128x4xbf16>, vector<4x4xbf16>, vector<128x4xf32> -> vector<128x4xf32>
    %249 = arith.addf %243, %248 : vector<128x4xf32>
    %250 = vector.extract_strided_slice %116 {offsets = [4, 2, 0], sizes = [8, 16, 4], strides = [1, 1, 1]} : vector<12x20x4xbf16> to vector<8x16x4xbf16>
    %251 = vector.shape_cast %250 : vector<8x16x4xbf16> to vector<128x4xbf16>
    %c22 = arith.constant 22 : index
    %c0_129 = arith.constant 0 : index
    %c0_130 = arith.constant 0 : index
    %252 = vector.load %arg8[%c22, %c0_129, %c0_130] : memref<25x4x4xbf16, #tpu.memory_space<vmem>>, vector<1x4x4xbf16>
    %253 = vector.shape_cast %252 : vector<1x4x4xbf16> to vector<4x4xbf16>
    %cst_131 = arith.constant dense<0.000000e+00> : vector<128x4xf32>
    %254 = tpu.matmul %251, %253, %cst_131 {dimension_numbers = #tpu.dot_dimension_numbers<[1], [0], [0], [1], [0, 0, 1, 1], [], []>} : vector<128x4xbf16>, vector<4x4xbf16>, vector<128x4xf32> -> vector<128x4xf32>
    %255 = arith.addf %249, %254 : vector<128x4xf32>
    %256 = vector.extract_strided_slice %116 {offsets = [4, 3, 0], sizes = [8, 16, 4], strides = [1, 1, 1]} : vector<12x20x4xbf16> to vector<8x16x4xbf16>
    %257 = vector.shape_cast %256 : vector<8x16x4xbf16> to vector<128x4xbf16>
    %c23 = arith.constant 23 : index
    %c0_132 = arith.constant 0 : index
    %c0_133 = arith.constant 0 : index
    %258 = vector.load %arg8[%c23, %c0_132, %c0_133] : memref<25x4x4xbf16, #tpu.memory_space<vmem>>, vector<1x4x4xbf16>
    %259 = vector.shape_cast %258 : vector<1x4x4xbf16> to vector<4x4xbf16>
    %cst_134 = arith.constant dense<0.000000e+00> : vector<128x4xf32>
    %260 = tpu.matmul %257, %259, %cst_134 {dimension_numbers = #tpu.dot_dimension_numbers<[1], [0], [0], [1], [0, 0, 1, 1], [], []>} : vector<128x4xbf16>, vector<4x4xbf16>, vector<128x4xf32> -> vector<128x4xf32>
    %261 = arith.addf %255, %260 : vector<128x4xf32>
    %262 = vector.extract_strided_slice %116 {offsets = [4, 4, 0], sizes = [8, 16, 4], strides = [1, 1, 1]} : vector<12x20x4xbf16> to vector<8x16x4xbf16>
    %263 = vector.shape_cast %262 : vector<8x16x4xbf16> to vector<128x4xbf16>
    %c24 = arith.constant 24 : index
    %c0_135 = arith.constant 0 : index
    %c0_136 = arith.constant 0 : index
    %264 = vector.load %arg8[%c24, %c0_135, %c0_136] : memref<25x4x4xbf16, #tpu.memory_space<vmem>>, vector<1x4x4xbf16>
    %265 = vector.shape_cast %264 : vector<1x4x4xbf16> to vector<4x4xbf16>
    %cst_137 = arith.constant dense<0.000000e+00> : vector<128x4xf32>
    %266 = tpu.matmul %263, %265, %cst_137 {dimension_numbers = #tpu.dot_dimension_numbers<[1], [0], [0], [1], [0, 0, 1, 1], [], []>} : vector<128x4xbf16>, vector<4x4xbf16>, vector<128x4xf32> -> vector<128x4xf32>
    %267 = arith.addf %261, %266 : vector<128x4xf32>
    %c0_138 = arith.constant 0 : index
    %c0_139 = arith.constant 0 : index
    %268 = vector.load %arg9[%c0_138, %c0_139] : memref<1x4xf32, #tpu.memory_space<vmem>>, vector<1x4xf32>
    %269 = vector.broadcast %268 : vector<1x4xf32> to vector<128x4xf32>
    %270 = arith.mulf %267, %269 : vector<128x4xf32>
    %c0_140 = arith.constant 0 : index
    %c0_141 = arith.constant 0 : index
    %271 = vector.load %arg10[%c0_140, %c0_141] : memref<1x4xf32, #tpu.memory_space<vmem>>, vector<1x4xf32>
    %272 = vector.broadcast %271 : vector<1x4xf32> to vector<128x4xf32>
    %273 = arith.addf %270, %272 : vector<128x4xf32>
    %cst_142 = arith.constant 0.000000e+00 : f32
    %274 = vector.broadcast %cst_142 : f32 to vector<128x4xf32>
    %275 = arith.maximumf %273, %274 : vector<128x4xf32>
    %276 = vector.shape_cast %275 : vector<128x4xf32> to vector<8x16x4xf32>
    %cst_143 = arith.constant -3.40282347E+38 : f32
    %277 = vector.shape_cast %30 : vector<12x24x1xi1> to vector<12x24x1xi1>
    %278 = vector.broadcast %277 : vector<12x24x1xi1> to vector<12x24x4xi1>
    %279 = vector.broadcast %cst_143 : f32 to vector<12x24x4xf32>
    %280 = arith.select %278, %12, %279 : vector<12x24x4xi1>, vector<12x24x4xf32>
    %281 = vector.extract_strided_slice %280 {offsets = [1, 1, 0], sizes = [8, 16, 4], strides = [1, 1, 1]} : vector<12x24x4xf32> to vector<8x16x4xf32>
    %282 = vector.extract_strided_slice %280 {offsets = [1, 2, 0], sizes = [8, 16, 4], strides = [1, 1, 1]} : vector<12x24x4xf32> to vector<8x16x4xf32>
    %283 = arith.maximumf %281, %282 : vector<8x16x4xf32>
    %284 = vector.extract_strided_slice %280 {offsets = [1, 3, 0], sizes = [8, 16, 4], strides = [1, 1, 1]} : vector<12x24x4xf32> to vector<8x16x4xf32>
    %285 = arith.maximumf %283, %284 : vector<8x16x4xf32>
    %286 = vector.extract_strided_slice %280 {offsets = [2, 1, 0], sizes = [8, 16, 4], strides = [1, 1, 1]} : vector<12x24x4xf32> to vector<8x16x4xf32>
    %287 = arith.maximumf %285, %286 : vector<8x16x4xf32>
    %288 = vector.extract_strided_slice %280 {offsets = [2, 2, 0], sizes = [8, 16, 4], strides = [1, 1, 1]} : vector<12x24x4xf32> to vector<8x16x4xf32>
    %289 = arith.maximumf %287, %288 : vector<8x16x4xf32>
    %290 = vector.extract_strided_slice %280 {offsets = [2, 3, 0], sizes = [8, 16, 4], strides = [1, 1, 1]} : vector<12x24x4xf32> to vector<8x16x4xf32>
    %291 = arith.maximumf %289, %290 : vector<8x16x4xf32>
    %292 = vector.extract_strided_slice %280 {offsets = [3, 1, 0], sizes = [8, 16, 4], strides = [1, 1, 1]} : vector<12x24x4xf32> to vector<8x16x4xf32>
    %293 = arith.maximumf %291, %292 : vector<8x16x4xf32>
    %294 = vector.extract_strided_slice %280 {offsets = [3, 2, 0], sizes = [8, 16, 4], strides = [1, 1, 1]} : vector<12x24x4xf32> to vector<8x16x4xf32>
    %295 = arith.maximumf %293, %294 : vector<8x16x4xf32>
    %296 = vector.extract_strided_slice %280 {offsets = [3, 3, 0], sizes = [8, 16, 4], strides = [1, 1, 1]} : vector<12x24x4xf32> to vector<8x16x4xf32>
    %297 = arith.maximumf %295, %296 : vector<8x16x4xf32>
    %298 = arith.truncf %297 : vector<8x16x4xf32> to vector<8x16x4xbf16>
    %299 = vector.shape_cast %298 : vector<8x16x4xbf16> to vector<128x4xbf16>
    %c0_144 = arith.constant 0 : index
    %c0_145 = arith.constant 0 : index
    %300 = vector.load %arg11[%c0_144, %c0_145] : memref<4x4xbf16, #tpu.memory_space<vmem>>, vector<4x4xbf16>
    %cst_146 = arith.constant dense<0.000000e+00> : vector<128x4xf32>
    %301 = tpu.matmul %299, %300, %cst_146 {dimension_numbers = #tpu.dot_dimension_numbers<[1], [0], [0], [1], [0, 0, 1, 1], [], []>} : vector<128x4xbf16>, vector<4x4xbf16>, vector<128x4xf32> -> vector<128x4xf32>
    %c0_147 = arith.constant 0 : index
    %c0_148 = arith.constant 0 : index
    %302 = vector.load %arg12[%c0_147, %c0_148] : memref<1x4xf32, #tpu.memory_space<vmem>>, vector<1x4xf32>
    %303 = vector.broadcast %302 : vector<1x4xf32> to vector<128x4xf32>
    %304 = arith.mulf %301, %303 : vector<128x4xf32>
    %c0_149 = arith.constant 0 : index
    %c0_150 = arith.constant 0 : index
    %305 = vector.load %arg13[%c0_149, %c0_150] : memref<1x4xf32, #tpu.memory_space<vmem>>, vector<1x4xf32>
    %306 = vector.broadcast %305 : vector<1x4xf32> to vector<128x4xf32>
    %307 = arith.addf %304, %306 : vector<128x4xf32>
    %cst_151 = arith.constant 0.000000e+00 : f32
    %308 = vector.broadcast %cst_151 : f32 to vector<128x4xf32>
    %309 = arith.maximumf %307, %308 : vector<128x4xf32>
    %310 = vector.shape_cast %309 : vector<128x4xf32> to vector<8x16x4xf32>
    %311 = tpu.concatenate %48, %114, %276, %310 in 2 : vector<8x16x4xf32>, vector<8x16x8xf32>, vector<8x16x4xf32>, vector<8x16x4xf32> -> vector<8x16x20xf32>
    %c0_152 = arith.constant 0 : index
    %c0_153 = arith.constant 0 : index
    %c0_154 = arith.constant 0 : index
    %c0_155 = arith.constant 0 : index
    %312 = vector.load %arg14[%c0_152, %c0_153, %c0_154, %c0_155] : memref<1x8x16x20xf32, #tpu.memory_space<vmem>>, vector<1x8x16x20xf32>
    %313 = vector.shape_cast %312 : vector<1x8x16x20xf32> to vector<8x16x20xf32>
    %314 = vector.shape_cast %311 : vector<8x16x20xf32> to vector<1x8x16x20xf32>
    tpu.vector_store %arg14[%c0_152, %c0_153, %c0_154, %c0_155], %314 {strides = array<i32>} : memref<1x8x16x20xf32, #tpu.memory_space<vmem>>, vector<1x8x16x20xf32>,
    return
  }
  func.func @transform_0(%arg0: i32) -> (i32, i32, i32, i32) {
    %c0_i32 = arith.constant 0 : i32
    %c0_i32_0 = arith.constant 0 : i32
    %c0_i32_1 = arith.constant 0 : i32
    %c0_i32_2 = arith.constant 0 : i32
    return %arg0, %c0_i32, %c0_i32_0, %c0_i32_1 : i32, i32, i32, i32
  }
  func.func @transform_1(%arg0: i32) -> (i32, i32) {
    %c0_i32 = arith.constant 0 : i32
    %c0_i32_0 = arith.constant 0 : i32
    %c0_i32_1 = arith.constant 0 : i32
    return %c0_i32, %c0_i32_0 : i32, i32
  }
  func.func @transform_2(%arg0: i32) -> (i32, i32) {
    %c0_i32 = arith.constant 0 : i32
    %c0_i32_0 = arith.constant 0 : i32
    %c0_i32_1 = arith.constant 0 : i32
    return %c0_i32, %c0_i32_0 : i32, i32
  }
  func.func @transform_3(%arg0: i32) -> (i32, i32) {
    %c0_i32 = arith.constant 0 : i32
    %c0_i32_0 = arith.constant 0 : i32
    %c0_i32_1 = arith.constant 0 : i32
    return %c0_i32, %c0_i32_0 : i32, i32
  }
  func.func @transform_4(%arg0: i32) -> (i32, i32, i32) {
    %c0_i32 = arith.constant 0 : i32
    %c0_i32_0 = arith.constant 0 : i32
    %c0_i32_1 = arith.constant 0 : i32
    %c0_i32_2 = arith.constant 0 : i32
    return %c0_i32, %c0_i32_0, %c0_i32_1 : i32, i32, i32
  }
  func.func @transform_5(%arg0: i32) -> (i32, i32) {
    %c0_i32 = arith.constant 0 : i32
    %c0_i32_0 = arith.constant 0 : i32
    %c0_i32_1 = arith.constant 0 : i32
    return %c0_i32, %c0_i32_0 : i32, i32
  }
  func.func @transform_6(%arg0: i32) -> (i32, i32) {
    %c0_i32 = arith.constant 0 : i32
    %c0_i32_0 = arith.constant 0 : i32
    %c0_i32_1 = arith.constant 0 : i32
    return %c0_i32, %c0_i32_0 : i32, i32
  }
  func.func @transform_7(%arg0: i32) -> (i32, i32, i32) {
    %c0_i32 = arith.constant 0 : i32
    %c0_i32_0 = arith.constant 0 : i32
    %c0_i32_1 = arith.constant 0 : i32
    %c0_i32_2 = arith.constant 0 : i32
    return %c0_i32, %c0_i32_0, %c0_i32_1 : i32, i32, i32
  }
  func.func @transform_8(%arg0: i32) -> (i32, i32) {
    %c0_i32 = arith.constant 0 : i32
    %c0_i32_0 = arith.constant 0 : i32
    %c0_i32_1 = arith.constant 0 : i32
    return %c0_i32, %c0_i32_0 : i32, i32
  }
  func.func @transform_9(%arg0: i32) -> (i32, i32) {
    %c0_i32 = arith.constant 0 : i32
    %c0_i32_0 = arith.constant 0 : i32
    %c0_i32_1 = arith.constant 0 : i32
    return %c0_i32, %c0_i32_0 : i32, i32
  }
  func.func @transform_10(%arg0: i32) -> (i32, i32) {
    %c0_i32 = arith.constant 0 : i32
    %c0_i32_0 = arith.constant 0 : i32
    %c0_i32_1 = arith.constant 0 : i32
    return %c0_i32, %c0_i32_0 : i32, i32
  }
  func.func @transform_11(%arg0: i32) -> (i32, i32) {
    %c0_i32 = arith.constant 0 : i32
    %c0_i32_0 = arith.constant 0 : i32
    %c0_i32_1 = arith.constant 0 : i32
    return %c0_i32, %c0_i32_0 : i32, i32
  }
  func.func @transform_12(%arg0: i32) -> (i32, i32) {
    %c0_i32 = arith.constant 0 : i32
    %c0_i32_0 = arith.constant 0 : i32
    %c0_i32_1 = arith.constant 0 : i32
    return %c0_i32, %c0_i32_0 : i32, i32
  }
  func.func @transform_13(%arg0: i32) -> (i32, i32, i32, i32) {
    %c0_i32 = arith.constant 0 : i32
    %c0_i32_0 = arith.constant 0 : i32
    %c0_i32_1 = arith.constant 0 : i32
    %c0_i32_2 = arith.constant 0 : i32
    return %arg0, %c0_i32, %c0_i32_0, %c0_i32_1 : i32, i32, i32, i32
  }
}

</mosaic_0001>

<llo_original>
// kernel: inception_block.1
$region0: #{inception_block.1}
  #allocation0 [shape = 'u32[]', space=smem, size = 0x4, offset = 0x4, fixed_abs, tag = 'smem constant byte address 0x4 - core index']
  #allocation1 [shape = 'u32[144,128]{1,0:T(1,128)}', space=vmem, size = 0x12000, scoped, tag = 'internal scratch']
  %s0 = inlined_call_operand.vmem [shape: f32[4,12,24,4], index: 0, kind: input, shape index: {}]
  %s1 = inlined_call_operand.vmem [shape: bf16[4,12], index: 1, kind: input, shape index: {}]
  %s2 = inlined_call_operand.vmem [shape: f32[1,12], index: 2, kind: input, shape index: {}]
  %s3 = inlined_call_operand.vmem [shape: f32[1,12], index: 3, kind: input, shape index: {}]
  %s4 = inlined_call_operand.vmem [shape: bf16[9,4,8], index: 4, kind: input, shape index: {}]
  %s5 = inlined_call_operand.vmem [shape: f32[1,8], index: 5, kind: input, shape index: {}]
  %s6 = inlined_call_operand.vmem [shape: f32[1,8], index: 6, kind: input, shape index: {}]
  %s7 = inlined_call_operand.vmem [shape: bf16[25,4,4], index: 7, kind: input, shape index: {}]
  %s8 = inlined_call_operand.vmem [shape: f32[1,4], index: 8, kind: input, shape index: {}]
  %s9 = inlined_call_operand.vmem [shape: f32[1,4], index: 9, kind: input, shape index: {}]
  %s10 = inlined_call_operand.vmem [shape: bf16[4,4], index: 10, kind: input, shape index: {}]
  %s11 = inlined_call_operand.vmem [shape: f32[1,4], index: 11, kind: input, shape index: {}]
  %s12 = inlined_call_operand.vmem [shape: f32[1,4], index: 12, kind: input, shape index: {}]
  %s13 = inlined_call_operand.hbm [shape: f32[4,8,16,20], index: 13, kind: output, shape index: {}]
  %s14 = sld [smem:[#allocation0]]
  $region85: #{inception_block.1} parent=0
    _
  %s16 = ssub.s32 1, %s14
  %s17 = scalar_select 0, %s16, %s14
  $region1: #{inception_block.1} parent=0
    #allocation2 [shape = 'u8[131072]{0}', space=vmem, size = 0x20000, scoped, tag = 'output window, operand 0']
    #allocation3 [shape = 's32[2]{0}', space=sflag, size = 0x8, scoped, tag = 'scoped memory for inception_block.1']
    %18 = vsyncpa [#allocation3], 0
    %s19 = scalar_lea.sflag [#allocation3], 1
    %20 = vsyncpa %s19, 0
    loop: start=0, step=1, limit=6
    $region2: #{inception_block.1} parent=1 // loop_pre_header
      _
    $region3: #{inception_block.1} parent=1 // loop_header
      %s22 = sphi 0, %s26
      %p23 = scmp.ge.s32.totalorder %s22, 6
      %s32 = sphi 0, %s34
      %s35 = sphi 0, %s32
      %s36 = sphi 0, %s35
      %s52 = sphi 0, %s36
      %s56 = sphi 0, %s56
      %s58 = sphi 0, %s56
      %s59 = sphi 0, %s58
      %s73 = sphi 0, %s59
      %s77 = sphi 0, %s77
      %s79 = sphi 0, %s77
      %s80 = sphi 0, %s79
      %s94 = sphi 0, %s80
      %s98 = sphi 0, %s98
      %s100 = sphi 0, %s98
      %s101 = sphi 0, %s100
      %s115 = sphi 0, %s101
      %s119 = sphi 0, %s119
      %s121 = sphi 0, %s119
      %s122 = sphi 0, %s121
      %s136 = sphi 0, %s122
      %s140 = sphi 0, %s140
      %s142 = sphi 0, %s140
      %s143 = sphi 0, %s142
      %s157 = sphi 0, %s143
      %s161 = sphi 0, %s161
      %s163 = sphi 0, %s161
      %s164 = sphi 0, %s163
      %s178 = sphi 0, %s164
      %s182 = sphi 0, %s182
      %s184 = sphi 0, %s182
      %s185 = sphi 0, %s184
      %s199 = sphi 0, %s185
      %s203 = sphi 0, %s203
      %s205 = sphi 0, %s203
      %s206 = sphi 0, %s205
      %s220 = sphi 0, %s206
      %s224 = sphi 0, %s224
      %s226 = sphi 0, %s224
      %s227 = sphi 0, %s226
      %s241 = sphi 0, %s227
      %s245 = sphi 0, %s245
      %s247 = sphi 0, %s245
      %s248 = sphi 0, %s247
      %s262 = sphi 0, %s248
      %s266 = sphi 0, %s266
      %s268 = sphi 0, %s266
      %s269 = sphi 0, %s268
      %s283 = sphi 0, %s269
      %s287 = sphi 0, %s287
      %s289 = sphi 0, %s287
      %s290 = sphi 0, %s289
      %s304 = sphi 0, %s290
      %s310 = sphi 0, %s312
      %s313 = sphi 0, %s310
      %s314 = sphi 0, %s313
      %s330 = sphi 0, %s314
    $region4: #{inception_block.1} parent=1 // loop_header_branch
      %25 = sbr.rel (%p23) target = $region8
    $region5: #{inception_block.1} parent=1 // loop_body
      %s27 = ssub.s32 %s22, 1
      %s28 = ssub.s32 %s22, 2
      %s29 = sadd.s32 %s22, 1
      %s30 = ssub.s32 %s22, %s29
      %p31 = scmp.eq.s32.totalorder %s30, 0
      %s33 = sadd.s32 %s32, 1
      %s34 = scalar_select %p31, %s32, %s33
      %p37 = pneg %p31
      %p38 = scmp.eq.s32.totalorder %s22, 3
      %p39 = por %p37, %p38
      %p40 = scmp.ne.s32.totalorder %s32, %s35
      %p41 = scmp.eq.s32.totalorder %s22, 0
      %p42 = por %p40, %p41
      %p43 = scmp.ne.s32.totalorder %s32, %s35
      %p44 = scmp.eq.s32.totalorder %s27, 3
      %p45 = por %p43, %p44
      %p46 = scmp.ne.s32.totalorder %s35, %s36
      %p47 = scmp.eq.s32.totalorder %s27, 0
      %p48 = por %p46, %p47
      %p49 = scmp.ne.s32.totalorder %s35, %s36
      %p50 = scmp.eq.s32.totalorder %s28, 3
      %p51 = por %p49, %p50
      %p53 = scmp.ne.s32.totalorder %s36, %s52
      %p54 = scmp.eq.s32.totalorder %s28, 0
      %p55 = por %p53, %p54
      %s57 = sadd.s32 %s56, 1
      %p60 = scmp.eq.s32.totalorder %s22, 3
      %p61 = scmp.ne.s32.totalorder %s56, %s58
      %p62 = scmp.eq.s32.totalorder %s22, 0
      %p63 = por %p61, %p62
      %p64 = scmp.ne.s32.totalorder %s56, %s58
      %p65 = scmp.eq.s32.totalorder %s27, 3
      %p66 = por %p64, %p65
      %p67 = scmp.ne.s32.totalorder %s58, %s59
      %p68 = scmp.eq.s32.totalorder %s27, 0
      %p69 = por %p67, %p68
      %p70 = scmp.ne.s32.totalorder %s58, %s59
      %p71 = scmp.eq.s32.totalorder %s28, 3
      %p72 = por %p70, %p71
      %p74 = scmp.ne.s32.totalorder %s59, %s73
      %p75 = scmp.eq.s32.totalorder %s28, 0
      %p76 = por %p74, %p75
      %s78 = sadd.s32 %s77, 1
      %p81 = scmp.eq.s32.totalorder %s22, 3
      %p82 = scmp.ne.s32.totalorder %s77, %s79
      %p83 = scmp.eq.s32.totalorder %s22, 0
      %p84 = por %p82, %p83
      %p85 = scmp.ne.s32.totalorder %s77, %s79
      %p86 = scmp.eq.s32.totalorder %s27, 3
      %p87 = por %p85, %p86
      %p88 = scmp.ne.s32.totalorder %s79, %s80
      %p89 = scmp.eq.s32.totalorder %s27, 0
      %p90 = por %p88, %p89
      %p91 = scmp.ne.s32.totalorder %s79, %s80
      %p92 = scmp.eq.s32.totalorder %s28, 3
      %p93 = por %p91, %p92
      %p95 = scmp.ne.s32.totalorder %s80, %s94
      %p96 = scmp.eq.s32.totalorder %s28, 0
      %p97 = por %p95, %p96
      %s99 = sadd.s32 %s98, 1
      %p102 = scmp.eq.s32.totalorder %s22, 3
      %p103 = scmp.ne.s32.totalorder %s98, %s100
      %p104 = scmp.eq.s32.totalorder %s22, 0
      %p105 = por %p103, %p104
      %p106 = scmp.ne.s32.totalorder %s98, %s100
      %p107 = scmp.eq.s32.totalorder %s27, 3
      %p108 = por %p106, %p107
      %p109 = scmp.ne.s32.totalorder %s100, %s101
      %p110 = scmp.eq.s32.totalorder %s27, 0
      %p111 = por %p109, %p110
      %p112 = scmp.ne.s32.totalorder %s100, %s101
      %p113 = scmp.eq.s32.totalorder %s28, 3
      %p114 = por %p112, %p113
      %p116 = scmp.ne.s32.totalorder %s101, %s115
      %p117 = scmp.eq.s32.totalorder %s28, 0
      %p118 = por %p116, %p117
      %s120 = sadd.s32 %s119, 1
      %p123 = scmp.eq.s32.totalorder %s22, 3
      %p124 = scmp.ne.s32.totalorder %s119, %s121
      %p125 = scmp.eq.s32.totalorder %s22, 0
      %p126 = por %p124, %p125
      %p127 = scmp.ne.s32.totalorder %s119, %s121
      %p128 = scmp.eq.s32.totalorder %s27, 3
      %p129 = por %p127, %p128
      %p130 = scmp.ne.s32.totalorder %s121, %s122
      %p131 = scmp.eq.s32.totalorder %s27, 0
      %p132 = por %p130, %p131
      %p133 = scmp.ne.s32.totalorder %s121, %s122
      %p134 = scmp.eq.s32.totalorder %s28, 3
      %p135 = por %p133, %p134
      %p137 = scmp.ne.s32.totalorder %s122, %s136
      %p138 = scmp.eq.s32.totalorder %s28, 0
      %p139 = por %p137, %p138
      %s141 = sadd.s32 %s140, 1
      %p144 = scmp.eq.s32.totalorder %s22, 3
      %p145 = scmp.ne.s32.totalorder %s140, %s142
      %p146 = scmp.eq.s32.totalorder %s22, 0
      %p147 = por %p145, %p146
      %p148 = scmp.ne.s32.totalorder %s140, %s142
      %p149 = scmp.eq.s32.totalorder %s27, 3
      %p150 = por %p148, %p149
      %p151 = scmp.ne.s32.totalorder %s142, %s143
      %p152 = scmp.eq.s32.totalorder %s27, 0
      %p153 = por %p151, %p152
      %p154 = scmp.ne.s32.totalorder %s142, %s143
      %p155 = scmp.eq.s32.totalorder %s28, 3
      %p156 = por %p154, %p155
      %p158 = scmp.ne.s32.totalorder %s143, %s157
      %p159 = scmp.eq.s32.totalorder %s28, 0
      %p160 = por %p158, %p159
      %s162 = sadd.s32 %s161, 1
      %p165 = scmp.eq.s32.totalorder %s22, 3
      %p166 = scmp.ne.s32.totalorder %s161, %s163
      %p167 = scmp.eq.s32.totalorder %s22, 0
      %p168 = por %p166, %p167
      %p169 = scmp.ne.s32.totalorder %s161, %s163
      %p170 = scmp.eq.s32.totalorder %s27, 3
      %p171 = por %p169, %p170
      %p172 = scmp.ne.s32.totalorder %s163, %s164
      %p173 = scmp.eq.s32.totalorder %s27, 0
      %p174 = por %p172, %p173
      %p175 = scmp.ne.s32.totalorder %s163, %s164
      %p176 = scmp.eq.s32.totalorder %s28, 3
      %p177 = por %p175, %p176
      %p179 = scmp.ne.s32.totalorder %s164, %s178
      %p180 = scmp.eq.s32.totalorder %s28, 0
      %p181 = por %p179, %p180
      %s183 = sadd.s32 %s182, 1
      %p186 = scmp.eq.s32.totalorder %s22, 3
      %p187 = scmp.ne.s32.totalorder %s182, %s184
      %p188 = scmp.eq.s32.totalorder %s22, 0
      %p189 = por %p187, %p188
      %p190 = scmp.ne.s32.totalorder %s182, %s184
      %p191 = scmp.eq.s32.totalorder %s27, 3
      %p192 = por %p190, %p191
      %p193 = scmp.ne.s32.totalorder %s184, %s185
      %p194 = scmp.eq.s32.totalorder %s27, 0
      %p195 = por %p193, %p194
      %p196 = scmp.ne.s32.totalorder %s184, %s185
      %p197 = scmp.eq.s32.totalorder %s28, 3
      %p198 = por %p196, %p197
      %p200 = scmp.ne.s32.totalorder %s185, %s199
      %p201 = scmp.eq.s32.totalorder %s28, 0
      %p202 = por %p200, %p201
      %s204 = sadd.s32 %s203, 1
      %p207 = scmp.eq.s32.totalorder %s22, 3
      %p208 = scmp.ne.s32.totalorder %s203, %s205
      %p209 = scmp.eq.s32.totalorder %s22, 0
      %p210 = por %p208, %p209
      %p211 = scmp.ne.s32.totalorder %s203, %s205
      %p212 = scmp.eq.s32.totalorder %s27, 3
      %p213 = por %p211, %p212
      %p214 = scmp.ne.s32.totalorder %s205, %s206
      %p215 = scmp.eq.s32.totalorder %s27, 0
      %p216 = por %p214, %p215
      %p217 = scmp.ne.s32.totalorder %s205, %s206
      %p218 = scmp.eq.s32.totalorder %s28, 3
      %p219 = por %p217, %p218
      %p221 = scmp.ne.s32.totalorder %s206, %s220
      %p222 = scmp.eq.s32.totalorder %s28, 0
      %p223 = por %p221, %p222
      %s225 = sadd.s32 %s224, 1
      %p228 = scmp.eq.s32.totalorder %s22, 3
      %p229 = scmp.ne.s32.totalorder %s224, %s226
      %p230 = scmp.eq.s32.totalorder %s22, 0
      %p231 = por %p229, %p230
      %p232 = scmp.ne.s32.totalorder %s224, %s226
      %p233 = scmp.eq.s32.totalorder %s27, 3
      %p234 = por %p232, %p233
      %p235 = scmp.ne.s32.totalorder %s226, %s227
      %p236 = scmp.eq.s32.totalorder %s27, 0
      %p237 = por %p235, %p236
      %p238 = scmp.ne.s32.totalorder %s226, %s227
      %p239 = scmp.eq.s32.totalorder %s28, 3
      %p240 = por %p238, %p239
      %p242 = scmp.ne.s32.totalorder %s227, %s241
      %p243 = scmp.eq.s32.totalorder %s28, 0
      %p244 = por %p242, %p243
      %s246 = sadd.s32 %s245, 1
      %p249 = scmp.eq.s32.totalorder %s22, 3
      %p250 = scmp.ne.s32.totalorder %s245, %s247
      %p251 = scmp.eq.s32.totalorder %s22, 0
      %p252 = por %p250, %p251
      %p253 = scmp.ne.s32.totalorder %s245, %s247
      %p254 = scmp.eq.s32.totalorder %s27, 3
      %p255 = por %p253, %p254
      %p256 = scmp.ne.s32.totalorder %s247, %s248
      %p257 = scmp.eq.s32.totalorder %s27, 0
      %p258 = por %p256, %p257
      %p259 = scmp.ne.s32.totalorder %s247, %s248
      %p260 = scmp.eq.s32.totalorder %s28, 3
      %p261 = por %p259, %p260
      %p263 = scmp.ne.s32.totalorder %s248, %s262
      %p264 = scmp.eq.s32.totalorder %s28, 0
      %p265 = por %p263, %p264
      %s267 = sadd.s32 %s266, 1
      %p270 = scmp.eq.s32.totalorder %s22, 3
      %p271 = scmp.ne.s32.totalorder %s266, %s268
      %p272 = scmp.eq.s32.totalorder %s22, 0
      %p273 = por %p271, %p272
      %p274 = scmp.ne.s32.totalorder %s266, %s268
      %p275 = scmp.eq.s32.totalorder %s27, 3
      %p276 = por %p274, %p275
      %p277 = scmp.ne.s32.totalorder %s268, %s269
      %p278 = scmp.eq.s32.totalorder %s27, 0
      %p279 = por %p277, %p278
      %p280 = scmp.ne.s32.totalorder %s268, %s269
      %p281 = scmp.eq.s32.totalorder %s28, 3
      %p282 = por %p280, %p281
      %p284 = scmp.ne.s32.totalorder %s269, %s283
      %p285 = scmp.eq.s32.totalorder %s28, 0
      %p286 = por %p284, %p285
      %s288 = sadd.s32 %s287, 1
      %p291 = scmp.eq.s32.totalorder %s22, 3
      %p292 = scmp.ne.s32.totalorder %s287, %s289
      %p293 = scmp.eq.s32.totalorder %s22, 0
      %p294 = por %p292, %p293
      %p295 = scmp.ne.s32.totalorder %s287, %s289
      %p296 = scmp.eq.s32.totalorder %s27, 3
      %p297 = por %p295, %p296
      %p298 = scmp.ne.s32.totalorder %s289, %s290
      %p299 = scmp.eq.s32.totalorder %s27, 0
      %p300 = por %p298, %p299
      %p301 = scmp.ne.s32.totalorder %s289, %s290
      %p302 = scmp.eq.s32.totalorder %s28, 3
      %p303 = por %p301, %p302
      %p305 = scmp.ne.s32.totalorder %s290, %s304
      %p306 = scmp.eq.s32.totalorder %s28, 0
      %p307 = por %p305, %p306
      %s308 = ssub.s32 %s22, %s29
      %p309 = scmp.eq.s32.totalorder %s308, 0
      %s311 = sadd.s32 %s310, 1
      %s312 = scalar_select %p309, %s310, %s311
      %p315 = pneg %p309
      %p316 = scmp.eq.s32.totalorder %s22, 3
      %p317 = por %p315, %p316
      %p318 = scmp.ne.s32.totalorder %s310, %s313
      %p319 = scmp.eq.s32.totalorder %s22, 0
      %p320 = por %p318, %p319
      %p321 = scmp.ne.s32.totalorder %s310, %s313
      %p322 = scmp.eq.s32.totalorder %s27, 3
      %p323 = por %p321, %p322
      %p324 = scmp.ne.s32.totalorder %s313, %s314
      %p325 = scmp.eq.s32.totalorder %s27, 0
      %p326 = por %p324, %p325
      %p327 = scmp.ne.s32.totalorder %s313, %s314
      %p328 = scmp.eq.s32.totalorder %s28, 3
      %p329 = por %p327, %p328
      %p331 = scmp.ne.s32.totalorder %s314, %s330
      %p332 = scmp.eq.s32.totalorder %s28, 0
      %p333 = por %p331, %p332
      %p334 = scmp.le.s32.totalorder 1, %s22
      %p335 = scmp.lt.s32.totalorder %s22, 5
      %p336 = pnand %p334, %p335
      %p337 = pneg %p336
      // Predicated region
      $region9: #{inception_block.1} parent=5 // pred_check
        _
      $region10: #{inception_block.1} parent=5 // pred_check_branch
        %339 = sbr.rel (%p336) target = $region12
      $region11: #{inception_block.1} parent=5 // pred_region
        %s340 = ssub.s32 %s22, 1
        // Predicated region
        $region13: #{inception_block.1} parent=11 // pred_check
          %p341 = pneg %p69
        $region14: #{inception_block.1} parent=11 // pred_check_branch
          %343 = sbr.rel (%p341) target = $region16
        $region15: #{inception_block.1} parent=11 // pred_region
          _
        $region16: #{inception_block.1} parent=11 // pred_fallthru
          _
        // Predicated region
        $region17: #{inception_block.1} parent=11 // pred_check
          %p344 = pneg %p90
        $region18: #{inception_block.1} parent=11 // pred_check_branch
          %346 = sbr.rel (%p344) target = $region20
        $region19: #{inception_block.1} parent=11 // pred_region
          _
        $region20: #{inception_block.1} parent=11 // pred_fallthru
          _
        // Predicated region
        $region21: #{inception_block.1} parent=11 // pred_check
          %p347 = pneg %p111
        $region22: #{inception_block.1} parent=11 // pred_check_branch
          %349 = sbr.rel (%p347) target = $region24
        $region23: #{inception_block.1} parent=11 // pred_region
          _
        $region24: #{inception_block.1} parent=11 // pred_fallthru
          _
        // Predicated region
        $region25: #{inception_block.1} parent=11 // pred_check
          %p350 = pneg %p132
        $region26: #{inception_block.1} parent=11 // pred_check_branch
          %352 = sbr.rel (%p350) target = $region28
        $region27: #{inception_block.1} parent=11 // pred_region
          _
        $region28: #{inception_block.1} parent=11 // pred_fallthru
          _
        // Predicated region
        $region29: #{inception_block.1} parent=11 // pred_check
          %p353 = pneg %p153
        $region30: #{inception_block.1} parent=11 // pred_check_branch
          %355 = sbr.rel (%p353) target = $region32
        $region31: #{inception_block.1} parent=11 // pred_region
          _
        $region32: #{inception_block.1} parent=11 // pred_fallthru
          _
        // Predicated region
        $region33: #{inception_block.1} parent=11 // pred_check
          %p356 = pneg %p174
        $region34: #{inception_block.1} parent=11 // pred_check_branch
          %358 = sbr.rel (%p356) target = $region36
        $region35: #{inception_block.1} parent=11 // pred_region
          _
        $region36: #{inception_block.1} parent=11 // pred_fallthru
          _
        // Predicated region
        $region37: #{inception_block.1} parent=11 // pred_check
          %p359 = pneg %p195
        $region38: #{inception_block.1} parent=11 // pred_check_branch
          %361 = sbr.rel (%p359) target = $region40
        $region39: #{inception_block.1} parent=11 // pred_region
          _
        $region40: #{inception_block.1} parent=11 // pred_fallthru
          _
        // Predicated region
        $region41: #{inception_block.1} parent=11 // pred_check
          %p362 = pneg %p216
        $region42: #{inception_block.1} parent=11 // pred_check_branch
          %364 = sbr.rel (%p362) target = $region44
        $region43: #{inception_block.1} parent=11 // pred_region
          _
        $region44: #{inception_block.1} parent=11 // pred_fallthru
          _
        // Predicated region
        $region45: #{inception_block.1} parent=11 // pred_check
          %p365 = pneg %p237
        $region46: #{inception_block.1} parent=11 // pred_check_branch
          %367 = sbr.rel (%p365) target = $region48
        $region47: #{inception_block.1} parent=11 // pred_region
          _
        $region48: #{inception_block.1} parent=11 // pred_fallthru
          _
        // Predicated region
        $region49: #{inception_block.1} parent=11 // pred_check
          %p368 = pneg %p258
        $region50: #{inception_block.1} parent=11 // pred_check_branch
          %370 = sbr.rel (%p368) target = $region52
        $region51: #{inception_block.1} parent=11 // pred_region
          _
        $region52: #{inception_block.1} parent=11 // pred_fallthru
          _
        // Predicated region
        $region53: #{inception_block.1} parent=11 // pred_check
          %p371 = pneg %p279
        $region54: #{inception_block.1} parent=11 // pred_check_branch
          %373 = sbr.rel (%p371) target = $region56
        $region55: #{inception_block.1} parent=11 // pred_region
          _
        $region56: #{inception_block.1} parent=11 // pred_fallthru
          _
        // Predicated region
        $region57: #{inception_block.1} parent=11 // pred_check
          %p374 = pneg %p300
        $region58: #{inception_block.1} parent=11 // pred_check_branch
          %376 = sbr.rel (%p374) target = $region60
        $region59: #{inception_block.1} parent=11 // pred_region
          _
        $region60: #{inception_block.1} parent=11 // pred_fallthru
          _
      $region12: #{inception_block.1} parent=5 // pred_fallthru
        _
      %p377 = scmp.lt.s32.totalorder %s22, 4
      // Predicated region
      $region61: #{inception_block.1} parent=5 // pred_check
        %p378 = pneg %p377
      $region62: #{inception_block.1} parent=5 // pred_check_branch
        %380 = sbr.rel (%p378) target = $region64
      $region63: #{inception_block.1} parent=5 // pred_region
        // Predicated region
        $region65: #{inception_block.1} parent=63 // pred_check
          %p381 = pneg %p42
        $region66: #{inception_block.1} parent=63 // pred_check_branch
          %383 = sbr.rel (%p381) target = $region68
        $region67: #{inception_block.1} parent=63 // pred_region
          %p384 = scmp.lt.s32.totalorder %s22, 3
          %s385 = scalar_select %p384, %s22, 3
          %s386 = smul.addr %s385, 36
          %s387 = smul.addr %s386, 8
          %s388 = scalar_lea.vmem %s0, %s387
        $region68: #{inception_block.1} parent=63 // pred_fallthru
          _
      $region64: #{inception_block.1} parent=5 // pred_fallthru
        _
      %p389 = scmp.le.s32.totalorder 1, %s22
      %p390 = scmp.lt.s32.totalorder %s22, 5
      %p391 = pnand %p389, %p390
      %p392 = pneg %p391
      // Predicated region
      $region69: #{inception_block.1} parent=5 // pred_check
        _
      $region70: #{inception_block.1} parent=5 // pred_check_branch
        %394 = sbr.rel (%p391) target = $region72
      $region71: #{inception_block.1} parent=5 // pred_region
        %s395 = ssub.s32 %s22, 1
        %p396 = scmp.lt.s32.totalorder %s27, 3
        %s397 = scalar_select %p396, %s27, 3
        %s398 = smul.addr %s397, 36
        %s399 = smul.addr %s398, 8
        %s400 = scalar_lea.vmem %s0, %s399
        %p401 = pneg %p48
        %p402 = pneg %p45
        %p403 = pneg %p69
        %p404 = pneg %p66
        %p405 = pneg %p90
        %p406 = pneg %p87
        %p407 = pneg %p111
        %p408 = pneg %p108
        %p409 = pneg %p132
        %p410 = pneg %p129
        %p411 = pneg %p153
        %p412 = pneg %p150
        %p413 = pneg %p174
        %p414 = pneg %p171
        %p415 = pneg %p195
        %p416 = pneg %p192
        %p417 = pneg %p216
        %p418 = pneg %p213
        %p419 = pneg %p237
        %p420 = pneg %p234
        %p421 = pneg %p258
        %p422 = pneg %p255
        %p423 = pneg %p279
        %p424 = pneg %p276
        %p425 = pneg %p300
        %p426 = pneg %p297
        %p427 = pneg %p326
        %p428 = pneg %p323
        %s429 = sand.u32 %s313, 1
        %s430 = scalar_lea.sflag [#allocation3], %s429
        %s431 = sand.u32 %s313, 1
        %s432 = smul.addr %s431, 128
        %s433 = scalar_lea.vmem [#allocation2], %s432
        %p434 = scmp.lt.s32.totalorder %s27, 3
        %s435 = scalar_select %p434, %s27, 3
        %s436 = smul.addr %s435, 36
        %s437 = smul.addr %s436, 8
        %s438 = scalar_lea.vmem %s0, %s437
        %p440 = scmp.lt.s32.totalorder %s27, 0
        %s441 = ssub.s32 0, %s27
        %s442 = scalar_select %p440, %s441, %s27
        %s443 = sand.u32 %s442, 1
        %s444 = ssub.s32 0, %s443
        %s445 = scalar_select %p440, %s444, %s443
        %p446 = scmp.ne.s32.totalorder %s445, 0
        %p447 = scmp.lt.s32.totalorder %s445, 0
        %p448 = pnand %p447, %p446
        %p449 = pneg %p448
        %s450 = sadd.s32 %s445, 2
        %s451 = scalar_select %p449, %s450, %s445
        %s452 = smul.u32 %s451, 8
        %v453 = vld [vmem:[%s438] sm:$0xff]
        %v454 = vld [vmem:[%s438 + $0x8] sm:$0xff]
        %v455 = vld [vmem:[%s438 + $0x10] sm:$0xff]
        %v456 = vld [vmem:[%s438 + $0x18] sm:$0xff]
        %v457 = vld [vmem:[%s438 + $0x20] sm:$0xff]
        %v458 = vld [vmem:[%s438 + $0x28] sm:$0xff]
        %v459 = vld [vmem:[%s438 + $0x30] sm:$0xff]
        %v460 = vld [vmem:[%s438 + $0x38] sm:$0xff]
        %v461 = vld [vmem:[%s438 + $0x40] sm:$0xff]
        %v462 = vld [vmem:[%s438 + $0x48] sm:$0xff]
        %v463 = vld [vmem:[%s438 + $0x50] sm:$0xff]
        %v464 = vld [vmem:[%s438 + $0x58] sm:$0xff]
        %v465 = vld [vmem:[%s438 + $0x60] sm:$0xff]
        %v466 = vld [vmem:[%s438 + $0x68] sm:$0xff]
        %v467 = vld [vmem:[%s438 + $0x70] sm:$0xff]
        %v468 = vld [vmem:[%s438 + $0x78] sm:$0xff]
        %v469 = vld [vmem:[%s438 + $0x80] sm:$0xff]
        %v470 = vld [vmem:[%s438 + $0x88] sm:$0xff]
        %v471 = vld [vmem:[%s438 + $0x90] sm:$0xff]
        %v472 = vld [vmem:[%s438 + $0x98] sm:$0xff]
        %v473 = vld [vmem:[%s438 + $0xa0] sm:$0xff]
        %v474 = vld [vmem:[%s438 + $0xa8] sm:$0xff]
        %v475 = vld [vmem:[%s438 + $0xb0] sm:$0xff]
        %v476 = vld [vmem:[%s438 + $0xb8] sm:$0xff]
        %v477 = vld [vmem:[%s438 + $0xc0] sm:$0xff]
        %v478 = vld [vmem:[%s438 + $0xc8] sm:$0xff]
        %v479 = vld [vmem:[%s438 + $0xd0] sm:$0xff]
        %v480 = vld [vmem:[%s438 + $0xd8] sm:$0xff]
        %v481 = vld [vmem:[%s438 + $0xe0] sm:$0xff]
        %v482 = vld [vmem:[%s438 + $0xe8] sm:$0xff]
        %v483 = vld [vmem:[%s438 + $0xf0] sm:$0xff]
        %v484 = vld [vmem:[%s438 + $0xf8] sm:$0xff]
        %v485 = vld [vmem:[%s438 + $0x100] sm:$0xff]
        %v486 = vld [vmem:[%s438 + $0x108] sm:$0xff]
        %v487 = vld [vmem:[%s438 + $0x110] sm:$0xff]
        %v488 = vld [vmem:[%s438 + $0x118] sm:$0xff]
        %s489 = ssub.s32 %s452, 2
        %v490 = vstv %s489
        %v491 = vadd.s32 %v490, 1
        %v492 = vadd.s32 %v490, 2
        %v493 = vadd.s32 %v490, 3
        %v494 = vadd.s32 %v490, 4
        %v495 = vadd.s32 %v490, 5
        %v496 = vadd.s32 %v490, 6
        %v497 = vadd.s32 %v490, 7
        %v498 = vadd.s32 %v490, 8
        %v499 = vadd.s32 %v490, 9
        %v500 = vadd.s32 %v490, 10
        %v501 = vadd.s32 %v490, 11
        %v502 = vlaneseq
        %v503 = vshrl.u32 %v502, 7
        %v504 = vadd.s32 %v503, 8
        %v505 = vadd.s32 %v503, 16
        %v506 = vsub.s32 %v503, 2
        %v507 = vsub.s32 %v504, 2
        %v508 = vsub.s32 %v505, 2
        %vm509 = vcmp.ge.s32.totalorder %v490, 0
        %vm510 = vcmp.ge.s32.totalorder %v491, 0
        %vm511 = vcmp.ge.s32.totalorder %v492, 0
        %vm512 = vcmp.ge.s32.totalorder %v493, 0
        %vm513 = vcmp.ge.s32.totalorder %v494, 0
        %vm514 = vcmp.ge.s32.totalorder %v495, 0
        %vm515 = vcmp.ge.s32.totalorder %v496, 0
        %vm516 = vcmp.ge.s32.totalorder %v497, 0
        %vm517 = vcmp.ge.s32.totalorder %v498, 0
        %vm518 = vcmp.ge.s32.totalorder %v499, 0
        %vm519 = vcmp.ge.s32.totalorder %v500, 0
        %vm520 = vcmp.ge.s32.totalorder %v501, 0
        %vm521 = vcmp.lt.s32.totalorder %v490, 16
        %vm522 = vcmp.lt.s32.totalorder %v491, 16
        %vm523 = vcmp.lt.s32.totalorder %v492, 16
        %vm524 = vcmp.lt.s32.totalorder %v493, 16
        %vm525 = vcmp.lt.s32.totalorder %v494, 16
        %vm526 = vcmp.lt.s32.totalorder %v495, 16
        %vm527 = vcmp.lt.s32.totalorder %v496, 16
        %vm528 = vcmp.lt.s32.totalorder %v497, 16
        %vm529 = vcmp.lt.s32.totalorder %v498, 16
        %vm530 = vcmp.lt.s32.totalorder %v499, 16
        %vm531 = vcmp.lt.s32.totalorder %v500, 16
        %vm532 = vcmp.lt.s32.totalorder %v501, 16
        %vm533 = vmand %vm509, %vm521
        %vm534 = vmand %vm510, %vm522
        %vm535 = vmand %vm511, %vm523
        %vm536 = vmand %vm512, %vm524
        %vm537 = vmand %vm513, %vm525
        %vm538 = vmand %vm514, %vm526
        %vm539 = vmand %vm515, %vm527
        %vm540 = vmand %vm516, %vm528
        %vm541 = vmand %vm517, %vm529
        %vm542 = vmand %vm518, %vm530
        %vm543 = vmand %vm519, %vm531
        %vm544 = vmand %vm520, %vm532
        %vm545 = vcmp.ge.s32.totalorder %v506, 0
        %vm546 = vcmp.ge.s32.totalorder %v507, 0
        %vm547 = vcmp.ge.s32.totalorder %v508, 0
        %vm548 = vmand %vm533, %vm545
        %vm549 = vmand %vm533, %vm546
        %vm550 = vmand %vm533, %vm547
        %vm551 = vmand %vm534, %vm545
        %vm552 = vmand %vm534, %vm546
        %vm553 = vmand %vm534, %vm547
        %vm554 = vmand %vm535, %vm545
        %vm555 = vmand %vm535, %vm546
        %vm556 = vmand %vm535, %vm547
        %vm557 = vmand %vm536, %vm545
        %vm558 = vmand %vm536, %vm546
        %vm559 = vmand %vm536, %vm547
        %vm560 = vmand %vm537, %vm545
        %vm561 = vmand %vm537, %vm546
        %vm562 = vmand %vm537, %vm547
        %vm563 = vmand %vm538, %vm545
        %vm564 = vmand %vm538, %vm546
        %vm565 = vmand %vm538, %vm547
        %vm566 = vmand %vm539, %vm545
        %vm567 = vmand %vm539, %vm546
        %vm568 = vmand %vm539, %vm547
        %vm569 = vmand %vm540, %vm545
        %vm570 = vmand %vm540, %vm546
        %vm571 = vmand %vm540, %vm547
        %vm572 = vmand %vm541, %vm545
        %vm573 = vmand %vm541, %vm546
        %vm574 = vmand %vm541, %vm547
        %vm575 = vmand %vm542, %vm545
        %vm576 = vmand %vm542, %vm546
        %vm577 = vmand %vm542, %vm547
        %vm578 = vmand %vm543, %vm545
        %vm579 = vmand %vm543, %vm546
        %vm580 = vmand %vm543, %vm547
        %vm581 = vmand %vm544, %vm545
        %vm582 = vmand %vm544, %vm546
        %vm583 = vmand %vm544, %vm547
        %vm584 = vcmp.lt.s32.totalorder %v506, 16
        %vm585 = vcmp.lt.s32.totalorder %v507, 16
        %vm586 = vcmp.lt.s32.totalorder %v508, 16
        %vm587 = vmand %vm548, %vm584
        %vm588 = vmand %vm549, %vm585
        %vm589 = vmand %vm550, %vm586
        %vm590 = vmand %vm551, %vm584
        %vm591 = vmand %vm552, %vm585
        %vm592 = vmand %vm553, %vm586
        %vm593 = vmand %vm554, %vm584
        %vm594 = vmand %vm555, %vm585
        %vm595 = vmand %vm556, %vm586
        %vm596 = vmand %vm557, %vm584
        %vm597 = vmand %vm558, %vm585
        %vm598 = vmand %vm559, %vm586
        %vm599 = vmand %vm560, %vm584
        %vm600 = vmand %vm561, %vm585
        %vm601 = vmand %vm562, %vm586
        %vm602 = vmand %vm563, %vm584
        %vm603 = vmand %vm564, %vm585
        %vm604 = vmand %vm565, %vm586
        %vm605 = vmand %vm566, %vm584
        %vm606 = vmand %vm567, %vm585
        %vm607 = vmand %vm568, %vm586
        %vm608 = vmand %vm569, %vm584
        %vm609 = vmand %vm570, %vm585
        %vm610 = vmand %vm571, %vm586
        %vm611 = vmand %vm572, %vm584
        %vm612 = vmand %vm573, %vm585
        %vm613 = vmand %vm574, %vm586
        %vm614 = vmand %vm575, %vm584
        %vm615 = vmand %vm576, %vm585
        %vm616 = vmand %vm577, %vm586
        %vm617 = vmand %vm578, %vm584
        %vm618 = vmand %vm579, %vm585
        %vm619 = vmand %vm580, %vm586
        %vm620 = vmand %vm581, %vm584
        %vm621 = vmand %vm582, %vm585
        %vm622 = vmand %vm583, %vm586
        %v623 = vpack.c.bf16 %v454, %v453
        %v624 = vpack.c.bf16 %v455, %v455
        %v625 = vpack.c.bf16 %v457, %v456
        %v626 = vpack.c.bf16 %v458, %v458
        %v627 = vpack.c.bf16 %v460, %v459
        %v628 = vpack.c.bf16 %v461, %v461
        %v629 = vpack.c.bf16 %v463, %v462
        %v630 = vpack.c.bf16 %v464, %v464
        %v631 = vpack.c.bf16 %v466, %v465
        %v632 = vpack.c.bf16 %v467, %v467
        %v633 = vpack.c.bf16 %v469, %v468
        %v634 = vpack.c.bf16 %v470, %v470
        %v635 = vpack.c.bf16 %v472, %v471
        %v636 = vpack.c.bf16 %v473, %v473
        %v637 = vpack.c.bf16 %v475, %v474
        %v638 = vpack.c.bf16 %v476, %v476
        %v639 = vpack.c.bf16 %v478, %v477
        %v640 = vpack.c.bf16 %v479, %v479
        %v641 = vpack.c.bf16 %v481, %v480
        %v642 = vpack.c.bf16 %v482, %v482
        %v643 = vpack.c.bf16 %v484, %v483
        %v644 = vpack.c.bf16 %v485, %v485
        %v645 = vpack.c.bf16 %v487, %v486
        %v646 = vpack.c.bf16 %v488, %v488
        %v671 = vunpack.c.l.b16 %v623
        %v672 = vunpack.c.h.b16 %v623
        %v673 = vunpack.c.l.b16 %v624
        %v674 = vunpack.c.l.b16 %v625
        %v675 = vunpack.c.h.b16 %v625
        %v676 = vunpack.c.l.b16 %v626
        %v677 = vunpack.c.l.b16 %v627
        %v678 = vunpack.c.h.b16 %v627
        %v679 = vunpack.c.l.b16 %v628
        %v680 = vunpack.c.l.b16 %v629
        %v681 = vunpack.c.h.b16 %v629
        %v682 = vunpack.c.l.b16 %v630
        %v683 = vunpack.c.l.b16 %v631
        %v684 = vunpack.c.h.b16 %v631
        %v685 = vunpack.c.l.b16 %v632
        %v686 = vunpack.c.l.b16 %v633
        %v687 = vunpack.c.h.b16 %v633
        %v688 = vunpack.c.l.b16 %v634
        %v689 = vunpack.c.l.b16 %v635
        %v690 = vunpack.c.h.b16 %v635
        %v691 = vunpack.c.l.b16 %v636
        %v692 = vunpack.c.l.b16 %v637
        %v693 = vunpack.c.h.b16 %v637
        %v694 = vunpack.c.l.b16 %v638
        %v695 = vunpack.c.l.b16 %v639
        %v696 = vunpack.c.h.b16 %v639
        %v697 = vunpack.c.l.b16 %v640
        %v698 = vunpack.c.l.b16 %v641
        %v699 = vunpack.c.h.b16 %v641
        %v700 = vunpack.c.l.b16 %v642
        %v701 = vunpack.c.l.b16 %v643
        %v702 = vunpack.c.h.b16 %v643
        %v703 = vunpack.c.l.b16 %v644
        %v704 = vunpack.c.l.b16 %v645
        %v705 = vunpack.c.h.b16 %v645
        %v706 = vunpack.c.l.b16 %v646
        %v707 = vld [vmem:[%s1] sm:$0x3]
        %v708 = vpack.c.b16 %v672, %v671
        %v709 = vpack.c.b16 %v674, %v673
        %v710 = vpack.c.b16 %v676, %v675
        %v711 = vpack.c.b16 %v678, %v677
        %v712 = vpack.c.b16 %v680, %v679
        %v713 = vpack.c.b16 %v682, %v681
        %v714 = vpack.c.b16 %v684, %v683
        %v715 = vpack.c.b16 %v686, %v685
        %v716 = vpack.c.b16 %v688, %v687
        %v717 = vpack.c.b16 %v690, %v689
        %v718 = vpack.c.b16 %v692, %v691
        %v719 = vpack.c.b16 %v694, %v693
        %v720 = vpack.c.b16 %v696, %v695
        %v721 = vpack.c.b16 %v698, %v697
        %v722 = vpack.c.b16 %v700, %v699
        %v723 = vpack.c.b16 %v702, %v701
        %v724 = vpack.c.b16 %v704, %v703
        %v725 = vpack.c.b16 %v706, %v705
        %vm726 = vcmask 31744
        %v728 = vsel %vm726, %v708, 0
        %v731 = vsel %vm726, %v709, 0
        %v734 = vsel %vm726, %v710, 0
        %v737 = vsel %vm726, %v711, 0
        %v740 = vsel %vm726, %v712, 0
        %v743 = vsel %vm726, %v713, 0
        %v746 = vsel %vm726, %v714, 0
        %v749 = vsel %vm726, %v715, 0
        %v752 = vsel %vm726, %v716, 0
        %v755 = vsel %vm726, %v717, 0
        %v758 = vsel %vm726, %v718, 0
        %v761 = vsel %vm726, %v719, 0
        %v764 = vsel %vm726, %v720, 0
        %v767 = vsel %vm726, %v721, 0
        %v770 = vsel %vm726, %v722, 0
        %v773 = vsel %vm726, %v723, 0
        %v776 = vsel %vm726, %v724, 0
        %v779 = vsel %vm726, %v725, 0
        %vm781 = vcmask 1041408
        %v783 = vsel %vm781, %v707, 0
        %785 = vmatprep.subr.bf16.mxu0 0
        %786 = vmatpush1.bf16.msra.mxu0 0
        %787 = vmatprep.subr.bf16.mxu0 0
        %788 = vmatpush1.bf16.msra.mxu0 0
        %789 = vmatprep.subr.bf16.mxu0 0
        %790 = vmatpush1.bf16.msra.mxu0 0
        %791 = vmatprep.subr.bf16.mxu0 0
        %792 = vmatpush1.bf16.msra.mxu0 0
        %793 = vmatprep.subr.bf16.mxu0 0
        %794 = vmatpush1.bf16.msra.mxu0 0
        %795 = vmatprep.subr.bf16.mxu0 0
        %796 = vmatpush1.bf16.msra.mxu0 0
        %797 = vmatprep.subr.bf16.mxu0 0
        %798 = vmatpush1.bf16.msra.mxu0 0
        %799 = vmatprep.subr.bf16.mxu0 0
        %800 = vmatpush1.bf16.msra.mxu0 %v783
        %801 = vmatprep.subr.bf16.mxu0 0
        %802 = vmatpush2.bf16.msra.mxu0 0
        %803 = vmatprep.subr.bf16.mxu0 0
        %804 = vmatpush2.bf16.msra.mxu0 0
        %805 = vmatprep.subr.bf16.mxu0 0
        %806 = vmatpush2.bf16.msra.mxu0 0
        %807 = vmatprep.subr.bf16.mxu0 0
        %808 = vmatpush2.bf16.msra.mxu0 0
        %809 = vmatprep.subr.bf16.mxu0 0
        %810 = vmatpush2.bf16.msra.mxu0 0
        %811 = vmatprep.subr.bf16.mxu0 0
        %812 = vmatpush2.bf16.msra.mxu0 0
        %813 = vmatprep.subr.bf16.mxu0 0
        %814 = vmatpush2.bf16.msra.mxu0 0
        %815 = vmatprep.subr.bf16.mxu0 0
        %816 = vmatpush2.bf16.msra.mxu0 0
        %817 = vmatprep.mubr.bf16.mxu0 0
        %818 = vmatmul.mubr.bf16.gmra.mxu0 %v728
        %v819 = vpop.f32.mrf.mxu0
        %v820 = vadd.f32 0.0, %v819
        %v821 = vpop.f32.mrf.mxu0
        %v822 = vpop.f32.mrf.mxu0
        %v823 = vadd.f32 0.0, %v822
        %v824 = vpop.f32.mrf.mxu0
        %825 = vmatprep.mubr.bf16.mxu0 0
        %826 = vmatmul.mubr.bf16.gmra.mxu0 %v731
        %v827 = vpop.f32.mrf.mxu0
        %v828 = vadd.f32 0.0, %v827
        %v829 = vpop.f32.mrf.mxu0
        %v830 = vpop.f32.mrf.mxu0
        %v831 = vadd.f32 0.0, %v830
        %v832 = vpop.f32.mrf.mxu0
        %833 = vmatprep.mubr.bf16.mxu0 0
        %834 = vmatmul.mubr.bf16.gmra.mxu0 %v734
        %v835 = vpop.f32.mrf.mxu0
        %v836 = vadd.f32 0.0, %v835
        %v837 = vpop.f32.mrf.mxu0
        %v838 = vpop.f32.mrf.mxu0
        %v839 = vadd.f32 0.0, %v838
        %v840 = vpop.f32.mrf.mxu0
        %841 = vmatprep.mubr.bf16.mxu0 0
        %842 = vmatmul.mubr.bf16.gmra.mxu0 %v737
        %v843 = vpop.f32.mrf.mxu0
        %v844 = vadd.f32 0.0, %v843
        %v845 = vpop.f32.mrf.mxu0
        %v846 = vpop.f32.mrf.mxu0
        %v847 = vadd.f32 0.0, %v846
        %v848 = vpop.f32.mrf.mxu0
        %849 = vmatprep.mubr.bf16.mxu0 0
        %850 = vmatmul.mubr.bf16.gmra.mxu0 %v740
        %v851 = vpop.f32.mrf.mxu0
        %v852 = vadd.f32 0.0, %v851
        %v853 = vpop.f32.mrf.mxu0
        %v854 = vpop.f32.mrf.mxu0
        %v855 = vadd.f32 0.0, %v854
        %v856 = vpop.f32.mrf.mxu0
        %857 = vmatprep.mubr.bf16.mxu0 0
        %858 = vmatmul.mubr.bf16.gmra.mxu0 %v743
        %v859 = vpop.f32.mrf.mxu0
        %v860 = vadd.f32 0.0, %v859
        %v861 = vpop.f32.mrf.mxu0
        %v862 = vpop.f32.mrf.mxu0
        %v863 = vadd.f32 0.0, %v862
        %v864 = vpop.f32.mrf.mxu0
        %865 = vmatprep.mubr.bf16.mxu0 0
        %866 = vmatmul.mubr.bf16.gmra.mxu0 %v746
        %v867 = vpop.f32.mrf.mxu0
        %v868 = vadd.f32 0.0, %v867
        %v869 = vpop.f32.mrf.mxu0
        %v870 = vpop.f32.mrf.mxu0
        %v871 = vadd.f32 0.0, %v870
        %v872 = vpop.f32.mrf.mxu0
        %873 = vmatprep.mubr.bf16.mxu0 0
        %874 = vmatmul.mubr.bf16.gmra.mxu0 %v749
        %v875 = vpop.f32.mrf.mxu0
        %v876 = vadd.f32 0.0, %v875
        %v877 = vpop.f32.mrf.mxu0
        %v878 = vpop.f32.mrf.mxu0
        %v879 = vadd.f32 0.0, %v878
        %v880 = vpop.f32.mrf.mxu0
        %881 = vmatprep.mubr.bf16.mxu0 0
        %882 = vmatmul.mubr.bf16.gmra.mxu0 %v752
        %v883 = vpop.f32.mrf.mxu0
        %v884 = vadd.f32 0.0, %v883
        %v885 = vpop.f32.mrf.mxu0
        %v886 = vpop.f32.mrf.mxu0
        %v887 = vadd.f32 0.0, %v886
        %v888 = vpop.f32.mrf.mxu0
        %889 = vmatprep.mubr.bf16.mxu0 0
        %890 = vmatmul.mubr.bf16.gmra.mxu0 %v755
        %v891 = vpop.f32.mrf.mxu0
        %v892 = vadd.f32 0.0, %v891
        %v893 = vpop.f32.mrf.mxu0
        %v894 = vpop.f32.mrf.mxu0
        %v895 = vadd.f32 0.0, %v894
        %v896 = vpop.f32.mrf.mxu0
        %897 = vmatprep.mubr.bf16.mxu0 0
        %898 = vmatmul.mubr.bf16.gmra.mxu0 %v758
        %v899 = vpop.f32.mrf.mxu0
        %v900 = vadd.f32 0.0, %v899
        %v901 = vpop.f32.mrf.mxu0
        %v902 = vpop.f32.mrf.mxu0
        %v903 = vadd.f32 0.0, %v902
        %v904 = vpop.f32.mrf.mxu0
        %905 = vmatprep.mubr.bf16.mxu0 0
        %906 = vmatmul.mubr.bf16.gmra.mxu0 %v761
        %v907 = vpop.f32.mrf.mxu0
        %v908 = vadd.f32 0.0, %v907
        %v909 = vpop.f32.mrf.mxu0
        %v910 = vpop.f32.mrf.mxu0
        %v911 = vadd.f32 0.0, %v910
        %v912 = vpop.f32.mrf.mxu0
        %913 = vmatprep.mubr.bf16.mxu0 0
        %914 = vmatmul.mubr.bf16.gmra.mxu0 %v764
        %v915 = vpop.f32.mrf.mxu0
        %v916 = vadd.f32 0.0, %v915
        %v917 = vpop.f32.mrf.mxu0
        %v918 = vpop.f32.mrf.mxu0
        %v919 = vadd.f32 0.0, %v918
        %v920 = vpop.f32.mrf.mxu0
        %921 = vmatprep.mubr.bf16.mxu0 0
        %922 = vmatmul.mubr.bf16.gmra.mxu0 %v767
        %v923 = vpop.f32.mrf.mxu0
        %v924 = vadd.f32 0.0, %v923
        %v925 = vpop.f32.mrf.mxu0
        %v926 = vpop.f32.mrf.mxu0
        %v927 = vadd.f32 0.0, %v926
        %v928 = vpop.f32.mrf.mxu0
        %929 = vmatprep.mubr.bf16.mxu0 0
        %930 = vmatmul.mubr.bf16.gmra.mxu0 %v770
        %v931 = vpop.f32.mrf.mxu0
        %v932 = vadd.f32 0.0, %v931
        %v933 = vpop.f32.mrf.mxu0
        %v934 = vpop.f32.mrf.mxu0
        %v935 = vadd.f32 0.0, %v934
        %v936 = vpop.f32.mrf.mxu0
        %937 = vmatprep.mubr.bf16.mxu0 0
        %938 = vmatmul.mubr.bf16.gmra.mxu0 %v773
        %v939 = vpop.f32.mrf.mxu0
        %v940 = vadd.f32 0.0, %v939
        %v941 = vpop.f32.mrf.mxu0
        %v942 = vpop.f32.mrf.mxu0
        %v943 = vadd.f32 0.0, %v942
        %v944 = vpop.f32.mrf.mxu0
        %945 = vmatprep.mubr.bf16.mxu0 0
        %946 = vmatmul.mubr.bf16.gmra.mxu0 %v776
        %v947 = vpop.f32.mrf.mxu0
        %v948 = vadd.f32 0.0, %v947
        %v949 = vpop.f32.mrf.mxu0
        %v950 = vpop.f32.mrf.mxu0
        %v951 = vadd.f32 0.0, %v950
        %v952 = vpop.f32.mrf.mxu0
        %953 = vmatprep.mubr.bf16.mxu0 0
        %954 = vmatmul.mubr.bf16.gmra.mxu0 %v779
        %v955 = vpop.f32.mrf.mxu0
        %v956 = vadd.f32 0.0, %v955
        %v957 = vpop.f32.mrf.mxu0
        %v958 = vpop.f32.mrf.mxu0
        %v959 = vadd.f32 0.0, %v958
        %v960 = vpop.f32.mrf.mxu0
        %961 = vdwg.mxu0
        %v962 = vld [vmem:[%s2] sm:$0x1]
        %v964 = vlaneseq
        %v965 = vshrl.u32 %v964, 7
        %v966 = vsub.s32 0, %v965
        %v967 = vrot.slane %v962, %v966
        %v969 = vmul.f32 %v820, %v967
        %v970 = vmul.f32 %v823, %v967
        %v971 = vmul.f32 %v828, %v967
        %v972 = vmul.f32 %v831, %v967
        %v973 = vmul.f32 %v836, %v967
        %v974 = vmul.f32 %v839, %v967
        %v975 = vmul.f32 %v844, %v967
        %v976 = vmul.f32 %v847, %v967
        %v977 = vmul.f32 %v852, %v967
        %v978 = vmul.f32 %v855, %v967
        %v979 = vmul.f32 %v860, %v967
        %v980 = vmul.f32 %v863, %v967
        %v981 = vmul.f32 %v868, %v967
        %v982 = vmul.f32 %v871, %v967
        %v983 = vmul.f32 %v876, %v967
        %v984 = vmul.f32 %v879, %v967
        %v985 = vmul.f32 %v884, %v967
        %v986 = vmul.f32 %v887, %v967
        %v987 = vmul.f32 %v892, %v967
        %v988 = vmul.f32 %v895, %v967
        %v989 = vmul.f32 %v900, %v967
        %v990 = vmul.f32 %v903, %v967
        %v991 = vmul.f32 %v908, %v967
        %v992 = vmul.f32 %v911, %v967
        %v993 = vmul.f32 %v916, %v967
        %v994 = vmul.f32 %v919, %v967
        %v995 = vmul.f32 %v924, %v967
        %v996 = vmul.f32 %v927, %v967
        %v997 = vmul.f32 %v932, %v967
        %v998 = vmul.f32 %v935, %v967
        %v999 = vmul.f32 %v940, %v967
        %v1000 = vmul.f32 %v943, %v967
        %v1001 = vmul.f32 %v948, %v967
        %v1002 = vmul.f32 %v951, %v967
        %v1003 = vmul.f32 %v956, %v967
        %v1004 = vmul.f32 %v959, %v967
        %v1005 = vld [vmem:[%s3] sm:$0x1]
        %v1007 = vlaneseq
        %v1008 = vshrl.u32 %v1007, 7
        %v1009 = vsub.s32 0, %v1008
        %v1010 = vrot.slane %v1005, %v1009
        %v1012 = vadd.f32 %v969, %v1010
        %v1013 = vadd.f32 %v970, %v1010
        %v1014 = vadd.f32 %v971, %v1010
        %v1015 = vadd.f32 %v972, %v1010
        %v1016 = vadd.f32 %v973, %v1010
        %v1017 = vadd.f32 %v974, %v1010
        %v1018 = vadd.f32 %v975, %v1010
        %v1019 = vadd.f32 %v976, %v1010
        %v1020 = vadd.f32 %v977, %v1010
        %v1021 = vadd.f32 %v978, %v1010
        %v1022 = vadd.f32 %v979, %v1010
        %v1023 = vadd.f32 %v980, %v1010
        %v1024 = vadd.f32 %v981, %v1010
        %v1025 = vadd.f32 %v982, %v1010
        %v1026 = vadd.f32 %v983, %v1010
        %v1027 = vadd.f32 %v984, %v1010
        %v1028 = vadd.f32 %v985, %v1010
        %v1029 = vadd.f32 %v986, %v1010
        %v1030 = vadd.f32 %v987, %v1010
        %v1031 = vadd.f32 %v988, %v1010
        %v1032 = vadd.f32 %v989, %v1010
        %v1033 = vadd.f32 %v990, %v1010
        %v1034 = vadd.f32 %v991, %v1010
        %v1035 = vadd.f32 %v992, %v1010
        %v1036 = vadd.f32 %v993, %v1010
        %v1037 = vadd.f32 %v994, %v1010
        %v1038 = vadd.f32 %v995, %v1010
        %v1039 = vadd.f32 %v996, %v1010
        %v1040 = vadd.f32 %v997, %v1010
        %v1041 = vadd.f32 %v998, %v1010
        %v1042 = vadd.f32 %v999, %v1010
        %v1043 = vadd.f32 %v1000, %v1010
        %v1044 = vadd.f32 %v1001, %v1010
        %v1045 = vadd.f32 %v1002, %v1010
        %v1046 = vadd.f32 %v1003, %v1010
        %v1047 = vadd.f32 %v1004, %v1010
        %v1048 = vmax.f32 %v1012, 0.0
        %v1049 = vmax.f32 %v1013, 0.0
        %v1050 = vmax.f32 %v1014, 0.0
        %v1051 = vmax.f32 %v1015, 0.0
        %v1052 = vmax.f32 %v1016, 0.0
        %v1053 = vmax.f32 %v1017, 0.0
        %v1054 = vmax.f32 %v1018, 0.0
        %v1055 = vmax.f32 %v1019, 0.0
        %v1056 = vmax.f32 %v1020, 0.0
        %v1057 = vmax.f32 %v1021, 0.0
        %v1058 = vmax.f32 %v1022, 0.0
        %v1059 = vmax.f32 %v1023, 0.0
        %v1060 = vmax.f32 %v1024, 0.0
        %v1061 = vmax.f32 %v1025, 0.0
        %v1062 = vmax.f32 %v1026, 0.0
        %v1063 = vmax.f32 %v1027, 0.0
        %v1064 = vmax.f32 %v1028, 0.0
        %v1065 = vmax.f32 %v1029, 0.0
        %v1066 = vmax.f32 %v1030, 0.0
        %v1067 = vmax.f32 %v1031, 0.0
        %v1068 = vmax.f32 %v1032, 0.0
        %v1069 = vmax.f32 %v1033, 0.0
        %v1070 = vmax.f32 %v1034, 0.0
        %v1071 = vmax.f32 %v1035, 0.0
        %v1072 = vmax.f32 %v1036, 0.0
        %v1073 = vmax.f32 %v1037, 0.0
        %v1074 = vmax.f32 %v1038, 0.0
        %v1075 = vmax.f32 %v1039, 0.0
        %v1076 = vmax.f32 %v1040, 0.0
        %v1077 = vmax.f32 %v1041, 0.0
        %v1078 = vmax.f32 %v1042, 0.0
        %v1079 = vmax.f32 %v1043, 0.0
        %v1080 = vmax.f32 %v1044, 0.0
        %v1081 = vmax.f32 %v1045, 0.0
        %v1082 = vmax.f32 %v1046, 0.0
        %v1083 = vmax.f32 %v1047, 0.0
        %v1084 = vsel %vm587, 1, 0
        %v1085 = vsel %vm588, 1, 0
        %v1086 = vsel %vm589, 1, 0
        %v1087 = vsel %vm590, 1, 0
        %v1088 = vsel %vm591, 1, 0
        %v1089 = vsel %vm592, 1, 0
        %v1090 = vsel %vm593, 1, 0
        %v1091 = vsel %vm594, 1, 0
        %v1092 = vsel %vm595, 1, 0
        %v1093 = vsel %vm596, 1, 0
        %v1094 = vsel %vm597, 1, 0
        %v1095 = vsel %vm598, 1, 0
        %v1096 = vsel %vm599, 1, 0
        %v1097 = vsel %vm600, 1, 0
        %v1098 = vsel %vm601, 1, 0
        %v1099 = vsel %vm602, 1, 0
        %v1100 = vsel %vm603, 1, 0
        %v1101 = vsel %vm604, 1, 0
        %v1102 = vsel %vm605, 1, 0
        %v1103 = vsel %vm606, 1, 0
        %v1104 = vsel %vm607, 1, 0
        %v1105 = vsel %vm608, 1, 0
        %v1106 = vsel %vm609, 1, 0
        %v1107 = vsel %vm610, 1, 0
        %v1108 = vsel %vm611, 1, 0
        %v1109 = vsel %vm612, 1, 0
        %v1110 = vsel %vm613, 1, 0
        %v1111 = vsel %vm614, 1, 0
        %v1112 = vsel %vm615, 1, 0
        %v1113 = vsel %vm616, 1, 0
        %v1114 = vsel %vm617, 1, 0
        %v1115 = vsel %vm618, 1, 0
        %v1116 = vsel %vm619, 1, 0
        %v1117 = vsel %vm620, 1, 0
        %v1118 = vsel %vm621, 1, 0
        %v1119 = vsel %vm622, 1, 0
        %vm1120 = vcmp.eq.s32.totalorder %v1084, 1
        %vm1121 = vcmp.eq.s32.totalorder %v1085, 1
        %vm1122 = vcmp.eq.s32.totalorder %v1086, 1
        %vm1123 = vcmp.eq.s32.totalorder %v1087, 1
        %vm1124 = vcmp.eq.s32.totalorder %v1088, 1
        %vm1125 = vcmp.eq.s32.totalorder %v1089, 1
        %vm1126 = vcmp.eq.s32.totalorder %v1090, 1
        %vm1127 = vcmp.eq.s32.totalorder %v1091, 1
        %vm1128 = vcmp.eq.s32.totalorder %v1092, 1
        %vm1129 = vcmp.eq.s32.totalorder %v1093, 1
        %vm1130 = vcmp.eq.s32.totalorder %v1094, 1
        %vm1131 = vcmp.eq.s32.totalorder %v1095, 1
        %vm1132 = vcmp.eq.s32.totalorder %v1096, 1
        %vm1133 = vcmp.eq.s32.totalorder %v1097, 1
        %vm1134 = vcmp.eq.s32.totalorder %v1098, 1
        %vm1135 = vcmp.eq.s32.totalorder %v1099, 1
        %vm1136 = vcmp.eq.s32.totalorder %v1100, 1
        %vm1137 = vcmp.eq.s32.totalorder %v1101, 1
        %vm1138 = vcmp.eq.s32.totalorder %v1102, 1
        %vm1139 = vcmp.eq.s32.totalorder %v1103, 1
        %vm1140 = vcmp.eq.s32.totalorder %v1104, 1
        %vm1141 = vcmp.eq.s32.totalorder %v1105, 1
        %vm1142 = vcmp.eq.s32.totalorder %v1106, 1
        %vm1143 = vcmp.eq.s32.totalorder %v1107, 1
        %vm1144 = vcmp.eq.s32.totalorder %v1108, 1
        %vm1145 = vcmp.eq.s32.totalorder %v1109, 1
        %vm1146 = vcmp.eq.s32.totalorder %v1110, 1
        %vm1147 = vcmp.eq.s32.totalorder %v1111, 1
        %vm1148 = vcmp.eq.s32.totalorder %v1112, 1
        %vm1149 = vcmp.eq.s32.totalorder %v1113, 1
        %vm1150 = vcmp.eq.s32.totalorder %v1114, 1
        %vm1151 = vcmp.eq.s32.totalorder %v1115, 1
        %vm1152 = vcmp.eq.s32.totalorder %v1116, 1
        %vm1153 = vcmp.eq.s32.totalorder %v1117, 1
        %vm1154 = vcmp.eq.s32.totalorder %v1118, 1
        %vm1155 = vcmp.eq.s32.totalorder %v1119, 1
        %v1156 = vsel %vm1120, %v1048, 0.0
        %v1157 = vsel %vm1121, %v1049, 0.0
        %v1158 = vsel %vm1122, %v1050, 0.0
        %v1159 = vsel %vm1123, %v1051, 0.0
        %v1160 = vsel %vm1124, %v1052, 0.0
        %v1161 = vsel %vm1125, %v1053, 0.0
        %v1162 = vsel %vm1126, %v1054, 0.0
        %v1163 = vsel %vm1127, %v1055, 0.0
        %v1164 = vsel %vm1128, %v1056, 0.0
        %v1165 = vsel %vm1129, %v1057, 0.0
        %v1166 = vsel %vm1130, %v1058, 0.0
        %v1167 = vsel %vm1131, %v1059, 0.0
        %v1168 = vsel %vm1132, %v1060, 0.0
        %v1169 = vsel %vm1133, %v1061, 0.0
        %v1170 = vsel %vm1134, %v1062, 0.0
        %v1171 = vsel %vm1135, %v1063, 0.0
        %v1172 = vsel %vm1136, %v1064, 0.0
        %v1173 = vsel %vm1137, %v1065, 0.0
        %v1174 = vsel %vm1138, %v1066, 0.0
        %v1175 = vsel %vm1139, %v1067, 0.0
        %v1176 = vsel %vm1140, %v1068, 0.0
        %v1177 = vsel %vm1141, %v1069, 0.0
        %v1178 = vsel %vm1142, %v1070, 0.0
        %v1179 = vsel %vm1143, %v1071, 0.0
        %v1180 = vsel %vm1144, %v1072, 0.0
        %v1181 = vsel %vm1145, %v1073, 0.0
        %v1182 = vsel %vm1146, %v1074, 0.0
        %v1183 = vsel %vm1147, %v1075, 0.0
        %v1184 = vsel %vm1148, %v1076, 0.0
        %v1185 = vsel %vm1149, %v1077, 0.0
        %v1186 = vsel %vm1150, %v1078, 0.0
        %v1187 = vsel %vm1151, %v1079, 0.0
        %v1188 = vsel %vm1152, %v1080, 0.0
        %v1189 = vsel %vm1153, %v1081, 0.0
        %v1190 = vsel %vm1154, %v1082, 0.0
        %v1191 = vsel %vm1155, %v1083, 0.0
        %v1192 = vpack.c.bf16 %v1160, %v1159
        %v1193 = vpack.c.bf16 %v1161, %v1161
        %v1194 = vpack.c.bf16 %v1163, %v1162
        %v1195 = vpack.c.bf16 %v1164, %v1164
        %v1196 = vpack.c.bf16 %v1166, %v1165
        %v1197 = vpack.c.bf16 %v1167, %v1167
        %v1198 = vpack.c.bf16 %v1169, %v1168
        %v1199 = vpack.c.bf16 %v1170, %v1170
        %v1200 = vpack.c.bf16 %v1172, %v1171
        %v1201 = vpack.c.bf16 %v1173, %v1173
        %v1202 = vpack.c.bf16 %v1175, %v1174
        %v1203 = vpack.c.bf16 %v1176, %v1176
        %v1204 = vpack.c.bf16 %v1178, %v1177
        %v1205 = vpack.c.bf16 %v1179, %v1179
        %v1206 = vpack.c.bf16 %v1181, %v1180
        %v1207 = vpack.c.bf16 %v1182, %v1182
        %v1208 = vpack.c.bf16 %v1184, %v1183
        %v1209 = vpack.c.bf16 %v1185, %v1185
        %v1210 = vpack.c.bf16 %v1187, %v1186
        %v1211 = vpack.c.bf16 %v1188, %v1188
        %vm1212 = vsmask.f32 7424
        %v1214 = vshrl.u32 %v1192, 16
        %v1216 = vshll.u32 %v1192, 16
        %v1218 = vrot.slane %v1216, 1
        %v1219 = vor.u32 %v1214, %v1218
        %v1221 = vshll.u32 %v1193, 16
        %v1223 = vrot.slane %v1221, 1
        %v1224 = vsel %vm1212, %v1219, %v1223
        %v1226 = vshrl.u32 %v1194, 16
        %v1228 = vshll.u32 %v1194, 16
        %v1230 = vrot.slane %v1228, 1
        %v1231 = vor.u32 %v1226, %v1230
        %v1233 = vshll.u32 %v1195, 16
        %v1235 = vrot.slane %v1233, 1
        %v1236 = vsel %vm1212, %v1231, %v1235
        %v1238 = vshrl.u32 %v1196, 16
        %v1240 = vshll.u32 %v1196, 16
        %v1242 = vrot.slane %v1240, 1
        %v1243 = vor.u32 %v1238, %v1242
        %v1245 = vshll.u32 %v1197, 16
        %v1247 = vrot.slane %v1245, 1
        %v1248 = vsel %vm1212, %v1243, %v1247
        %v1250 = vshrl.u32 %v1198, 16
        %v1252 = vshll.u32 %v1198, 16
        %v1254 = vrot.slane %v1252, 1
        %v1255 = vor.u32 %v1250, %v1254
        %v1257 = vshll.u32 %v1199, 16
        %v1259 = vrot.slane %v1257, 1
        %v1260 = vsel %vm1212, %v1255, %v1259
        %v1262 = vshrl.u32 %v1200, 16
        %v1264 = vshll.u32 %v1200, 16
        %v1266 = vrot.slane %v1264, 1
        %v1267 = vor.u32 %v1262, %v1266
        %v1269 = vshll.u32 %v1201, 16
        %v1271 = vrot.slane %v1269, 1
        %v1272 = vsel %vm1212, %v1267, %v1271
        %v1274 = vshrl.u32 %v1202, 16
        %v1276 = vshll.u32 %v1202, 16
        %v1278 = vrot.slane %v1276, 1
        %v1279 = vor.u32 %v1274, %v1278
        %v1281 = vshll.u32 %v1203, 16
        %v1283 = vrot.slane %v1281, 1
        %v1284 = vsel %vm1212, %v1279, %v1283
        %v1286 = vshrl.u32 %v1204, 16
        %v1288 = vshll.u32 %v1204, 16
        %v1290 = vrot.slane %v1288, 1
        %v1291 = vor.u32 %v1286, %v1290
        %v1293 = vshll.u32 %v1205, 16
        %v1295 = vrot.slane %v1293, 1
        %v1296 = vsel %vm1212, %v1291, %v1295
        %v1298 = vshrl.u32 %v1206, 16
        %v1300 = vshll.u32 %v1206, 16
        %v1302 = vrot.slane %v1300, 1
        %v1303 = vor.u32 %v1298, %v1302
        %v1305 = vshll.u32 %v1207, 16
        %v1307 = vrot.slane %v1305, 1
        %v1308 = vsel %vm1212, %v1303, %v1307
        %v1309 = vld [vmem:[%s4] sm:$0x3]
        %vm1326 = vcmask 1046528
        %v1327 = vrot.slane %v1192, 1
        %v1328 = vrot.slane %v1193, 1
        %v1329 = vsel %vm1326, %v1327, %v1328
        %v1330 = vrot.slane %v1194, 1
        %v1331 = vrot.slane %v1195, 1
        %v1332 = vsel %vm1326, %v1330, %v1331
        %v1333 = vrot.slane %v1196, 1
        %v1334 = vrot.slane %v1197, 1
        %v1335 = vsel %vm1326, %v1333, %v1334
        %v1336 = vrot.slane %v1198, 1
        %v1337 = vrot.slane %v1199, 1
        %v1338 = vsel %vm1326, %v1336, %v1337
        %v1339 = vrot.slane %v1200, 1
        %v1340 = vrot.slane %v1201, 1
        %v1341 = vsel %vm1326, %v1339, %v1340
        %v1342 = vrot.slane %v1202, 1
        %v1343 = vrot.slane %v1203, 1
        %v1344 = vsel %vm1326, %v1342, %v1343
        %v1345 = vrot.slane %v1204, 1
        %v1346 = vrot.slane %v1205, 1
        %v1347 = vsel %vm1326, %v1345, %v1346
        %v1348 = vrot.slane %v1206, 1
        %v1349 = vrot.slane %v1207, 1
        %v1350 = vsel %vm1326, %v1348, %v1349
        %s1351 = scalar_lea.vmem %s4, 2
        %v1352 = vld [vmem:[%s1351] sm:$0x3]
        %1353 = vrot.lane.b32.xlu0 %v1329, 124
        %v1354 = vpop.permute.xlu0 %1353
        %1355 = vrot.lane.b32.xlu0 %v1332, 124
        %v1356 = vpop.permute.xlu0 %1355
        %1357 = vrot.lane.b32.xlu0 %v1335, 124
        %v1358 = vpop.permute.xlu0 %1357
        %1359 = vrot.lane.b32.xlu0 %v1338, 124
        %v1360 = vpop.permute.xlu0 %1359
        %1361 = vrot.lane.b32.xlu0 %v1341, 124
        %v1362 = vpop.permute.xlu0 %1361
        %1363 = vrot.lane.b32.xlu0 %v1344, 124
        %v1364 = vpop.permute.xlu0 %1363
        %1365 = vrot.lane.b32.xlu0 %v1347, 124
        %v1366 = vpop.permute.xlu0 %1365
        %1367 = vrot.lane.b32.xlu0 %v1350, 124
        %v1368 = vpop.permute.xlu0 %1367
        %v1370 = vsel %vm726, %v1354, 0
        %v1373 = vsel %vm726, %v1356, 0
        %v1376 = vsel %vm726, %v1358, 0
        %v1379 = vsel %vm726, %v1360, 0
        %v1382 = vsel %vm726, %v1362, 0
        %v1385 = vsel %vm726, %v1364, 0
        %v1388 = vsel %vm726, %v1366, 0
        %v1391 = vsel %vm726, %v1368, 0
        %v1394 = vsel %vm781, %v1352, 0
        %1396 = vmatprep.subr.bf16.mxu0 0
        %1397 = vmatpush1.bf16.msra.mxu0 0
        %1398 = vmatprep.subr.bf16.mxu0 0
        %1399 = vmatpush1.bf16.msra.mxu0 0
        %1400 = vmatprep.subr.bf16.mxu0 0
        %1401 = vmatpush1.bf16.msra.mxu0 0
        %1402 = vmatprep.subr.bf16.mxu0 0
        %1403 = vmatpush1.bf16.msra.mxu0 0
        %1404 = vmatprep.subr.bf16.mxu0 0
        %1405 = vmatpush1.bf16.msra.mxu0 0
        %1406 = vmatprep.subr.bf16.mxu0 0
        %1407 = vmatpush1.bf16.msra.mxu0 0
        %1408 = vmatprep.subr.bf16.mxu0 0
        %1409 = vmatpush1.bf16.msra.mxu0 0
        %1410 = vmatprep.subr.bf16.mxu0 0
        %1411 = vmatpush1.bf16.msra.mxu0 %v1394
        %1412 = vmatprep.subr.bf16.mxu0 0
        %1413 = vmatpush2.bf16.msra.mxu0 0
        %1414 = vmatprep.subr.bf16.mxu0 0
        %1415 = vmatpush2.bf16.msra.mxu0 0
        %1416 = vmatprep.subr.bf16.mxu0 0
        %1417 = vmatpush2.bf16.msra.mxu0 0
        %1418 = vmatprep.subr.bf16.mxu0 0
        %1419 = vmatpush2.bf16.msra.mxu0 0
        %1420 = vmatprep.subr.bf16.mxu0 0
        %1421 = vmatpush2.bf16.msra.mxu0 0
        %1422 = vmatprep.subr.bf16.mxu0 0
        %1423 = vmatpush2.bf16.msra.mxu0 0
        %1424 = vmatprep.subr.bf16.mxu0 0
        %1425 = vmatpush2.bf16.msra.mxu0 0
        %1426 = vmatprep.subr.bf16.mxu0 0
        %1427 = vmatpush2.bf16.msra.mxu0 0
        %1428 = vmatprep.mubr.bf16.mxu0 0
        %1429 = vmatmul.mubr.bf16.gmra.mxu0 %v1370
        %v1430 = vpop.f32.mrf.mxu0
        %v1431 = vadd.f32 0.0, %v1430
        %v1432 = vpop.f32.mrf.mxu0
        %v1433 = vpop.f32.mrf.mxu0
        %v1434 = vadd.f32 0.0, %v1433
        %v1435 = vpop.f32.mrf.mxu0
        %1436 = vmatprep.mubr.bf16.mxu0 0
        %1437 = vmatmul.mubr.bf16.gmra.mxu0 %v1373
        %v1438 = vpop.f32.mrf.mxu0
        %v1439 = vadd.f32 0.0, %v1438
        %v1440 = vpop.f32.mrf.mxu0
        %v1441 = vpop.f32.mrf.mxu0
        %v1442 = vadd.f32 0.0, %v1441
        %v1443 = vpop.f32.mrf.mxu0
        %1444 = vmatprep.mubr.bf16.mxu0 0
        %1445 = vmatmul.mubr.bf16.gmra.mxu0 %v1376
        %v1446 = vpop.f32.mrf.mxu0
        %v1447 = vadd.f32 0.0, %v1446
        %v1448 = vpop.f32.mrf.mxu0
        %v1449 = vpop.f32.mrf.mxu0
        %v1450 = vadd.f32 0.0, %v1449
        %v1451 = vpop.f32.mrf.mxu0
        %1452 = vmatprep.mubr.bf16.mxu0 0
        %1453 = vmatmul.mubr.bf16.gmra.mxu0 %v1379
        %v1454 = vpop.f32.mrf.mxu0
        %v1455 = vadd.f32 0.0, %v1454
        %v1456 = vpop.f32.mrf.mxu0
        %v1457 = vpop.f32.mrf.mxu0
        %v1458 = vadd.f32 0.0, %v1457
        %v1459 = vpop.f32.mrf.mxu0
        %1460 = vmatprep.mubr.bf16.mxu0 0
        %1461 = vmatmul.mubr.bf16.gmra.mxu0 %v1382
        %v1462 = vpop.f32.mrf.mxu0
        %v1463 = vadd.f32 0.0, %v1462
        %v1464 = vpop.f32.mrf.mxu0
        %v1465 = vpop.f32.mrf.mxu0
        %v1466 = vadd.f32 0.0, %v1465
        %v1467 = vpop.f32.mrf.mxu0
        %1468 = vmatprep.mubr.bf16.mxu0 0
        %1469 = vmatmul.mubr.bf16.gmra.mxu0 %v1385
        %v1470 = vpop.f32.mrf.mxu0
        %v1471 = vadd.f32 0.0, %v1470
        %v1472 = vpop.f32.mrf.mxu0
        %v1473 = vpop.f32.mrf.mxu0
        %v1474 = vadd.f32 0.0, %v1473
        %v1475 = vpop.f32.mrf.mxu0
        %1476 = vmatprep.mubr.bf16.mxu0 0
        %1477 = vmatmul.mubr.bf16.gmra.mxu0 %v1388
        %v1478 = vpop.f32.mrf.mxu0
        %v1479 = vadd.f32 0.0, %v1478
        %v1480 = vpop.f32.mrf.mxu0
        %v1481 = vpop.f32.mrf.mxu0
        %v1482 = vadd.f32 0.0, %v1481
        %v1483 = vpop.f32.mrf.mxu0
        %1484 = vmatprep.mubr.bf16.mxu0 0
        %1485 = vmatmul.mubr.bf16.gmra.mxu0 %v1391
        %v1486 = vpop.f32.mrf.mxu0
        %v1487 = vadd.f32 0.0, %v1486
        %v1488 = vpop.f32.mrf.mxu0
        %v1489 = vpop.f32.mrf.mxu0
        %v1490 = vadd.f32 0.0, %v1489
        %v1491 = vpop.f32.mrf.mxu0
        %1492 = vdwg.mxu0
        %1493 = vrot.lane.b32.xlu0 %v1224, 124
        %v1494 = vpop.permute.xlu0 %1493
        %1495 = vrot.lane.b32.xlu0 %v1236, 124
        %v1496 = vpop.permute.xlu0 %1495
        %1497 = vrot.lane.b32.xlu0 %v1248, 124
        %v1498 = vpop.permute.xlu0 %1497
        %1499 = vrot.lane.b32.xlu0 %v1260, 124
        %v1500 = vpop.permute.xlu0 %1499
        %1501 = vrot.lane.b32.xlu0 %v1272, 124
        %v1502 = vpop.permute.xlu0 %1501
        %1503 = vrot.lane.b32.xlu0 %v1284, 124
        %v1504 = vpop.permute.xlu0 %1503
        %1505 = vrot.lane.b32.xlu0 %v1296, 124
        %v1506 = vpop.permute.xlu0 %1505
        %1507 = vrot.lane.b32.xlu0 %v1308, 124
        %v1508 = vpop.permute.xlu0 %1507
        %v1510 = vsel %vm726, %v1494, 0
        %v1513 = vsel %vm726, %v1496, 0
        %v1516 = vsel %vm726, %v1498, 0
        %v1519 = vsel %vm726, %v1500, 0
        %v1522 = vsel %vm726, %v1502, 0
        %v1525 = vsel %vm726, %v1504, 0
        %v1528 = vsel %vm726, %v1506, 0
        %v1531 = vsel %vm726, %v1508, 0
        %v1534 = vsel %vm781, %v1309, 0
        %1536 = vmatprep.subr.bf16.mxu0 0
        %1537 = vmatpush1.bf16.msra.mxu0 0
        %1538 = vmatprep.subr.bf16.mxu0 0
        %1539 = vmatpush1.bf16.msra.mxu0 0
        %1540 = vmatprep.subr.bf16.mxu0 0
        %1541 = vmatpush1.bf16.msra.mxu0 0
        %1542 = vmatprep.subr.bf16.mxu0 0
        %1543 = vmatpush1.bf16.msra.mxu0 0
        %1544 = vmatprep.subr.bf16.mxu0 0
        %1545 = vmatpush1.bf16.msra.mxu0 0
        %1546 = vmatprep.subr.bf16.mxu0 0
        %1547 = vmatpush1.bf16.msra.mxu0 0
        %1548 = vmatprep.subr.bf16.mxu0 0
        %1549 = vmatpush1.bf16.msra.mxu0 0
        %1550 = vmatprep.subr.bf16.mxu0 0
        %1551 = vmatpush1.bf16.msra.mxu0 %v1534
        %1552 = vmatprep.subr.bf16.mxu0 0
        %1553 = vmatpush2.bf16.msra.mxu0 0
        %1554 = vmatprep.subr.bf16.mxu0 0
        %1555 = vmatpush2.bf16.msra.mxu0 0
        %1556 = vmatprep.subr.bf16.mxu0 0
        %1557 = vmatpush2.bf16.msra.mxu0 0
        %1558 = vmatprep.subr.bf16.mxu0 0
        %1559 = vmatpush2.bf16.msra.mxu0 0
        %1560 = vmatprep.subr.bf16.mxu0 0
        %1561 = vmatpush2.bf16.msra.mxu0 0
        %1562 = vmatprep.subr.bf16.mxu0 0
        %1563 = vmatpush2.bf16.msra.mxu0 0
        %1564 = vmatprep.subr.bf16.mxu0 0
        %1565 = vmatpush2.bf16.msra.mxu0 0
        %1566 = vmatprep.subr.bf16.mxu0 0
        %1567 = vmatpush2.bf16.msra.mxu0 0
        %1568 = vmatprep.mubr.bf16.mxu0 0
        %1569 = vmatmul.mubr.bf16.gmra.mxu0 %v1510
        %v1570 = vpop.f32.mrf.mxu0
        %v1571 = vadd.f32 %v1431, %v1570
        %v1572 = vpop.f32.mrf.mxu0
        %v1573 = vpop.f32.mrf.mxu0
        %v1574 = vadd.f32 %v1434, %v1573
        %v1575 = vpop.f32.mrf.mxu0
        %1576 = vmatprep.mubr.bf16.mxu0 0
        %1577 = vmatmul.mubr.bf16.gmra.mxu0 %v1513
        %v1578 = vpop.f32.mrf.mxu0
        %v1579 = vadd.f32 %v1439, %v1578
        %v1580 = vpop.f32.mrf.mxu0
        %v1581 = vpop.f32.mrf.mxu0
        %v1582 = vadd.f32 %v1442, %v1581
        %v1583 = vpop.f32.mrf.mxu0
        %1584 = vmatprep.mubr.bf16.mxu0 0
        %1585 = vmatmul.mubr.bf16.gmra.mxu0 %v1516
        %v1586 = vpop.f32.mrf.mxu0
        %v1587 = vadd.f32 %v1447, %v1586
        %v1588 = vpop.f32.mrf.mxu0
        %v1589 = vpop.f32.mrf.mxu0
        %v1590 = vadd.f32 %v1450, %v1589
        %v1591 = vpop.f32.mrf.mxu0
        %1592 = vmatprep.mubr.bf16.mxu0 0
        %1593 = vmatmul.mubr.bf16.gmra.mxu0 %v1519
        %v1594 = vpop.f32.mrf.mxu0
        %v1595 = vadd.f32 %v1455, %v1594
        %v1596 = vpop.f32.mrf.mxu0
        %v1597 = vpop.f32.mrf.mxu0
        %v1598 = vadd.f32 %v1458, %v1597
        %v1599 = vpop.f32.mrf.mxu0
        %1600 = vmatprep.mubr.bf16.mxu0 0
        %1601 = vmatmul.mubr.bf16.gmra.mxu0 %v1522
        %v1602 = vpop.f32.mrf.mxu0
        %v1603 = vadd.f32 %v1463, %v1602
        %v1604 = vpop.f32.mrf.mxu0
        %v1605 = vpop.f32.mrf.mxu0
        %v1606 = vadd.f32 %v1466, %v1605
        %v1607 = vpop.f32.mrf.mxu0
        %1608 = vmatprep.mubr.bf16.mxu0 0
        %1609 = vmatmul.mubr.bf16.gmra.mxu0 %v1525
        %v1610 = vpop.f32.mrf.mxu0
        %v1611 = vadd.f32 %v1471, %v1610
        %v1612 = vpop.f32.mrf.mxu0
        %v1613 = vpop.f32.mrf.mxu0
        %v1614 = vadd.f32 %v1474, %v1613
        %v1615 = vpop.f32.mrf.mxu0
        %1616 = vmatprep.mubr.bf16.mxu0 0
        %1617 = vmatmul.mubr.bf16.gmra.mxu0 %v1528
        %v1618 = vpop.f32.mrf.mxu0
        %v1619 = vadd.f32 %v1479, %v1618
        %v1620 = vpop.f32.mrf.mxu0
        %v1621 = vpop.f32.mrf.mxu0
        %v1622 = vadd.f32 %v1482, %v1621
        %v1623 = vpop.f32.mrf.mxu0
        %1624 = vmatprep.mubr.bf16.mxu0 0
        %1625 = vmatmul.mubr.bf16.gmra.mxu0 %v1531
        %v1626 = vpop.f32.mrf.mxu0
        %v1627 = vadd.f32 %v1487, %v1626
        %v1628 = vpop.f32.mrf.mxu0
        %v1629 = vpop.f32.mrf.mxu0
        %v1630 = vadd.f32 %v1490, %v1629
        %v1631 = vpop.f32.mrf.mxu0
        %1632 = vdwg.mxu0
        %vm1633 = vsmask.f32 6400
        %v1634 = vrot.slane %v1214, 1
        %v1635 = vrot.slane %v1216, 2
        %v1636 = vor.u32 %v1634, %v1635
        %v1637 = vshrl.u32 %v1193, 16
        %v1639 = vrot.slane %v1637, 1
        %v1640 = vrot.slane %v1221, 2
        %v1641 = vor.u32 %v1639, %v1640
        %v1642 = vsel %vm1633, %v1636, %v1641
        %v1643 = vrot.slane %v1226, 1
        %v1644 = vrot.slane %v1228, 2
        %v1645 = vor.u32 %v1643, %v1644
        %v1646 = vshrl.u32 %v1195, 16
        %v1648 = vrot.slane %v1646, 1
        %v1649 = vrot.slane %v1233, 2
        %v1650 = vor.u32 %v1648, %v1649
        %v1651 = vsel %vm1633, %v1645, %v1650
        %v1652 = vrot.slane %v1238, 1
        %v1653 = vrot.slane %v1240, 2
        %v1654 = vor.u32 %v1652, %v1653
        %v1655 = vshrl.u32 %v1197, 16
        %v1657 = vrot.slane %v1655, 1
        %v1658 = vrot.slane %v1245, 2
        %v1659 = vor.u32 %v1657, %v1658
        %v1660 = vsel %vm1633, %v1654, %v1659
        %v1661 = vrot.slane %v1250, 1
        %v1662 = vrot.slane %v1252, 2
        %v1663 = vor.u32 %v1661, %v1662
        %v1664 = vshrl.u32 %v1199, 16
        %v1666 = vrot.slane %v1664, 1
        %v1667 = vrot.slane %v1257, 2
        %v1668 = vor.u32 %v1666, %v1667
        %v1669 = vsel %vm1633, %v1663, %v1668
        %v1670 = vrot.slane %v1262, 1
        %v1671 = vrot.slane %v1264, 2
        %v1672 = vor.u32 %v1670, %v1671
        %v1673 = vshrl.u32 %v1201, 16
        %v1675 = vrot.slane %v1673, 1
        %v1676 = vrot.slane %v1269, 2
        %v1677 = vor.u32 %v1675, %v1676
        %v1678 = vsel %vm1633, %v1672, %v1677
        %v1679 = vrot.slane %v1274, 1
        %v1680 = vrot.slane %v1276, 2
        %v1681 = vor.u32 %v1679, %v1680
        %v1682 = vshrl.u32 %v1203, 16
        %v1684 = vrot.slane %v1682, 1
        %v1685 = vrot.slane %v1281, 2
        %v1686 = vor.u32 %v1684, %v1685
        %v1687 = vsel %vm1633, %v1681, %v1686
        %v1688 = vrot.slane %v1286, 1
        %v1689 = vrot.slane %v1288, 2
        %v1690 = vor.u32 %v1688, %v1689
        %v1691 = vshrl.u32 %v1205, 16
        %v1693 = vrot.slane %v1691, 1
        %v1694 = vrot.slane %v1293, 2
        %v1695 = vor.u32 %v1693, %v1694
        %v1696 = vsel %vm1633, %v1690, %v1695
        %v1697 = vrot.slane %v1298, 1
        %v1698 = vrot.slane %v1300, 2
        %v1699 = vor.u32 %v1697, %v1698
        %v1700 = vshrl.u32 %v1207, 16
        %v1702 = vrot.slane %v1700, 1
        %v1703 = vrot.slane %v1305, 2
        %v1704 = vor.u32 %v1702, %v1703
        %v1705 = vsel %vm1633, %v1699, %v1704
        %s1706 = scalar_lea.vmem %s4, 4
        %v1707 = vld [vmem:[%s1706] sm:$0x3]
        %1708 = vrot.lane.b32.xlu0 %v1642, 124
        %v1709 = vpop.permute.xlu0 %1708
        %1710 = vrot.lane.b32.xlu0 %v1651, 124
        %v1711 = vpop.permute.xlu0 %1710
        %1712 = vrot.lane.b32.xlu0 %v1660, 124
        %v1713 = vpop.permute.xlu0 %1712
        %1714 = vrot.lane.b32.xlu0 %v1669, 124
        %v1715 = vpop.permute.xlu0 %1714
        %1716 = vrot.lane.b32.xlu0 %v1678, 124
        %v1717 = vpop.permute.xlu0 %1716
        %1718 = vrot.lane.b32.xlu0 %v1687, 124
        %v1719 = vpop.permute.xlu0 %1718
        %1720 = vrot.lane.b32.xlu0 %v1696, 124
        %v1721 = vpop.permute.xlu0 %1720
        %1722 = vrot.lane.b32.xlu0 %v1705, 124
        %v1723 = vpop.permute.xlu0 %1722
        %v1725 = vsel %vm726, %v1709, 0
        %v1728 = vsel %vm726, %v1711, 0
        %v1731 = vsel %vm726, %v1713, 0
        %v1734 = vsel %vm726, %v1715, 0
        %v1737 = vsel %vm726, %v1717, 0
        %v1740 = vsel %vm726, %v1719, 0
        %v1743 = vsel %vm726, %v1721, 0
        %v1746 = vsel %vm726, %v1723, 0
        %v1749 = vsel %vm781, %v1707, 0
        %1751 = vmatprep.subr.bf16.mxu0 0
        %1752 = vmatpush1.bf16.msra.mxu0 0
        %1753 = vmatprep.subr.bf16.mxu0 0
        %1754 = vmatpush1.bf16.msra.mxu0 0
        %1755 = vmatprep.subr.bf16.mxu0 0
        %1756 = vmatpush1.bf16.msra.mxu0 0
        %1757 = vmatprep.subr.bf16.mxu0 0
        %1758 = vmatpush1.bf16.msra.mxu0 0
        %1759 = vmatprep.subr.bf16.mxu0 0
        %1760 = vmatpush1.bf16.msra.mxu0 0
        %1761 = vmatprep.subr.bf16.mxu0 0
        %1762 = vmatpush1.bf16.msra.mxu0 0
        %1763 = vmatprep.subr.bf16.mxu0 0
        %1764 = vmatpush1.bf16.msra.mxu0 0
        %1765 = vmatprep.subr.bf16.mxu0 0
        %1766 = vmatpush1.bf16.msra.mxu0 %v1749
        %1767 = vmatprep.subr.bf16.mxu0 0
        %1768 = vmatpush2.bf16.msra.mxu0 0
        %1769 = vmatprep.subr.bf16.mxu0 0
        %1770 = vmatpush2.bf16.msra.mxu0 0
        %1771 = vmatprep.subr.bf16.mxu0 0
        %1772 = vmatpush2.bf16.msra.mxu0 0
        %1773 = vmatprep.subr.bf16.mxu0 0
        %1774 = vmatpush2.bf16.msra.mxu0 0
        %1775 = vmatprep.subr.bf16.mxu0 0
        %1776 = vmatpush2.bf16.msra.mxu0 0
        %1777 = vmatprep.subr.bf16.mxu0 0
        %1778 = vmatpush2.bf16.msra.mxu0 0
        %1779 = vmatprep.subr.bf16.mxu0 0
        %1780 = vmatpush2.bf16.msra.mxu0 0
        %1781 = vmatprep.subr.bf16.mxu0 0
        %1782 = vmatpush2.bf16.msra.mxu0 0
        %1783 = vmatprep.mubr.bf16.mxu0 0
        %1784 = vmatmul.mubr.bf16.gmra.mxu0 %v1725
        %v1785 = vpop.f32.mrf.mxu0
        %v1786 = vadd.f32 0.0, %v1785
        %v1787 = vpop.f32.mrf.mxu0
        %v1788 = vpop.f32.mrf.mxu0
        %v1789 = vadd.f32 0.0, %v1788
        %v1790 = vpop.f32.mrf.mxu0
        %1791 = vmatprep.mubr.bf16.mxu0 0
        %1792 = vmatmul.mubr.bf16.gmra.mxu0 %v1728
        %v1793 = vpop.f32.mrf.mxu0
        %v1794 = vadd.f32 0.0, %v1793
        %v1795 = vpop.f32.mrf.mxu0
        %v1796 = vpop.f32.mrf.mxu0
        %v1797 = vadd.f32 0.0, %v1796
        %v1798 = vpop.f32.mrf.mxu0
        %1799 = vmatprep.mubr.bf16.mxu0 0
        %1800 = vmatmul.mubr.bf16.gmra.mxu0 %v1731
        %v1801 = vpop.f32.mrf.mxu0
        %v1802 = vadd.f32 0.0, %v1801
        %v1803 = vpop.f32.mrf.mxu0
        %v1804 = vpop.f32.mrf.mxu0
        %v1805 = vadd.f32 0.0, %v1804
        %v1806 = vpop.f32.mrf.mxu0
        %1807 = vmatprep.mubr.bf16.mxu0 0
        %1808 = vmatmul.mubr.bf16.gmra.mxu0 %v1734
        %v1809 = vpop.f32.mrf.mxu0
        %v1810 = vadd.f32 0.0, %v1809
        %v1811 = vpop.f32.mrf.mxu0
        %v1812 = vpop.f32.mrf.mxu0
        %v1813 = vadd.f32 0.0, %v1812
        %v1814 = vpop.f32.mrf.mxu0
        %1815 = vmatprep.mubr.bf16.mxu0 0
        %1816 = vmatmul.mubr.bf16.gmra.mxu0 %v1737
        %v1817 = vpop.f32.mrf.mxu0
        %v1818 = vadd.f32 0.0, %v1817
        %v1819 = vpop.f32.mrf.mxu0
        %v1820 = vpop.f32.mrf.mxu0
        %v1821 = vadd.f32 0.0, %v1820
        %v1822 = vpop.f32.mrf.mxu0
        %1823 = vmatprep.mubr.bf16.mxu0 0
        %1824 = vmatmul.mubr.bf16.gmra.mxu0 %v1740
        %v1825 = vpop.f32.mrf.mxu0
        %v1826 = vadd.f32 0.0, %v1825
        %v1827 = vpop.f32.mrf.mxu0
        %v1828 = vpop.f32.mrf.mxu0
        %v1829 = vadd.f32 0.0, %v1828
        %v1830 = vpop.f32.mrf.mxu0
        %1831 = vmatprep.mubr.bf16.mxu0 0
        %1832 = vmatmul.mubr.bf16.gmra.mxu0 %v1743
        %v1833 = vpop.f32.mrf.mxu0
        %v1834 = vadd.f32 0.0, %v1833
        %v1835 = vpop.f32.mrf.mxu0
        %v1836 = vpop.f32.mrf.mxu0
        %v1837 = vadd.f32 0.0, %v1836
        %v1838 = vpop.f32.mrf.mxu0
        %1839 = vmatprep.mubr.bf16.mxu0 0
        %1840 = vmatmul.mubr.bf16.gmra.mxu0 %v1746
        %v1841 = vpop.f32.mrf.mxu0
        %v1842 = vadd.f32 0.0, %v1841
        %v1843 = vpop.f32.mrf.mxu0
        %v1844 = vpop.f32.mrf.mxu0
        %v1845 = vadd.f32 0.0, %v1844
        %v1846 = vpop.f32.mrf.mxu0
        %1847 = vdwg.mxu0
        %v1848 = vadd.f32 %v1571, %v1786
        %v1849 = vadd.f32 %v1574, %v1789
        %v1850 = vadd.f32 %v1579, %v1794
        %v1851 = vadd.f32 %v1582, %v1797
        %v1852 = vadd.f32 %v1587, %v1802
        %v1853 = vadd.f32 %v1590, %v1805
        %v1854 = vadd.f32 %v1595, %v1810
        %v1855 = vadd.f32 %v1598, %v1813
        %v1856 = vadd.f32 %v1603, %v1818
        %v1857 = vadd.f32 %v1606, %v1821
        %v1858 = vadd.f32 %v1611, %v1826
        %v1859 = vadd.f32 %v1614, %v1829
        %v1860 = vadd.f32 %v1619, %v1834
        %v1861 = vadd.f32 %v1622, %v1837
        %v1862 = vadd.f32 %v1627, %v1842
        %v1863 = vadd.f32 %v1630, %v1845
        %v1865 = vshrl.u32 %v1208, 16
        %v1867 = vshll.u32 %v1208, 16
        %v1869 = vrot.slane %v1867, 1
        %v1870 = vor.u32 %v1865, %v1869
        %v1872 = vshll.u32 %v1209, 16
        %v1874 = vrot.slane %v1872, 1
        %v1875 = vsel %vm1212, %v1870, %v1874
        %s1876 = scalar_lea.vmem %s4, 6
        %v1877 = vld [vmem:[%s1876] sm:$0x3]
        %1878 = vrot.lane.b32.xlu0 %v1875, 124
        %v1879 = vpop.permute.xlu0 %1878
        %v1881 = vsel %vm726, %v1879, 0
        %v1884 = vsel %vm781, %v1877, 0
        %1886 = vmatprep.subr.bf16.mxu0 0
        %1887 = vmatpush1.bf16.msra.mxu0 0
        %1888 = vmatprep.subr.bf16.mxu0 0
        %1889 = vmatpush1.bf16.msra.mxu0 0
        %1890 = vmatprep.subr.bf16.mxu0 0
        %1891 = vmatpush1.bf16.msra.mxu0 0
        %1892 = vmatprep.subr.bf16.mxu0 0
        %1893 = vmatpush1.bf16.msra.mxu0 0
        %1894 = vmatprep.subr.bf16.mxu0 0
        %1895 = vmatpush1.bf16.msra.mxu0 0
        %1896 = vmatprep.subr.bf16.mxu0 0
        %1897 = vmatpush1.bf16.msra.mxu0 0
        %1898 = vmatprep.subr.bf16.mxu0 0
        %1899 = vmatpush1.bf16.msra.mxu0 0
        %1900 = vmatprep.subr.bf16.mxu0 0
        %1901 = vmatpush1.bf16.msra.mxu0 %v1884
        %1902 = vmatprep.subr.bf16.mxu0 0
        %1903 = vmatpush2.bf16.msra.mxu0 0
        %1904 = vmatprep.subr.bf16.mxu0 0
        %1905 = vmatpush2.bf16.msra.mxu0 0
        %1906 = vmatprep.subr.bf16.mxu0 0
        %1907 = vmatpush2.bf16.msra.mxu0 0
        %1908 = vmatprep.subr.bf16.mxu0 0
        %1909 = vmatpush2.bf16.msra.mxu0 0
        %1910 = vmatprep.subr.bf16.mxu0 0
        %1911 = vmatpush2.bf16.msra.mxu0 0
        %1912 = vmatprep.subr.bf16.mxu0 0
        %1913 = vmatpush2.bf16.msra.mxu0 0
        %1914 = vmatprep.subr.bf16.mxu0 0
        %1915 = vmatpush2.bf16.msra.mxu0 0
        %1916 = vmatprep.subr.bf16.mxu0 0
        %1917 = vmatpush2.bf16.msra.mxu0 0
        %1918 = vmatprep.mubr.bf16.mxu0 0
        %1919 = vmatmul.mubr.bf16.gmra.mxu0 %v1513
        %v1920 = vpop.f32.mrf.mxu0
        %v1921 = vadd.f32 0.0, %v1920
        %v1922 = vpop.f32.mrf.mxu0
        %v1923 = vpop.f32.mrf.mxu0
        %v1924 = vadd.f32 0.0, %v1923
        %v1925 = vpop.f32.mrf.mxu0
        %1926 = vmatprep.mubr.bf16.mxu0 0
        %1927 = vmatmul.mubr.bf16.gmra.mxu0 %v1516
        %v1928 = vpop.f32.mrf.mxu0
        %v1929 = vadd.f32 0.0, %v1928
        %v1930 = vpop.f32.mrf.mxu0
        %v1931 = vpop.f32.mrf.mxu0
        %v1932 = vadd.f32 0.0, %v1931
        %v1933 = vpop.f32.mrf.mxu0
        %1934 = vmatprep.mubr.bf16.mxu0 0
        %1935 = vmatmul.mubr.bf16.gmra.mxu0 %v1519
        %v1936 = vpop.f32.mrf.mxu0
        %v1937 = vadd.f32 0.0, %v1936
        %v1938 = vpop.f32.mrf.mxu0
        %v1939 = vpop.f32.mrf.mxu0
        %v1940 = vadd.f32 0.0, %v1939
        %v1941 = vpop.f32.mrf.mxu0
        %1942 = vmatprep.mubr.bf16.mxu0 0
        %1943 = vmatmul.mubr.bf16.gmra.mxu0 %v1522
        %v1944 = vpop.f32.mrf.mxu0
        %v1945 = vadd.f32 0.0, %v1944
        %v1946 = vpop.f32.mrf.mxu0
        %v1947 = vpop.f32.mrf.mxu0
        %v1948 = vadd.f32 0.0, %v1947
        %v1949 = vpop.f32.mrf.mxu0
        %1950 = vmatprep.mubr.bf16.mxu0 0
        %1951 = vmatmul.mubr.bf16.gmra.mxu0 %v1525
        %v1952 = vpop.f32.mrf.mxu0
        %v1953 = vadd.f32 0.0, %v1952
        %v1954 = vpop.f32.mrf.mxu0
        %v1955 = vpop.f32.mrf.mxu0
        %v1956 = vadd.f32 0.0, %v1955
        %v1957 = vpop.f32.mrf.mxu0
        %1958 = vmatprep.mubr.bf16.mxu0 0
        %1959 = vmatmul.mubr.bf16.gmra.mxu0 %v1528
        %v1960 = vpop.f32.mrf.mxu0
        %v1961 = vadd.f32 0.0, %v1960
        %v1962 = vpop.f32.mrf.mxu0
        %v1963 = vpop.f32.mrf.mxu0
        %v1964 = vadd.f32 0.0, %v1963
        %v1965 = vpop.f32.mrf.mxu0
        %1966 = vmatprep.mubr.bf16.mxu0 0
        %1967 = vmatmul.mubr.bf16.gmra.mxu0 %v1531
        %v1968 = vpop.f32.mrf.mxu0
        %v1969 = vadd.f32 0.0, %v1968
        %v1970 = vpop.f32.mrf.mxu0
        %v1971 = vpop.f32.mrf.mxu0
        %v1972 = vadd.f32 0.0, %v1971
        %v1973 = vpop.f32.mrf.mxu0
        %1974 = vmatprep.mubr.bf16.mxu0 0
        %1975 = vmatmul.mubr.bf16.gmra.mxu0 %v1881
        %v1976 = vpop.f32.mrf.mxu0
        %v1977 = vadd.f32 0.0, %v1976
        %v1978 = vpop.f32.mrf.mxu0
        %v1979 = vpop.f32.mrf.mxu0
        %v1980 = vadd.f32 0.0, %v1979
        %v1981 = vpop.f32.mrf.mxu0
        %1982 = vdwg.mxu0
        %v1983 = vadd.f32 %v1848, %v1921
        %v1984 = vadd.f32 %v1849, %v1924
        %v1985 = vadd.f32 %v1850, %v1929
        %v1986 = vadd.f32 %v1851, %v1932
        %v1987 = vadd.f32 %v1852, %v1937
        %v1988 = vadd.f32 %v1853, %v1940
        %v1989 = vadd.f32 %v1854, %v1945
        %v1990 = vadd.f32 %v1855, %v1948
        %v1991 = vadd.f32 %v1856, %v1953
        %v1992 = vadd.f32 %v1857, %v1956
        %v1993 = vadd.f32 %v1858, %v1961
        %v1994 = vadd.f32 %v1859, %v1964
        %v1995 = vadd.f32 %v1860, %v1969
        %v1996 = vadd.f32 %v1861, %v1972
        %v1997 = vadd.f32 %v1862, %v1977
        %v1998 = vadd.f32 %v1863, %v1980
        %v2001 = vrot.slane %v1208, 1
        %v2002 = vrot.slane %v1209, 1
        %v2003 = vsel %vm1326, %v2001, %v2002
        %s2004 = scalar_lea.vmem %s4, 8
        %v2005 = vld [vmem:[%s2004] sm:$0x3]
        %2006 = vrot.lane.b32.xlu0 %v2003, 124
        %v2007 = vpop.permute.xlu0 %2006
        %v2009 = vsel %vm726, %v2007, 0
        %v2012 = vsel %vm781, %v2005, 0
        %2014 = vmatprep.subr.bf16.mxu0 0
        %2015 = vmatpush1.bf16.msra.mxu0 0
        %2016 = vmatprep.subr.bf16.mxu0 0
        %2017 = vmatpush1.bf16.msra.mxu0 0
        %2018 = vmatprep.subr.bf16.mxu0 0
        %2019 = vmatpush1.bf16.msra.mxu0 0
        %2020 = vmatprep.subr.bf16.mxu0 0
        %2021 = vmatpush1.bf16.msra.mxu0 0
        %2022 = vmatprep.subr.bf16.mxu0 0
        %2023 = vmatpush1.bf16.msra.mxu0 0
        %2024 = vmatprep.subr.bf16.mxu0 0
        %2025 = vmatpush1.bf16.msra.mxu0 0
        %2026 = vmatprep.subr.bf16.mxu0 0
        %2027 = vmatpush1.bf16.msra.mxu0 0
        %2028 = vmatprep.subr.bf16.mxu0 0
        %2029 = vmatpush1.bf16.msra.mxu0 %v2012
        %2030 = vmatprep.subr.bf16.mxu0 0
        %2031 = vmatpush2.bf16.msra.mxu0 0
        %2032 = vmatprep.subr.bf16.mxu0 0
        %2033 = vmatpush2.bf16.msra.mxu0 0
        %2034 = vmatprep.subr.bf16.mxu0 0
        %2035 = vmatpush2.bf16.msra.mxu0 0
        %2036 = vmatprep.subr.bf16.mxu0 0
        %2037 = vmatpush2.bf16.msra.mxu0 0
        %2038 = vmatprep.subr.bf16.mxu0 0
        %2039 = vmatpush2.bf16.msra.mxu0 0
        %2040 = vmatprep.subr.bf16.mxu0 0
        %2041 = vmatpush2.bf16.msra.mxu0 0
        %2042 = vmatprep.subr.bf16.mxu0 0
        %2043 = vmatpush2.bf16.msra.mxu0 0
        %2044 = vmatprep.subr.bf16.mxu0 0
        %2045 = vmatpush2.bf16.msra.mxu0 0
        %2046 = vmatprep.mubr.bf16.mxu0 0
        %2047 = vmatmul.mubr.bf16.gmra.mxu0 %v1373
        %v2048 = vpop.f32.mrf.mxu0
        %v2049 = vadd.f32 0.0, %v2048
        %v2050 = vpop.f32.mrf.mxu0
        %v2051 = vpop.f32.mrf.mxu0
        %v2052 = vadd.f32 0.0, %v2051
        %v2053 = vpop.f32.mrf.mxu0
        %2054 = vmatprep.mubr.bf16.mxu0 0
        %2055 = vmatmul.mubr.bf16.gmra.mxu0 %v1376
        %v2056 = vpop.f32.mrf.mxu0
        %v2057 = vadd.f32 0.0, %v2056
        %v2058 = vpop.f32.mrf.mxu0
        %v2059 = vpop.f32.mrf.mxu0
        %v2060 = vadd.f32 0.0, %v2059
        %v2061 = vpop.f32.mrf.mxu0
        %2062 = vmatprep.mubr.bf16.mxu0 0
        %2063 = vmatmul.mubr.bf16.gmra.mxu0 %v1379
        %v2064 = vpop.f32.mrf.mxu0
        %v2065 = vadd.f32 0.0, %v2064
        %v2066 = vpop.f32.mrf.mxu0
        %v2067 = vpop.f32.mrf.mxu0
        %v2068 = vadd.f32 0.0, %v2067
        %v2069 = vpop.f32.mrf.mxu0
        %2070 = vmatprep.mubr.bf16.mxu0 0
        %2071 = vmatmul.mubr.bf16.gmra.mxu0 %v1382
        %v2072 = vpop.f32.mrf.mxu0
        %v2073 = vadd.f32 0.0, %v2072
        %v2074 = vpop.f32.mrf.mxu0
        %v2075 = vpop.f32.mrf.mxu0
        %v2076 = vadd.f32 0.0, %v2075
        %v2077 = vpop.f32.mrf.mxu0
        %2078 = vmatprep.mubr.bf16.mxu0 0
        %2079 = vmatmul.mubr.bf16.gmra.mxu0 %v1385
        %v2080 = vpop.f32.mrf.mxu0
        %v2081 = vadd.f32 0.0, %v2080
        %v2082 = vpop.f32.mrf.mxu0
        %v2083 = vpop.f32.mrf.mxu0
        %v2084 = vadd.f32 0.0, %v2083
        %v2085 = vpop.f32.mrf.mxu0
        %2086 = vmatprep.mubr.bf16.mxu0 0
        %2087 = vmatmul.mubr.bf16.gmra.mxu0 %v1388
        %v2088 = vpop.f32.mrf.mxu0
        %v2089 = vadd.f32 0.0, %v2088
        %v2090 = vpop.f32.mrf.mxu0
        %v2091 = vpop.f32.mrf.mxu0
        %v2092 = vadd.f32 0.0, %v2091
        %v2093 = vpop.f32.mrf.mxu0
        %2094 = vmatprep.mubr.bf16.mxu0 0
        %2095 = vmatmul.mubr.bf16.gmra.mxu0 %v1391
        %v2096 = vpop.f32.mrf.mxu0
        %v2097 = vadd.f32 0.0, %v2096
        %v2098 = vpop.f32.mrf.mxu0
        %v2099 = vpop.f32.mrf.mxu0
        %v2100 = vadd.f32 0.0, %v2099
        %v2101 = vpop.f32.mrf.mxu0
        %2102 = vmatprep.mubr.bf16.mxu0 0
        %2103 = vmatmul.mubr.bf16.gmra.mxu0 %v2009
        %v2104 = vpop.f32.mrf.mxu0
        %v2105 = vadd.f32 0.0, %v2104
        %v2106 = vpop.f32.mrf.mxu0
        %v2107 = vpop.f32.mrf.mxu0
        %v2108 = vadd.f32 0.0, %v2107
        %v2109 = vpop.f32.mrf.mxu0
        %2110 = vdwg.mxu0
        %v2111 = vadd.f32 %v1983, %v2049
        %v2112 = vadd.f32 %v1984, %v2052
        %v2113 = vadd.f32 %v1985, %v2057
        %v2114 = vadd.f32 %v1986, %v2060
        %v2115 = vadd.f32 %v1987, %v2065
        %v2116 = vadd.f32 %v1988, %v2068
        %v2117 = vadd.f32 %v1989, %v2073
        %v2118 = vadd.f32 %v1990, %v2076
        %v2119 = vadd.f32 %v1991, %v2081
        %v2120 = vadd.f32 %v1992, %v2084
        %v2121 = vadd.f32 %v1993, %v2089
        %v2122 = vadd.f32 %v1994, %v2092
        %v2123 = vadd.f32 %v1995, %v2097
        %v2124 = vadd.f32 %v1996, %v2100
        %v2125 = vadd.f32 %v1997, %v2105
        %v2126 = vadd.f32 %v1998, %v2108
        %v2127 = vrot.slane %v1865, 1
        %v2128 = vrot.slane %v1867, 2
        %v2129 = vor.u32 %v2127, %v2128
        %v2130 = vshrl.u32 %v1209, 16
        %v2132 = vrot.slane %v2130, 1
        %v2133 = vrot.slane %v1872, 2
        %v2134 = vor.u32 %v2132, %v2133
        %v2135 = vsel %vm1633, %v2129, %v2134
        %s2136 = scalar_lea.vmem %s4, 10
        %v2137 = vld [vmem:[%s2136] sm:$0x3]
        %2138 = vrot.lane.b32.xlu0 %v2135, 124
        %v2139 = vpop.permute.xlu0 %2138
        %v2141 = vsel %vm726, %v2139, 0
        %v2144 = vsel %vm781, %v2137, 0
        %2146 = vmatprep.subr.bf16.mxu0 0
        %2147 = vmatpush1.bf16.msra.mxu0 0
        %2148 = vmatprep.subr.bf16.mxu0 0
        %2149 = vmatpush1.bf16.msra.mxu0 0
        %2150 = vmatprep.subr.bf16.mxu0 0
        %2151 = vmatpush1.bf16.msra.mxu0 0
        %2152 = vmatprep.subr.bf16.mxu0 0
        %2153 = vmatpush1.bf16.msra.mxu0 0
        %2154 = vmatprep.subr.bf16.mxu0 0
        %2155 = vmatpush1.bf16.msra.mxu0 0
        %2156 = vmatprep.subr.bf16.mxu0 0
        %2157 = vmatpush1.bf16.msra.mxu0 0
        %2158 = vmatprep.subr.bf16.mxu0 0
        %2159 = vmatpush1.bf16.msra.mxu0 0
        %2160 = vmatprep.subr.bf16.mxu0 0
        %2161 = vmatpush1.bf16.msra.mxu0 %v2144
        %2162 = vmatprep.subr.bf16.mxu0 0
        %2163 = vmatpush2.bf16.msra.mxu0 0
        %2164 = vmatprep.subr.bf16.mxu0 0
        %2165 = vmatpush2.bf16.msra.mxu0 0
        %2166 = vmatprep.subr.bf16.mxu0 0
        %2167 = vmatpush2.bf16.msra.mxu0 0
        %2168 = vmatprep.subr.bf16.mxu0 0
        %2169 = vmatpush2.bf16.msra.mxu0 0
        %2170 = vmatprep.subr.bf16.mxu0 0
        %2171 = vmatpush2.bf16.msra.mxu0 0
        %2172 = vmatprep.subr.bf16.mxu0 0
        %2173 = vmatpush2.bf16.msra.mxu0 0
        %2174 = vmatprep.subr.bf16.mxu0 0
        %2175 = vmatpush2.bf16.msra.mxu0 0
        %2176 = vmatprep.subr.bf16.mxu0 0
        %2177 = vmatpush2.bf16.msra.mxu0 0
        %2178 = vmatprep.mubr.bf16.mxu0 0
        %2179 = vmatmul.mubr.bf16.gmra.mxu0 %v1728
        %v2180 = vpop.f32.mrf.mxu0
        %v2181 = vadd.f32 0.0, %v2180
        %v2182 = vpop.f32.mrf.mxu0
        %v2183 = vpop.f32.mrf.mxu0
        %v2184 = vadd.f32 0.0, %v2183
        %v2185 = vpop.f32.mrf.mxu0
        %2186 = vmatprep.mubr.bf16.mxu0 0
        %2187 = vmatmul.mubr.bf16.gmra.mxu0 %v1731
        %v2188 = vpop.f32.mrf.mxu0
        %v2189 = vadd.f32 0.0, %v2188
        %v2190 = vpop.f32.mrf.mxu0
        %v2191 = vpop.f32.mrf.mxu0
        %v2192 = vadd.f32 0.0, %v2191
        %v2193 = vpop.f32.mrf.mxu0
        %2194 = vmatprep.mubr.bf16.mxu0 0
        %2195 = vmatmul.mubr.bf16.gmra.mxu0 %v1734
        %v2196 = vpop.f32.mrf.mxu0
        %v2197 = vadd.f32 0.0, %v2196
        %v2198 = vpop.f32.mrf.mxu0
        %v2199 = vpop.f32.mrf.mxu0
        %v2200 = vadd.f32 0.0, %v2199
        %v2201 = vpop.f32.mrf.mxu0
        %2202 = vmatprep.mubr.bf16.mxu0 0
        %2203 = vmatmul.mubr.bf16.gmra.mxu0 %v1737
        %v2204 = vpop.f32.mrf.mxu0
        %v2205 = vadd.f32 0.0, %v2204
        %v2206 = vpop.f32.mrf.mxu0
        %v2207 = vpop.f32.mrf.mxu0
        %v2208 = vadd.f32 0.0, %v2207
        %v2209 = vpop.f32.mrf.mxu0
        %2210 = vmatprep.mubr.bf16.mxu0 0
        %2211 = vmatmul.mubr.bf16.gmra.mxu0 %v1740
        %v2212 = vpop.f32.mrf.mxu0
        %v2213 = vadd.f32 0.0, %v2212
        %v2214 = vpop.f32.mrf.mxu0
        %v2215 = vpop.f32.mrf.mxu0
        %v2216 = vadd.f32 0.0, %v2215
        %v2217 = vpop.f32.mrf.mxu0
        %2218 = vmatprep.mubr.bf16.mxu0 0
        %2219 = vmatmul.mubr.bf16.gmra.mxu0 %v1743
        %v2220 = vpop.f32.mrf.mxu0
        %v2221 = vadd.f32 0.0, %v2220
        %v2222 = vpop.f32.mrf.mxu0
        %v2223 = vpop.f32.mrf.mxu0
        %v2224 = vadd.f32 0.0, %v2223
        %v2225 = vpop.f32.mrf.mxu0
        %2226 = vmatprep.mubr.bf16.mxu0 0
        %2227 = vmatmul.mubr.bf16.gmra.mxu0 %v1746
        %v2228 = vpop.f32.mrf.mxu0
        %v2229 = vadd.f32 0.0, %v2228
        %v2230 = vpop.f32.mrf.mxu0
        %v2231 = vpop.f32.mrf.mxu0
        %v2232 = vadd.f32 0.0, %v2231
        %v2233 = vpop.f32.mrf.mxu0
        %2234 = vmatprep.mubr.bf16.mxu0 0
        %2235 = vmatmul.mubr.bf16.gmra.mxu0 %v2141
        %v2236 = vpop.f32.mrf.mxu0
        %v2237 = vadd.f32 0.0, %v2236
        %v2238 = vpop.f32.mrf.mxu0
        %v2239 = vpop.f32.mrf.mxu0
        %v2240 = vadd.f32 0.0, %v2239
        %v2241 = vpop.f32.mrf.mxu0
        %2242 = vdwg.mxu0
        %v2243 = vadd.f32 %v2111, %v2181
        %v2244 = vadd.f32 %v2112, %v2184
        %v2245 = vadd.f32 %v2113, %v2189
        %v2246 = vadd.f32 %v2114, %v2192
        %v2247 = vadd.f32 %v2115, %v2197
        %v2248 = vadd.f32 %v2116, %v2200
        %v2249 = vadd.f32 %v2117, %v2205
        %v2250 = vadd.f32 %v2118, %v2208
        %v2251 = vadd.f32 %v2119, %v2213
        %v2252 = vadd.f32 %v2120, %v2216
        %v2253 = vadd.f32 %v2121, %v2221
        %v2254 = vadd.f32 %v2122, %v2224
        %v2255 = vadd.f32 %v2123, %v2229
        %v2256 = vadd.f32 %v2124, %v2232
        %v2257 = vadd.f32 %v2125, %v2237
        %v2258 = vadd.f32 %v2126, %v2240
        %v2260 = vshrl.u32 %v1210, 16
        %v2262 = vshll.u32 %v1210, 16
        %v2264 = vrot.slane %v2262, 1
        %v2265 = vor.u32 %v2260, %v2264
        %v2267 = vshll.u32 %v1211, 16
        %v2269 = vrot.slane %v2267, 1
        %v2270 = vsel %vm1212, %v2265, %v2269
        %s2271 = scalar_lea.vmem %s4, 12
        %v2272 = vld [vmem:[%s2271] sm:$0x3]
        %2273 = vrot.lane.b32.xlu0 %v2270, 124
        %v2274 = vpop.permute.xlu0 %2273
        %v2276 = vsel %vm726, %v2274, 0
        %v2279 = vsel %vm781, %v2272, 0
        %2281 = vmatprep.subr.bf16.mxu0 0
        %2282 = vmatpush1.bf16.msra.mxu0 0
        %2283 = vmatprep.subr.bf16.mxu0 0
        %2284 = vmatpush1.bf16.msra.mxu0 0
        %2285 = vmatprep.subr.bf16.mxu0 0
        %2286 = vmatpush1.bf16.msra.mxu0 0
        %2287 = vmatprep.subr.bf16.mxu0 0
        %2288 = vmatpush1.bf16.msra.mxu0 0
        %2289 = vmatprep.subr.bf16.mxu0 0
        %2290 = vmatpush1.bf16.msra.mxu0 0
        %2291 = vmatprep.subr.bf16.mxu0 0
        %2292 = vmatpush1.bf16.msra.mxu0 0
        %2293 = vmatprep.subr.bf16.mxu0 0
        %2294 = vmatpush1.bf16.msra.mxu0 0
        %2295 = vmatprep.subr.bf16.mxu0 0
        %2296 = vmatpush1.bf16.msra.mxu0 %v2279
        %2297 = vmatprep.subr.bf16.mxu0 0
        %2298 = vmatpush2.bf16.msra.mxu0 0
        %2299 = vmatprep.subr.bf16.mxu0 0
        %2300 = vmatpush2.bf16.msra.mxu0 0
        %2301 = vmatprep.subr.bf16.mxu0 0
        %2302 = vmatpush2.bf16.msra.mxu0 0
        %2303 = vmatprep.subr.bf16.mxu0 0
        %2304 = vmatpush2.bf16.msra.mxu0 0
        %2305 = vmatprep.subr.bf16.mxu0 0
        %2306 = vmatpush2.bf16.msra.mxu0 0
        %2307 = vmatprep.subr.bf16.mxu0 0
        %2308 = vmatpush2.bf16.msra.mxu0 0
        %2309 = vmatprep.subr.bf16.mxu0 0
        %2310 = vmatpush2.bf16.msra.mxu0 0
        %2311 = vmatprep.subr.bf16.mxu0 0
        %2312 = vmatpush2.bf16.msra.mxu0 0
        %2313 = vmatprep.mubr.bf16.mxu0 0
        %2314 = vmatmul.mubr.bf16.gmra.mxu0 %v1516
        %v2315 = vpop.f32.mrf.mxu0
        %v2316 = vadd.f32 0.0, %v2315
        %v2317 = vpop.f32.mrf.mxu0
        %v2318 = vpop.f32.mrf.mxu0
        %v2319 = vadd.f32 0.0, %v2318
        %v2320 = vpop.f32.mrf.mxu0
        %2321 = vmatprep.mubr.bf16.mxu0 0
        %2322 = vmatmul.mubr.bf16.gmra.mxu0 %v1519
        %v2323 = vpop.f32.mrf.mxu0
        %v2324 = vadd.f32 0.0, %v2323
        %v2325 = vpop.f32.mrf.mxu0
        %v2326 = vpop.f32.mrf.mxu0
        %v2327 = vadd.f32 0.0, %v2326
        %v2328 = vpop.f32.mrf.mxu0
        %2329 = vmatprep.mubr.bf16.mxu0 0
        %2330 = vmatmul.mubr.bf16.gmra.mxu0 %v1522
        %v2331 = vpop.f32.mrf.mxu0
        %v2332 = vadd.f32 0.0, %v2331
        %v2333 = vpop.f32.mrf.mxu0
        %v2334 = vpop.f32.mrf.mxu0
        %v2335 = vadd.f32 0.0, %v2334
        %v2336 = vpop.f32.mrf.mxu0
        %2337 = vmatprep.mubr.bf16.mxu0 0
        %2338 = vmatmul.mubr.bf16.gmra.mxu0 %v1525
        %v2339 = vpop.f32.mrf.mxu0
        %v2340 = vadd.f32 0.0, %v2339
        %v2341 = vpop.f32.mrf.mxu0
        %v2342 = vpop.f32.mrf.mxu0
        %v2343 = vadd.f32 0.0, %v2342
        %v2344 = vpop.f32.mrf.mxu0
        %2345 = vmatprep.mubr.bf16.mxu0 0
        %2346 = vmatmul.mubr.bf16.gmra.mxu0 %v1528
        %v2347 = vpop.f32.mrf.mxu0
        %v2348 = vadd.f32 0.0, %v2347
        %v2349 = vpop.f32.mrf.mxu0
        %v2350 = vpop.f32.mrf.mxu0
        %v2351 = vadd.f32 0.0, %v2350
        %v2352 = vpop.f32.mrf.mxu0
        %2353 = vmatprep.mubr.bf16.mxu0 0
        %2354 = vmatmul.mubr.bf16.gmra.mxu0 %v1531
        %v2355 = vpop.f32.mrf.mxu0
        %v2356 = vadd.f32 0.0, %v2355
        %v2357 = vpop.f32.mrf.mxu0
        %v2358 = vpop.f32.mrf.mxu0
        %v2359 = vadd.f32 0.0, %v2358
        %v2360 = vpop.f32.mrf.mxu0
        %2361 = vmatprep.mubr.bf16.mxu0 0
        %2362 = vmatmul.mubr.bf16.gmra.mxu0 %v1881
        %v2363 = vpop.f32.mrf.mxu0
        %v2364 = vadd.f32 0.0, %v2363
        %v2365 = vpop.f32.mrf.mxu0
        %v2366 = vpop.f32.mrf.mxu0
        %v2367 = vadd.f32 0.0, %v2366
        %v2368 = vpop.f32.mrf.mxu0
        %2369 = vmatprep.mubr.bf16.mxu0 0
        %2370 = vmatmul.mubr.bf16.gmra.mxu0 %v2276
        %v2371 = vpop.f32.mrf.mxu0
        %v2372 = vadd.f32 0.0, %v2371
        %v2373 = vpop.f32.mrf.mxu0
        %v2374 = vpop.f32.mrf.mxu0
        %v2375 = vadd.f32 0.0, %v2374
        %v2376 = vpop.f32.mrf.mxu0
        %2377 = vdwg.mxu0
        %v2378 = vadd.f32 %v2243, %v2316
        %v2379 = vadd.f32 %v2244, %v2319
        %v2380 = vadd.f32 %v2245, %v2324
        %v2381 = vadd.f32 %v2246, %v2327
        %v2382 = vadd.f32 %v2247, %v2332
        %v2383 = vadd.f32 %v2248, %v2335
        %v2384 = vadd.f32 %v2249, %v2340
        %v2385 = vadd.f32 %v2250, %v2343
        %v2386 = vadd.f32 %v2251, %v2348
        %v2387 = vadd.f32 %v2252, %v2351
        %v2388 = vadd.f32 %v2253, %v2356
        %v2389 = vadd.f32 %v2254, %v2359
        %v2390 = vadd.f32 %v2255, %v2364
        %v2391 = vadd.f32 %v2256, %v2367
        %v2392 = vadd.f32 %v2257, %v2372
        %v2393 = vadd.f32 %v2258, %v2375
        %v2396 = vrot.slane %v1210, 1
        %v2397 = vrot.slane %v1211, 1
        %v2398 = vsel %vm1326, %v2396, %v2397
        %s2399 = scalar_lea.vmem %s4, 14
        %v2400 = vld [vmem:[%s2399] sm:$0x3]
        %2401 = vrot.lane.b32.xlu0 %v2398, 124
        %v2402 = vpop.permute.xlu0 %2401
        %v2404 = vsel %vm726, %v2402, 0
        %v2407 = vsel %vm781, %v2400, 0
        %2409 = vmatprep.subr.bf16.mxu0 0
        %2410 = vmatpush1.bf16.msra.mxu0 0
        %2411 = vmatprep.subr.bf16.mxu0 0
        %2412 = vmatpush1.bf16.msra.mxu0 0
        %2413 = vmatprep.subr.bf16.mxu0 0
        %2414 = vmatpush1.bf16.msra.mxu0 0
        %2415 = vmatprep.subr.bf16.mxu0 0
        %2416 = vmatpush1.bf16.msra.mxu0 0
        %2417 = vmatprep.subr.bf16.mxu0 0
        %2418 = vmatpush1.bf16.msra.mxu0 0
        %2419 = vmatprep.subr.bf16.mxu0 0
        %2420 = vmatpush1.bf16.msra.mxu0 0
        %2421 = vmatprep.subr.bf16.mxu0 0
        %2422 = vmatpush1.bf16.msra.mxu0 0
        %2423 = vmatprep.subr.bf16.mxu0 0
        %2424 = vmatpush1.bf16.msra.mxu0 %v2407
        %2425 = vmatprep.subr.bf16.mxu0 0
        %2426 = vmatpush2.bf16.msra.mxu0 0
        %2427 = vmatprep.subr.bf16.mxu0 0
        %2428 = vmatpush2.bf16.msra.mxu0 0
        %2429 = vmatprep.subr.bf16.mxu0 0
        %2430 = vmatpush2.bf16.msra.mxu0 0
        %2431 = vmatprep.subr.bf16.mxu0 0
        %2432 = vmatpush2.bf16.msra.mxu0 0
        %2433 = vmatprep.subr.bf16.mxu0 0
        %2434 = vmatpush2.bf16.msra.mxu0 0
        %2435 = vmatprep.subr.bf16.mxu0 0
        %2436 = vmatpush2.bf16.msra.mxu0 0
        %2437 = vmatprep.subr.bf16.mxu0 0
        %2438 = vmatpush2.bf16.msra.mxu0 0
        %2439 = vmatprep.subr.bf16.mxu0 0
        %2440 = vmatpush2.bf16.msra.mxu0 0
        %2441 = vmatprep.mubr.bf16.mxu0 0
        %2442 = vmatmul.mubr.bf16.gmra.mxu0 %v1376
        %v2443 = vpop.f32.mrf.mxu0
        %v2444 = vadd.f32 0.0, %v2443
        %v2445 = vpop.f32.mrf.mxu0
        %v2446 = vpop.f32.mrf.mxu0
        %v2447 = vadd.f32 0.0, %v2446
        %v2448 = vpop.f32.mrf.mxu0
        %2449 = vmatprep.mubr.bf16.mxu0 0
        %2450 = vmatmul.mubr.bf16.gmra.mxu0 %v1379
        %v2451 = vpop.f32.mrf.mxu0
        %v2452 = vadd.f32 0.0, %v2451
        %v2453 = vpop.f32.mrf.mxu0
        %v2454 = vpop.f32.mrf.mxu0
        %v2455 = vadd.f32 0.0, %v2454
        %v2456 = vpop.f32.mrf.mxu0
        %2457 = vmatprep.mubr.bf16.mxu0 0
        %2458 = vmatmul.mubr.bf16.gmra.mxu0 %v1382
        %v2459 = vpop.f32.mrf.mxu0
        %v2460 = vadd.f32 0.0, %v2459
        %v2461 = vpop.f32.mrf.mxu0
        %v2462 = vpop.f32.mrf.mxu0
        %v2463 = vadd.f32 0.0, %v2462
        %v2464 = vpop.f32.mrf.mxu0
        %2465 = vmatprep.mubr.bf16.mxu0 0
        %2466 = vmatmul.mubr.bf16.gmra.mxu0 %v1385
        %v2467 = vpop.f32.mrf.mxu0
        %v2468 = vadd.f32 0.0, %v2467
        %v2469 = vpop.f32.mrf.mxu0
        %v2470 = vpop.f32.mrf.mxu0
        %v2471 = vadd.f32 0.0, %v2470
        %v2472 = vpop.f32.mrf.mxu0
        %2473 = vmatprep.mubr.bf16.mxu0 0
        %2474 = vmatmul.mubr.bf16.gmra.mxu0 %v1388
        %v2475 = vpop.f32.mrf.mxu0
        %v2476 = vadd.f32 0.0, %v2475
        %v2477 = vpop.f32.mrf.mxu0
        %v2478 = vpop.f32.mrf.mxu0
        %v2479 = vadd.f32 0.0, %v2478
        %v2480 = vpop.f32.mrf.mxu0
        %2481 = vmatprep.mubr.bf16.mxu0 0
        %2482 = vmatmul.mubr.bf16.gmra.mxu0 %v1391
        %v2483 = vpop.f32.mrf.mxu0
        %v2484 = vadd.f32 0.0, %v2483
        %v2485 = vpop.f32.mrf.mxu0
        %v2486 = vpop.f32.mrf.mxu0
        %v2487 = vadd.f32 0.0, %v2486
        %v2488 = vpop.f32.mrf.mxu0
        %2489 = vmatprep.mubr.bf16.mxu0 0
        %2490 = vmatmul.mubr.bf16.gmra.mxu0 %v2009
        %v2491 = vpop.f32.mrf.mxu0
        %v2492 = vadd.f32 0.0, %v2491
        %v2493 = vpop.f32.mrf.mxu0
        %v2494 = vpop.f32.mrf.mxu0
        %v2495 = vadd.f32 0.0, %v2494
        %v2496 = vpop.f32.mrf.mxu0
        %2497 = vmatprep.mubr.bf16.mxu0 0
        %2498 = vmatmul.mubr.bf16.gmra.mxu0 %v2404
        %v2499 = vpop.f32.mrf.mxu0
        %v2500 = vadd.f32 0.0, %v2499
        %v2501 = vpop.f32.mrf.mxu0
        %v2502 = vpop.f32.mrf.mxu0
        %v2503 = vadd.f32 0.0, %v2502
        %v2504 = vpop.f32.mrf.mxu0
        %2505 = vdwg.mxu0
        %v2506 = vadd.f32 %v2378, %v2444
        %v2507 = vadd.f32 %v2379, %v2447
        %v2508 = vadd.f32 %v2380, %v2452
        %v2509 = vadd.f32 %v2381, %v2455
        %v2510 = vadd.f32 %v2382, %v2460
        %v2511 = vadd.f32 %v2383, %v2463
        %v2512 = vadd.f32 %v2384, %v2468
        %v2513 = vadd.f32 %v2385, %v2471
        %v2514 = vadd.f32 %v2386, %v2476
        %v2515 = vadd.f32 %v2387, %v2479
        %v2516 = vadd.f32 %v2388, %v2484
        %v2517 = vadd.f32 %v2389, %v2487
        %v2518 = vadd.f32 %v2390, %v2492
        %v2519 = vadd.f32 %v2391, %v2495
        %v2520 = vadd.f32 %v2392, %v2500
        %v2521 = vadd.f32 %v2393, %v2503
        %v2522 = vrot.slane %v2260, 1
        %v2523 = vrot.slane %v2262, 2
        %v2524 = vor.u32 %v2522, %v2523
        %v2525 = vshrl.u32 %v1211, 16
        %v2527 = vrot.slane %v2525, 1
        %v2528 = vrot.slane %v2267, 2
        %v2529 = vor.u32 %v2527, %v2528
        %v2530 = vsel %vm1633, %v2524, %v2529
        %s2531 = scalar_lea.vmem %s4, 16
        %v2532 = vld [vmem:[%s2531] sm:$0x3]
        %2533 = vrot.lane.b32.xlu0 %v2530, 124
        %v2534 = vpop.permute.xlu0 %2533
        %v2536 = vsel %vm726, %v2534, 0
        %v2539 = vsel %vm781, %v2532, 0
        %2541 = vmatprep.subr.bf16.mxu0 0
        %2542 = vmatpush1.bf16.msra.mxu0 0
        %2543 = vmatprep.subr.bf16.mxu0 0
        %2544 = vmatpush1.bf16.msra.mxu0 0
        %2545 = vmatprep.subr.bf16.mxu0 0
        %2546 = vmatpush1.bf16.msra.mxu0 0
        %2547 = vmatprep.subr.bf16.mxu0 0
        %2548 = vmatpush1.bf16.msra.mxu0 0
        %2549 = vmatprep.subr.bf16.mxu0 0
        %2550 = vmatpush1.bf16.msra.mxu0 0
        %2551 = vmatprep.subr.bf16.mxu0 0
        %2552 = vmatpush1.bf16.msra.mxu0 0
        %2553 = vmatprep.subr.bf16.mxu0 0
        %2554 = vmatpush1.bf16.msra.mxu0 0
        %2555 = vmatprep.subr.bf16.mxu0 0
        %2556 = vmatpush1.bf16.msra.mxu0 %v2539
        %2557 = vmatprep.subr.bf16.mxu0 0
        %2558 = vmatpush2.bf16.msra.mxu0 0
        %2559 = vmatprep.subr.bf16.mxu0 0
        %2560 = vmatpush2.bf16.msra.mxu0 0
        %2561 = vmatprep.subr.bf16.mxu0 0
        %2562 = vmatpush2.bf16.msra.mxu0 0
        %2563 = vmatprep.subr.bf16.mxu0 0
        %2564 = vmatpush2.bf16.msra.mxu0 0
        %2565 = vmatprep.subr.bf16.mxu0 0
        %2566 = vmatpush2.bf16.msra.mxu0 0
        %2567 = vmatprep.subr.bf16.mxu0 0
        %2568 = vmatpush2.bf16.msra.mxu0 0
        %2569 = vmatprep.subr.bf16.mxu0 0
        %2570 = vmatpush2.bf16.msra.mxu0 0
        %2571 = vmatprep.subr.bf16.mxu0 0
        %2572 = vmatpush2.bf16.msra.mxu0 0
        %2573 = vmatprep.mubr.bf16.mxu0 0
        %2574 = vmatmul.mubr.bf16.gmra.mxu0 %v1731
        %v2575 = vpop.f32.mrf.mxu0
        %v2576 = vadd.f32 0.0, %v2575
        %v2577 = vpop.f32.mrf.mxu0
        %v2578 = vpop.f32.mrf.mxu0
        %v2579 = vadd.f32 0.0, %v2578
        %v2580 = vpop.f32.mrf.mxu0
        %2581 = vmatprep.mubr.bf16.mxu0 0
        %2582 = vmatmul.mubr.bf16.gmra.mxu0 %v1734
        %v2583 = vpop.f32.mrf.mxu0
        %v2584 = vadd.f32 0.0, %v2583
        %v2585 = vpop.f32.mrf.mxu0
        %v2586 = vpop.f32.mrf.mxu0
        %v2587 = vadd.f32 0.0, %v2586
        %v2588 = vpop.f32.mrf.mxu0
        %2589 = vmatprep.mubr.bf16.mxu0 0
        %2590 = vmatmul.mubr.bf16.gmra.mxu0 %v1737
        %v2591 = vpop.f32.mrf.mxu0
        %v2592 = vadd.f32 0.0, %v2591
        %v2593 = vpop.f32.mrf.mxu0
        %v2594 = vpop.f32.mrf.mxu0
        %v2595 = vadd.f32 0.0, %v2594
        %v2596 = vpop.f32.mrf.mxu0
        %2597 = vmatprep.mubr.bf16.mxu0 0
        %2598 = vmatmul.mubr.bf16.gmra.mxu0 %v1740
        %v2599 = vpop.f32.mrf.mxu0
        %v2600 = vadd.f32 0.0, %v2599
        %v2601 = vpop.f32.mrf.mxu0
        %v2602 = vpop.f32.mrf.mxu0
        %v2603 = vadd.f32 0.0, %v2602
        %v2604 = vpop.f32.mrf.mxu0
        %2605 = vmatprep.mubr.bf16.mxu0 0
        %2606 = vmatmul.mubr.bf16.gmra.mxu0 %v1743
        %v2607 = vpop.f32.mrf.mxu0
        %v2608 = vadd.f32 0.0, %v2607
        %v2609 = vpop.f32.mrf.mxu0
        %v2610 = vpop.f32.mrf.mxu0
        %v2611 = vadd.f32 0.0, %v2610
        %v2612 = vpop.f32.mrf.mxu0
        %2613 = vmatprep.mubr.bf16.mxu0 0
        %2614 = vmatmul.mubr.bf16.gmra.mxu0 %v1746
        %v2615 = vpop.f32.mrf.mxu0
        %v2616 = vadd.f32 0.0, %v2615
        %v2617 = vpop.f32.mrf.mxu0
        %v2618 = vpop.f32.mrf.mxu0
        %v2619 = vadd.f32 0.0, %v2618
        %v2620 = vpop.f32.mrf.mxu0
        %2621 = vmatprep.mubr.bf16.mxu0 0
        %2622 = vmatmul.mubr.bf16.gmra.mxu0 %v2141
        %v2623 = vpop.f32.mrf.mxu0
        %v2624 = vadd.f32 0.0, %v2623
        %v2625 = vpop.f32.mrf.mxu0
        %v2626 = vpop.f32.mrf.mxu0
        %v2627 = vadd.f32 0.0, %v2626
        %v2628 = vpop.f32.mrf.mxu0
        %2629 = vmatprep.mubr.bf16.mxu0 0
        %2630 = vmatmul.mubr.bf16.gmra.mxu0 %v2536
        %v2631 = vpop.f32.mrf.mxu0
        %v2632 = vadd.f32 0.0, %v2631
        %v2633 = vpop.f32.mrf.mxu0
        %v2634 = vpop.f32.mrf.mxu0
        %v2635 = vadd.f32 0.0, %v2634
        %v2636 = vpop.f32.mrf.mxu0
        %2637 = vdwg.mxu0
        %v2638 = vadd.f32 %v2506, %v2576
        %v2639 = vadd.f32 %v2507, %v2579
        %v2640 = vadd.f32 %v2508, %v2584
        %v2641 = vadd.f32 %v2509, %v2587
        %v2642 = vadd.f32 %v2510, %v2592
        %v2643 = vadd.f32 %v2511, %v2595
        %v2644 = vadd.f32 %v2512, %v2600
        %v2645 = vadd.f32 %v2513, %v2603
        %v2646 = vadd.f32 %v2514, %v2608
        %v2647 = vadd.f32 %v2515, %v2611
        %v2648 = vadd.f32 %v2516, %v2616
        %v2649 = vadd.f32 %v2517, %v2619
        %v2650 = vadd.f32 %v2518, %v2624
        %v2651 = vadd.f32 %v2519, %v2627
        %v2652 = vadd.f32 %v2520, %v2632
        %v2653 = vadd.f32 %v2521, %v2635
        %v2654 = vld [vmem:[%s5] sm:$0x1]
        %v2656 = vlaneseq
        %v2657 = vshrl.u32 %v2656, 7
        %v2658 = vsub.s32 0, %v2657
        %v2659 = vrot.slane %v2654, %v2658
        %v2661 = vmul.f32 %v2638, %v2659
        %v2662 = vmul.f32 %v2639, %v2659
        %v2663 = vmul.f32 %v2640, %v2659
        %v2664 = vmul.f32 %v2641, %v2659
        %v2665 = vmul.f32 %v2642, %v2659
        %v2666 = vmul.f32 %v2643, %v2659
        %v2667 = vmul.f32 %v2644, %v2659
        %v2668 = vmul.f32 %v2645, %v2659
        %v2669 = vmul.f32 %v2646, %v2659
        %v2670 = vmul.f32 %v2647, %v2659
        %v2671 = vmul.f32 %v2648, %v2659
        %v2672 = vmul.f32 %v2649, %v2659
        %v2673 = vmul.f32 %v2650, %v2659
        %v2674 = vmul.f32 %v2651, %v2659
        %v2675 = vmul.f32 %v2652, %v2659
        %v2676 = vmul.f32 %v2653, %v2659
        %v2677 = vld [vmem:[%s6] sm:$0x1]
        %v2679 = vlaneseq
        %v2680 = vshrl.u32 %v2679, 7
        %v2681 = vsub.s32 0, %v2680
        %v2682 = vrot.slane %v2677, %v2681
        %v2684 = vadd.f32 %v2661, %v2682
        %v2685 = vadd.f32 %v2662, %v2682
        %v2686 = vadd.f32 %v2663, %v2682
        %v2687 = vadd.f32 %v2664, %v2682
        %v2688 = vadd.f32 %v2665, %v2682
        %v2689 = vadd.f32 %v2666, %v2682
        %v2690 = vadd.f32 %v2667, %v2682
        %v2691 = vadd.f32 %v2668, %v2682
        %v2692 = vadd.f32 %v2669, %v2682
        %v2693 = vadd.f32 %v2670, %v2682
        %v2694 = vadd.f32 %v2671, %v2682
        %v2695 = vadd.f32 %v2672, %v2682
        %v2696 = vadd.f32 %v2673, %v2682
        %v2697 = vadd.f32 %v2674, %v2682
        %v2698 = vadd.f32 %v2675, %v2682
        %v2699 = vadd.f32 %v2676, %v2682
        %v2700 = vmax.f32 %v2684, 0.0
        %v2701 = vmax.f32 %v2685, 0.0
        %v2702 = vmax.f32 %v2686, 0.0
        %v2703 = vmax.f32 %v2687, 0.0
        %v2704 = vmax.f32 %v2688, 0.0
        %v2705 = vmax.f32 %v2689, 0.0
        %v2706 = vmax.f32 %v2690, 0.0
        %v2707 = vmax.f32 %v2691, 0.0
        %v2708 = vmax.f32 %v2692, 0.0
        %v2709 = vmax.f32 %v2693, 0.0
        %v2710 = vmax.f32 %v2694, 0.0
        %v2711 = vmax.f32 %v2695, 0.0
        %v2712 = vmax.f32 %v2696, 0.0
        %v2713 = vmax.f32 %v2697, 0.0
        %v2714 = vmax.f32 %v2698, 0.0
        %v2715 = vmax.f32 %v2699, 0.0
        %v2716 = vpack.c.bf16 %v1157, %v1156
        %v2717 = vpack.c.bf16 %v1158, %v1158
        %v2718 = vpack.c.bf16 %v1190, %v1189
        %v2719 = vpack.c.bf16 %v1191, %v1191
        %v2720 = vld [vmem:[%s7] sm:$0x3]
        %v2722 = vshrl.u32 %v2716, 16
        %v2724 = vshll.u32 %v2716, 16
        %v2726 = vrot.slane %v2724, 1
        %v2727 = vor.u32 %v2722, %v2726
        %v2729 = vshll.u32 %v2717, 16
        %v2731 = vrot.slane %v2729, 1
        %v2732 = vsel %vm1212, %v2727, %v2731
        %s2733 = scalar_lea.vmem %s7, 2
        %v2734 = vld [vmem:[%s2733] sm:$0x3]
        %2735 = vrot.lane.b32.xlu0 %v2732, 120
        %v2736 = vpop.permute.xlu0 %2735
        %2737 = vrot.lane.b32.xlu0 %v1224, 120
        %v2738 = vpop.permute.xlu0 %2737
        %2739 = vrot.lane.b32.xlu0 %v1236, 120
        %v2740 = vpop.permute.xlu0 %2739
        %2741 = vrot.lane.b32.xlu0 %v1248, 120
        %v2742 = vpop.permute.xlu0 %2741
        %2743 = vrot.lane.b32.xlu0 %v1260, 120
        %v2744 = vpop.permute.xlu0 %2743
        %2745 = vrot.lane.b32.xlu0 %v1272, 120
        %v2746 = vpop.permute.xlu0 %2745
        %2747 = vrot.lane.b32.xlu0 %v1284, 120
        %v2748 = vpop.permute.xlu0 %2747
        %2749 = vrot.lane.b32.xlu0 %v1296, 120
        %v2750 = vpop.permute.xlu0 %2749
        %v2752 = vsel %vm726, %v2736, 0
        %v2755 = vsel %vm726, %v2738, 0
        %v2758 = vsel %vm726, %v2740, 0
        %v2761 = vsel %vm726, %v2742, 0
        %v2764 = vsel %vm726, %v2744, 0
        %v2767 = vsel %vm726, %v2746, 0
        %v2770 = vsel %vm726, %v2748, 0
        %v2773 = vsel %vm726, %v2750, 0
        %v2776 = vsel %vm781, %v2734, 0
        %2778 = vmatprep.subr.bf16.mxu0 0
        %2779 = vmatpush1.bf16.msra.mxu0 0
        %2780 = vmatprep.subr.bf16.mxu0 0
        %2781 = vmatpush1.bf16.msra.mxu0 0
        %2782 = vmatprep.subr.bf16.mxu0 0
        %2783 = vmatpush1.bf16.msra.mxu0 0
        %2784 = vmatprep.subr.bf16.mxu0 0
        %2785 = vmatpush1.bf16.msra.mxu0 0
        %2786 = vmatprep.subr.bf16.mxu0 0
        %2787 = vmatpush1.bf16.msra.mxu0 0
        %2788 = vmatprep.subr.bf16.mxu0 0
        %2789 = vmatpush1.bf16.msra.mxu0 0
        %2790 = vmatprep.subr.bf16.mxu0 0
        %2791 = vmatpush1.bf16.msra.mxu0 0
        %2792 = vmatprep.subr.bf16.mxu0 0
        %2793 = vmatpush1.bf16.msra.mxu0 %v2776
        %2794 = vmatprep.subr.bf16.mxu0 0
        %2795 = vmatpush2.bf16.msra.mxu0 0
        %2796 = vmatprep.subr.bf16.mxu0 0
        %2797 = vmatpush2.bf16.msra.mxu0 0
        %2798 = vmatprep.subr.bf16.mxu0 0
        %2799 = vmatpush2.bf16.msra.mxu0 0
        %2800 = vmatprep.subr.bf16.mxu0 0
        %2801 = vmatpush2.bf16.msra.mxu0 0
        %2802 = vmatprep.subr.bf16.mxu0 0
        %2803 = vmatpush2.bf16.msra.mxu0 0
        %2804 = vmatprep.subr.bf16.mxu0 0
        %2805 = vmatpush2.bf16.msra.mxu0 0
        %2806 = vmatprep.subr.bf16.mxu0 0
        %2807 = vmatpush2.bf16.msra.mxu0 0
        %2808 = vmatprep.subr.bf16.mxu0 0
        %2809 = vmatpush2.bf16.msra.mxu0 0
        %2810 = vmatprep.mubr.bf16.mxu0 0
        %2811 = vmatmul.mubr.bf16.gmra.mxu0 %v2752
        %v2812 = vpop.f32.mrf.mxu0
        %v2813 = vadd.f32 0.0, %v2812
        %v2814 = vpop.f32.mrf.mxu0
        %v2815 = vpop.f32.mrf.mxu0
        %v2816 = vadd.f32 0.0, %v2815
        %v2817 = vpop.f32.mrf.mxu0
        %2818 = vmatprep.mubr.bf16.mxu0 0
        %2819 = vmatmul.mubr.bf16.gmra.mxu0 %v2755
        %v2820 = vpop.f32.mrf.mxu0
        %v2821 = vadd.f32 0.0, %v2820
        %v2822 = vpop.f32.mrf.mxu0
        %v2823 = vpop.f32.mrf.mxu0
        %v2824 = vadd.f32 0.0, %v2823
        %v2825 = vpop.f32.mrf.mxu0
        %2826 = vmatprep.mubr.bf16.mxu0 0
        %2827 = vmatmul.mubr.bf16.gmra.mxu0 %v2758
        %v2828 = vpop.f32.mrf.mxu0
        %v2829 = vadd.f32 0.0, %v2828
        %v2830 = vpop.f32.mrf.mxu0
        %v2831 = vpop.f32.mrf.mxu0
        %v2832 = vadd.f32 0.0, %v2831
        %v2833 = vpop.f32.mrf.mxu0
        %2834 = vmatprep.mubr.bf16.mxu0 0
        %2835 = vmatmul.mubr.bf16.gmra.mxu0 %v2761
        %v2836 = vpop.f32.mrf.mxu0
        %v2837 = vadd.f32 0.0, %v2836
        %v2838 = vpop.f32.mrf.mxu0
        %v2839 = vpop.f32.mrf.mxu0
        %v2840 = vadd.f32 0.0, %v2839
        %v2841 = vpop.f32.mrf.mxu0
        %2842 = vmatprep.mubr.bf16.mxu0 0
        %2843 = vmatmul.mubr.bf16.gmra.mxu0 %v2764
        %v2844 = vpop.f32.mrf.mxu0
        %v2845 = vadd.f32 0.0, %v2844
        %v2846 = vpop.f32.mrf.mxu0
        %v2847 = vpop.f32.mrf.mxu0
        %v2848 = vadd.f32 0.0, %v2847
        %v2849 = vpop.f32.mrf.mxu0
        %2850 = vmatprep.mubr.bf16.mxu0 0
        %2851 = vmatmul.mubr.bf16.gmra.mxu0 %v2767
        %v2852 = vpop.f32.mrf.mxu0
        %v2853 = vadd.f32 0.0, %v2852
        %v2854 = vpop.f32.mrf.mxu0
        %v2855 = vpop.f32.mrf.mxu0
        %v2856 = vadd.f32 0.0, %v2855
        %v2857 = vpop.f32.mrf.mxu0
        %2858 = vmatprep.mubr.bf16.mxu0 0
        %2859 = vmatmul.mubr.bf16.gmra.mxu0 %v2770
        %v2860 = vpop.f32.mrf.mxu0
        %v2861 = vadd.f32 0.0, %v2860
        %v2862 = vpop.f32.mrf.mxu0
        %v2863 = vpop.f32.mrf.mxu0
        %v2864 = vadd.f32 0.0, %v2863
        %v2865 = vpop.f32.mrf.mxu0
        %2866 = vmatprep.mubr.bf16.mxu0 0
        %2867 = vmatmul.mubr.bf16.gmra.mxu0 %v2773
        %v2868 = vpop.f32.mrf.mxu0
        %v2869 = vadd.f32 0.0, %v2868
        %v2870 = vpop.f32.mrf.mxu0
        %v2871 = vpop.f32.mrf.mxu0
        %v2872 = vadd.f32 0.0, %v2871
        %v2873 = vpop.f32.mrf.mxu0
        %2874 = vdwg.mxu0
        %2876 = vrot.lane.b32.xlu0 %v2716, 120
        %v2877 = vpop.permute.xlu0 %2876
        %2878 = vrot.lane.b32.xlu0 %v1192, 120
        %v2879 = vpop.permute.xlu0 %2878
        %2880 = vrot.lane.b32.xlu0 %v1194, 120
        %v2881 = vpop.permute.xlu0 %2880
        %2882 = vrot.lane.b32.xlu0 %v1196, 120
        %v2883 = vpop.permute.xlu0 %2882
        %2884 = vrot.lane.b32.xlu0 %v1198, 120
        %v2885 = vpop.permute.xlu0 %2884
        %2886 = vrot.lane.b32.xlu0 %v1200, 120
        %v2887 = vpop.permute.xlu0 %2886
        %2888 = vrot.lane.b32.xlu0 %v1202, 120
        %v2889 = vpop.permute.xlu0 %2888
        %2890 = vrot.lane.b32.xlu0 %v1204, 120
        %v2891 = vpop.permute.xlu0 %2890
        %v2893 = vsel %vm726, %v2877, 0
        %v2896 = vsel %vm726, %v2879, 0
        %v2899 = vsel %vm726, %v2881, 0
        %v2902 = vsel %vm726, %v2883, 0
        %v2905 = vsel %vm726, %v2885, 0
        %v2908 = vsel %vm726, %v2887, 0
        %v2911 = vsel %vm726, %v2889, 0
        %v2914 = vsel %vm726, %v2891, 0
        %v2917 = vsel %vm781, %v2720, 0
        %2919 = vmatprep.subr.bf16.mxu0 0
        %2920 = vmatpush1.bf16.msra.mxu0 0
        %2921 = vmatprep.subr.bf16.mxu0 0
        %2922 = vmatpush1.bf16.msra.mxu0 0
        %2923 = vmatprep.subr.bf16.mxu0 0
        %2924 = vmatpush1.bf16.msra.mxu0 0
        %2925 = vmatprep.subr.bf16.mxu0 0
        %2926 = vmatpush1.bf16.msra.mxu0 0
        %2927 = vmatprep.subr.bf16.mxu0 0
        %2928 = vmatpush1.bf16.msra.mxu0 0
        %2929 = vmatprep.subr.bf16.mxu0 0
        %2930 = vmatpush1.bf16.msra.mxu0 0
        %2931 = vmatprep.subr.bf16.mxu0 0
        %2932 = vmatpush1.bf16.msra.mxu0 0
        %2933 = vmatprep.subr.bf16.mxu0 0
        %2934 = vmatpush1.bf16.msra.mxu0 %v2917
        %2935 = vmatprep.subr.bf16.mxu0 0
        %2936 = vmatpush2.bf16.msra.mxu0 0
        %2937 = vmatprep.subr.bf16.mxu0 0
        %2938 = vmatpush2.bf16.msra.mxu0 0
        %2939 = vmatprep.subr.bf16.mxu0 0
        %2940 = vmatpush2.bf16.msra.mxu0 0
        %2941 = vmatprep.subr.bf16.mxu0 0
        %2942 = vmatpush2.bf16.msra.mxu0 0
        %2943 = vmatprep.subr.bf16.mxu0 0
        %2944 = vmatpush2.bf16.msra.mxu0 0
        %2945 = vmatprep.subr.bf16.mxu0 0
        %2946 = vmatpush2.bf16.msra.mxu0 0
        %2947 = vmatprep.subr.bf16.mxu0 0
        %2948 = vmatpush2.bf16.msra.mxu0 0
        %2949 = vmatprep.subr.bf16.mxu0 0
        %2950 = vmatpush2.bf16.msra.mxu0 0
        %2951 = vmatprep.mubr.bf16.mxu0 0
        %2952 = vmatmul.mubr.bf16.gmra.mxu0 %v2893
        %v2953 = vpop.f32.mrf.mxu0
        %v2954 = vadd.f32 %v2813, %v2953
        %v2955 = vpop.f32.mrf.mxu0
        %v2956 = vpop.f32.mrf.mxu0
        %v2957 = vadd.f32 %v2816, %v2956
        %v2958 = vpop.f32.mrf.mxu0
        %2959 = vmatprep.mubr.bf16.mxu0 0
        %2960 = vmatmul.mubr.bf16.gmra.mxu0 %v2896
        %v2961 = vpop.f32.mrf.mxu0
        %v2962 = vadd.f32 %v2821, %v2961
        %v2963 = vpop.f32.mrf.mxu0
        %v2964 = vpop.f32.mrf.mxu0
        %v2965 = vadd.f32 %v2824, %v2964
        %v2966 = vpop.f32.mrf.mxu0
        %2967 = vmatprep.mubr.bf16.mxu0 0
        %2968 = vmatmul.mubr.bf16.gmra.mxu0 %v2899
        %v2969 = vpop.f32.mrf.mxu0
        %v2970 = vadd.f32 %v2829, %v2969
        %v2971 = vpop.f32.mrf.mxu0
        %v2972 = vpop.f32.mrf.mxu0
        %v2973 = vadd.f32 %v2832, %v2972
        %v2974 = vpop.f32.mrf.mxu0
        %2975 = vmatprep.mubr.bf16.mxu0 0
        %2976 = vmatmul.mubr.bf16.gmra.mxu0 %v2902
        %v2977 = vpop.f32.mrf.mxu0
        %v2978 = vadd.f32 %v2837, %v2977
        %v2979 = vpop.f32.mrf.mxu0
        %v2980 = vpop.f32.mrf.mxu0
        %v2981 = vadd.f32 %v2840, %v2980
        %v2982 = vpop.f32.mrf.mxu0
        %2983 = vmatprep.mubr.bf16.mxu0 0
        %2984 = vmatmul.mubr.bf16.gmra.mxu0 %v2905
        %v2985 = vpop.f32.mrf.mxu0
        %v2986 = vadd.f32 %v2845, %v2985
        %v2987 = vpop.f32.mrf.mxu0
        %v2988 = vpop.f32.mrf.mxu0
        %v2989 = vadd.f32 %v2848, %v2988
        %v2990 = vpop.f32.mrf.mxu0
        %2991 = vmatprep.mubr.bf16.mxu0 0
        %2992 = vmatmul.mubr.bf16.gmra.mxu0 %v2908
        %v2993 = vpop.f32.mrf.mxu0
        %v2994 = vadd.f32 %v2853, %v2993
        %v2995 = vpop.f32.mrf.mxu0
        %v2996 = vpop.f32.mrf.mxu0
        %v2997 = vadd.f32 %v2856, %v2996
        %v2998 = vpop.f32.mrf.mxu0
        %2999 = vmatprep.mubr.bf16.mxu0 0
        %3000 = vmatmul.mubr.bf16.gmra.mxu0 %v2911
        %v3001 = vpop.f32.mrf.mxu0
        %v3002 = vadd.f32 %v2861, %v3001
        %v3003 = vpop.f32.mrf.mxu0
        %v3004 = vpop.f32.mrf.mxu0
        %v3005 = vadd.f32 %v2864, %v3004
        %v3006 = vpop.f32.mrf.mxu0
        %3007 = vmatprep.mubr.bf16.mxu0 0
        %3008 = vmatmul.mubr.bf16.gmra.mxu0 %v2914
        %v3009 = vpop.f32.mrf.mxu0
        %v3010 = vadd.f32 %v2869, %v3009
        %v3011 = vpop.f32.mrf.mxu0
        %v3012 = vpop.f32.mrf.mxu0
        %v3013 = vadd.f32 %v2872, %v3012
        %v3014 = vpop.f32.mrf.mxu0
        %3015 = vdwg.mxu0
        %v3017 = vrot.slane %v2716, 1
        %v3018 = vrot.slane %v2717, 1
        %v3019 = vsel %vm1326, %v3017, %v3018
        %s3020 = scalar_lea.vmem %s7, 4
        %v3021 = vld [vmem:[%s3020] sm:$0x3]
        %3022 = vrot.lane.b32.xlu0 %v3019, 120
        %v3023 = vpop.permute.xlu0 %3022
        %3024 = vrot.lane.b32.xlu0 %v1329, 120
        %v3025 = vpop.permute.xlu0 %3024
        %3026 = vrot.lane.b32.xlu0 %v1332, 120
        %v3027 = vpop.permute.xlu0 %3026
        %3028 = vrot.lane.b32.xlu0 %v1335, 120
        %v3029 = vpop.permute.xlu0 %3028
        %3030 = vrot.lane.b32.xlu0 %v1338, 120
        %v3031 = vpop.permute.xlu0 %3030
        %3032 = vrot.lane.b32.xlu0 %v1341, 120
        %v3033 = vpop.permute.xlu0 %3032
        %3034 = vrot.lane.b32.xlu0 %v1344, 120
        %v3035 = vpop.permute.xlu0 %3034
        %3036 = vrot.lane.b32.xlu0 %v1347, 120
        %v3037 = vpop.permute.xlu0 %3036
        %v3039 = vsel %vm726, %v3023, 0
        %v3042 = vsel %vm726, %v3025, 0
        %v3045 = vsel %vm726, %v3027, 0
        %v3048 = vsel %vm726, %v3029, 0
        %v3051 = vsel %vm726, %v3031, 0
        %v3054 = vsel %vm726, %v3033, 0
        %v3057 = vsel %vm726, %v3035, 0
        %v3060 = vsel %vm726, %v3037, 0
        %v3063 = vsel %vm781, %v3021, 0
        %3065 = vmatprep.subr.bf16.mxu0 0
        %3066 = vmatpush1.bf16.msra.mxu0 0
        %3067 = vmatprep.subr.bf16.mxu0 0
        %3068 = vmatpush1.bf16.msra.mxu0 0
        %3069 = vmatprep.subr.bf16.mxu0 0
        %3070 = vmatpush1.bf16.msra.mxu0 0
        %3071 = vmatprep.subr.bf16.mxu0 0
        %3072 = vmatpush1.bf16.msra.mxu0 0
        %3073 = vmatprep.subr.bf16.mxu0 0
        %3074 = vmatpush1.bf16.msra.mxu0 0
        %3075 = vmatprep.subr.bf16.mxu0 0
        %3076 = vmatpush1.bf16.msra.mxu0 0
        %3077 = vmatprep.subr.bf16.mxu0 0
        %3078 = vmatpush1.bf16.msra.mxu0 0
        %3079 = vmatprep.subr.bf16.mxu0 0
        %3080 = vmatpush1.bf16.msra.mxu0 %v3063
        %3081 = vmatprep.subr.bf16.mxu0 0
        %3082 = vmatpush2.bf16.msra.mxu0 0
        %3083 = vmatprep.subr.bf16.mxu0 0
        %3084 = vmatpush2.bf16.msra.mxu0 0
        %3085 = vmatprep.subr.bf16.mxu0 0
        %3086 = vmatpush2.bf16.msra.mxu0 0
        %3087 = vmatprep.subr.bf16.mxu0 0
        %3088 = vmatpush2.bf16.msra.mxu0 0
        %3089 = vmatprep.subr.bf16.mxu0 0
        %3090 = vmatpush2.bf16.msra.mxu0 0
        %3091 = vmatprep.subr.bf16.mxu0 0
        %3092 = vmatpush2.bf16.msra.mxu0 0
        %3093 = vmatprep.subr.bf16.mxu0 0
        %3094 = vmatpush2.bf16.msra.mxu0 0
        %3095 = vmatprep.subr.bf16.mxu0 0
        %3096 = vmatpush2.bf16.msra.mxu0 0
        %3097 = vmatprep.mubr.bf16.mxu0 0
        %3098 = vmatmul.mubr.bf16.gmra.mxu0 %v3039
        %v3099 = vpop.f32.mrf.mxu0
        %v3100 = vadd.f32 0.0, %v3099
        %v3101 = vpop.f32.mrf.mxu0
        %v3102 = vpop.f32.mrf.mxu0
        %v3103 = vadd.f32 0.0, %v3102
        %v3104 = vpop.f32.mrf.mxu0
        %3105 = vmatprep.mubr.bf16.mxu0 0
        %3106 = vmatmul.mubr.bf16.gmra.mxu0 %v3042
        %v3107 = vpop.f32.mrf.mxu0
        %v3108 = vadd.f32 0.0, %v3107
        %v3109 = vpop.f32.mrf.mxu0
        %v3110 = vpop.f32.mrf.mxu0
        %v3111 = vadd.f32 0.0, %v3110
        %v3112 = vpop.f32.mrf.mxu0
        %3113 = vmatprep.mubr.bf16.mxu0 0
        %3114 = vmatmul.mubr.bf16.gmra.mxu0 %v3045
        %v3115 = vpop.f32.mrf.mxu0
        %v3116 = vadd.f32 0.0, %v3115
        %v3117 = vpop.f32.mrf.mxu0
        %v3118 = vpop.f32.mrf.mxu0
        %v3119 = vadd.f32 0.0, %v3118
        %v3120 = vpop.f32.mrf.mxu0
        %3121 = vmatprep.mubr.bf16.mxu0 0
        %3122 = vmatmul.mubr.bf16.gmra.mxu0 %v3048
        %v3123 = vpop.f32.mrf.mxu0
        %v3124 = vadd.f32 0.0, %v3123
        %v3125 = vpop.f32.mrf.mxu0
        %v3126 = vpop.f32.mrf.mxu0
        %v3127 = vadd.f32 0.0, %v3126
        %v3128 = vpop.f32.mrf.mxu0
        %3129 = vmatprep.mubr.bf16.mxu0 0
        %3130 = vmatmul.mubr.bf16.gmra.mxu0 %v3051
        %v3131 = vpop.f32.mrf.mxu0
        %v3132 = vadd.f32 0.0, %v3131
        %v3133 = vpop.f32.mrf.mxu0
        %v3134 = vpop.f32.mrf.mxu0
        %v3135 = vadd.f32 0.0, %v3134
        %v3136 = vpop.f32.mrf.mxu0
        %3137 = vmatprep.mubr.bf16.mxu0 0
        %3138 = vmatmul.mubr.bf16.gmra.mxu0 %v3054
        %v3139 = vpop.f32.mrf.mxu0
        %v3140 = vadd.f32 0.0, %v3139
        %v3141 = vpop.f32.mrf.mxu0
        %v3142 = vpop.f32.mrf.mxu0
        %v3143 = vadd.f32 0.0, %v3142
        %v3144 = vpop.f32.mrf.mxu0
        %3145 = vmatprep.mubr.bf16.mxu0 0
        %3146 = vmatmul.mubr.bf16.gmra.mxu0 %v3057
        %v3147 = vpop.f32.mrf.mxu0
        %v3148 = vadd.f32 0.0, %v3147
        %v3149 = vpop.f32.mrf.mxu0
        %v3150 = vpop.f32.mrf.mxu0
        %v3151 = vadd.f32 0.0, %v3150
        %v3152 = vpop.f32.mrf.mxu0
        %3153 = vmatprep.mubr.bf16.mxu0 0
        %3154 = vmatmul.mubr.bf16.gmra.mxu0 %v3060
        %v3155 = vpop.f32.mrf.mxu0
        %v3156 = vadd.f32 0.0, %v3155
        %v3157 = vpop.f32.mrf.mxu0
        %v3158 = vpop.f32.mrf.mxu0
        %v3159 = vadd.f32 0.0, %v3158
        %v3160 = vpop.f32.mrf.mxu0
        %3161 = vdwg.mxu0
        %v3162 = vadd.f32 %v2954, %v3100
        %v3163 = vadd.f32 %v2957, %v3103
        %v3164 = vadd.f32 %v2962, %v3108
        %v3165 = vadd.f32 %v2965, %v3111
        %v3166 = vadd.f32 %v2970, %v3116
        %v3167 = vadd.f32 %v2973, %v3119
        %v3168 = vadd.f32 %v2978, %v3124
        %v3169 = vadd.f32 %v2981, %v3127
        %v3170 = vadd.f32 %v2986, %v3132
        %v3171 = vadd.f32 %v2989, %v3135
        %v3172 = vadd.f32 %v2994, %v3140
        %v3173 = vadd.f32 %v2997, %v3143
        %v3174 = vadd.f32 %v3002, %v3148
        %v3175 = vadd.f32 %v3005, %v3151
        %v3176 = vadd.f32 %v3010, %v3156
        %v3177 = vadd.f32 %v3013, %v3159
        %v3178 = vrot.slane %v2722, 1
        %v3179 = vrot.slane %v2724, 2
        %v3180 = vor.u32 %v3178, %v3179
        %v3181 = vshrl.u32 %v2717, 16
        %v3183 = vrot.slane %v3181, 1
        %v3184 = vrot.slane %v2729, 2
        %v3185 = vor.u32 %v3183, %v3184
        %v3186 = vsel %vm1633, %v3180, %v3185
        %s3187 = scalar_lea.vmem %s7, 6
        %v3188 = vld [vmem:[%s3187] sm:$0x3]
        %3189 = vrot.lane.b32.xlu0 %v3186, 120
        %v3190 = vpop.permute.xlu0 %3189
        %3191 = vrot.lane.b32.xlu0 %v1642, 120
        %v3192 = vpop.permute.xlu0 %3191
        %3193 = vrot.lane.b32.xlu0 %v1651, 120
        %v3194 = vpop.permute.xlu0 %3193
        %3195 = vrot.lane.b32.xlu0 %v1660, 120
        %v3196 = vpop.permute.xlu0 %3195
        %3197 = vrot.lane.b32.xlu0 %v1669, 120
        %v3198 = vpop.permute.xlu0 %3197
        %3199 = vrot.lane.b32.xlu0 %v1678, 120
        %v3200 = vpop.permute.xlu0 %3199
        %3201 = vrot.lane.b32.xlu0 %v1687, 120
        %v3202 = vpop.permute.xlu0 %3201
        %3203 = vrot.lane.b32.xlu0 %v1696, 120
        %v3204 = vpop.permute.xlu0 %3203
        %v3206 = vsel %vm726, %v3190, 0
        %v3209 = vsel %vm726, %v3192, 0
        %v3212 = vsel %vm726, %v3194, 0
        %v3215 = vsel %vm726, %v3196, 0
        %v3218 = vsel %vm726, %v3198, 0
        %v3221 = vsel %vm726, %v3200, 0
        %v3224 = vsel %vm726, %v3202, 0
        %v3227 = vsel %vm726, %v3204, 0
        %v3230 = vsel %vm781, %v3188, 0
        %3232 = vmatprep.subr.bf16.mxu0 0
        %3233 = vmatpush1.bf16.msra.mxu0 0
        %3234 = vmatprep.subr.bf16.mxu0 0
        %3235 = vmatpush1.bf16.msra.mxu0 0
        %3236 = vmatprep.subr.bf16.mxu0 0
        %3237 = vmatpush1.bf16.msra.mxu0 0
        %3238 = vmatprep.subr.bf16.mxu0 0
        %3239 = vmatpush1.bf16.msra.mxu0 0
        %3240 = vmatprep.subr.bf16.mxu0 0
        %3241 = vmatpush1.bf16.msra.mxu0 0
        %3242 = vmatprep.subr.bf16.mxu0 0
        %3243 = vmatpush1.bf16.msra.mxu0 0
        %3244 = vmatprep.subr.bf16.mxu0 0
        %3245 = vmatpush1.bf16.msra.mxu0 0
        %3246 = vmatprep.subr.bf16.mxu0 0
        %3247 = vmatpush1.bf16.msra.mxu0 %v3230
        %3248 = vmatprep.subr.bf16.mxu0 0
        %3249 = vmatpush2.bf16.msra.mxu0 0
        %3250 = vmatprep.subr.bf16.mxu0 0
        %3251 = vmatpush2.bf16.msra.mxu0 0
        %3252 = vmatprep.subr.bf16.mxu0 0
        %3253 = vmatpush2.bf16.msra.mxu0 0
        %3254 = vmatprep.subr.bf16.mxu0 0
        %3255 = vmatpush2.bf16.msra.mxu0 0
        %3256 = vmatprep.subr.bf16.mxu0 0
        %3257 = vmatpush2.bf16.msra.mxu0 0
        %3258 = vmatprep.subr.bf16.mxu0 0
        %3259 = vmatpush2.bf16.msra.mxu0 0
        %3260 = vmatprep.subr.bf16.mxu0 0
        %3261 = vmatpush2.bf16.msra.mxu0 0
        %3262 = vmatprep.subr.bf16.mxu0 0
        %3263 = vmatpush2.bf16.msra.mxu0 0
        %3264 = vmatprep.mubr.bf16.mxu0 0
        %3265 = vmatmul.mubr.bf16.gmra.mxu0 %v3206
        %v3266 = vpop.f32.mrf.mxu0
        %v3267 = vadd.f32 0.0, %v3266
        %v3268 = vpop.f32.mrf.mxu0
        %v3269 = vpop.f32.mrf.mxu0
        %v3270 = vadd.f32 0.0, %v3269
        %v3271 = vpop.f32.mrf.mxu0
        %3272 = vmatprep.mubr.bf16.mxu0 0
        %3273 = vmatmul.mubr.bf16.gmra.mxu0 %v3209
        %v3274 = vpop.f32.mrf.mxu0
        %v3275 = vadd.f32 0.0, %v3274
        %v3276 = vpop.f32.mrf.mxu0
        %v3277 = vpop.f32.mrf.mxu0
        %v3278 = vadd.f32 0.0, %v3277
        %v3279 = vpop.f32.mrf.mxu0
        %3280 = vmatprep.mubr.bf16.mxu0 0
        %3281 = vmatmul.mubr.bf16.gmra.mxu0 %v3212
        %v3282 = vpop.f32.mrf.mxu0
        %v3283 = vadd.f32 0.0, %v3282
        %v3284 = vpop.f32.mrf.mxu0
        %v3285 = vpop.f32.mrf.mxu0
        %v3286 = vadd.f32 0.0, %v3285
        %v3287 = vpop.f32.mrf.mxu0
        %3288 = vmatprep.mubr.bf16.mxu0 0
        %3289 = vmatmul.mubr.bf16.gmra.mxu0 %v3215
        %v3290 = vpop.f32.mrf.mxu0
        %v3291 = vadd.f32 0.0, %v3290
        %v3292 = vpop.f32.mrf.mxu0
        %v3293 = vpop.f32.mrf.mxu0
        %v3294 = vadd.f32 0.0, %v3293
        %v3295 = vpop.f32.mrf.mxu0
        %3296 = vmatprep.mubr.bf16.mxu0 0
        %3297 = vmatmul.mubr.bf16.gmra.mxu0 %v3218
        %v3298 = vpop.f32.mrf.mxu0
        %v3299 = vadd.f32 0.0, %v3298
        %v3300 = vpop.f32.mrf.mxu0
        %v3301 = vpop.f32.mrf.mxu0
        %v3302 = vadd.f32 0.0, %v3301
        %v3303 = vpop.f32.mrf.mxu0
        %3304 = vmatprep.mubr.bf16.mxu0 0
        %3305 = vmatmul.mubr.bf16.gmra.mxu0 %v3221
        %v3306 = vpop.f32.mrf.mxu0
        %v3307 = vadd.f32 0.0, %v3306
        %v3308 = vpop.f32.mrf.mxu0
        %v3309 = vpop.f32.mrf.mxu0
        %v3310 = vadd.f32 0.0, %v3309
        %v3311 = vpop.f32.mrf.mxu0
        %3312 = vmatprep.mubr.bf16.mxu0 0
        %3313 = vmatmul.mubr.bf16.gmra.mxu0 %v3224
        %v3314 = vpop.f32.mrf.mxu0
        %v3315 = vadd.f32 0.0, %v3314
        %v3316 = vpop.f32.mrf.mxu0
        %v3317 = vpop.f32.mrf.mxu0
        %v3318 = vadd.f32 0.0, %v3317
        %v3319 = vpop.f32.mrf.mxu0
        %3320 = vmatprep.mubr.bf16.mxu0 0
        %3321 = vmatmul.mubr.bf16.gmra.mxu0 %v3227
        %v3322 = vpop.f32.mrf.mxu0
        %v3323 = vadd.f32 0.0, %v3322
        %v3324 = vpop.f32.mrf.mxu0
        %v3325 = vpop.f32.mrf.mxu0
        %v3326 = vadd.f32 0.0, %v3325
        %v3327 = vpop.f32.mrf.mxu0
        %3328 = vdwg.mxu0
        %v3329 = vadd.f32 %v3162, %v3267
        %v3330 = vadd.f32 %v3163, %v3270
        %v3331 = vadd.f32 %v3164, %v3275
        %v3332 = vadd.f32 %v3165, %v3278
        %v3333 = vadd.f32 %v3166, %v3283
        %v3334 = vadd.f32 %v3167, %v3286
        %v3335 = vadd.f32 %v3168, %v3291
        %v3336 = vadd.f32 %v3169, %v3294
        %v3337 = vadd.f32 %v3170, %v3299
        %v3338 = vadd.f32 %v3171, %v3302
        %v3339 = vadd.f32 %v3172, %v3307
        %v3340 = vadd.f32 %v3173, %v3310
        %v3341 = vadd.f32 %v3174, %v3315
        %v3342 = vadd.f32 %v3175, %v3318
        %v3343 = vadd.f32 %v3176, %v3323
        %v3344 = vadd.f32 %v3177, %v3326
        %vm3345 = vcmask 1045504
        %v3346 = vrot.slane %v2716, 2
        %v3347 = vrot.slane %v2717, 2
        %v3348 = vsel %vm3345, %v3346, %v3347
        %v3349 = vrot.slane %v1192, 2
        %v3350 = vrot.slane %v1193, 2
        %v3351 = vsel %vm3345, %v3349, %v3350
        %v3352 = vrot.slane %v1194, 2
        %v3353 = vrot.slane %v1195, 2
        %v3354 = vsel %vm3345, %v3352, %v3353
        %v3355 = vrot.slane %v1196, 2
        %v3356 = vrot.slane %v1197, 2
        %v3357 = vsel %vm3345, %v3355, %v3356
        %v3358 = vrot.slane %v1198, 2
        %v3359 = vrot.slane %v1199, 2
        %v3360 = vsel %vm3345, %v3358, %v3359
        %v3361 = vrot.slane %v1200, 2
        %v3362 = vrot.slane %v1201, 2
        %v3363 = vsel %vm3345, %v3361, %v3362
        %v3364 = vrot.slane %v1202, 2
        %v3365 = vrot.slane %v1203, 2
        %v3366 = vsel %vm3345, %v3364, %v3365
        %v3367 = vrot.slane %v1204, 2
        %v3368 = vrot.slane %v1205, 2
        %v3369 = vsel %vm3345, %v3367, %v3368
        %s3370 = scalar_lea.vmem %s7, 8
        %v3371 = vld [vmem:[%s3370] sm:$0x3]
        %3372 = vrot.lane.b32.xlu0 %v3348, 120
        %v3373 = vpop.permute.xlu0 %3372
        %3374 = vrot.lane.b32.xlu0 %v3351, 120
        %v3375 = vpop.permute.xlu0 %3374
        %3376 = vrot.lane.b32.xlu0 %v3354, 120
        %v3377 = vpop.permute.xlu0 %3376
        %3378 = vrot.lane.b32.xlu0 %v3357, 120
        %v3379 = vpop.permute.xlu0 %3378
        %3380 = vrot.lane.b32.xlu0 %v3360, 120
        %v3381 = vpop.permute.xlu0 %3380
        %3382 = vrot.lane.b32.xlu0 %v3363, 120
        %v3383 = vpop.permute.xlu0 %3382
        %3384 = vrot.lane.b32.xlu0 %v3366, 120
        %v3385 = vpop.permute.xlu0 %3384
        %3386 = vrot.lane.b32.xlu0 %v3369, 120
        %v3387 = vpop.permute.xlu0 %3386
        %v3389 = vsel %vm726, %v3373, 0
        %v3392 = vsel %vm726, %v3375, 0
        %v3395 = vsel %vm726, %v3377, 0
        %v3398 = vsel %vm726, %v3379, 0
        %v3401 = vsel %vm726, %v3381, 0
        %v3404 = vsel %vm726, %v3383, 0
        %v3407 = vsel %vm726, %v3385, 0
        %v3410 = vsel %vm726, %v3387, 0
        %v3413 = vsel %vm781, %v3371, 0
        %3415 = vmatprep.subr.bf16.mxu0 0
        %3416 = vmatpush1.bf16.msra.mxu0 0
        %3417 = vmatprep.subr.bf16.mxu0 0
        %3418 = vmatpush1.bf16.msra.mxu0 0
        %3419 = vmatprep.subr.bf16.mxu0 0
        %3420 = vmatpush1.bf16.msra.mxu0 0
        %3421 = vmatprep.subr.bf16.mxu0 0
        %3422 = vmatpush1.bf16.msra.mxu0 0
        %3423 = vmatprep.subr.bf16.mxu0 0
        %3424 = vmatpush1.bf16.msra.mxu0 0
        %3425 = vmatprep.subr.bf16.mxu0 0
        %3426 = vmatpush1.bf16.msra.mxu0 0
        %3427 = vmatprep.subr.bf16.mxu0 0
        %3428 = vmatpush1.bf16.msra.mxu0 0
        %3429 = vmatprep.subr.bf16.mxu0 0
        %3430 = vmatpush1.bf16.msra.mxu0 %v3413
        %3431 = vmatprep.subr.bf16.mxu0 0
        %3432 = vmatpush2.bf16.msra.mxu0 0
        %3433 = vmatprep.subr.bf16.mxu0 0
        %3434 = vmatpush2.bf16.msra.mxu0 0
        %3435 = vmatprep.subr.bf16.mxu0 0
        %3436 = vmatpush2.bf16.msra.mxu0 0
        %3437 = vmatprep.subr.bf16.mxu0 0
        %3438 = vmatpush2.bf16.msra.mxu0 0
        %3439 = vmatprep.subr.bf16.mxu0 0
        %3440 = vmatpush2.bf16.msra.mxu0 0
        %3441 = vmatprep.subr.bf16.mxu0 0
        %3442 = vmatpush2.bf16.msra.mxu0 0
        %3443 = vmatprep.subr.bf16.mxu0 0
        %3444 = vmatpush2.bf16.msra.mxu0 0
        %3445 = vmatprep.subr.bf16.mxu0 0
        %3446 = vmatpush2.bf16.msra.mxu0 0
        %3447 = vmatprep.mubr.bf16.mxu0 0
        %3448 = vmatmul.mubr.bf16.gmra.mxu0 %v3389
        %v3449 = vpop.f32.mrf.mxu0
        %v3450 = vadd.f32 0.0, %v3449
        %v3451 = vpop.f32.mrf.mxu0
        %v3452 = vpop.f32.mrf.mxu0
        %v3453 = vadd.f32 0.0, %v3452
        %v3454 = vpop.f32.mrf.mxu0
        %3455 = vmatprep.mubr.bf16.mxu0 0
        %3456 = vmatmul.mubr.bf16.gmra.mxu0 %v3392
        %v3457 = vpop.f32.mrf.mxu0
        %v3458 = vadd.f32 0.0, %v3457
        %v3459 = vpop.f32.mrf.mxu0
        %v3460 = vpop.f32.mrf.mxu0
        %v3461 = vadd.f32 0.0, %v3460
        %v3462 = vpop.f32.mrf.mxu0
        %3463 = vmatprep.mubr.bf16.mxu0 0
        %3464 = vmatmul.mubr.bf16.gmra.mxu0 %v3395
        %v3465 = vpop.f32.mrf.mxu0
        %v3466 = vadd.f32 0.0, %v3465
        %v3467 = vpop.f32.mrf.mxu0
        %v3468 = vpop.f32.mrf.mxu0
        %v3469 = vadd.f32 0.0, %v3468
        %v3470 = vpop.f32.mrf.mxu0
        %3471 = vmatprep.mubr.bf16.mxu0 0
        %3472 = vmatmul.mubr.bf16.gmra.mxu0 %v3398
        %v3473 = vpop.f32.mrf.mxu0
        %v3474 = vadd.f32 0.0, %v3473
        %v3475 = vpop.f32.mrf.mxu0
        %v3476 = vpop.f32.mrf.mxu0
        %v3477 = vadd.f32 0.0, %v3476
        %v3478 = vpop.f32.mrf.mxu0
        %3479 = vmatprep.mubr.bf16.mxu0 0
        %3480 = vmatmul.mubr.bf16.gmra.mxu0 %v3401
        %v3481 = vpop.f32.mrf.mxu0
        %v3482 = vadd.f32 0.0, %v3481
        %v3483 = vpop.f32.mrf.mxu0
        %v3484 = vpop.f32.mrf.mxu0
        %v3485 = vadd.f32 0.0, %v3484
        %v3486 = vpop.f32.mrf.mxu0
        %3487 = vmatprep.mubr.bf16.mxu0 0
        %3488 = vmatmul.mubr.bf16.gmra.mxu0 %v3404
        %v3489 = vpop.f32.mrf.mxu0
        %v3490 = vadd.f32 0.0, %v3489
        %v3491 = vpop.f32.mrf.mxu0
        %v3492 = vpop.f32.mrf.mxu0
        %v3493 = vadd.f32 0.0, %v3492
        %v3494 = vpop.f32.mrf.mxu0
        %3495 = vmatprep.mubr.bf16.mxu0 0
        %3496 = vmatmul.mubr.bf16.gmra.mxu0 %v3407
        %v3497 = vpop.f32.mrf.mxu0
        %v3498 = vadd.f32 0.0, %v3497
        %v3499 = vpop.f32.mrf.mxu0
        %v3500 = vpop.f32.mrf.mxu0
        %v3501 = vadd.f32 0.0, %v3500
        %v3502 = vpop.f32.mrf.mxu0
        %3503 = vmatprep.mubr.bf16.mxu0 0
        %3504 = vmatmul.mubr.bf16.gmra.mxu0 %v3410
        %v3505 = vpop.f32.mrf.mxu0
        %v3506 = vadd.f32 0.0, %v3505
        %v3507 = vpop.f32.mrf.mxu0
        %v3508 = vpop.f32.mrf.mxu0
        %v3509 = vadd.f32 0.0, %v3508
        %v3510 = vpop.f32.mrf.mxu0
        %3511 = vdwg.mxu0
        %v3512 = vadd.f32 %v3329, %v3450
        %v3513 = vadd.f32 %v3330, %v3453
        %v3514 = vadd.f32 %v3331, %v3458
        %v3515 = vadd.f32 %v3332, %v3461
        %v3516 = vadd.f32 %v3333, %v3466
        %v3517 = vadd.f32 %v3334, %v3469
        %v3518 = vadd.f32 %v3335, %v3474
        %v3519 = vadd.f32 %v3336, %v3477
        %v3520 = vadd.f32 %v3337, %v3482
        %v3521 = vadd.f32 %v3338, %v3485
        %v3522 = vadd.f32 %v3339, %v3490
        %v3523 = vadd.f32 %v3340, %v3493
        %v3524 = vadd.f32 %v3341, %v3498
        %v3525 = vadd.f32 %v3342, %v3501
        %v3526 = vadd.f32 %v3343, %v3506
        %v3527 = vadd.f32 %v3344, %v3509
        %s3528 = scalar_lea.vmem %s7, 10
        %v3529 = vld [vmem:[%s3528] sm:$0x3]
        %3530 = vrot.lane.b32.xlu0 %v1206, 120
        %v3531 = vpop.permute.xlu0 %3530
        %v3533 = vsel %vm726, %v3531, 0
        %v3536 = vsel %vm781, %v3529, 0
        %3538 = vmatprep.subr.bf16.mxu0 0
        %3539 = vmatpush1.bf16.msra.mxu0 0
        %3540 = vmatprep.subr.bf16.mxu0 0
        %3541 = vmatpush1.bf16.msra.mxu0 0
        %3542 = vmatprep.subr.bf16.mxu0 0
        %3543 = vmatpush1.bf16.msra.mxu0 0
        %3544 = vmatprep.subr.bf16.mxu0 0
        %3545 = vmatpush1.bf16.msra.mxu0 0
        %3546 = vmatprep.subr.bf16.mxu0 0
        %3547 = vmatpush1.bf16.msra.mxu0 0
        %3548 = vmatprep.subr.bf16.mxu0 0
        %3549 = vmatpush1.bf16.msra.mxu0 0
        %3550 = vmatprep.subr.bf16.mxu0 0
        %3551 = vmatpush1.bf16.msra.mxu0 0
        %3552 = vmatprep.subr.bf16.mxu0 0
        %3553 = vmatpush1.bf16.msra.mxu0 %v3536
        %3554 = vmatprep.subr.bf16.mxu0 0
        %3555 = vmatpush2.bf16.msra.mxu0 0
        %3556 = vmatprep.subr.bf16.mxu0 0
        %3557 = vmatpush2.bf16.msra.mxu0 0
        %3558 = vmatprep.subr.bf16.mxu0 0
        %3559 = vmatpush2.bf16.msra.mxu0 0
        %3560 = vmatprep.subr.bf16.mxu0 0
        %3561 = vmatpush2.bf16.msra.mxu0 0
        %3562 = vmatprep.subr.bf16.mxu0 0
        %3563 = vmatpush2.bf16.msra.mxu0 0
        %3564 = vmatprep.subr.bf16.mxu0 0
        %3565 = vmatpush2.bf16.msra.mxu0 0
        %3566 = vmatprep.subr.bf16.mxu0 0
        %3567 = vmatpush2.bf16.msra.mxu0 0
        %3568 = vmatprep.subr.bf16.mxu0 0
        %3569 = vmatpush2.bf16.msra.mxu0 0
        %3570 = vmatprep.mubr.bf16.mxu0 0
        %3571 = vmatmul.mubr.bf16.gmra.mxu0 %v2896
        %v3572 = vpop.f32.mrf.mxu0
        %v3573 = vadd.f32 0.0, %v3572
        %v3574 = vpop.f32.mrf.mxu0
        %v3575 = vpop.f32.mrf.mxu0
        %v3576 = vadd.f32 0.0, %v3575
        %v3577 = vpop.f32.mrf.mxu0
        %3578 = vmatprep.mubr.bf16.mxu0 0
        %3579 = vmatmul.mubr.bf16.gmra.mxu0 %v2899
        %v3580 = vpop.f32.mrf.mxu0
        %v3581 = vadd.f32 0.0, %v3580
        %v3582 = vpop.f32.mrf.mxu0
        %v3583 = vpop.f32.mrf.mxu0
        %v3584 = vadd.f32 0.0, %v3583
        %v3585 = vpop.f32.mrf.mxu0
        %3586 = vmatprep.mubr.bf16.mxu0 0
        %3587 = vmatmul.mubr.bf16.gmra.mxu0 %v2902
        %v3588 = vpop.f32.mrf.mxu0
        %v3589 = vadd.f32 0.0, %v3588
        %v3590 = vpop.f32.mrf.mxu0
        %v3591 = vpop.f32.mrf.mxu0
        %v3592 = vadd.f32 0.0, %v3591
        %v3593 = vpop.f32.mrf.mxu0
        %3594 = vmatprep.mubr.bf16.mxu0 0
        %3595 = vmatmul.mubr.bf16.gmra.mxu0 %v2905
        %v3596 = vpop.f32.mrf.mxu0
        %v3597 = vadd.f32 0.0, %v3596
        %v3598 = vpop.f32.mrf.mxu0
        %v3599 = vpop.f32.mrf.mxu0
        %v3600 = vadd.f32 0.0, %v3599
        %v3601 = vpop.f32.mrf.mxu0
        %3602 = vmatprep.mubr.bf16.mxu0 0
        %3603 = vmatmul.mubr.bf16.gmra.mxu0 %v2908
        %v3604 = vpop.f32.mrf.mxu0
        %v3605 = vadd.f32 0.0, %v3604
        %v3606 = vpop.f32.mrf.mxu0
        %v3607 = vpop.f32.mrf.mxu0
        %v3608 = vadd.f32 0.0, %v3607
        %v3609 = vpop.f32.mrf.mxu0
        %3610 = vmatprep.mubr.bf16.mxu0 0
        %3611 = vmatmul.mubr.bf16.gmra.mxu0 %v2911
        %v3612 = vpop.f32.mrf.mxu0
        %v3613 = vadd.f32 0.0, %v3612
        %v3614 = vpop.f32.mrf.mxu0
        %v3615 = vpop.f32.mrf.mxu0
        %v3616 = vadd.f32 0.0, %v3615
        %v3617 = vpop.f32.mrf.mxu0
        %3618 = vmatprep.mubr.bf16.mxu0 0
        %3619 = vmatmul.mubr.bf16.gmra.mxu0 %v2914
        %v3620 = vpop.f32.mrf.mxu0
        %v3621 = vadd.f32 0.0, %v3620
        %v3622 = vpop.f32.mrf.mxu0
        %v3623 = vpop.f32.mrf.mxu0
        %v3624 = vadd.f32 0.0, %v3623
        %v3625 = vpop.f32.mrf.mxu0
        %3626 = vmatprep.mubr.bf16.mxu0 0
        %3627 = vmatmul.mubr.bf16.gmra.mxu0 %v3533
        %v3628 = vpop.f32.mrf.mxu0
        %v3629 = vadd.f32 0.0, %v3628
        %v3630 = vpop.f32.mrf.mxu0
        %v3631 = vpop.f32.mrf.mxu0
        %v3632 = vadd.f32 0.0, %v3631
        %v3633 = vpop.f32.mrf.mxu0
        %3634 = vdwg.mxu0
        %v3635 = vadd.f32 %v3512, %v3573
        %v3636 = vadd.f32 %v3513, %v3576
        %v3637 = vadd.f32 %v3514, %v3581
        %v3638 = vadd.f32 %v3515, %v3584
        %v3639 = vadd.f32 %v3516, %v3589
        %v3640 = vadd.f32 %v3517, %v3592
        %v3641 = vadd.f32 %v3518, %v3597
        %v3642 = vadd.f32 %v3519, %v3600
        %v3643 = vadd.f32 %v3520, %v3605
        %v3644 = vadd.f32 %v3521, %v3608
        %v3645 = vadd.f32 %v3522, %v3613
        %v3646 = vadd.f32 %v3523, %v3616
        %v3647 = vadd.f32 %v3524, %v3621
        %v3648 = vadd.f32 %v3525, %v3624
        %v3649 = vadd.f32 %v3526, %v3629
        %v3650 = vadd.f32 %v3527, %v3632
        %s3651 = scalar_lea.vmem %s7, 12
        %v3652 = vld [vmem:[%s3651] sm:$0x3]
        %3653 = vrot.lane.b32.xlu0 %v1308, 120
        %v3654 = vpop.permute.xlu0 %3653
        %v3656 = vsel %vm726, %v3654, 0
        %v3659 = vsel %vm781, %v3652, 0
        %3661 = vmatprep.subr.bf16.mxu0 0
        %3662 = vmatpush1.bf16.msra.mxu0 0
        %3663 = vmatprep.subr.bf16.mxu0 0
        %3664 = vmatpush1.bf16.msra.mxu0 0
        %3665 = vmatprep.subr.bf16.mxu0 0
        %3666 = vmatpush1.bf16.msra.mxu0 0
        %3667 = vmatprep.subr.bf16.mxu0 0
        %3668 = vmatpush1.bf16.msra.mxu0 0
        %3669 = vmatprep.subr.bf16.mxu0 0
        %3670 = vmatpush1.bf16.msra.mxu0 0
        %3671 = vmatprep.subr.bf16.mxu0 0
        %3672 = vmatpush1.bf16.msra.mxu0 0
        %3673 = vmatprep.subr.bf16.mxu0 0
        %3674 = vmatpush1.bf16.msra.mxu0 0
        %3675 = vmatprep.subr.bf16.mxu0 0
        %3676 = vmatpush1.bf16.msra.mxu0 %v3659
        %3677 = vmatprep.subr.bf16.mxu0 0
        %3678 = vmatpush2.bf16.msra.mxu0 0
        %3679 = vmatprep.subr.bf16.mxu0 0
        %3680 = vmatpush2.bf16.msra.mxu0 0
        %3681 = vmatprep.subr.bf16.mxu0 0
        %3682 = vmatpush2.bf16.msra.mxu0 0
        %3683 = vmatprep.subr.bf16.mxu0 0
        %3684 = vmatpush2.bf16.msra.mxu0 0
        %3685 = vmatprep.subr.bf16.mxu0 0
        %3686 = vmatpush2.bf16.msra.mxu0 0
        %3687 = vmatprep.subr.bf16.mxu0 0
        %3688 = vmatpush2.bf16.msra.mxu0 0
        %3689 = vmatprep.subr.bf16.mxu0 0
        %3690 = vmatpush2.bf16.msra.mxu0 0
        %3691 = vmatprep.subr.bf16.mxu0 0
        %3692 = vmatpush2.bf16.msra.mxu0 0
        %3693 = vmatprep.mubr.bf16.mxu0 0
        %3694 = vmatmul.mubr.bf16.gmra.mxu0 %v2755
        %v3695 = vpop.f32.mrf.mxu0
        %v3696 = vadd.f32 0.0, %v3695
        %v3697 = vpop.f32.mrf.mxu0
        %v3698 = vpop.f32.mrf.mxu0
        %v3699 = vadd.f32 0.0, %v3698
        %v3700 = vpop.f32.mrf.mxu0
        %3701 = vmatprep.mubr.bf16.mxu0 0
        %3702 = vmatmul.mubr.bf16.gmra.mxu0 %v2758
        %v3703 = vpop.f32.mrf.mxu0
        %v3704 = vadd.f32 0.0, %v3703
        %v3705 = vpop.f32.mrf.mxu0
        %v3706 = vpop.f32.mrf.mxu0
        %v3707 = vadd.f32 0.0, %v3706
        %v3708 = vpop.f32.mrf.mxu0
        %3709 = vmatprep.mubr.bf16.mxu0 0
        %3710 = vmatmul.mubr.bf16.gmra.mxu0 %v2761
        %v3711 = vpop.f32.mrf.mxu0
        %v3712 = vadd.f32 0.0, %v3711
        %v3713 = vpop.f32.mrf.mxu0
        %v3714 = vpop.f32.mrf.mxu0
        %v3715 = vadd.f32 0.0, %v3714
        %v3716 = vpop.f32.mrf.mxu0
        %3717 = vmatprep.mubr.bf16.mxu0 0
        %3718 = vmatmul.mubr.bf16.gmra.mxu0 %v2764
        %v3719 = vpop.f32.mrf.mxu0
        %v3720 = vadd.f32 0.0, %v3719
        %v3721 = vpop.f32.mrf.mxu0
        %v3722 = vpop.f32.mrf.mxu0
        %v3723 = vadd.f32 0.0, %v3722
        %v3724 = vpop.f32.mrf.mxu0
        %3725 = vmatprep.mubr.bf16.mxu0 0
        %3726 = vmatmul.mubr.bf16.gmra.mxu0 %v2767
        %v3727 = vpop.f32.mrf.mxu0
        %v3728 = vadd.f32 0.0, %v3727
        %v3729 = vpop.f32.mrf.mxu0
        %v3730 = vpop.f32.mrf.mxu0
        %v3731 = vadd.f32 0.0, %v3730
        %v3732 = vpop.f32.mrf.mxu0
        %3733 = vmatprep.mubr.bf16.mxu0 0
        %3734 = vmatmul.mubr.bf16.gmra.mxu0 %v2770
        %v3735 = vpop.f32.mrf.mxu0
        %v3736 = vadd.f32 0.0, %v3735
        %v3737 = vpop.f32.mrf.mxu0
        %v3738 = vpop.f32.mrf.mxu0
        %v3739 = vadd.f32 0.0, %v3738
        %v3740 = vpop.f32.mrf.mxu0
        %3741 = vmatprep.mubr.bf16.mxu0 0
        %3742 = vmatmul.mubr.bf16.gmra.mxu0 %v2773
        %v3743 = vpop.f32.mrf.mxu0
        %v3744 = vadd.f32 0.0, %v3743
        %v3745 = vpop.f32.mrf.mxu0
        %v3746 = vpop.f32.mrf.mxu0
        %v3747 = vadd.f32 0.0, %v3746
        %v3748 = vpop.f32.mrf.mxu0
        %3749 = vmatprep.mubr.bf16.mxu0 0
        %3750 = vmatmul.mubr.bf16.gmra.mxu0 %v3656
        %v3751 = vpop.f32.mrf.mxu0
        %v3752 = vadd.f32 0.0, %v3751
        %v3753 = vpop.f32.mrf.mxu0
        %v3754 = vpop.f32.mrf.mxu0
        %v3755 = vadd.f32 0.0, %v3754
        %v3756 = vpop.f32.mrf.mxu0
        %3757 = vdwg.mxu0
        %v3758 = vadd.f32 %v3635, %v3696
        %v3759 = vadd.f32 %v3636, %v3699
        %v3760 = vadd.f32 %v3637, %v3704
        %v3761 = vadd.f32 %v3638, %v3707
        %v3762 = vadd.f32 %v3639, %v3712
        %v3763 = vadd.f32 %v3640, %v3715
        %v3764 = vadd.f32 %v3641, %v3720
        %v3765 = vadd.f32 %v3642, %v3723
        %v3766 = vadd.f32 %v3643, %v3728
        %v3767 = vadd.f32 %v3644, %v3731
        %v3768 = vadd.f32 %v3645, %v3736
        %v3769 = vadd.f32 %v3646, %v3739
        %v3770 = vadd.f32 %v3647, %v3744
        %v3771 = vadd.f32 %v3648, %v3747
        %v3772 = vadd.f32 %v3649, %v3752
        %v3773 = vadd.f32 %v3650, %v3755
        %s3774 = scalar_lea.vmem %s7, 14
        %v3775 = vld [vmem:[%s3774] sm:$0x3]
        %3776 = vrot.lane.b32.xlu0 %v1350, 120
        %v3777 = vpop.permute.xlu0 %3776
        %v3779 = vsel %vm726, %v3777, 0
        %v3782 = vsel %vm781, %v3775, 0
        %3784 = vmatprep.subr.bf16.mxu0 0
        %3785 = vmatpush1.bf16.msra.mxu0 0
        %3786 = vmatprep.subr.bf16.mxu0 0
        %3787 = vmatpush1.bf16.msra.mxu0 0
        %3788 = vmatprep.subr.bf16.mxu0 0
        %3789 = vmatpush1.bf16.msra.mxu0 0
        %3790 = vmatprep.subr.bf16.mxu0 0
        %3791 = vmatpush1.bf16.msra.mxu0 0
        %3792 = vmatprep.subr.bf16.mxu0 0
        %3793 = vmatpush1.bf16.msra.mxu0 0
        %3794 = vmatprep.subr.bf16.mxu0 0
        %3795 = vmatpush1.bf16.msra.mxu0 0
        %3796 = vmatprep.subr.bf16.mxu0 0
        %3797 = vmatpush1.bf16.msra.mxu0 0
        %3798 = vmatprep.subr.bf16.mxu0 0
        %3799 = vmatpush1.bf16.msra.mxu0 %v3782
        %3800 = vmatprep.subr.bf16.mxu0 0
        %3801 = vmatpush2.bf16.msra.mxu0 0
        %3802 = vmatprep.subr.bf16.mxu0 0
        %3803 = vmatpush2.bf16.msra.mxu0 0
        %3804 = vmatprep.subr.bf16.mxu0 0
        %3805 = vmatpush2.bf16.msra.mxu0 0
        %3806 = vmatprep.subr.bf16.mxu0 0
        %3807 = vmatpush2.bf16.msra.mxu0 0
        %3808 = vmatprep.subr.bf16.mxu0 0
        %3809 = vmatpush2.bf16.msra.mxu0 0
        %3810 = vmatprep.subr.bf16.mxu0 0
        %3811 = vmatpush2.bf16.msra.mxu0 0
        %3812 = vmatprep.subr.bf16.mxu0 0
        %3813 = vmatpush2.bf16.msra.mxu0 0
        %3814 = vmatprep.subr.bf16.mxu0 0
        %3815 = vmatpush2.bf16.msra.mxu0 0
        %3816 = vmatprep.mubr.bf16.mxu0 0
        %3817 = vmatmul.mubr.bf16.gmra.mxu0 %v3042
        %v3818 = vpop.f32.mrf.mxu0
        %v3819 = vadd.f32 0.0, %v3818
        %v3820 = vpop.f32.mrf.mxu0
        %v3821 = vpop.f32.mrf.mxu0
        %v3822 = vadd.f32 0.0, %v3821
        %v3823 = vpop.f32.mrf.mxu0
        %3824 = vmatprep.mubr.bf16.mxu0 0
        %3825 = vmatmul.mubr.bf16.gmra.mxu0 %v3045
        %v3826 = vpop.f32.mrf.mxu0
        %v3827 = vadd.f32 0.0, %v3826
        %v3828 = vpop.f32.mrf.mxu0
        %v3829 = vpop.f32.mrf.mxu0
        %v3830 = vadd.f32 0.0, %v3829
        %v3831 = vpop.f32.mrf.mxu0
        %3832 = vmatprep.mubr.bf16.mxu0 0
        %3833 = vmatmul.mubr.bf16.gmra.mxu0 %v3048
        %v3834 = vpop.f32.mrf.mxu0
        %v3835 = vadd.f32 0.0, %v3834
        %v3836 = vpop.f32.mrf.mxu0
        %v3837 = vpop.f32.mrf.mxu0
        %v3838 = vadd.f32 0.0, %v3837
        %v3839 = vpop.f32.mrf.mxu0
        %3840 = vmatprep.mubr.bf16.mxu0 0
        %3841 = vmatmul.mubr.bf16.gmra.mxu0 %v3051
        %v3842 = vpop.f32.mrf.mxu0
        %v3843 = vadd.f32 0.0, %v3842
        %v3844 = vpop.f32.mrf.mxu0
        %v3845 = vpop.f32.mrf.mxu0
        %v3846 = vadd.f32 0.0, %v3845
        %v3847 = vpop.f32.mrf.mxu0
        %3848 = vmatprep.mubr.bf16.mxu0 0
        %3849 = vmatmul.mubr.bf16.gmra.mxu0 %v3054
        %v3850 = vpop.f32.mrf.mxu0
        %v3851 = vadd.f32 0.0, %v3850
        %v3852 = vpop.f32.mrf.mxu0
        %v3853 = vpop.f32.mrf.mxu0
        %v3854 = vadd.f32 0.0, %v3853
        %v3855 = vpop.f32.mrf.mxu0
        %3856 = vmatprep.mubr.bf16.mxu0 0
        %3857 = vmatmul.mubr.bf16.gmra.mxu0 %v3057
        %v3858 = vpop.f32.mrf.mxu0
        %v3859 = vadd.f32 0.0, %v3858
        %v3860 = vpop.f32.mrf.mxu0
        %v3861 = vpop.f32.mrf.mxu0
        %v3862 = vadd.f32 0.0, %v3861
        %v3863 = vpop.f32.mrf.mxu0
        %3864 = vmatprep.mubr.bf16.mxu0 0
        %3865 = vmatmul.mubr.bf16.gmra.mxu0 %v3060
        %v3866 = vpop.f32.mrf.mxu0
        %v3867 = vadd.f32 0.0, %v3866
        %v3868 = vpop.f32.mrf.mxu0
        %v3869 = vpop.f32.mrf.mxu0
        %v3870 = vadd.f32 0.0, %v3869
        %v3871 = vpop.f32.mrf.mxu0
        %3872 = vmatprep.mubr.bf16.mxu0 0
        %3873 = vmatmul.mubr.bf16.gmra.mxu0 %v3779
        %v3874 = vpop.f32.mrf.mxu0
        %v3875 = vadd.f32 0.0, %v3874
        %v3876 = vpop.f32.mrf.mxu0
        %v3877 = vpop.f32.mrf.mxu0
        %v3878 = vadd.f32 0.0, %v3877
        %v3879 = vpop.f32.mrf.mxu0
        %3880 = vdwg.mxu0
        %v3881 = vadd.f32 %v3758, %v3819
        %v3882 = vadd.f32 %v3759, %v3822
        %v3883 = vadd.f32 %v3760, %v3827
        %v3884 = vadd.f32 %v3761, %v3830
        %v3885 = vadd.f32 %v3762, %v3835
        %v3886 = vadd.f32 %v3763, %v3838
        %v3887 = vadd.f32 %v3764, %v3843
        %v3888 = vadd.f32 %v3765, %v3846
        %v3889 = vadd.f32 %v3766, %v3851
        %v3890 = vadd.f32 %v3767, %v3854
        %v3891 = vadd.f32 %v3768, %v3859
        %v3892 = vadd.f32 %v3769, %v3862
        %v3893 = vadd.f32 %v3770, %v3867
        %v3894 = vadd.f32 %v3771, %v3870
        %v3895 = vadd.f32 %v3772, %v3875
        %v3896 = vadd.f32 %v3773, %v3878
        %s3897 = scalar_lea.vmem %s7, 16
        %v3898 = vld [vmem:[%s3897] sm:$0x3]
        %3899 = vrot.lane.b32.xlu0 %v1705, 120
        %v3900 = vpop.permute.xlu0 %3899
        %v3902 = vsel %vm726, %v3900, 0
        %v3905 = vsel %vm781, %v3898, 0
        %3907 = vmatprep.subr.bf16.mxu0 0
        %3908 = vmatpush1.bf16.msra.mxu0 0
        %3909 = vmatprep.subr.bf16.mxu0 0
        %3910 = vmatpush1.bf16.msra.mxu0 0
        %3911 = vmatprep.subr.bf16.mxu0 0
        %3912 = vmatpush1.bf16.msra.mxu0 0
        %3913 = vmatprep.subr.bf16.mxu0 0
        %3914 = vmatpush1.bf16.msra.mxu0 0
        %3915 = vmatprep.subr.bf16.mxu0 0
        %3916 = vmatpush1.bf16.msra.mxu0 0
        %3917 = vmatprep.subr.bf16.mxu0 0
        %3918 = vmatpush1.bf16.msra.mxu0 0
        %3919 = vmatprep.subr.bf16.mxu0 0
        %3920 = vmatpush1.bf16.msra.mxu0 0
        %3921 = vmatprep.subr.bf16.mxu0 0
        %3922 = vmatpush1.bf16.msra.mxu0 %v3905
        %3923 = vmatprep.subr.bf16.mxu0 0
        %3924 = vmatpush2.bf16.msra.mxu0 0
        %3925 = vmatprep.subr.bf16.mxu0 0
        %3926 = vmatpush2.bf16.msra.mxu0 0
        %3927 = vmatprep.subr.bf16.mxu0 0
        %3928 = vmatpush2.bf16.msra.mxu0 0
        %3929 = vmatprep.subr.bf16.mxu0 0
        %3930 = vmatpush2.bf16.msra.mxu0 0
        %3931 = vmatprep.subr.bf16.mxu0 0
        %3932 = vmatpush2.bf16.msra.mxu0 0
        %3933 = vmatprep.subr.bf16.mxu0 0
        %3934 = vmatpush2.bf16.msra.mxu0 0
        %3935 = vmatprep.subr.bf16.mxu0 0
        %3936 = vmatpush2.bf16.msra.mxu0 0
        %3937 = vmatprep.subr.bf16.mxu0 0
        %3938 = vmatpush2.bf16.msra.mxu0 0
        %3939 = vmatprep.mubr.bf16.mxu0 0
        %3940 = vmatmul.mubr.bf16.gmra.mxu0 %v3209
        %v3941 = vpop.f32.mrf.mxu0
        %v3942 = vadd.f32 0.0, %v3941
        %v3943 = vpop.f32.mrf.mxu0
        %v3944 = vpop.f32.mrf.mxu0
        %v3945 = vadd.f32 0.0, %v3944
        %v3946 = vpop.f32.mrf.mxu0
        %3947 = vmatprep.mubr.bf16.mxu0 0
        %3948 = vmatmul.mubr.bf16.gmra.mxu0 %v3212
        %v3949 = vpop.f32.mrf.mxu0
        %v3950 = vadd.f32 0.0, %v3949
        %v3951 = vpop.f32.mrf.mxu0
        %v3952 = vpop.f32.mrf.mxu0
        %v3953 = vadd.f32 0.0, %v3952
        %v3954 = vpop.f32.mrf.mxu0
        %3955 = vmatprep.mubr.bf16.mxu0 0
        %3956 = vmatmul.mubr.bf16.gmra.mxu0 %v3215
        %v3957 = vpop.f32.mrf.mxu0
        %v3958 = vadd.f32 0.0, %v3957
        %v3959 = vpop.f32.mrf.mxu0
        %v3960 = vpop.f32.mrf.mxu0
        %v3961 = vadd.f32 0.0, %v3960
        %v3962 = vpop.f32.mrf.mxu0
        %3963 = vmatprep.mubr.bf16.mxu0 0
        %3964 = vmatmul.mubr.bf16.gmra.mxu0 %v3218
        %v3965 = vpop.f32.mrf.mxu0
        %v3966 = vadd.f32 0.0, %v3965
        %v3967 = vpop.f32.mrf.mxu0
        %v3968 = vpop.f32.mrf.mxu0
        %v3969 = vadd.f32 0.0, %v3968
        %v3970 = vpop.f32.mrf.mxu0
        %3971 = vmatprep.mubr.bf16.mxu0 0
        %3972 = vmatmul.mubr.bf16.gmra.mxu0 %v3221
        %v3973 = vpop.f32.mrf.mxu0
        %v3974 = vadd.f32 0.0, %v3973
        %v3975 = vpop.f32.mrf.mxu0
        %v3976 = vpop.f32.mrf.mxu0
        %v3977 = vadd.f32 0.0, %v3976
        %v3978 = vpop.f32.mrf.mxu0
        %3979 = vmatprep.mubr.bf16.mxu0 0
        %3980 = vmatmul.mubr.bf16.gmra.mxu0 %v3224
        %v3981 = vpop.f32.mrf.mxu0
        %v3982 = vadd.f32 0.0, %v3981
        %v3983 = vpop.f32.mrf.mxu0
        %v3984 = vpop.f32.mrf.mxu0
        %v3985 = vadd.f32 0.0, %v3984
        %v3986 = vpop.f32.mrf.mxu0
        %3987 = vmatprep.mubr.bf16.mxu0 0
        %3988 = vmatmul.mubr.bf16.gmra.mxu0 %v3227
        %v3989 = vpop.f32.mrf.mxu0
        %v3990 = vadd.f32 0.0, %v3989
        %v3991 = vpop.f32.mrf.mxu0
        %v3992 = vpop.f32.mrf.mxu0
        %v3993 = vadd.f32 0.0, %v3992
        %v3994 = vpop.f32.mrf.mxu0
        %3995 = vmatprep.mubr.bf16.mxu0 0
        %3996 = vmatmul.mubr.bf16.gmra.mxu0 %v3902
        %v3997 = vpop.f32.mrf.mxu0
        %v3998 = vadd.f32 0.0, %v3997
        %v3999 = vpop.f32.mrf.mxu0
        %v4000 = vpop.f32.mrf.mxu0
        %v4001 = vadd.f32 0.0, %v4000
        %v4002 = vpop.f32.mrf.mxu0
        %4003 = vdwg.mxu0
        %v4004 = vadd.f32 %v3881, %v3942
        %v4005 = vadd.f32 %v3882, %v3945
        %v4006 = vadd.f32 %v3883, %v3950
        %v4007 = vadd.f32 %v3884, %v3953
        %v4008 = vadd.f32 %v3885, %v3958
        %v4009 = vadd.f32 %v3886, %v3961
        %v4010 = vadd.f32 %v3887, %v3966
        %v4011 = vadd.f32 %v3888, %v3969
        %v4012 = vadd.f32 %v3889, %v3974
        %v4013 = vadd.f32 %v3890, %v3977
        %v4014 = vadd.f32 %v3891, %v3982
        %v4015 = vadd.f32 %v3892, %v3985
        %v4016 = vadd.f32 %v3893, %v3990
        %v4017 = vadd.f32 %v3894, %v3993
        %v4018 = vadd.f32 %v3895, %v3998
        %v4019 = vadd.f32 %v3896, %v4001
        %v4020 = vrot.slane %v1206, 2
        %v4021 = vrot.slane %v1207, 2
        %v4022 = vsel %vm3345, %v4020, %v4021
        %s4023 = scalar_lea.vmem %s7, 18
        %v4024 = vld [vmem:[%s4023] sm:$0x3]
        %4025 = vrot.lane.b32.xlu0 %v4022, 120
        %v4026 = vpop.permute.xlu0 %4025
        %v4028 = vsel %vm726, %v4026, 0
        %v4031 = vsel %vm781, %v4024, 0
        %4033 = vmatprep.subr.bf16.mxu0 0
        %4034 = vmatpush1.bf16.msra.mxu0 0
        %4035 = vmatprep.subr.bf16.mxu0 0
        %4036 = vmatpush1.bf16.msra.mxu0 0
        %4037 = vmatprep.subr.bf16.mxu0 0
        %4038 = vmatpush1.bf16.msra.mxu0 0
        %4039 = vmatprep.subr.bf16.mxu0 0
        %4040 = vmatpush1.bf16.msra.mxu0 0
        %4041 = vmatprep.subr.bf16.mxu0 0
        %4042 = vmatpush1.bf16.msra.mxu0 0
        %4043 = vmatprep.subr.bf16.mxu0 0
        %4044 = vmatpush1.bf16.msra.mxu0 0
        %4045 = vmatprep.subr.bf16.mxu0 0
        %4046 = vmatpush1.bf16.msra.mxu0 0
        %4047 = vmatprep.subr.bf16.mxu0 0
        %4048 = vmatpush1.bf16.msra.mxu0 %v4031
        %4049 = vmatprep.subr.bf16.mxu0 0
        %4050 = vmatpush2.bf16.msra.mxu0 0
        %4051 = vmatprep.subr.bf16.mxu0 0
        %4052 = vmatpush2.bf16.msra.mxu0 0
        %4053 = vmatprep.subr.bf16.mxu0 0
        %4054 = vmatpush2.bf16.msra.mxu0 0
        %4055 = vmatprep.subr.bf16.mxu0 0
        %4056 = vmatpush2.bf16.msra.mxu0 0
        %4057 = vmatprep.subr.bf16.mxu0 0
        %4058 = vmatpush2.bf16.msra.mxu0 0
        %4059 = vmatprep.subr.bf16.mxu0 0
        %4060 = vmatpush2.bf16.msra.mxu0 0
        %4061 = vmatprep.subr.bf16.mxu0 0
        %4062 = vmatpush2.bf16.msra.mxu0 0
        %4063 = vmatprep.subr.bf16.mxu0 0
        %4064 = vmatpush2.bf16.msra.mxu0 0
        %4065 = vmatprep.mubr.bf16.mxu0 0
        %4066 = vmatmul.mubr.bf16.gmra.mxu0 %v3392
        %v4067 = vpop.f32.mrf.mxu0
        %v4068 = vadd.f32 0.0, %v4067
        %v4069 = vpop.f32.mrf.mxu0
        %v4070 = vpop.f32.mrf.mxu0
        %v4071 = vadd.f32 0.0, %v4070
        %v4072 = vpop.f32.mrf.mxu0
        %4073 = vmatprep.mubr.bf16.mxu0 0
        %4074 = vmatmul.mubr.bf16.gmra.mxu0 %v3395
        %v4075 = vpop.f32.mrf.mxu0
        %v4076 = vadd.f32 0.0, %v4075
        %v4077 = vpop.f32.mrf.mxu0
        %v4078 = vpop.f32.mrf.mxu0
        %v4079 = vadd.f32 0.0, %v4078
        %v4080 = vpop.f32.mrf.mxu0
        %4081 = vmatprep.mubr.bf16.mxu0 0
        %4082 = vmatmul.mubr.bf16.gmra.mxu0 %v3398
        %v4083 = vpop.f32.mrf.mxu0
        %v4084 = vadd.f32 0.0, %v4083
        %v4085 = vpop.f32.mrf.mxu0
        %v4086 = vpop.f32.mrf.mxu0
        %v4087 = vadd.f32 0.0, %v4086
        %v4088 = vpop.f32.mrf.mxu0
        %4089 = vmatprep.mubr.bf16.mxu0 0
        %4090 = vmatmul.mubr.bf16.gmra.mxu0 %v3401
        %v4091 = vpop.f32.mrf.mxu0
        %v4092 = vadd.f32 0.0, %v4091
        %v4093 = vpop.f32.mrf.mxu0
        %v4094 = vpop.f32.mrf.mxu0
        %v4095 = vadd.f32 0.0, %v4094
        %v4096 = vpop.f32.mrf.mxu0
        %4097 = vmatprep.mubr.bf16.mxu0 0
        %4098 = vmatmul.mubr.bf16.gmra.mxu0 %v3404
        %v4099 = vpop.f32.mrf.mxu0
        %v4100 = vadd.f32 0.0, %v4099
        %v4101 = vpop.f32.mrf.mxu0
        %v4102 = vpop.f32.mrf.mxu0
        %v4103 = vadd.f32 0.0, %v4102
        %v4104 = vpop.f32.mrf.mxu0
        %4105 = vmatprep.mubr.bf16.mxu0 0
        %4106 = vmatmul.mubr.bf16.gmra.mxu0 %v3407
        %v4107 = vpop.f32.mrf.mxu0
        %v4108 = vadd.f32 0.0, %v4107
        %v4109 = vpop.f32.mrf.mxu0
        %v4110 = vpop.f32.mrf.mxu0
        %v4111 = vadd.f32 0.0, %v4110
        %v4112 = vpop.f32.mrf.mxu0
        %4113 = vmatprep.mubr.bf16.mxu0 0
        %4114 = vmatmul.mubr.bf16.gmra.mxu0 %v3410
        %v4115 = vpop.f32.mrf.mxu0
        %v4116 = vadd.f32 0.0, %v4115
        %v4117 = vpop.f32.mrf.mxu0
        %v4118 = vpop.f32.mrf.mxu0
        %v4119 = vadd.f32 0.0, %v4118
        %v4120 = vpop.f32.mrf.mxu0
        %4121 = vmatprep.mubr.bf16.mxu0 0
        %4122 = vmatmul.mubr.bf16.gmra.mxu0 %v4028
        %v4123 = vpop.f32.mrf.mxu0
        %v4124 = vadd.f32 0.0, %v4123
        %v4125 = vpop.f32.mrf.mxu0
        %v4126 = vpop.f32.mrf.mxu0
        %v4127 = vadd.f32 0.0, %v4126
        %v4128 = vpop.f32.mrf.mxu0
        %4129 = vdwg.mxu0
        %v4130 = vadd.f32 %v4004, %v4068
        %v4131 = vadd.f32 %v4005, %v4071
        %v4132 = vadd.f32 %v4006, %v4076
        %v4133 = vadd.f32 %v4007, %v4079
        %v4134 = vadd.f32 %v4008, %v4084
        %v4135 = vadd.f32 %v4009, %v4087
        %v4136 = vadd.f32 %v4010, %v4092
        %v4137 = vadd.f32 %v4011, %v4095
        %v4138 = vadd.f32 %v4012, %v4100
        %v4139 = vadd.f32 %v4013, %v4103
        %v4140 = vadd.f32 %v4014, %v4108
        %v4141 = vadd.f32 %v4015, %v4111
        %v4142 = vadd.f32 %v4016, %v4116
        %v4143 = vadd.f32 %v4017, %v4119
        %v4144 = vadd.f32 %v4018, %v4124
        %v4145 = vadd.f32 %v4019, %v4127
        %s4146 = scalar_lea.vmem %s7, 20
        %v4147 = vld [vmem:[%s4146] sm:$0x3]
        %4148 = vrot.lane.b32.xlu0 %v1208, 120
        %v4149 = vpop.permute.xlu0 %4148
        %v4151 = vsel %vm726, %v4149, 0
        %v4154 = vsel %vm781, %v4147, 0
        %4156 = vmatprep.subr.bf16.mxu0 0
        %4157 = vmatpush1.bf16.msra.mxu0 0
        %4158 = vmatprep.subr.bf16.mxu0 0
        %4159 = vmatpush1.bf16.msra.mxu0 0
        %4160 = vmatprep.subr.bf16.mxu0 0
        %4161 = vmatpush1.bf16.msra.mxu0 0
        %4162 = vmatprep.subr.bf16.mxu0 0
        %4163 = vmatpush1.bf16.msra.mxu0 0
        %4164 = vmatprep.subr.bf16.mxu0 0
        %4165 = vmatpush1.bf16.msra.mxu0 0
        %4166 = vmatprep.subr.bf16.mxu0 0
        %4167 = vmatpush1.bf16.msra.mxu0 0
        %4168 = vmatprep.subr.bf16.mxu0 0
        %4169 = vmatpush1.bf16.msra.mxu0 0
        %4170 = vmatprep.subr.bf16.mxu0 0
        %4171 = vmatpush1.bf16.msra.mxu0 %v4154
        %4172 = vmatprep.subr.bf16.mxu0 0
        %4173 = vmatpush2.bf16.msra.mxu0 0
        %4174 = vmatprep.subr.bf16.mxu0 0
        %4175 = vmatpush2.bf16.msra.mxu0 0
        %4176 = vmatprep.subr.bf16.mxu0 0
        %4177 = vmatpush2.bf16.msra.mxu0 0
        %4178 = vmatprep.subr.bf16.mxu0 0
        %4179 = vmatpush2.bf16.msra.mxu0 0
        %4180 = vmatprep.subr.bf16.mxu0 0
        %4181 = vmatpush2.bf16.msra.mxu0 0
        %4182 = vmatprep.subr.bf16.mxu0 0
        %4183 = vmatpush2.bf16.msra.mxu0 0
        %4184 = vmatprep.subr.bf16.mxu0 0
        %4185 = vmatpush2.bf16.msra.mxu0 0
        %4186 = vmatprep.subr.bf16.mxu0 0
        %4187 = vmatpush2.bf16.msra.mxu0 0
        %4188 = vmatprep.mubr.bf16.mxu0 0
        %4189 = vmatmul.mubr.bf16.gmra.mxu0 %v2899
        %v4190 = vpop.f32.mrf.mxu0
        %v4191 = vadd.f32 0.0, %v4190
        %v4192 = vpop.f32.mrf.mxu0
        %v4193 = vpop.f32.mrf.mxu0
        %v4194 = vadd.f32 0.0, %v4193
        %v4195 = vpop.f32.mrf.mxu0
        %4196 = vmatprep.mubr.bf16.mxu0 0
        %4197 = vmatmul.mubr.bf16.gmra.mxu0 %v2902
        %v4198 = vpop.f32.mrf.mxu0
        %v4199 = vadd.f32 0.0, %v4198
        %v4200 = vpop.f32.mrf.mxu0
        %v4201 = vpop.f32.mrf.mxu0
        %v4202 = vadd.f32 0.0, %v4201
        %v4203 = vpop.f32.mrf.mxu0
        %4204 = vmatprep.mubr.bf16.mxu0 0
        %4205 = vmatmul.mubr.bf16.gmra.mxu0 %v2905
        %v4206 = vpop.f32.mrf.mxu0
        %v4207 = vadd.f32 0.0, %v4206
        %v4208 = vpop.f32.mrf.mxu0
        %v4209 = vpop.f32.mrf.mxu0
        %v4210 = vadd.f32 0.0, %v4209
        %v4211 = vpop.f32.mrf.mxu0
        %4212 = vmatprep.mubr.bf16.mxu0 0
        %4213 = vmatmul.mubr.bf16.gmra.mxu0 %v2908
        %v4214 = vpop.f32.mrf.mxu0
        %v4215 = vadd.f32 0.0, %v4214
        %v4216 = vpop.f32.mrf.mxu0
        %v4217 = vpop.f32.mrf.mxu0
        %v4218 = vadd.f32 0.0, %v4217
        %v4219 = vpop.f32.mrf.mxu0
        %4220 = vmatprep.mubr.bf16.mxu0 0
        %4221 = vmatmul.mubr.bf16.gmra.mxu0 %v2911
        %v4222 = vpop.f32.mrf.mxu0
        %v4223 = vadd.f32 0.0, %v4222
        %v4224 = vpop.f32.mrf.mxu0
        %v4225 = vpop.f32.mrf.mxu0
        %v4226 = vadd.f32 0.0, %v4225
        %v4227 = vpop.f32.mrf.mxu0
        %4228 = vmatprep.mubr.bf16.mxu0 0
        %4229 = vmatmul.mubr.bf16.gmra.mxu0 %v2914
        %v4230 = vpop.f32.mrf.mxu0
        %v4231 = vadd.f32 0.0, %v4230
        %v4232 = vpop.f32.mrf.mxu0
        %v4233 = vpop.f32.mrf.mxu0
        %v4234 = vadd.f32 0.0, %v4233
        %v4235 = vpop.f32.mrf.mxu0
        %4236 = vmatprep.mubr.bf16.mxu0 0
        %4237 = vmatmul.mubr.bf16.gmra.mxu0 %v3533
        %v4238 = vpop.f32.mrf.mxu0
        %v4239 = vadd.f32 0.0, %v4238
        %v4240 = vpop.f32.mrf.mxu0
        %v4241 = vpop.f32.mrf.mxu0
        %v4242 = vadd.f32 0.0, %v4241
        %v4243 = vpop.f32.mrf.mxu0
        %4244 = vmatprep.mubr.bf16.mxu0 0
        %4245 = vmatmul.mubr.bf16.gmra.mxu0 %v4151
        %v4246 = vpop.f32.mrf.mxu0
        %v4247 = vadd.f32 0.0, %v4246
        %v4248 = vpop.f32.mrf.mxu0
        %v4249 = vpop.f32.mrf.mxu0
        %v4250 = vadd.f32 0.0, %v4249
        %v4251 = vpop.f32.mrf.mxu0
        %4252 = vdwg.mxu0
        %v4253 = vadd.f32 %v4130, %v4191
        %v4254 = vadd.f32 %v4131, %v4194
        %v4255 = vadd.f32 %v4132, %v4199
        %v4256 = vadd.f32 %v4133, %v4202
        %v4257 = vadd.f32 %v4134, %v4207
        %v4258 = vadd.f32 %v4135, %v4210
        %v4259 = vadd.f32 %v4136, %v4215
        %v4260 = vadd.f32 %v4137, %v4218
        %v4261 = vadd.f32 %v4138, %v4223
        %v4262 = vadd.f32 %v4139, %v4226
        %v4263 = vadd.f32 %v4140, %v4231
        %v4264 = vadd.f32 %v4141, %v4234
        %v4265 = vadd.f32 %v4142, %v4239
        %v4266 = vadd.f32 %v4143, %v4242
        %v4267 = vadd.f32 %v4144, %v4247
        %v4268 = vadd.f32 %v4145, %v4250
        %s4269 = scalar_lea.vmem %s7, 22
        %v4270 = vld [vmem:[%s4269] sm:$0x3]
        %4271 = vrot.lane.b32.xlu0 %v1875, 120
        %v4272 = vpop.permute.xlu0 %4271
        %v4274 = vsel %vm726, %v4272, 0
        %v4277 = vsel %vm781, %v4270, 0
        %4279 = vmatprep.subr.bf16.mxu0 0
        %4280 = vmatpush1.bf16.msra.mxu0 0
        %4281 = vmatprep.subr.bf16.mxu0 0
        %4282 = vmatpush1.bf16.msra.mxu0 0
        %4283 = vmatprep.subr.bf16.mxu0 0
        %4284 = vmatpush1.bf16.msra.mxu0 0
        %4285 = vmatprep.subr.bf16.mxu0 0
        %4286 = vmatpush1.bf16.msra.mxu0 0
        %4287 = vmatprep.subr.bf16.mxu0 0
        %4288 = vmatpush1.bf16.msra.mxu0 0
        %4289 = vmatprep.subr.bf16.mxu0 0
        %4290 = vmatpush1.bf16.msra.mxu0 0
        %4291 = vmatprep.subr.bf16.mxu0 0
        %4292 = vmatpush1.bf16.msra.mxu0 0
        %4293 = vmatprep.subr.bf16.mxu0 0
        %4294 = vmatpush1.bf16.msra.mxu0 %v4277
        %4295 = vmatprep.subr.bf16.mxu0 0
        %4296 = vmatpush2.bf16.msra.mxu0 0
        %4297 = vmatprep.subr.bf16.mxu0 0
        %4298 = vmatpush2.bf16.msra.mxu0 0
        %4299 = vmatprep.subr.bf16.mxu0 0
        %4300 = vmatpush2.bf16.msra.mxu0 0
        %4301 = vmatprep.subr.bf16.mxu0 0
        %4302 = vmatpush2.bf16.msra.mxu0 0
        %4303 = vmatprep.subr.bf16.mxu0 0
        %4304 = vmatpush2.bf16.msra.mxu0 0
        %4305 = vmatprep.subr.bf16.mxu0 0
        %4306 = vmatpush2.bf16.msra.mxu0 0
        %4307 = vmatprep.subr.bf16.mxu0 0
        %4308 = vmatpush2.bf16.msra.mxu0 0
        %4309 = vmatprep.subr.bf16.mxu0 0
        %4310 = vmatpush2.bf16.msra.mxu0 0
        %4311 = vmatprep.mubr.bf16.mxu0 0
        %4312 = vmatmul.mubr.bf16.gmra.mxu0 %v2758
        %v4313 = vpop.f32.mrf.mxu0
        %v4314 = vadd.f32 0.0, %v4313
        %v4315 = vpop.f32.mrf.mxu0
        %v4316 = vpop.f32.mrf.mxu0
        %v4317 = vadd.f32 0.0, %v4316
        %v4318 = vpop.f32.mrf.mxu0
        %4319 = vmatprep.mubr.bf16.mxu0 0
        %4320 = vmatmul.mubr.bf16.gmra.mxu0 %v2761
        %v4321 = vpop.f32.mrf.mxu0
        %v4322 = vadd.f32 0.0, %v4321
        %v4323 = vpop.f32.mrf.mxu0
        %v4324 = vpop.f32.mrf.mxu0
        %v4325 = vadd.f32 0.0, %v4324
        %v4326 = vpop.f32.mrf.mxu0
        %4327 = vmatprep.mubr.bf16.mxu0 0
        %4328 = vmatmul.mubr.bf16.gmra.mxu0 %v2764
        %v4329 = vpop.f32.mrf.mxu0
        %v4330 = vadd.f32 0.0, %v4329
        %v4331 = vpop.f32.mrf.mxu0
        %v4332 = vpop.f32.mrf.mxu0
        %v4333 = vadd.f32 0.0, %v4332
        %v4334 = vpop.f32.mrf.mxu0
        %4335 = vmatprep.mubr.bf16.mxu0 0
        %4336 = vmatmul.mubr.bf16.gmra.mxu0 %v2767
        %v4337 = vpop.f32.mrf.mxu0
        %v4338 = vadd.f32 0.0, %v4337
        %v4339 = vpop.f32.mrf.mxu0
        %v4340 = vpop.f32.mrf.mxu0
        %v4341 = vadd.f32 0.0, %v4340
        %v4342 = vpop.f32.mrf.mxu0
        %4343 = vmatprep.mubr.bf16.mxu0 0
        %4344 = vmatmul.mubr.bf16.gmra.mxu0 %v2770
        %v4345 = vpop.f32.mrf.mxu0
        %v4346 = vadd.f32 0.0, %v4345
        %v4347 = vpop.f32.mrf.mxu0
        %v4348 = vpop.f32.mrf.mxu0
        %v4349 = vadd.f32 0.0, %v4348
        %v4350 = vpop.f32.mrf.mxu0
        %4351 = vmatprep.mubr.bf16.mxu0 0
        %4352 = vmatmul.mubr.bf16.gmra.mxu0 %v2773
        %v4353 = vpop.f32.mrf.mxu0
        %v4354 = vadd.f32 0.0, %v4353
        %v4355 = vpop.f32.mrf.mxu0
        %v4356 = vpop.f32.mrf.mxu0
        %v4357 = vadd.f32 0.0, %v4356
        %v4358 = vpop.f32.mrf.mxu0
        %4359 = vmatprep.mubr.bf16.mxu0 0
        %4360 = vmatmul.mubr.bf16.gmra.mxu0 %v3656
        %v4361 = vpop.f32.mrf.mxu0
        %v4362 = vadd.f32 0.0, %v4361
        %v4363 = vpop.f32.mrf.mxu0
        %v4364 = vpop.f32.mrf.mxu0
        %v4365 = vadd.f32 0.0, %v4364
        %v4366 = vpop.f32.mrf.mxu0
        %4367 = vmatprep.mubr.bf16.mxu0 0
        %4368 = vmatmul.mubr.bf16.gmra.mxu0 %v4274
        %v4369 = vpop.f32.mrf.mxu0
        %v4370 = vadd.f32 0.0, %v4369
        %v4371 = vpop.f32.mrf.mxu0
        %v4372 = vpop.f32.mrf.mxu0
        %v4373 = vadd.f32 0.0, %v4372
        %v4374 = vpop.f32.mrf.mxu0
        %4375 = vdwg.mxu0
        %v4376 = vadd.f32 %v4253, %v4314
        %v4377 = vadd.f32 %v4254, %v4317
        %v4378 = vadd.f32 %v4255, %v4322
        %v4379 = vadd.f32 %v4256, %v4325
        %v4380 = vadd.f32 %v4257, %v4330
        %v4381 = vadd.f32 %v4258, %v4333
        %v4382 = vadd.f32 %v4259, %v4338
        %v4383 = vadd.f32 %v4260, %v4341
        %v4384 = vadd.f32 %v4261, %v4346
        %v4385 = vadd.f32 %v4262, %v4349
        %v4386 = vadd.f32 %v4263, %v4354
        %v4387 = vadd.f32 %v4264, %v4357
        %v4388 = vadd.f32 %v4265, %v4362
        %v4389 = vadd.f32 %v4266, %v4365
        %v4390 = vadd.f32 %v4267, %v4370
        %v4391 = vadd.f32 %v4268, %v4373
        %s4392 = scalar_lea.vmem %s7, 24
        %v4393 = vld [vmem:[%s4392] sm:$0x3]
        %4394 = vrot.lane.b32.xlu0 %v2003, 120
        %v4395 = vpop.permute.xlu0 %4394
        %v4397 = vsel %vm726, %v4395, 0
        %v4400 = vsel %vm781, %v4393, 0
        %4402 = vmatprep.subr.bf16.mxu0 0
        %4403 = vmatpush1.bf16.msra.mxu0 0
        %4404 = vmatprep.subr.bf16.mxu0 0
        %4405 = vmatpush1.bf16.msra.mxu0 0
        %4406 = vmatprep.subr.bf16.mxu0 0
        %4407 = vmatpush1.bf16.msra.mxu0 0
        %4408 = vmatprep.subr.bf16.mxu0 0
        %4409 = vmatpush1.bf16.msra.mxu0 0
        %4410 = vmatprep.subr.bf16.mxu0 0
        %4411 = vmatpush1.bf16.msra.mxu0 0
        %4412 = vmatprep.subr.bf16.mxu0 0
        %4413 = vmatpush1.bf16.msra.mxu0 0
        %4414 = vmatprep.subr.bf16.mxu0 0
        %4415 = vmatpush1.bf16.msra.mxu0 0
        %4416 = vmatprep.subr.bf16.mxu0 0
        %4417 = vmatpush1.bf16.msra.mxu0 %v4400
        %4418 = vmatprep.subr.bf16.mxu0 0
        %4419 = vmatpush2.bf16.msra.mxu0 0
        %4420 = vmatprep.subr.bf16.mxu0 0
        %4421 = vmatpush2.bf16.msra.mxu0 0
        %4422 = vmatprep.subr.bf16.mxu0 0
        %4423 = vmatpush2.bf16.msra.mxu0 0
        %4424 = vmatprep.subr.bf16.mxu0 0
        %4425 = vmatpush2.bf16.msra.mxu0 0
        %4426 = vmatprep.subr.bf16.mxu0 0
        %4427 = vmatpush2.bf16.msra.mxu0 0
        %4428 = vmatprep.subr.bf16.mxu0 0
        %4429 = vmatpush2.bf16.msra.mxu0 0
        %4430 = vmatprep.subr.bf16.mxu0 0
        %4431 = vmatpush2.bf16.msra.mxu0 0
        %4432 = vmatprep.subr.bf16.mxu0 0
        %4433 = vmatpush2.bf16.msra.mxu0 0
        %4434 = vmatprep.mubr.bf16.mxu0 0
        %4435 = vmatmul.mubr.bf16.gmra.mxu0 %v3045
        %v4436 = vpop.f32.mrf.mxu0
        %v4437 = vadd.f32 0.0, %v4436
        %v4438 = vpop.f32.mrf.mxu0
        %v4439 = vpop.f32.mrf.mxu0
        %v4440 = vadd.f32 0.0, %v4439
        %v4441 = vpop.f32.mrf.mxu0
        %4442 = vmatprep.mubr.bf16.mxu0 0
        %4443 = vmatmul.mubr.bf16.gmra.mxu0 %v3048
        %v4444 = vpop.f32.mrf.mxu0
        %v4445 = vadd.f32 0.0, %v4444
        %v4446 = vpop.f32.mrf.mxu0
        %v4447 = vpop.f32.mrf.mxu0
        %v4448 = vadd.f32 0.0, %v4447
        %v4449 = vpop.f32.mrf.mxu0
        %4450 = vmatprep.mubr.bf16.mxu0 0
        %4451 = vmatmul.mubr.bf16.gmra.mxu0 %v3051
        %v4452 = vpop.f32.mrf.mxu0
        %v4453 = vadd.f32 0.0, %v4452
        %v4454 = vpop.f32.mrf.mxu0
        %v4455 = vpop.f32.mrf.mxu0
        %v4456 = vadd.f32 0.0, %v4455
        %v4457 = vpop.f32.mrf.mxu0
        %4458 = vmatprep.mubr.bf16.mxu0 0
        %4459 = vmatmul.mubr.bf16.gmra.mxu0 %v3054
        %v4460 = vpop.f32.mrf.mxu0
        %v4461 = vadd.f32 0.0, %v4460
        %v4462 = vpop.f32.mrf.mxu0
        %v4463 = vpop.f32.mrf.mxu0
        %v4464 = vadd.f32 0.0, %v4463
        %v4465 = vpop.f32.mrf.mxu0
        %4466 = vmatprep.mubr.bf16.mxu0 0
        %4467 = vmatmul.mubr.bf16.gmra.mxu0 %v3057
        %v4468 = vpop.f32.mrf.mxu0
        %v4469 = vadd.f32 0.0, %v4468
        %v4470 = vpop.f32.mrf.mxu0
        %v4471 = vpop.f32.mrf.mxu0
        %v4472 = vadd.f32 0.0, %v4471
        %v4473 = vpop.f32.mrf.mxu0
        %4474 = vmatprep.mubr.bf16.mxu0 0
        %4475 = vmatmul.mubr.bf16.gmra.mxu0 %v3060
        %v4476 = vpop.f32.mrf.mxu0
        %v4477 = vadd.f32 0.0, %v4476
        %v4478 = vpop.f32.mrf.mxu0
        %v4479 = vpop.f32.mrf.mxu0
        %v4480 = vadd.f32 0.0, %v4479
        %v4481 = vpop.f32.mrf.mxu0
        %4482 = vmatprep.mubr.bf16.mxu0 0
        %4483 = vmatmul.mubr.bf16.gmra.mxu0 %v3779
        %v4484 = vpop.f32.mrf.mxu0
        %v4485 = vadd.f32 0.0, %v4484
        %v4486 = vpop.f32.mrf.mxu0
        %v4487 = vpop.f32.mrf.mxu0
        %v4488 = vadd.f32 0.0, %v4487
        %v4489 = vpop.f32.mrf.mxu0
        %4490 = vmatprep.mubr.bf16.mxu0 0
        %4491 = vmatmul.mubr.bf16.gmra.mxu0 %v4397
        %v4492 = vpop.f32.mrf.mxu0
        %v4493 = vadd.f32 0.0, %v4492
        %v4494 = vpop.f32.mrf.mxu0
        %v4495 = vpop.f32.mrf.mxu0
        %v4496 = vadd.f32 0.0, %v4495
        %v4497 = vpop.f32.mrf.mxu0
        %4498 = vdwg.mxu0
        %v4499 = vadd.f32 %v4376, %v4437
        %v4500 = vadd.f32 %v4377, %v4440
        %v4501 = vadd.f32 %v4378, %v4445
        %v4502 = vadd.f32 %v4379, %v4448
        %v4503 = vadd.f32 %v4380, %v4453
        %v4504 = vadd.f32 %v4381, %v4456
        %v4505 = vadd.f32 %v4382, %v4461
        %v4506 = vadd.f32 %v4383, %v4464
        %v4507 = vadd.f32 %v4384, %v4469
        %v4508 = vadd.f32 %v4385, %v4472
        %v4509 = vadd.f32 %v4386, %v4477
        %v4510 = vadd.f32 %v4387, %v4480
        %v4511 = vadd.f32 %v4388, %v4485
        %v4512 = vadd.f32 %v4389, %v4488
        %v4513 = vadd.f32 %v4390, %v4493
        %v4514 = vadd.f32 %v4391, %v4496
        %s4515 = scalar_lea.vmem %s7, 26
        %v4516 = vld [vmem:[%s4515] sm:$0x3]
        %4517 = vrot.lane.b32.xlu0 %v2135, 120
        %v4518 = vpop.permute.xlu0 %4517
        %v4520 = vsel %vm726, %v4518, 0
        %v4523 = vsel %vm781, %v4516, 0
        %4525 = vmatprep.subr.bf16.mxu0 0
        %4526 = vmatpush1.bf16.msra.mxu0 0
        %4527 = vmatprep.subr.bf16.mxu0 0
        %4528 = vmatpush1.bf16.msra.mxu0 0
        %4529 = vmatprep.subr.bf16.mxu0 0
        %4530 = vmatpush1.bf16.msra.mxu0 0
        %4531 = vmatprep.subr.bf16.mxu0 0
        %4532 = vmatpush1.bf16.msra.mxu0 0
        %4533 = vmatprep.subr.bf16.mxu0 0
        %4534 = vmatpush1.bf16.msra.mxu0 0
        %4535 = vmatprep.subr.bf16.mxu0 0
        %4536 = vmatpush1.bf16.msra.mxu0 0
        %4537 = vmatprep.subr.bf16.mxu0 0
        %4538 = vmatpush1.bf16.msra.mxu0 0
        %4539 = vmatprep.subr.bf16.mxu0 0
        %4540 = vmatpush1.bf16.msra.mxu0 %v4523
        %4541 = vmatprep.subr.bf16.mxu0 0
        %4542 = vmatpush2.bf16.msra.mxu0 0
        %4543 = vmatprep.subr.bf16.mxu0 0
        %4544 = vmatpush2.bf16.msra.mxu0 0
        %4545 = vmatprep.subr.bf16.mxu0 0
        %4546 = vmatpush2.bf16.msra.mxu0 0
        %4547 = vmatprep.subr.bf16.mxu0 0
        %4548 = vmatpush2.bf16.msra.mxu0 0
        %4549 = vmatprep.subr.bf16.mxu0 0
        %4550 = vmatpush2.bf16.msra.mxu0 0
        %4551 = vmatprep.subr.bf16.mxu0 0
        %4552 = vmatpush2.bf16.msra.mxu0 0
        %4553 = vmatprep.subr.bf16.mxu0 0
        %4554 = vmatpush2.bf16.msra.mxu0 0
        %4555 = vmatprep.subr.bf16.mxu0 0
        %4556 = vmatpush2.bf16.msra.mxu0 0
        %4557 = vmatprep.mubr.bf16.mxu0 0
        %4558 = vmatmul.mubr.bf16.gmra.mxu0 %v3212
        %v4559 = vpop.f32.mrf.mxu0
        %v4560 = vadd.f32 0.0, %v4559
        %v4561 = vpop.f32.mrf.mxu0
        %v4562 = vpop.f32.mrf.mxu0
        %v4563 = vadd.f32 0.0, %v4562
        %v4564 = vpop.f32.mrf.mxu0
        %4565 = vmatprep.mubr.bf16.mxu0 0
        %4566 = vmatmul.mubr.bf16.gmra.mxu0 %v3215
        %v4567 = vpop.f32.mrf.mxu0
        %v4568 = vadd.f32 0.0, %v4567
        %v4569 = vpop.f32.mrf.mxu0
        %v4570 = vpop.f32.mrf.mxu0
        %v4571 = vadd.f32 0.0, %v4570
        %v4572 = vpop.f32.mrf.mxu0
        %4573 = vmatprep.mubr.bf16.mxu0 0
        %4574 = vmatmul.mubr.bf16.gmra.mxu0 %v3218
        %v4575 = vpop.f32.mrf.mxu0
        %v4576 = vadd.f32 0.0, %v4575
        %v4577 = vpop.f32.mrf.mxu0
        %v4578 = vpop.f32.mrf.mxu0
        %v4579 = vadd.f32 0.0, %v4578
        %v4580 = vpop.f32.mrf.mxu0
        %4581 = vmatprep.mubr.bf16.mxu0 0
        %4582 = vmatmul.mubr.bf16.gmra.mxu0 %v3221
        %v4583 = vpop.f32.mrf.mxu0
        %v4584 = vadd.f32 0.0, %v4583
        %v4585 = vpop.f32.mrf.mxu0
        %v4586 = vpop.f32.mrf.mxu0
        %v4587 = vadd.f32 0.0, %v4586
        %v4588 = vpop.f32.mrf.mxu0
        %4589 = vmatprep.mubr.bf16.mxu0 0
        %4590 = vmatmul.mubr.bf16.gmra.mxu0 %v3224
        %v4591 = vpop.f32.mrf.mxu0
        %v4592 = vadd.f32 0.0, %v4591
        %v4593 = vpop.f32.mrf.mxu0
        %v4594 = vpop.f32.mrf.mxu0
        %v4595 = vadd.f32 0.0, %v4594
        %v4596 = vpop.f32.mrf.mxu0
        %4597 = vmatprep.mubr.bf16.mxu0 0
        %4598 = vmatmul.mubr.bf16.gmra.mxu0 %v3227
        %v4599 = vpop.f32.mrf.mxu0
        %v4600 = vadd.f32 0.0, %v4599
        %v4601 = vpop.f32.mrf.mxu0
        %v4602 = vpop.f32.mrf.mxu0
        %v4603 = vadd.f32 0.0, %v4602
        %v4604 = vpop.f32.mrf.mxu0
        %4605 = vmatprep.mubr.bf16.mxu0 0
        %4606 = vmatmul.mubr.bf16.gmra.mxu0 %v3902
        %v4607 = vpop.f32.mrf.mxu0
        %v4608 = vadd.f32 0.0, %v4607
        %v4609 = vpop.f32.mrf.mxu0
        %v4610 = vpop.f32.mrf.mxu0
        %v4611 = vadd.f32 0.0, %v4610
        %v4612 = vpop.f32.mrf.mxu0
        %4613 = vmatprep.mubr.bf16.mxu0 0
        %4614 = vmatmul.mubr.bf16.gmra.mxu0 %v4520
        %v4615 = vpop.f32.mrf.mxu0
        %v4616 = vadd.f32 0.0, %v4615
        %v4617 = vpop.f32.mrf.mxu0
        %v4618 = vpop.f32.mrf.mxu0
        %v4619 = vadd.f32 0.0, %v4618
        %v4620 = vpop.f32.mrf.mxu0
        %4621 = vdwg.mxu0
        %v4622 = vadd.f32 %v4499, %v4560
        %v4623 = vadd.f32 %v4500, %v4563
        %v4624 = vadd.f32 %v4501, %v4568
        %v4625 = vadd.f32 %v4502, %v4571
        %v4626 = vadd.f32 %v4503, %v4576
        %v4627 = vadd.f32 %v4504, %v4579
        %v4628 = vadd.f32 %v4505, %v4584
        %v4629 = vadd.f32 %v4506, %v4587
        %v4630 = vadd.f32 %v4507, %v4592
        %v4631 = vadd.f32 %v4508, %v4595
        %v4632 = vadd.f32 %v4509, %v4600
        %v4633 = vadd.f32 %v4510, %v4603
        %v4634 = vadd.f32 %v4511, %v4608
        %v4635 = vadd.f32 %v4512, %v4611
        %v4636 = vadd.f32 %v4513, %v4616
        %v4637 = vadd.f32 %v4514, %v4619
        %v4638 = vrot.slane %v1208, 2
        %v4639 = vrot.slane %v1209, 2
        %v4640 = vsel %vm3345, %v4638, %v4639
        %s4641 = scalar_lea.vmem %s7, 28
        %v4642 = vld [vmem:[%s4641] sm:$0x3]
        %4643 = vrot.lane.b32.xlu0 %v4640, 120
        %v4644 = vpop.permute.xlu0 %4643
        %v4646 = vsel %vm726, %v4644, 0
        %v4649 = vsel %vm781, %v4642, 0
        %4651 = vmatprep.subr.bf16.mxu0 0
        %4652 = vmatpush1.bf16.msra.mxu0 0
        %4653 = vmatprep.subr.bf16.mxu0 0
        %4654 = vmatpush1.bf16.msra.mxu0 0
        %4655 = vmatprep.subr.bf16.mxu0 0
        %4656 = vmatpush1.bf16.msra.mxu0 0
        %4657 = vmatprep.subr.bf16.mxu0 0
        %4658 = vmatpush1.bf16.msra.mxu0 0
        %4659 = vmatprep.subr.bf16.mxu0 0
        %4660 = vmatpush1.bf16.msra.mxu0 0
        %4661 = vmatprep.subr.bf16.mxu0 0
        %4662 = vmatpush1.bf16.msra.mxu0 0
        %4663 = vmatprep.subr.bf16.mxu0 0
        %4664 = vmatpush1.bf16.msra.mxu0 0
        %4665 = vmatprep.subr.bf16.mxu0 0
        %4666 = vmatpush1.bf16.msra.mxu0 %v4649
        %4667 = vmatprep.subr.bf16.mxu0 0
        %4668 = vmatpush2.bf16.msra.mxu0 0
        %4669 = vmatprep.subr.bf16.mxu0 0
        %4670 = vmatpush2.bf16.msra.mxu0 0
        %4671 = vmatprep.subr.bf16.mxu0 0
        %4672 = vmatpush2.bf16.msra.mxu0 0
        %4673 = vmatprep.subr.bf16.mxu0 0
        %4674 = vmatpush2.bf16.msra.mxu0 0
        %4675 = vmatprep.subr.bf16.mxu0 0
        %4676 = vmatpush2.bf16.msra.mxu0 0
        %4677 = vmatprep.subr.bf16.mxu0 0
        %4678 = vmatpush2.bf16.msra.mxu0 0
        %4679 = vmatprep.subr.bf16.mxu0 0
        %4680 = vmatpush2.bf16.msra.mxu0 0
        %4681 = vmatprep.subr.bf16.mxu0 0
        %4682 = vmatpush2.bf16.msra.mxu0 0
        %4683 = vmatprep.mubr.bf16.mxu0 0
        %4684 = vmatmul.mubr.bf16.gmra.mxu0 %v3395
        %v4685 = vpop.f32.mrf.mxu0
        %v4686 = vadd.f32 0.0, %v4685
        %v4687 = vpop.f32.mrf.mxu0
        %v4688 = vpop.f32.mrf.mxu0
        %v4689 = vadd.f32 0.0, %v4688
        %v4690 = vpop.f32.mrf.mxu0
        %4691 = vmatprep.mubr.bf16.mxu0 0
        %4692 = vmatmul.mubr.bf16.gmra.mxu0 %v3398
        %v4693 = vpop.f32.mrf.mxu0
        %v4694 = vadd.f32 0.0, %v4693
        %v4695 = vpop.f32.mrf.mxu0
        %v4696 = vpop.f32.mrf.mxu0
        %v4697 = vadd.f32 0.0, %v4696
        %v4698 = vpop.f32.mrf.mxu0
        %4699 = vmatprep.mubr.bf16.mxu0 0
        %4700 = vmatmul.mubr.bf16.gmra.mxu0 %v3401
        %v4701 = vpop.f32.mrf.mxu0
        %v4702 = vadd.f32 0.0, %v4701
        %v4703 = vpop.f32.mrf.mxu0
        %v4704 = vpop.f32.mrf.mxu0
        %v4705 = vadd.f32 0.0, %v4704
        %v4706 = vpop.f32.mrf.mxu0
        %4707 = vmatprep.mubr.bf16.mxu0 0
        %4708 = vmatmul.mubr.bf16.gmra.mxu0 %v3404
        %v4709 = vpop.f32.mrf.mxu0
        %v4710 = vadd.f32 0.0, %v4709
        %v4711 = vpop.f32.mrf.mxu0
        %v4712 = vpop.f32.mrf.mxu0
        %v4713 = vadd.f32 0.0, %v4712
        %v4714 = vpop.f32.mrf.mxu0
        %4715 = vmatprep.mubr.bf16.mxu0 0
        %4716 = vmatmul.mubr.bf16.gmra.mxu0 %v3407
        %v4717 = vpop.f32.mrf.mxu0
        %v4718 = vadd.f32 0.0, %v4717
        %v4719 = vpop.f32.mrf.mxu0
        %v4720 = vpop.f32.mrf.mxu0
        %v4721 = vadd.f32 0.0, %v4720
        %v4722 = vpop.f32.mrf.mxu0
        %4723 = vmatprep.mubr.bf16.mxu0 0
        %4724 = vmatmul.mubr.bf16.gmra.mxu0 %v3410
        %v4725 = vpop.f32.mrf.mxu0
        %v4726 = vadd.f32 0.0, %v4725
        %v4727 = vpop.f32.mrf.mxu0
        %v4728 = vpop.f32.mrf.mxu0
        %v4729 = vadd.f32 0.0, %v4728
        %v4730 = vpop.f32.mrf.mxu0
        %4731 = vmatprep.mubr.bf16.mxu0 0
        %4732 = vmatmul.mubr.bf16.gmra.mxu0 %v4028
        %v4733 = vpop.f32.mrf.mxu0
        %v4734 = vadd.f32 0.0, %v4733
        %v4735 = vpop.f32.mrf.mxu0
        %v4736 = vpop.f32.mrf.mxu0
        %v4737 = vadd.f32 0.0, %v4736
        %v4738 = vpop.f32.mrf.mxu0
        %4739 = vmatprep.mubr.bf16.mxu0 0
        %4740 = vmatmul.mubr.bf16.gmra.mxu0 %v4646
        %v4741 = vpop.f32.mrf.mxu0
        %v4742 = vadd.f32 0.0, %v4741
        %v4743 = vpop.f32.mrf.mxu0
        %v4744 = vpop.f32.mrf.mxu0
        %v4745 = vadd.f32 0.0, %v4744
        %v4746 = vpop.f32.mrf.mxu0
        %4747 = vdwg.mxu0
        %v4748 = vadd.f32 %v4622, %v4686
        %v4749 = vadd.f32 %v4623, %v4689
        %v4750 = vadd.f32 %v4624, %v4694
        %v4751 = vadd.f32 %v4625, %v4697
        %v4752 = vadd.f32 %v4626, %v4702
        %v4753 = vadd.f32 %v4627, %v4705
        %v4754 = vadd.f32 %v4628, %v4710
        %v4755 = vadd.f32 %v4629, %v4713
        %v4756 = vadd.f32 %v4630, %v4718
        %v4757 = vadd.f32 %v4631, %v4721
        %v4758 = vadd.f32 %v4632, %v4726
        %v4759 = vadd.f32 %v4633, %v4729
        %v4760 = vadd.f32 %v4634, %v4734
        %v4761 = vadd.f32 %v4635, %v4737
        %v4762 = vadd.f32 %v4636, %v4742
        %v4763 = vadd.f32 %v4637, %v4745
        %s4764 = scalar_lea.vmem %s7, 30
        %v4765 = vld [vmem:[%s4764] sm:$0x3]
        %4766 = vrot.lane.b32.xlu0 %v1210, 120
        %v4767 = vpop.permute.xlu0 %4766
        %v4769 = vsel %vm726, %v4767, 0
        %v4772 = vsel %vm781, %v4765, 0
        %4774 = vmatprep.subr.bf16.mxu0 0
        %4775 = vmatpush1.bf16.msra.mxu0 0
        %4776 = vmatprep.subr.bf16.mxu0 0
        %4777 = vmatpush1.bf16.msra.mxu0 0
        %4778 = vmatprep.subr.bf16.mxu0 0
        %4779 = vmatpush1.bf16.msra.mxu0 0
        %4780 = vmatprep.subr.bf16.mxu0 0
        %4781 = vmatpush1.bf16.msra.mxu0 0
        %4782 = vmatprep.subr.bf16.mxu0 0
        %4783 = vmatpush1.bf16.msra.mxu0 0
        %4784 = vmatprep.subr.bf16.mxu0 0
        %4785 = vmatpush1.bf16.msra.mxu0 0
        %4786 = vmatprep.subr.bf16.mxu0 0
        %4787 = vmatpush1.bf16.msra.mxu0 0
        %4788 = vmatprep.subr.bf16.mxu0 0
        %4789 = vmatpush1.bf16.msra.mxu0 %v4772
        %4790 = vmatprep.subr.bf16.mxu0 0
        %4791 = vmatpush2.bf16.msra.mxu0 0
        %4792 = vmatprep.subr.bf16.mxu0 0
        %4793 = vmatpush2.bf16.msra.mxu0 0
        %4794 = vmatprep.subr.bf16.mxu0 0
        %4795 = vmatpush2.bf16.msra.mxu0 0
        %4796 = vmatprep.subr.bf16.mxu0 0
        %4797 = vmatpush2.bf16.msra.mxu0 0
        %4798 = vmatprep.subr.bf16.mxu0 0
        %4799 = vmatpush2.bf16.msra.mxu0 0
        %4800 = vmatprep.subr.bf16.mxu0 0
        %4801 = vmatpush2.bf16.msra.mxu0 0
        %4802 = vmatprep.subr.bf16.mxu0 0
        %4803 = vmatpush2.bf16.msra.mxu0 0
        %4804 = vmatprep.subr.bf16.mxu0 0
        %4805 = vmatpush2.bf16.msra.mxu0 0
        %4806 = vmatprep.mubr.bf16.mxu0 0
        %4807 = vmatmul.mubr.bf16.gmra.mxu0 %v2902
        %v4808 = vpop.f32.mrf.mxu0
        %v4809 = vadd.f32 0.0, %v4808
        %v4810 = vpop.f32.mrf.mxu0
        %v4811 = vpop.f32.mrf.mxu0
        %v4812 = vadd.f32 0.0, %v4811
        %v4813 = vpop.f32.mrf.mxu0
        %4814 = vmatprep.mubr.bf16.mxu0 0
        %4815 = vmatmul.mubr.bf16.gmra.mxu0 %v2905
        %v4816 = vpop.f32.mrf.mxu0
        %v4817 = vadd.f32 0.0, %v4816
        %v4818 = vpop.f32.mrf.mxu0
        %v4819 = vpop.f32.mrf.mxu0
        %v4820 = vadd.f32 0.0, %v4819
        %v4821 = vpop.f32.mrf.mxu0
        %4822 = vmatprep.mubr.bf16.mxu0 0
        %4823 = vmatmul.mubr.bf16.gmra.mxu0 %v2908
        %v4824 = vpop.f32.mrf.mxu0
        %v4825 = vadd.f32 0.0, %v4824
        %v4826 = vpop.f32.mrf.mxu0
        %v4827 = vpop.f32.mrf.mxu0
        %v4828 = vadd.f32 0.0, %v4827
        %v4829 = vpop.f32.mrf.mxu0
        %4830 = vmatprep.mubr.bf16.mxu0 0
        %4831 = vmatmul.mubr.bf16.gmra.mxu0 %v2911
        %v4832 = vpop.f32.mrf.mxu0
        %v4833 = vadd.f32 0.0, %v4832
        %v4834 = vpop.f32.mrf.mxu0
        %v4835 = vpop.f32.mrf.mxu0
        %v4836 = vadd.f32 0.0, %v4835
        %v4837 = vpop.f32.mrf.mxu0
        %4838 = vmatprep.mubr.bf16.mxu0 0
        %4839 = vmatmul.mubr.bf16.gmra.mxu0 %v2914
        %v4840 = vpop.f32.mrf.mxu0
        %v4841 = vadd.f32 0.0, %v4840
        %v4842 = vpop.f32.mrf.mxu0
        %v4843 = vpop.f32.mrf.mxu0
        %v4844 = vadd.f32 0.0, %v4843
        %v4845 = vpop.f32.mrf.mxu0
        %4846 = vmatprep.mubr.bf16.mxu0 0
        %4847 = vmatmul.mubr.bf16.gmra.mxu0 %v3533
        %v4848 = vpop.f32.mrf.mxu0
        %v4849 = vadd.f32 0.0, %v4848
        %v4850 = vpop.f32.mrf.mxu0
        %v4851 = vpop.f32.mrf.mxu0
        %v4852 = vadd.f32 0.0, %v4851
        %v4853 = vpop.f32.mrf.mxu0
        %4854 = vmatprep.mubr.bf16.mxu0 0
        %4855 = vmatmul.mubr.bf16.gmra.mxu0 %v4151
        %v4856 = vpop.f32.mrf.mxu0
        %v4857 = vadd.f32 0.0, %v4856
        %v4858 = vpop.f32.mrf.mxu0
        %v4859 = vpop.f32.mrf.mxu0
        %v4860 = vadd.f32 0.0, %v4859
        %v4861 = vpop.f32.mrf.mxu0
        %4862 = vmatprep.mubr.bf16.mxu0 0
        %4863 = vmatmul.mubr.bf16.gmra.mxu0 %v4769
        %v4864 = vpop.f32.mrf.mxu0
        %v4865 = vadd.f32 0.0, %v4864
        %v4866 = vpop.f32.mrf.mxu0
        %v4867 = vpop.f32.mrf.mxu0
        %v4868 = vadd.f32 0.0, %v4867
        %v4869 = vpop.f32.mrf.mxu0
        %4870 = vdwg.mxu0
        %v4871 = vadd.f32 %v4748, %v4809
        %v4872 = vadd.f32 %v4749, %v4812
        %v4873 = vadd.f32 %v4750, %v4817
        %v4874 = vadd.f32 %v4751, %v4820
        %v4875 = vadd.f32 %v4752, %v4825
        %v4876 = vadd.f32 %v4753, %v4828
        %v4877 = vadd.f32 %v4754, %v4833
        %v4878 = vadd.f32 %v4755, %v4836
        %v4879 = vadd.f32 %v4756, %v4841
        %v4880 = vadd.f32 %v4757, %v4844
        %v4881 = vadd.f32 %v4758, %v4849
        %v4882 = vadd.f32 %v4759, %v4852
        %v4883 = vadd.f32 %v4760, %v4857
        %v4884 = vadd.f32 %v4761, %v4860
        %v4885 = vadd.f32 %v4762, %v4865
        %v4886 = vadd.f32 %v4763, %v4868
        %s4887 = scalar_lea.vmem %s7, 32
        %v4888 = vld [vmem:[%s4887] sm:$0x3]
        %4889 = vrot.lane.b32.xlu0 %v2270, 120
        %v4890 = vpop.permute.xlu0 %4889
        %v4892 = vsel %vm726, %v4890, 0
        %v4895 = vsel %vm781, %v4888, 0
        %4897 = vmatprep.subr.bf16.mxu0 0
        %4898 = vmatpush1.bf16.msra.mxu0 0
        %4899 = vmatprep.subr.bf16.mxu0 0
        %4900 = vmatpush1.bf16.msra.mxu0 0
        %4901 = vmatprep.subr.bf16.mxu0 0
        %4902 = vmatpush1.bf16.msra.mxu0 0
        %4903 = vmatprep.subr.bf16.mxu0 0
        %4904 = vmatpush1.bf16.msra.mxu0 0
        %4905 = vmatprep.subr.bf16.mxu0 0
        %4906 = vmatpush1.bf16.msra.mxu0 0
        %4907 = vmatprep.subr.bf16.mxu0 0
        %4908 = vmatpush1.bf16.msra.mxu0 0
        %4909 = vmatprep.subr.bf16.mxu0 0
        %4910 = vmatpush1.bf16.msra.mxu0 0
        %4911 = vmatprep.subr.bf16.mxu0 0
        %4912 = vmatpush1.bf16.msra.mxu0 %v4895
        %4913 = vmatprep.subr.bf16.mxu0 0
        %4914 = vmatpush2.bf16.msra.mxu0 0
        %4915 = vmatprep.subr.bf16.mxu0 0
        %4916 = vmatpush2.bf16.msra.mxu0 0
        %4917 = vmatprep.subr.bf16.mxu0 0
        %4918 = vmatpush2.bf16.msra.mxu0 0
        %4919 = vmatprep.subr.bf16.mxu0 0
        %4920 = vmatpush2.bf16.msra.mxu0 0
        %4921 = vmatprep.subr.bf16.mxu0 0
        %4922 = vmatpush2.bf16.msra.mxu0 0
        %4923 = vmatprep.subr.bf16.mxu0 0
        %4924 = vmatpush2.bf16.msra.mxu0 0
        %4925 = vmatprep.subr.bf16.mxu0 0
        %4926 = vmatpush2.bf16.msra.mxu0 0
        %4927 = vmatprep.subr.bf16.mxu0 0
        %4928 = vmatpush2.bf16.msra.mxu0 0
        %4929 = vmatprep.mubr.bf16.mxu0 0
        %4930 = vmatmul.mubr.bf16.gmra.mxu0 %v2761
        %v4931 = vpop.f32.mrf.mxu0
        %v4932 = vadd.f32 0.0, %v4931
        %v4933 = vpop.f32.mrf.mxu0
        %v4934 = vpop.f32.mrf.mxu0
        %v4935 = vadd.f32 0.0, %v4934
        %v4936 = vpop.f32.mrf.mxu0
        %4937 = vmatprep.mubr.bf16.mxu0 0
        %4938 = vmatmul.mubr.bf16.gmra.mxu0 %v2764
        %v4939 = vpop.f32.mrf.mxu0
        %v4940 = vadd.f32 0.0, %v4939
        %v4941 = vpop.f32.mrf.mxu0
        %v4942 = vpop.f32.mrf.mxu0
        %v4943 = vadd.f32 0.0, %v4942
        %v4944 = vpop.f32.mrf.mxu0
        %4945 = vmatprep.mubr.bf16.mxu0 0
        %4946 = vmatmul.mubr.bf16.gmra.mxu0 %v2767
        %v4947 = vpop.f32.mrf.mxu0
        %v4948 = vadd.f32 0.0, %v4947
        %v4949 = vpop.f32.mrf.mxu0
        %v4950 = vpop.f32.mrf.mxu0
        %v4951 = vadd.f32 0.0, %v4950
        %v4952 = vpop.f32.mrf.mxu0
        %4953 = vmatprep.mubr.bf16.mxu0 0
        %4954 = vmatmul.mubr.bf16.gmra.mxu0 %v2770
        %v4955 = vpop.f32.mrf.mxu0
        %v4956 = vadd.f32 0.0, %v4955
        %v4957 = vpop.f32.mrf.mxu0
        %v4958 = vpop.f32.mrf.mxu0
        %v4959 = vadd.f32 0.0, %v4958
        %v4960 = vpop.f32.mrf.mxu0
        %4961 = vmatprep.mubr.bf16.mxu0 0
        %4962 = vmatmul.mubr.bf16.gmra.mxu0 %v2773
        %v4963 = vpop.f32.mrf.mxu0
        %v4964 = vadd.f32 0.0, %v4963
        %v4965 = vpop.f32.mrf.mxu0
        %v4966 = vpop.f32.mrf.mxu0
        %v4967 = vadd.f32 0.0, %v4966
        %v4968 = vpop.f32.mrf.mxu0
        %4969 = vmatprep.mubr.bf16.mxu0 0
        %4970 = vmatmul.mubr.bf16.gmra.mxu0 %v3656
        %v4971 = vpop.f32.mrf.mxu0
        %v4972 = vadd.f32 0.0, %v4971
        %v4973 = vpop.f32.mrf.mxu0
        %v4974 = vpop.f32.mrf.mxu0
        %v4975 = vadd.f32 0.0, %v4974
        %v4976 = vpop.f32.mrf.mxu0
        %4977 = vmatprep.mubr.bf16.mxu0 0
        %4978 = vmatmul.mubr.bf16.gmra.mxu0 %v4274
        %v4979 = vpop.f32.mrf.mxu0
        %v4980 = vadd.f32 0.0, %v4979
        %v4981 = vpop.f32.mrf.mxu0
        %v4982 = vpop.f32.mrf.mxu0
        %v4983 = vadd.f32 0.0, %v4982
        %v4984 = vpop.f32.mrf.mxu0
        %4985 = vmatprep.mubr.bf16.mxu0 0
        %4986 = vmatmul.mubr.bf16.gmra.mxu0 %v4892
        %v4987 = vpop.f32.mrf.mxu0
        %v4988 = vadd.f32 0.0, %v4987
        %v4989 = vpop.f32.mrf.mxu0
        %v4990 = vpop.f32.mrf.mxu0
        %v4991 = vadd.f32 0.0, %v4990
        %v4992 = vpop.f32.mrf.mxu0
        %4993 = vdwg.mxu0
        %v4994 = vadd.f32 %v4871, %v4932
        %v4995 = vadd.f32 %v4872, %v4935
        %v4996 = vadd.f32 %v4873, %v4940
        %v4997 = vadd.f32 %v4874, %v4943
        %v4998 = vadd.f32 %v4875, %v4948
        %v4999 = vadd.f32 %v4876, %v4951
        %v5000 = vadd.f32 %v4877, %v4956
        %v5001 = vadd.f32 %v4878, %v4959
        %v5002 = vadd.f32 %v4879, %v4964
        %v5003 = vadd.f32 %v4880, %v4967
        %v5004 = vadd.f32 %v4881, %v4972
        %v5005 = vadd.f32 %v4882, %v4975
        %v5006 = vadd.f32 %v4883, %v4980
        %v5007 = vadd.f32 %v4884, %v4983
        %v5008 = vadd.f32 %v4885, %v4988
        %v5009 = vadd.f32 %v4886, %v4991
        %s5010 = scalar_lea.vmem %s7, 34
        %v5011 = vld [vmem:[%s5010] sm:$0x3]
        %5012 = vrot.lane.b32.xlu0 %v2398, 120
        %v5013 = vpop.permute.xlu0 %5012
        %v5015 = vsel %vm726, %v5013, 0
        %v5018 = vsel %vm781, %v5011, 0
        %5020 = vmatprep.subr.bf16.mxu0 0
        %5021 = vmatpush1.bf16.msra.mxu0 0
        %5022 = vmatprep.subr.bf16.mxu0 0
        %5023 = vmatpush1.bf16.msra.mxu0 0
        %5024 = vmatprep.subr.bf16.mxu0 0
        %5025 = vmatpush1.bf16.msra.mxu0 0
        %5026 = vmatprep.subr.bf16.mxu0 0
        %5027 = vmatpush1.bf16.msra.mxu0 0
        %5028 = vmatprep.subr.bf16.mxu0 0
        %5029 = vmatpush1.bf16.msra.mxu0 0
        %5030 = vmatprep.subr.bf16.mxu0 0
        %5031 = vmatpush1.bf16.msra.mxu0 0
        %5032 = vmatprep.subr.bf16.mxu0 0
        %5033 = vmatpush1.bf16.msra.mxu0 0
        %5034 = vmatprep.subr.bf16.mxu0 0
        %5035 = vmatpush1.bf16.msra.mxu0 %v5018
        %5036 = vmatprep.subr.bf16.mxu0 0
        %5037 = vmatpush2.bf16.msra.mxu0 0
        %5038 = vmatprep.subr.bf16.mxu0 0
        %5039 = vmatpush2.bf16.msra.mxu0 0
        %5040 = vmatprep.subr.bf16.mxu0 0
        %5041 = vmatpush2.bf16.msra.mxu0 0
        %5042 = vmatprep.subr.bf16.mxu0 0
        %5043 = vmatpush2.bf16.msra.mxu0 0
        %5044 = vmatprep.subr.bf16.mxu0 0
        %5045 = vmatpush2.bf16.msra.mxu0 0
        %5046 = vmatprep.subr.bf16.mxu0 0
        %5047 = vmatpush2.bf16.msra.mxu0 0
        %5048 = vmatprep.subr.bf16.mxu0 0
        %5049 = vmatpush2.bf16.msra.mxu0 0
        %5050 = vmatprep.subr.bf16.mxu0 0
        %5051 = vmatpush2.bf16.msra.mxu0 0
        %5052 = vmatprep.mubr.bf16.mxu0 0
        %5053 = vmatmul.mubr.bf16.gmra.mxu0 %v3048
        %v5054 = vpop.f32.mrf.mxu0
        %v5055 = vadd.f32 0.0, %v5054
        %v5056 = vpop.f32.mrf.mxu0
        %v5057 = vpop.f32.mrf.mxu0
        %v5058 = vadd.f32 0.0, %v5057
        %v5059 = vpop.f32.mrf.mxu0
        %5060 = vmatprep.mubr.bf16.mxu0 0
        %5061 = vmatmul.mubr.bf16.gmra.mxu0 %v3051
        %v5062 = vpop.f32.mrf.mxu0
        %v5063 = vadd.f32 0.0, %v5062
        %v5064 = vpop.f32.mrf.mxu0
        %v5065 = vpop.f32.mrf.mxu0
        %v5066 = vadd.f32 0.0, %v5065
        %v5067 = vpop.f32.mrf.mxu0
        %5068 = vmatprep.mubr.bf16.mxu0 0
        %5069 = vmatmul.mubr.bf16.gmra.mxu0 %v3054
        %v5070 = vpop.f32.mrf.mxu0
        %v5071 = vadd.f32 0.0, %v5070
        %v5072 = vpop.f32.mrf.mxu0
        %v5073 = vpop.f32.mrf.mxu0
        %v5074 = vadd.f32 0.0, %v5073
        %v5075 = vpop.f32.mrf.mxu0
        %5076 = vmatprep.mubr.bf16.mxu0 0
        %5077 = vmatmul.mubr.bf16.gmra.mxu0 %v3057
        %v5078 = vpop.f32.mrf.mxu0
        %v5079 = vadd.f32 0.0, %v5078
        %v5080 = vpop.f32.mrf.mxu0
        %v5081 = vpop.f32.mrf.mxu0
        %v5082 = vadd.f32 0.0, %v5081
        %v5083 = vpop.f32.mrf.mxu0
        %5084 = vmatprep.mubr.bf16.mxu0 0
        %5085 = vmatmul.mubr.bf16.gmra.mxu0 %v3060
        %v5086 = vpop.f32.mrf.mxu0
        %v5087 = vadd.f32 0.0, %v5086
        %v5088 = vpop.f32.mrf.mxu0
        %v5089 = vpop.f32.mrf.mxu0
        %v5090 = vadd.f32 0.0, %v5089
        %v5091 = vpop.f32.mrf.mxu0
        %5092 = vmatprep.mubr.bf16.mxu0 0
        %5093 = vmatmul.mubr.bf16.gmra.mxu0 %v3779
        %v5094 = vpop.f32.mrf.mxu0
        %v5095 = vadd.f32 0.0, %v5094
        %v5096 = vpop.f32.mrf.mxu0
        %v5097 = vpop.f32.mrf.mxu0
        %v5098 = vadd.f32 0.0, %v5097
        %v5099 = vpop.f32.mrf.mxu0
        %5100 = vmatprep.mubr.bf16.mxu0 0
        %5101 = vmatmul.mubr.bf16.gmra.mxu0 %v4397
        %v5102 = vpop.f32.mrf.mxu0
        %v5103 = vadd.f32 0.0, %v5102
        %v5104 = vpop.f32.mrf.mxu0
        %v5105 = vpop.f32.mrf.mxu0
        %v5106 = vadd.f32 0.0, %v5105
        %v5107 = vpop.f32.mrf.mxu0
        %5108 = vmatprep.mubr.bf16.mxu0 0
        %5109 = vmatmul.mubr.bf16.gmra.mxu0 %v5015
        %v5110 = vpop.f32.mrf.mxu0
        %v5111 = vadd.f32 0.0, %v5110
        %v5112 = vpop.f32.mrf.mxu0
        %v5113 = vpop.f32.mrf.mxu0
        %v5114 = vadd.f32 0.0, %v5113
        %v5115 = vpop.f32.mrf.mxu0
        %5116 = vdwg.mxu0
        %v5117 = vadd.f32 %v4994, %v5055
        %v5118 = vadd.f32 %v4995, %v5058
        %v5119 = vadd.f32 %v4996, %v5063
        %v5120 = vadd.f32 %v4997, %v5066
        %v5121 = vadd.f32 %v4998, %v5071
        %v5122 = vadd.f32 %v4999, %v5074
        %v5123 = vadd.f32 %v5000, %v5079
        %v5124 = vadd.f32 %v5001, %v5082
        %v5125 = vadd.f32 %v5002, %v5087
        %v5126 = vadd.f32 %v5003, %v5090
        %v5127 = vadd.f32 %v5004, %v5095
        %v5128 = vadd.f32 %v5005, %v5098
        %v5129 = vadd.f32 %v5006, %v5103
        %v5130 = vadd.f32 %v5007, %v5106
        %v5131 = vadd.f32 %v5008, %v5111
        %v5132 = vadd.f32 %v5009, %v5114
        %s5133 = scalar_lea.vmem %s7, 36
        %v5134 = vld [vmem:[%s5133] sm:$0x3]
        %5135 = vrot.lane.b32.xlu0 %v2530, 120
        %v5136 = vpop.permute.xlu0 %5135
        %v5138 = vsel %vm726, %v5136, 0
        %v5141 = vsel %vm781, %v5134, 0
        %5143 = vmatprep.subr.bf16.mxu0 0
        %5144 = vmatpush1.bf16.msra.mxu0 0
        %5145 = vmatprep.subr.bf16.mxu0 0
        %5146 = vmatpush1.bf16.msra.mxu0 0
        %5147 = vmatprep.subr.bf16.mxu0 0
        %5148 = vmatpush1.bf16.msra.mxu0 0
        %5149 = vmatprep.subr.bf16.mxu0 0
        %5150 = vmatpush1.bf16.msra.mxu0 0
        %5151 = vmatprep.subr.bf16.mxu0 0
        %5152 = vmatpush1.bf16.msra.mxu0 0
        %5153 = vmatprep.subr.bf16.mxu0 0
        %5154 = vmatpush1.bf16.msra.mxu0 0
        %5155 = vmatprep.subr.bf16.mxu0 0
        %5156 = vmatpush1.bf16.msra.mxu0 0
        %5157 = vmatprep.subr.bf16.mxu0 0
        %5158 = vmatpush1.bf16.msra.mxu0 %v5141
        %5159 = vmatprep.subr.bf16.mxu0 0
        %5160 = vmatpush2.bf16.msra.mxu0 0
        %5161 = vmatprep.subr.bf16.mxu0 0
        %5162 = vmatpush2.bf16.msra.mxu0 0
        %5163 = vmatprep.subr.bf16.mxu0 0
        %5164 = vmatpush2.bf16.msra.mxu0 0
        %5165 = vmatprep.subr.bf16.mxu0 0
        %5166 = vmatpush2.bf16.msra.mxu0 0
        %5167 = vmatprep.subr.bf16.mxu0 0
        %5168 = vmatpush2.bf16.msra.mxu0 0
        %5169 = vmatprep.subr.bf16.mxu0 0
        %5170 = vmatpush2.bf16.msra.mxu0 0
        %5171 = vmatprep.subr.bf16.mxu0 0
        %5172 = vmatpush2.bf16.msra.mxu0 0
        %5173 = vmatprep.subr.bf16.mxu0 0
        %5174 = vmatpush2.bf16.msra.mxu0 0
        %5175 = vmatprep.mubr.bf16.mxu0 0
        %5176 = vmatmul.mubr.bf16.gmra.mxu0 %v3215
        %v5177 = vpop.f32.mrf.mxu0
        %v5178 = vadd.f32 0.0, %v5177
        %v5179 = vpop.f32.mrf.mxu0
        %v5180 = vpop.f32.mrf.mxu0
        %v5181 = vadd.f32 0.0, %v5180
        %v5182 = vpop.f32.mrf.mxu0
        %5183 = vmatprep.mubr.bf16.mxu0 0
        %5184 = vmatmul.mubr.bf16.gmra.mxu0 %v3218
        %v5185 = vpop.f32.mrf.mxu0
        %v5186 = vadd.f32 0.0, %v5185
        %v5187 = vpop.f32.mrf.mxu0
        %v5188 = vpop.f32.mrf.mxu0
        %v5189 = vadd.f32 0.0, %v5188
        %v5190 = vpop.f32.mrf.mxu0
        %5191 = vmatprep.mubr.bf16.mxu0 0
        %5192 = vmatmul.mubr.bf16.gmra.mxu0 %v3221
        %v5193 = vpop.f32.mrf.mxu0
        %v5194 = vadd.f32 0.0, %v5193
        %v5195 = vpop.f32.mrf.mxu0
        %v5196 = vpop.f32.mrf.mxu0
        %v5197 = vadd.f32 0.0, %v5196
        %v5198 = vpop.f32.mrf.mxu0
        %5199 = vmatprep.mubr.bf16.mxu0 0
        %5200 = vmatmul.mubr.bf16.gmra.mxu0 %v3224
        %v5201 = vpop.f32.mrf.mxu0
        %v5202 = vadd.f32 0.0, %v5201
        %v5203 = vpop.f32.mrf.mxu0
        %v5204 = vpop.f32.mrf.mxu0
        %v5205 = vadd.f32 0.0, %v5204
        %v5206 = vpop.f32.mrf.mxu0
        %5207 = vmatprep.mubr.bf16.mxu0 0
        %5208 = vmatmul.mubr.bf16.gmra.mxu0 %v3227
        %v5209 = vpop.f32.mrf.mxu0
        %v5210 = vadd.f32 0.0, %v5209
        %v5211 = vpop.f32.mrf.mxu0
        %v5212 = vpop.f32.mrf.mxu0
        %v5213 = vadd.f32 0.0, %v5212
        %v5214 = vpop.f32.mrf.mxu0
        %5215 = vmatprep.mubr.bf16.mxu0 0
        %5216 = vmatmul.mubr.bf16.gmra.mxu0 %v3902
        %v5217 = vpop.f32.mrf.mxu0
        %v5218 = vadd.f32 0.0, %v5217
        %v5219 = vpop.f32.mrf.mxu0
        %v5220 = vpop.f32.mrf.mxu0
        %v5221 = vadd.f32 0.0, %v5220
        %v5222 = vpop.f32.mrf.mxu0
        %5223 = vmatprep.mubr.bf16.mxu0 0
        %5224 = vmatmul.mubr.bf16.gmra.mxu0 %v4520
        %v5225 = vpop.f32.mrf.mxu0
        %v5226 = vadd.f32 0.0, %v5225
        %v5227 = vpop.f32.mrf.mxu0
        %v5228 = vpop.f32.mrf.mxu0
        %v5229 = vadd.f32 0.0, %v5228
        %v5230 = vpop.f32.mrf.mxu0
        %5231 = vmatprep.mubr.bf16.mxu0 0
        %5232 = vmatmul.mubr.bf16.gmra.mxu0 %v5138
        %v5233 = vpop.f32.mrf.mxu0
        %v5234 = vadd.f32 0.0, %v5233
        %v5235 = vpop.f32.mrf.mxu0
        %v5236 = vpop.f32.mrf.mxu0
        %v5237 = vadd.f32 0.0, %v5236
        %v5238 = vpop.f32.mrf.mxu0
        %5239 = vdwg.mxu0
        %v5240 = vadd.f32 %v5117, %v5178
        %v5241 = vadd.f32 %v5118, %v5181
        %v5242 = vadd.f32 %v5119, %v5186
        %v5243 = vadd.f32 %v5120, %v5189
        %v5244 = vadd.f32 %v5121, %v5194
        %v5245 = vadd.f32 %v5122, %v5197
        %v5246 = vadd.f32 %v5123, %v5202
        %v5247 = vadd.f32 %v5124, %v5205
        %v5248 = vadd.f32 %v5125, %v5210
        %v5249 = vadd.f32 %v5126, %v5213
        %v5250 = vadd.f32 %v5127, %v5218
        %v5251 = vadd.f32 %v5128, %v5221
        %v5252 = vadd.f32 %v5129, %v5226
        %v5253 = vadd.f32 %v5130, %v5229
        %v5254 = vadd.f32 %v5131, %v5234
        %v5255 = vadd.f32 %v5132, %v5237
        %v5256 = vrot.slane %v1210, 2
        %v5257 = vrot.slane %v1211, 2
        %v5258 = vsel %vm3345, %v5256, %v5257
        %s5259 = scalar_lea.vmem %s7, 38
        %v5260 = vld [vmem:[%s5259] sm:$0x3]
        %5261 = vrot.lane.b32.xlu0 %v5258, 120
        %v5262 = vpop.permute.xlu0 %5261
        %v5264 = vsel %vm726, %v5262, 0
        %v5267 = vsel %vm781, %v5260, 0
        %5269 = vmatprep.subr.bf16.mxu0 0
        %5270 = vmatpush1.bf16.msra.mxu0 0
        %5271 = vmatprep.subr.bf16.mxu0 0
        %5272 = vmatpush1.bf16.msra.mxu0 0
        %5273 = vmatprep.subr.bf16.mxu0 0
        %5274 = vmatpush1.bf16.msra.mxu0 0
        %5275 = vmatprep.subr.bf16.mxu0 0
        %5276 = vmatpush1.bf16.msra.mxu0 0
        %5277 = vmatprep.subr.bf16.mxu0 0
        %5278 = vmatpush1.bf16.msra.mxu0 0
        %5279 = vmatprep.subr.bf16.mxu0 0
        %5280 = vmatpush1.bf16.msra.mxu0 0
        %5281 = vmatprep.subr.bf16.mxu0 0
        %5282 = vmatpush1.bf16.msra.mxu0 0
        %5283 = vmatprep.subr.bf16.mxu0 0
        %5284 = vmatpush1.bf16.msra.mxu0 %v5267
        %5285 = vmatprep.subr.bf16.mxu0 0
        %5286 = vmatpush2.bf16.msra.mxu0 0
        %5287 = vmatprep.subr.bf16.mxu0 0
        %5288 = vmatpush2.bf16.msra.mxu0 0
        %5289 = vmatprep.subr.bf16.mxu0 0
        %5290 = vmatpush2.bf16.msra.mxu0 0
        %5291 = vmatprep.subr.bf16.mxu0 0
        %5292 = vmatpush2.bf16.msra.mxu0 0
        %5293 = vmatprep.subr.bf16.mxu0 0
        %5294 = vmatpush2.bf16.msra.mxu0 0
        %5295 = vmatprep.subr.bf16.mxu0 0
        %5296 = vmatpush2.bf16.msra.mxu0 0
        %5297 = vmatprep.subr.bf16.mxu0 0
        %5298 = vmatpush2.bf16.msra.mxu0 0
        %5299 = vmatprep.subr.bf16.mxu0 0
        %5300 = vmatpush2.bf16.msra.mxu0 0
        %5301 = vmatprep.mubr.bf16.mxu0 0
        %5302 = vmatmul.mubr.bf16.gmra.mxu0 %v3398
        %v5303 = vpop.f32.mrf.mxu0
        %v5304 = vadd.f32 0.0, %v5303
        %v5305 = vpop.f32.mrf.mxu0
        %v5306 = vpop.f32.mrf.mxu0
        %v5307 = vadd.f32 0.0, %v5306
        %v5308 = vpop.f32.mrf.mxu0
        %5309 = vmatprep.mubr.bf16.mxu0 0
        %5310 = vmatmul.mubr.bf16.gmra.mxu0 %v3401
        %v5311 = vpop.f32.mrf.mxu0
        %v5312 = vadd.f32 0.0, %v5311
        %v5313 = vpop.f32.mrf.mxu0
        %v5314 = vpop.f32.mrf.mxu0
        %v5315 = vadd.f32 0.0, %v5314
        %v5316 = vpop.f32.mrf.mxu0
        %5317 = vmatprep.mubr.bf16.mxu0 0
        %5318 = vmatmul.mubr.bf16.gmra.mxu0 %v3404
        %v5319 = vpop.f32.mrf.mxu0
        %v5320 = vadd.f32 0.0, %v5319
        %v5321 = vpop.f32.mrf.mxu0
        %v5322 = vpop.f32.mrf.mxu0
        %v5323 = vadd.f32 0.0, %v5322
        %v5324 = vpop.f32.mrf.mxu0
        %5325 = vmatprep.mubr.bf16.mxu0 0
        %5326 = vmatmul.mubr.bf16.gmra.mxu0 %v3407
        %v5327 = vpop.f32.mrf.mxu0
        %v5328 = vadd.f32 0.0, %v5327
        %v5329 = vpop.f32.mrf.mxu0
        %v5330 = vpop.f32.mrf.mxu0
        %v5331 = vadd.f32 0.0, %v5330
        %v5332 = vpop.f32.mrf.mxu0
        %5333 = vmatprep.mubr.bf16.mxu0 0
        %5334 = vmatmul.mubr.bf16.gmra.mxu0 %v3410
        %v5335 = vpop.f32.mrf.mxu0
        %v5336 = vadd.f32 0.0, %v5335
        %v5337 = vpop.f32.mrf.mxu0
        %v5338 = vpop.f32.mrf.mxu0
        %v5339 = vadd.f32 0.0, %v5338
        %v5340 = vpop.f32.mrf.mxu0
        %5341 = vmatprep.mubr.bf16.mxu0 0
        %5342 = vmatmul.mubr.bf16.gmra.mxu0 %v4028
        %v5343 = vpop.f32.mrf.mxu0
        %v5344 = vadd.f32 0.0, %v5343
        %v5345 = vpop.f32.mrf.mxu0
        %v5346 = vpop.f32.mrf.mxu0
        %v5347 = vadd.f32 0.0, %v5346
        %v5348 = vpop.f32.mrf.mxu0
        %5349 = vmatprep.mubr.bf16.mxu0 0
        %5350 = vmatmul.mubr.bf16.gmra.mxu0 %v4646
        %v5351 = vpop.f32.mrf.mxu0
        %v5352 = vadd.f32 0.0, %v5351
        %v5353 = vpop.f32.mrf.mxu0
        %v5354 = vpop.f32.mrf.mxu0
        %v5355 = vadd.f32 0.0, %v5354
        %v5356 = vpop.f32.mrf.mxu0
        %5357 = vmatprep.mubr.bf16.mxu0 0
        %5358 = vmatmul.mubr.bf16.gmra.mxu0 %v5264
        %v5359 = vpop.f32.mrf.mxu0
        %v5360 = vadd.f32 0.0, %v5359
        %v5361 = vpop.f32.mrf.mxu0
        %v5362 = vpop.f32.mrf.mxu0
        %v5363 = vadd.f32 0.0, %v5362
        %v5364 = vpop.f32.mrf.mxu0
        %5365 = vdwg.mxu0
        %v5366 = vadd.f32 %v5240, %v5304
        %v5367 = vadd.f32 %v5241, %v5307
        %v5368 = vadd.f32 %v5242, %v5312
        %v5369 = vadd.f32 %v5243, %v5315
        %v5370 = vadd.f32 %v5244, %v5320
        %v5371 = vadd.f32 %v5245, %v5323
        %v5372 = vadd.f32 %v5246, %v5328
        %v5373 = vadd.f32 %v5247, %v5331
        %v5374 = vadd.f32 %v5248, %v5336
        %v5375 = vadd.f32 %v5249, %v5339
        %v5376 = vadd.f32 %v5250, %v5344
        %v5377 = vadd.f32 %v5251, %v5347
        %v5378 = vadd.f32 %v5252, %v5352
        %v5379 = vadd.f32 %v5253, %v5355
        %v5380 = vadd.f32 %v5254, %v5360
        %v5381 = vadd.f32 %v5255, %v5363
        %s5382 = scalar_lea.vmem %s7, 40
        %v5383 = vld [vmem:[%s5382] sm:$0x3]
        %5385 = vrot.lane.b32.xlu0 %v2718, 120
        %v5386 = vpop.permute.xlu0 %5385
        %v5388 = vsel %vm726, %v5386, 0
        %v5391 = vsel %vm781, %v5383, 0
        %5393 = vmatprep.subr.bf16.mxu0 0
        %5394 = vmatpush1.bf16.msra.mxu0 0
        %5395 = vmatprep.subr.bf16.mxu0 0
        %5396 = vmatpush1.bf16.msra.mxu0 0
        %5397 = vmatprep.subr.bf16.mxu0 0
        %5398 = vmatpush1.bf16.msra.mxu0 0
        %5399 = vmatprep.subr.bf16.mxu0 0
        %5400 = vmatpush1.bf16.msra.mxu0 0
        %5401 = vmatprep.subr.bf16.mxu0 0
        %5402 = vmatpush1.bf16.msra.mxu0 0
        %5403 = vmatprep.subr.bf16.mxu0 0
        %5404 = vmatpush1.bf16.msra.mxu0 0
        %5405 = vmatprep.subr.bf16.mxu0 0
        %5406 = vmatpush1.bf16.msra.mxu0 0
        %5407 = vmatprep.subr.bf16.mxu0 0
        %5408 = vmatpush1.bf16.msra.mxu0 %v5391
        %5409 = vmatprep.subr.bf16.mxu0 0
        %5410 = vmatpush2.bf16.msra.mxu0 0
        %5411 = vmatprep.subr.bf16.mxu0 0
        %5412 = vmatpush2.bf16.msra.mxu0 0
        %5413 = vmatprep.subr.bf16.mxu0 0
        %5414 = vmatpush2.bf16.msra.mxu0 0
        %5415 = vmatprep.subr.bf16.mxu0 0
        %5416 = vmatpush2.bf16.msra.mxu0 0
        %5417 = vmatprep.subr.bf16.mxu0 0
        %5418 = vmatpush2.bf16.msra.mxu0 0
        %5419 = vmatprep.subr.bf16.mxu0 0
        %5420 = vmatpush2.bf16.msra.mxu0 0
        %5421 = vmatprep.subr.bf16.mxu0 0
        %5422 = vmatpush2.bf16.msra.mxu0 0
        %5423 = vmatprep.subr.bf16.mxu0 0
        %5424 = vmatpush2.bf16.msra.mxu0 0
        %5425 = vmatprep.mubr.bf16.mxu0 0
        %5426 = vmatmul.mubr.bf16.gmra.mxu0 %v2905
        %v5427 = vpop.f32.mrf.mxu0
        %v5428 = vadd.f32 0.0, %v5427
        %v5429 = vpop.f32.mrf.mxu0
        %v5430 = vpop.f32.mrf.mxu0
        %v5431 = vadd.f32 0.0, %v5430
        %v5432 = vpop.f32.mrf.mxu0
        %5433 = vmatprep.mubr.bf16.mxu0 0
        %5434 = vmatmul.mubr.bf16.gmra.mxu0 %v2908
        %v5435 = vpop.f32.mrf.mxu0
        %v5436 = vadd.f32 0.0, %v5435
        %v5437 = vpop.f32.mrf.mxu0
        %v5438 = vpop.f32.mrf.mxu0
        %v5439 = vadd.f32 0.0, %v5438
        %v5440 = vpop.f32.mrf.mxu0
        %5441 = vmatprep.mubr.bf16.mxu0 0
        %5442 = vmatmul.mubr.bf16.gmra.mxu0 %v2911
        %v5443 = vpop.f32.mrf.mxu0
        %v5444 = vadd.f32 0.0, %v5443
        %v5445 = vpop.f32.mrf.mxu0
        %v5446 = vpop.f32.mrf.mxu0
        %v5447 = vadd.f32 0.0, %v5446
        %v5448 = vpop.f32.mrf.mxu0
        %5449 = vmatprep.mubr.bf16.mxu0 0
        %5450 = vmatmul.mubr.bf16.gmra.mxu0 %v2914
        %v5451 = vpop.f32.mrf.mxu0
        %v5452 = vadd.f32 0.0, %v5451
        %v5453 = vpop.f32.mrf.mxu0
        %v5454 = vpop.f32.mrf.mxu0
        %v5455 = vadd.f32 0.0, %v5454
        %v5456 = vpop.f32.mrf.mxu0
        %5457 = vmatprep.mubr.bf16.mxu0 0
        %5458 = vmatmul.mubr.bf16.gmra.mxu0 %v3533
        %v5459 = vpop.f32.mrf.mxu0
        %v5460 = vadd.f32 0.0, %v5459
        %v5461 = vpop.f32.mrf.mxu0
        %v5462 = vpop.f32.mrf.mxu0
        %v5463 = vadd.f32 0.0, %v5462
        %v5464 = vpop.f32.mrf.mxu0
        %5465 = vmatprep.mubr.bf16.mxu0 0
        %5466 = vmatmul.mubr.bf16.gmra.mxu0 %v4151
        %v5467 = vpop.f32.mrf.mxu0
        %v5468 = vadd.f32 0.0, %v5467
        %v5469 = vpop.f32.mrf.mxu0
        %v5470 = vpop.f32.mrf.mxu0
        %v5471 = vadd.f32 0.0, %v5470
        %v5472 = vpop.f32.mrf.mxu0
        %5473 = vmatprep.mubr.bf16.mxu0 0
        %5474 = vmatmul.mubr.bf16.gmra.mxu0 %v4769
        %v5475 = vpop.f32.mrf.mxu0
        %v5476 = vadd.f32 0.0, %v5475
        %v5477 = vpop.f32.mrf.mxu0
        %v5478 = vpop.f32.mrf.mxu0
        %v5479 = vadd.f32 0.0, %v5478
        %v5480 = vpop.f32.mrf.mxu0
        %5481 = vmatprep.mubr.bf16.mxu0 0
        %5482 = vmatmul.mubr.bf16.gmra.mxu0 %v5388
        %v5483 = vpop.f32.mrf.mxu0
        %v5484 = vadd.f32 0.0, %v5483
        %v5485 = vpop.f32.mrf.mxu0
        %v5486 = vpop.f32.mrf.mxu0
        %v5487 = vadd.f32 0.0, %v5486
        %v5488 = vpop.f32.mrf.mxu0
        %5489 = vdwg.mxu0
        %v5490 = vadd.f32 %v5366, %v5428
        %v5491 = vadd.f32 %v5367, %v5431
        %v5492 = vadd.f32 %v5368, %v5436
        %v5493 = vadd.f32 %v5369, %v5439
        %v5494 = vadd.f32 %v5370, %v5444
        %v5495 = vadd.f32 %v5371, %v5447
        %v5496 = vadd.f32 %v5372, %v5452
        %v5497 = vadd.f32 %v5373, %v5455
        %v5498 = vadd.f32 %v5374, %v5460
        %v5499 = vadd.f32 %v5375, %v5463
        %v5500 = vadd.f32 %v5376, %v5468
        %v5501 = vadd.f32 %v5377, %v5471
        %v5502 = vadd.f32 %v5378, %v5476
        %v5503 = vadd.f32 %v5379, %v5479
        %v5504 = vadd.f32 %v5380, %v5484
        %v5505 = vadd.f32 %v5381, %v5487
        %v5507 = vshrl.u32 %v2718, 16
        %v5509 = vshll.u32 %v2718, 16
        %v5511 = vrot.slane %v5509, 1
        %v5512 = vor.u32 %v5507, %v5511
        %v5514 = vshll.u32 %v2719, 16
        %v5516 = vrot.slane %v5514, 1
        %v5517 = vsel %vm1212, %v5512, %v5516
        %s5518 = scalar_lea.vmem %s7, 42
        %v5519 = vld [vmem:[%s5518] sm:$0x3]
        %5520 = vrot.lane.b32.xlu0 %v5517, 120
        %v5521 = vpop.permute.xlu0 %5520
        %v5523 = vsel %vm726, %v5521, 0
        %v5526 = vsel %vm781, %v5519, 0
        %5528 = vmatprep.subr.bf16.mxu0 0
        %5529 = vmatpush1.bf16.msra.mxu0 0
        %5530 = vmatprep.subr.bf16.mxu0 0
        %5531 = vmatpush1.bf16.msra.mxu0 0
        %5532 = vmatprep.subr.bf16.mxu0 0
        %5533 = vmatpush1.bf16.msra.mxu0 0
        %5534 = vmatprep.subr.bf16.mxu0 0
        %5535 = vmatpush1.bf16.msra.mxu0 0
        %5536 = vmatprep.subr.bf16.mxu0 0
        %5537 = vmatpush1.bf16.msra.mxu0 0
        %5538 = vmatprep.subr.bf16.mxu0 0
        %5539 = vmatpush1.bf16.msra.mxu0 0
        %5540 = vmatprep.subr.bf16.mxu0 0
        %5541 = vmatpush1.bf16.msra.mxu0 0
        %5542 = vmatprep.subr.bf16.mxu0 0
        %5543 = vmatpush1.bf16.msra.mxu0 %v5526
        %5544 = vmatprep.subr.bf16.mxu0 0
        %5545 = vmatpush2.bf16.msra.mxu0 0
        %5546 = vmatprep.subr.bf16.mxu0 0
        %5547 = vmatpush2.bf16.msra.mxu0 0
        %5548 = vmatprep.subr.bf16.mxu0 0
        %5549 = vmatpush2.bf16.msra.mxu0 0
        %5550 = vmatprep.subr.bf16.mxu0 0
        %5551 = vmatpush2.bf16.msra.mxu0 0
        %5552 = vmatprep.subr.bf16.mxu0 0
        %5553 = vmatpush2.bf16.msra.mxu0 0
        %5554 = vmatprep.subr.bf16.mxu0 0
        %5555 = vmatpush2.bf16.msra.mxu0 0
        %5556 = vmatprep.subr.bf16.mxu0 0
        %5557 = vmatpush2.bf16.msra.mxu0 0
        %5558 = vmatprep.subr.bf16.mxu0 0
        %5559 = vmatpush2.bf16.msra.mxu0 0
        %5560 = vmatprep.mubr.bf16.mxu0 0
        %5561 = vmatmul.mubr.bf16.gmra.mxu0 %v2764
        %v5562 = vpop.f32.mrf.mxu0
        %v5563 = vadd.f32 0.0, %v5562
        %v5564 = vpop.f32.mrf.mxu0
        %v5565 = vpop.f32.mrf.mxu0
        %v5566 = vadd.f32 0.0, %v5565
        %v5567 = vpop.f32.mrf.mxu0
        %5568 = vmatprep.mubr.bf16.mxu0 0
        %5569 = vmatmul.mubr.bf16.gmra.mxu0 %v2767
        %v5570 = vpop.f32.mrf.mxu0
        %v5571 = vadd.f32 0.0, %v5570
        %v5572 = vpop.f32.mrf.mxu0
        %v5573 = vpop.f32.mrf.mxu0
        %v5574 = vadd.f32 0.0, %v5573
        %v5575 = vpop.f32.mrf.mxu0
        %5576 = vmatprep.mubr.bf16.mxu0 0
        %5577 = vmatmul.mubr.bf16.gmra.mxu0 %v2770
        %v5578 = vpop.f32.mrf.mxu0
        %v5579 = vadd.f32 0.0, %v5578
        %v5580 = vpop.f32.mrf.mxu0
        %v5581 = vpop.f32.mrf.mxu0
        %v5582 = vadd.f32 0.0, %v5581
        %v5583 = vpop.f32.mrf.mxu0
        %5584 = vmatprep.mubr.bf16.mxu0 0
        %5585 = vmatmul.mubr.bf16.gmra.mxu0 %v2773
        %v5586 = vpop.f32.mrf.mxu0
        %v5587 = vadd.f32 0.0, %v5586
        %v5588 = vpop.f32.mrf.mxu0
        %v5589 = vpop.f32.mrf.mxu0
        %v5590 = vadd.f32 0.0, %v5589
        %v5591 = vpop.f32.mrf.mxu0
        %5592 = vmatprep.mubr.bf16.mxu0 0
        %5593 = vmatmul.mubr.bf16.gmra.mxu0 %v3656
        %v5594 = vpop.f32.mrf.mxu0
        %v5595 = vadd.f32 0.0, %v5594
        %v5596 = vpop.f32.mrf.mxu0
        %v5597 = vpop.f32.mrf.mxu0
        %v5598 = vadd.f32 0.0, %v5597
        %v5599 = vpop.f32.mrf.mxu0
        %5600 = vmatprep.mubr.bf16.mxu0 0
        %5601 = vmatmul.mubr.bf16.gmra.mxu0 %v4274
        %v5602 = vpop.f32.mrf.mxu0
        %v5603 = vadd.f32 0.0, %v5602
        %v5604 = vpop.f32.mrf.mxu0
        %v5605 = vpop.f32.mrf.mxu0
        %v5606 = vadd.f32 0.0, %v5605
        %v5607 = vpop.f32.mrf.mxu0
        %5608 = vmatprep.mubr.bf16.mxu0 0
        %5609 = vmatmul.mubr.bf16.gmra.mxu0 %v4892
        %v5610 = vpop.f32.mrf.mxu0
        %v5611 = vadd.f32 0.0, %v5610
        %v5612 = vpop.f32.mrf.mxu0
        %v5613 = vpop.f32.mrf.mxu0
        %v5614 = vadd.f32 0.0, %v5613
        %v5615 = vpop.f32.mrf.mxu0
        %5616 = vmatprep.mubr.bf16.mxu0 0
        %5617 = vmatmul.mubr.bf16.gmra.mxu0 %v5523
        %v5618 = vpop.f32.mrf.mxu0
        %v5619 = vadd.f32 0.0, %v5618
        %v5620 = vpop.f32.mrf.mxu0
        %v5621 = vpop.f32.mrf.mxu0
        %v5622 = vadd.f32 0.0, %v5621
        %v5623 = vpop.f32.mrf.mxu0
        %5624 = vdwg.mxu0
        %v5625 = vadd.f32 %v5490, %v5563
        %v5626 = vadd.f32 %v5491, %v5566
        %v5627 = vadd.f32 %v5492, %v5571
        %v5628 = vadd.f32 %v5493, %v5574
        %v5629 = vadd.f32 %v5494, %v5579
        %v5630 = vadd.f32 %v5495, %v5582
        %v5631 = vadd.f32 %v5496, %v5587
        %v5632 = vadd.f32 %v5497, %v5590
        %v5633 = vadd.f32 %v5498, %v5595
        %v5634 = vadd.f32 %v5499, %v5598
        %v5635 = vadd.f32 %v5500, %v5603
        %v5636 = vadd.f32 %v5501, %v5606
        %v5637 = vadd.f32 %v5502, %v5611
        %v5638 = vadd.f32 %v5503, %v5614
        %v5639 = vadd.f32 %v5504, %v5619
        %v5640 = vadd.f32 %v5505, %v5622
        %v5642 = vrot.slane %v2718, 1
        %v5643 = vrot.slane %v2719, 1
        %v5644 = vsel %vm1326, %v5642, %v5643
        %s5645 = scalar_lea.vmem %s7, 44
        %v5646 = vld [vmem:[%s5645] sm:$0x3]
        %5647 = vrot.lane.b32.xlu0 %v5644, 120
        %v5648 = vpop.permute.xlu0 %5647
        %v5650 = vsel %vm726, %v5648, 0
        %v5653 = vsel %vm781, %v5646, 0
        %5655 = vmatprep.subr.bf16.mxu0 0
        %5656 = vmatpush1.bf16.msra.mxu0 0
        %5657 = vmatprep.subr.bf16.mxu0 0
        %5658 = vmatpush1.bf16.msra.mxu0 0
        %5659 = vmatprep.subr.bf16.mxu0 0
        %5660 = vmatpush1.bf16.msra.mxu0 0
        %5661 = vmatprep.subr.bf16.mxu0 0
        %5662 = vmatpush1.bf16.msra.mxu0 0
        %5663 = vmatprep.subr.bf16.mxu0 0
        %5664 = vmatpush1.bf16.msra.mxu0 0
        %5665 = vmatprep.subr.bf16.mxu0 0
        %5666 = vmatpush1.bf16.msra.mxu0 0
        %5667 = vmatprep.subr.bf16.mxu0 0
        %5668 = vmatpush1.bf16.msra.mxu0 0
        %5669 = vmatprep.subr.bf16.mxu0 0
        %5670 = vmatpush1.bf16.msra.mxu0 %v5653
        %5671 = vmatprep.subr.bf16.mxu0 0
        %5672 = vmatpush2.bf16.msra.mxu0 0
        %5673 = vmatprep.subr.bf16.mxu0 0
        %5674 = vmatpush2.bf16.msra.mxu0 0
        %5675 = vmatprep.subr.bf16.mxu0 0
        %5676 = vmatpush2.bf16.msra.mxu0 0
        %5677 = vmatprep.subr.bf16.mxu0 0
        %5678 = vmatpush2.bf16.msra.mxu0 0
        %5679 = vmatprep.subr.bf16.mxu0 0
        %5680 = vmatpush2.bf16.msra.mxu0 0
        %5681 = vmatprep.subr.bf16.mxu0 0
        %5682 = vmatpush2.bf16.msra.mxu0 0
        %5683 = vmatprep.subr.bf16.mxu0 0
        %5684 = vmatpush2.bf16.msra.mxu0 0
        %5685 = vmatprep.subr.bf16.mxu0 0
        %5686 = vmatpush2.bf16.msra.mxu0 0
        %5687 = vmatprep.mubr.bf16.mxu0 0
        %5688 = vmatmul.mubr.bf16.gmra.mxu0 %v3051
        %v5689 = vpop.f32.mrf.mxu0
        %v5690 = vadd.f32 0.0, %v5689
        %v5691 = vpop.f32.mrf.mxu0
        %v5692 = vpop.f32.mrf.mxu0
        %v5693 = vadd.f32 0.0, %v5692
        %v5694 = vpop.f32.mrf.mxu0
        %5695 = vmatprep.mubr.bf16.mxu0 0
        %5696 = vmatmul.mubr.bf16.gmra.mxu0 %v3054
        %v5697 = vpop.f32.mrf.mxu0
        %v5698 = vadd.f32 0.0, %v5697
        %v5699 = vpop.f32.mrf.mxu0
        %v5700 = vpop.f32.mrf.mxu0
        %v5701 = vadd.f32 0.0, %v5700
        %v5702 = vpop.f32.mrf.mxu0
        %5703 = vmatprep.mubr.bf16.mxu0 0
        %5704 = vmatmul.mubr.bf16.gmra.mxu0 %v3057
        %v5705 = vpop.f32.mrf.mxu0
        %v5706 = vadd.f32 0.0, %v5705
        %v5707 = vpop.f32.mrf.mxu0
        %v5708 = vpop.f32.mrf.mxu0
        %v5709 = vadd.f32 0.0, %v5708
        %v5710 = vpop.f32.mrf.mxu0
        %5711 = vmatprep.mubr.bf16.mxu0 0
        %5712 = vmatmul.mubr.bf16.gmra.mxu0 %v3060
        %v5713 = vpop.f32.mrf.mxu0
        %v5714 = vadd.f32 0.0, %v5713
        %v5715 = vpop.f32.mrf.mxu0
        %v5716 = vpop.f32.mrf.mxu0
        %v5717 = vadd.f32 0.0, %v5716
        %v5718 = vpop.f32.mrf.mxu0
        %5719 = vmatprep.mubr.bf16.mxu0 0
        %5720 = vmatmul.mubr.bf16.gmra.mxu0 %v3779
        %v5721 = vpop.f32.mrf.mxu0
        %v5722 = vadd.f32 0.0, %v5721
        %v5723 = vpop.f32.mrf.mxu0
        %v5724 = vpop.f32.mrf.mxu0
        %v5725 = vadd.f32 0.0, %v5724
        %v5726 = vpop.f32.mrf.mxu0
        %5727 = vmatprep.mubr.bf16.mxu0 0
        %5728 = vmatmul.mubr.bf16.gmra.mxu0 %v4397
        %v5729 = vpop.f32.mrf.mxu0
        %v5730 = vadd.f32 0.0, %v5729
        %v5731 = vpop.f32.mrf.mxu0
        %v5732 = vpop.f32.mrf.mxu0
        %v5733 = vadd.f32 0.0, %v5732
        %v5734 = vpop.f32.mrf.mxu0
        %5735 = vmatprep.mubr.bf16.mxu0 0
        %5736 = vmatmul.mubr.bf16.gmra.mxu0 %v5015
        %v5737 = vpop.f32.mrf.mxu0
        %v5738 = vadd.f32 0.0, %v5737
        %v5739 = vpop.f32.mrf.mxu0
        %v5740 = vpop.f32.mrf.mxu0
        %v5741 = vadd.f32 0.0, %v5740
        %v5742 = vpop.f32.mrf.mxu0
        %5743 = vmatprep.mubr.bf16.mxu0 0
        %5744 = vmatmul.mubr.bf16.gmra.mxu0 %v5650
        %v5745 = vpop.f32.mrf.mxu0
        %v5746 = vadd.f32 0.0, %v5745
        %v5747 = vpop.f32.mrf.mxu0
        %v5748 = vpop.f32.mrf.mxu0
        %v5749 = vadd.f32 0.0, %v5748
        %v5750 = vpop.f32.mrf.mxu0
        %5751 = vdwg.mxu0
        %v5752 = vadd.f32 %v5625, %v5690
        %v5753 = vadd.f32 %v5626, %v5693
        %v5754 = vadd.f32 %v5627, %v5698
        %v5755 = vadd.f32 %v5628, %v5701
        %v5756 = vadd.f32 %v5629, %v5706
        %v5757 = vadd.f32 %v5630, %v5709
        %v5758 = vadd.f32 %v5631, %v5714
        %v5759 = vadd.f32 %v5632, %v5717
        %v5760 = vadd.f32 %v5633, %v5722
        %v5761 = vadd.f32 %v5634, %v5725
        %v5762 = vadd.f32 %v5635, %v5730
        %v5763 = vadd.f32 %v5636, %v5733
        %v5764 = vadd.f32 %v5637, %v5738
        %v5765 = vadd.f32 %v5638, %v5741
        %v5766 = vadd.f32 %v5639, %v5746
        %v5767 = vadd.f32 %v5640, %v5749
        %v5768 = vrot.slane %v5507, 1
        %v5769 = vrot.slane %v5509, 2
        %v5770 = vor.u32 %v5768, %v5769
        %v5771 = vshrl.u32 %v2719, 16
        %v5773 = vrot.slane %v5771, 1
        %v5774 = vrot.slane %v5514, 2
        %v5775 = vor.u32 %v5773, %v5774
        %v5776 = vsel %vm1633, %v5770, %v5775
        %s5777 = scalar_lea.vmem %s7, 46
        %v5778 = vld [vmem:[%s5777] sm:$0x3]
        %5779 = vrot.lane.b32.xlu0 %v5776, 120
        %v5780 = vpop.permute.xlu0 %5779
        %v5782 = vsel %vm726, %v5780, 0
        %v5785 = vsel %vm781, %v5778, 0
        %5787 = vmatprep.subr.bf16.mxu0 0
        %5788 = vmatpush1.bf16.msra.mxu0 0
        %5789 = vmatprep.subr.bf16.mxu0 0
        %5790 = vmatpush1.bf16.msra.mxu0 0
        %5791 = vmatprep.subr.bf16.mxu0 0
        %5792 = vmatpush1.bf16.msra.mxu0 0
        %5793 = vmatprep.subr.bf16.mxu0 0
        %5794 = vmatpush1.bf16.msra.mxu0 0
        %5795 = vmatprep.subr.bf16.mxu0 0
        %5796 = vmatpush1.bf16.msra.mxu0 0
        %5797 = vmatprep.subr.bf16.mxu0 0
        %5798 = vmatpush1.bf16.msra.mxu0 0
        %5799 = vmatprep.subr.bf16.mxu0 0
        %5800 = vmatpush1.bf16.msra.mxu0 0
        %5801 = vmatprep.subr.bf16.mxu0 0
        %5802 = vmatpush1.bf16.msra.mxu0 %v5785
        %5803 = vmatprep.subr.bf16.mxu0 0
        %5804 = vmatpush2.bf16.msra.mxu0 0
        %5805 = vmatprep.subr.bf16.mxu0 0
        %5806 = vmatpush2.bf16.msra.mxu0 0
        %5807 = vmatprep.subr.bf16.mxu0 0
        %5808 = vmatpush2.bf16.msra.mxu0 0
        %5809 = vmatprep.subr.bf16.mxu0 0
        %5810 = vmatpush2.bf16.msra.mxu0 0
        %5811 = vmatprep.subr.bf16.mxu0 0
        %5812 = vmatpush2.bf16.msra.mxu0 0
        %5813 = vmatprep.subr.bf16.mxu0 0
        %5814 = vmatpush2.bf16.msra.mxu0 0
        %5815 = vmatprep.subr.bf16.mxu0 0
        %5816 = vmatpush2.bf16.msra.mxu0 0
        %5817 = vmatprep.subr.bf16.mxu0 0
        %5818 = vmatpush2.bf16.msra.mxu0 0
        %5819 = vmatprep.mubr.bf16.mxu0 0
        %5820 = vmatmul.mubr.bf16.gmra.mxu0 %v3218
        %v5821 = vpop.f32.mrf.mxu0
        %v5822 = vadd.f32 0.0, %v5821
        %v5823 = vpop.f32.mrf.mxu0
        %v5824 = vpop.f32.mrf.mxu0
        %v5825 = vadd.f32 0.0, %v5824
        %v5826 = vpop.f32.mrf.mxu0
        %5827 = vmatprep.mubr.bf16.mxu0 0
        %5828 = vmatmul.mubr.bf16.gmra.mxu0 %v3221
        %v5829 = vpop.f32.mrf.mxu0
        %v5830 = vadd.f32 0.0, %v5829
        %v5831 = vpop.f32.mrf.mxu0
        %v5832 = vpop.f32.mrf.mxu0
        %v5833 = vadd.f32 0.0, %v5832
        %v5834 = vpop.f32.mrf.mxu0
        %5835 = vmatprep.mubr.bf16.mxu0 0
        %5836 = vmatmul.mubr.bf16.gmra.mxu0 %v3224
        %v5837 = vpop.f32.mrf.mxu0
        %v5838 = vadd.f32 0.0, %v5837
        %v5839 = vpop.f32.mrf.mxu0
        %v5840 = vpop.f32.mrf.mxu0
        %v5841 = vadd.f32 0.0, %v5840
        %v5842 = vpop.f32.mrf.mxu0
        %5843 = vmatprep.mubr.bf16.mxu0 0
        %5844 = vmatmul.mubr.bf16.gmra.mxu0 %v3227
        %v5845 = vpop.f32.mrf.mxu0
        %v5846 = vadd.f32 0.0, %v5845
        %v5847 = vpop.f32.mrf.mxu0
        %v5848 = vpop.f32.mrf.mxu0
        %v5849 = vadd.f32 0.0, %v5848
        %v5850 = vpop.f32.mrf.mxu0
        %5851 = vmatprep.mubr.bf16.mxu0 0
        %5852 = vmatmul.mubr.bf16.gmra.mxu0 %v3902
        %v5853 = vpop.f32.mrf.mxu0
        %v5854 = vadd.f32 0.0, %v5853
        %v5855 = vpop.f32.mrf.mxu0
        %v5856 = vpop.f32.mrf.mxu0
        %v5857 = vadd.f32 0.0, %v5856
        %v5858 = vpop.f32.mrf.mxu0
        %5859 = vmatprep.mubr.bf16.mxu0 0
        %5860 = vmatmul.mubr.bf16.gmra.mxu0 %v4520
        %v5861 = vpop.f32.mrf.mxu0
        %v5862 = vadd.f32 0.0, %v5861
        %v5863 = vpop.f32.mrf.mxu0
        %v5864 = vpop.f32.mrf.mxu0
        %v5865 = vadd.f32 0.0, %v5864
        %v5866 = vpop.f32.mrf.mxu0
        %5867 = vmatprep.mubr.bf16.mxu0 0
        %5868 = vmatmul.mubr.bf16.gmra.mxu0 %v5138
        %v5869 = vpop.f32.mrf.mxu0
        %v5870 = vadd.f32 0.0, %v5869
        %v5871 = vpop.f32.mrf.mxu0
        %v5872 = vpop.f32.mrf.mxu0
        %v5873 = vadd.f32 0.0, %v5872
        %v5874 = vpop.f32.mrf.mxu0
        %5875 = vmatprep.mubr.bf16.mxu0 0
        %5876 = vmatmul.mubr.bf16.gmra.mxu0 %v5782
        %v5877 = vpop.f32.mrf.mxu0
        %v5878 = vadd.f32 0.0, %v5877
        %v5879 = vpop.f32.mrf.mxu0
        %v5880 = vpop.f32.mrf.mxu0
        %v5881 = vadd.f32 0.0, %v5880
        %v5882 = vpop.f32.mrf.mxu0
        %5883 = vdwg.mxu0
        %v5884 = vadd.f32 %v5752, %v5822
        %v5885 = vadd.f32 %v5753, %v5825
        %v5886 = vadd.f32 %v5754, %v5830
        %v5887 = vadd.f32 %v5755, %v5833
        %v5888 = vadd.f32 %v5756, %v5838
        %v5889 = vadd.f32 %v5757, %v5841
        %v5890 = vadd.f32 %v5758, %v5846
        %v5891 = vadd.f32 %v5759, %v5849
        %v5892 = vadd.f32 %v5760, %v5854
        %v5893 = vadd.f32 %v5761, %v5857
        %v5894 = vadd.f32 %v5762, %v5862
        %v5895 = vadd.f32 %v5763, %v5865
        %v5896 = vadd.f32 %v5764, %v5870
        %v5897 = vadd.f32 %v5765, %v5873
        %v5898 = vadd.f32 %v5766, %v5878
        %v5899 = vadd.f32 %v5767, %v5881
        %v5900 = vrot.slane %v2718, 2
        %v5901 = vrot.slane %v2719, 2
        %v5902 = vsel %vm3345, %v5900, %v5901
        %s5903 = scalar_lea.vmem %s7, 48
        %v5904 = vld [vmem:[%s5903] sm:$0x3]
        %5905 = vrot.lane.b32.xlu0 %v5902, 120
        %v5906 = vpop.permute.xlu0 %5905
        %v5908 = vsel %vm726, %v5906, 0
        %v5911 = vsel %vm781, %v5904, 0
        %5913 = vmatprep.subr.bf16.mxu0 0
        %5914 = vmatpush1.bf16.msra.mxu0 0
        %5915 = vmatprep.subr.bf16.mxu0 0
        %5916 = vmatpush1.bf16.msra.mxu0 0
        %5917 = vmatprep.subr.bf16.mxu0 0
        %5918 = vmatpush1.bf16.msra.mxu0 0
        %5919 = vmatprep.subr.bf16.mxu0 0
        %5920 = vmatpush1.bf16.msra.mxu0 0
        %5921 = vmatprep.subr.bf16.mxu0 0
        %5922 = vmatpush1.bf16.msra.mxu0 0
        %5923 = vmatprep.subr.bf16.mxu0 0
        %5924 = vmatpush1.bf16.msra.mxu0 0
        %5925 = vmatprep.subr.bf16.mxu0 0
        %5926 = vmatpush1.bf16.msra.mxu0 0
        %5927 = vmatprep.subr.bf16.mxu0 0
        %5928 = vmatpush1.bf16.msra.mxu0 %v5911
        %5929 = vmatprep.subr.bf16.mxu0 0
        %5930 = vmatpush2.bf16.msra.mxu0 0
        %5931 = vmatprep.subr.bf16.mxu0 0
        %5932 = vmatpush2.bf16.msra.mxu0 0
        %5933 = vmatprep.subr.bf16.mxu0 0
        %5934 = vmatpush2.bf16.msra.mxu0 0
        %5935 = vmatprep.subr.bf16.mxu0 0
        %5936 = vmatpush2.bf16.msra.mxu0 0
        %5937 = vmatprep.subr.bf16.mxu0 0
        %5938 = vmatpush2.bf16.msra.mxu0 0
        %5939 = vmatprep.subr.bf16.mxu0 0
        %5940 = vmatpush2.bf16.msra.mxu0 0
        %5941 = vmatprep.subr.bf16.mxu0 0
        %5942 = vmatpush2.bf16.msra.mxu0 0
        %5943 = vmatprep.subr.bf16.mxu0 0
        %5944 = vmatpush2.bf16.msra.mxu0 0
        %5945 = vmatprep.mubr.bf16.mxu0 0
        %5946 = vmatmul.mubr.bf16.gmra.mxu0 %v3401
        %v5947 = vpop.f32.mrf.mxu0
        %v5948 = vadd.f32 0.0, %v5947
        %v5949 = vpop.f32.mrf.mxu0
        %v5950 = vpop.f32.mrf.mxu0
        %v5951 = vadd.f32 0.0, %v5950
        %v5952 = vpop.f32.mrf.mxu0
        %5953 = vmatprep.mubr.bf16.mxu0 0
        %5954 = vmatmul.mubr.bf16.gmra.mxu0 %v3404
        %v5955 = vpop.f32.mrf.mxu0
        %v5956 = vadd.f32 0.0, %v5955
        %v5957 = vpop.f32.mrf.mxu0
        %v5958 = vpop.f32.mrf.mxu0
        %v5959 = vadd.f32 0.0, %v5958
        %v5960 = vpop.f32.mrf.mxu0
        %5961 = vmatprep.mubr.bf16.mxu0 0
        %5962 = vmatmul.mubr.bf16.gmra.mxu0 %v3407
        %v5963 = vpop.f32.mrf.mxu0
        %v5964 = vadd.f32 0.0, %v5963
        %v5965 = vpop.f32.mrf.mxu0
        %v5966 = vpop.f32.mrf.mxu0
        %v5967 = vadd.f32 0.0, %v5966
        %v5968 = vpop.f32.mrf.mxu0
        %5969 = vmatprep.mubr.bf16.mxu0 0
        %5970 = vmatmul.mubr.bf16.gmra.mxu0 %v3410
        %v5971 = vpop.f32.mrf.mxu0
        %v5972 = vadd.f32 0.0, %v5971
        %v5973 = vpop.f32.mrf.mxu0
        %v5974 = vpop.f32.mrf.mxu0
        %v5975 = vadd.f32 0.0, %v5974
        %v5976 = vpop.f32.mrf.mxu0
        %5977 = vmatprep.mubr.bf16.mxu0 0
        %5978 = vmatmul.mubr.bf16.gmra.mxu0 %v4028
        %v5979 = vpop.f32.mrf.mxu0
        %v5980 = vadd.f32 0.0, %v5979
        %v5981 = vpop.f32.mrf.mxu0
        %v5982 = vpop.f32.mrf.mxu0
        %v5983 = vadd.f32 0.0, %v5982
        %v5984 = vpop.f32.mrf.mxu0
        %5985 = vmatprep.mubr.bf16.mxu0 0
        %5986 = vmatmul.mubr.bf16.gmra.mxu0 %v4646
        %v5987 = vpop.f32.mrf.mxu0
        %v5988 = vadd.f32 0.0, %v5987
        %v5989 = vpop.f32.mrf.mxu0
        %v5990 = vpop.f32.mrf.mxu0
        %v5991 = vadd.f32 0.0, %v5990
        %v5992 = vpop.f32.mrf.mxu0
        %5993 = vmatprep.mubr.bf16.mxu0 0
        %5994 = vmatmul.mubr.bf16.gmra.mxu0 %v5264
        %v5995 = vpop.f32.mrf.mxu0
        %v5996 = vadd.f32 0.0, %v5995
        %v5997 = vpop.f32.mrf.mxu0
        %v5998 = vpop.f32.mrf.mxu0
        %v5999 = vadd.f32 0.0, %v5998
        %v6000 = vpop.f32.mrf.mxu0
        %6001 = vmatprep.mubr.bf16.mxu0 0
        %6002 = vmatmul.mubr.bf16.gmra.mxu0 %v5908
        %v6003 = vpop.f32.mrf.mxu0
        %v6004 = vadd.f32 0.0, %v6003
        %v6005 = vpop.f32.mrf.mxu0
        %v6006 = vpop.f32.mrf.mxu0
        %v6007 = vadd.f32 0.0, %v6006
        %v6008 = vpop.f32.mrf.mxu0
        %6009 = vdwg.mxu0
        %v6010 = vadd.f32 %v5884, %v5948
        %v6011 = vadd.f32 %v5885, %v5951
        %v6012 = vadd.f32 %v5886, %v5956
        %v6013 = vadd.f32 %v5887, %v5959
        %v6014 = vadd.f32 %v5888, %v5964
        %v6015 = vadd.f32 %v5889, %v5967
        %v6016 = vadd.f32 %v5890, %v5972
        %v6017 = vadd.f32 %v5891, %v5975
        %v6018 = vadd.f32 %v5892, %v5980
        %v6019 = vadd.f32 %v5893, %v5983
        %v6020 = vadd.f32 %v5894, %v5988
        %v6021 = vadd.f32 %v5895, %v5991
        %v6022 = vadd.f32 %v5896, %v5996
        %v6023 = vadd.f32 %v5897, %v5999
        %v6024 = vadd.f32 %v5898, %v6004
        %v6025 = vadd.f32 %v5899, %v6007
        %v6026 = vld [vmem:[%s8] sm:$0x1]
        %v6028 = vlaneseq
        %v6029 = vshrl.u32 %v6028, 7
        %v6030 = vsub.s32 0, %v6029
        %v6031 = vrot.slane %v6026, %v6030
        %v6033 = vmul.f32 %v6010, %v6031
        %v6034 = vmul.f32 %v6011, %v6031
        %v6035 = vmul.f32 %v6012, %v6031
        %v6036 = vmul.f32 %v6013, %v6031
        %v6037 = vmul.f32 %v6014, %v6031
        %v6038 = vmul.f32 %v6015, %v6031
        %v6039 = vmul.f32 %v6016, %v6031
        %v6040 = vmul.f32 %v6017, %v6031
        %v6041 = vmul.f32 %v6018, %v6031
        %v6042 = vmul.f32 %v6019, %v6031
        %v6043 = vmul.f32 %v6020, %v6031
        %v6044 = vmul.f32 %v6021, %v6031
        %v6045 = vmul.f32 %v6022, %v6031
        %v6046 = vmul.f32 %v6023, %v6031
        %v6047 = vmul.f32 %v6024, %v6031
        %v6048 = vmul.f32 %v6025, %v6031
        %v6049 = vld [vmem:[%s9] sm:$0x1]
        %v6051 = vlaneseq
        %v6052 = vshrl.u32 %v6051, 7
        %v6053 = vsub.s32 0, %v6052
        %v6054 = vrot.slane %v6049, %v6053
        %v6056 = vadd.f32 %v6033, %v6054
        %v6057 = vadd.f32 %v6034, %v6054
        %v6058 = vadd.f32 %v6035, %v6054
        %v6059 = vadd.f32 %v6036, %v6054
        %v6060 = vadd.f32 %v6037, %v6054
        %v6061 = vadd.f32 %v6038, %v6054
        %v6062 = vadd.f32 %v6039, %v6054
        %v6063 = vadd.f32 %v6040, %v6054
        %v6064 = vadd.f32 %v6041, %v6054
        %v6065 = vadd.f32 %v6042, %v6054
        %v6066 = vadd.f32 %v6043, %v6054
        %v6067 = vadd.f32 %v6044, %v6054
        %v6068 = vadd.f32 %v6045, %v6054
        %v6069 = vadd.f32 %v6046, %v6054
        %v6070 = vadd.f32 %v6047, %v6054
        %v6071 = vadd.f32 %v6048, %v6054
        %v6072 = vmax.f32 %v6056, 0.0
        %v6073 = vmax.f32 %v6057, 0.0
        %v6074 = vmax.f32 %v6058, 0.0
        %v6075 = vmax.f32 %v6059, 0.0
        %v6076 = vmax.f32 %v6060, 0.0
        %v6077 = vmax.f32 %v6061, 0.0
        %v6078 = vmax.f32 %v6062, 0.0
        %v6079 = vmax.f32 %v6063, 0.0
        %v6080 = vmax.f32 %v6064, 0.0
        %v6081 = vmax.f32 %v6065, 0.0
        %v6082 = vmax.f32 %v6066, 0.0
        %v6083 = vmax.f32 %v6067, 0.0
        %v6084 = vmax.f32 %v6068, 0.0
        %v6085 = vmax.f32 %v6069, 0.0
        %v6086 = vmax.f32 %v6070, 0.0
        %v6087 = vmax.f32 %v6071, 0.0
        %v6088 = vsel %vm1123, %v456, -3.4028235e+38
        %v6089 = vsel %vm1124, %v457, -3.4028235e+38
        %v6090 = vsel %vm1125, %v458, -3.4028235e+38
        %v6091 = vsel %vm1126, %v459, -3.4028235e+38
        %v6092 = vsel %vm1127, %v460, -3.4028235e+38
        %v6093 = vsel %vm1128, %v461, -3.4028235e+38
        %v6094 = vsel %vm1129, %v462, -3.4028235e+38
        %v6095 = vsel %vm1130, %v463, -3.4028235e+38
        %v6096 = vsel %vm1131, %v464, -3.4028235e+38
        %v6097 = vsel %vm1132, %v465, -3.4028235e+38
        %v6098 = vsel %vm1133, %v466, -3.4028235e+38
        %v6099 = vsel %vm1134, %v467, -3.4028235e+38
        %v6100 = vsel %vm1135, %v468, -3.4028235e+38
        %v6101 = vsel %vm1136, %v469, -3.4028235e+38
        %v6102 = vsel %vm1137, %v470, -3.4028235e+38
        %v6103 = vsel %vm1138, %v471, -3.4028235e+38
        %v6104 = vsel %vm1139, %v472, -3.4028235e+38
        %v6105 = vsel %vm1140, %v473, -3.4028235e+38
        %v6106 = vsel %vm1141, %v474, -3.4028235e+38
        %v6107 = vsel %vm1142, %v475, -3.4028235e+38
        %v6108 = vsel %vm1143, %v476, -3.4028235e+38
        %v6109 = vsel %vm1144, %v477, -3.4028235e+38
        %v6110 = vsel %vm1145, %v478, -3.4028235e+38
        %v6111 = vsel %vm1146, %v479, -3.4028235e+38
        %v6112 = vsel %vm1147, %v480, -3.4028235e+38
        %v6113 = vsel %vm1148, %v481, -3.4028235e+38
        %v6114 = vsel %vm1149, %v482, -3.4028235e+38
        %v6115 = vsel %vm1150, %v483, -3.4028235e+38
        %v6116 = vsel %vm1151, %v484, -3.4028235e+38
        %v6117 = vsel %vm1152, %v485, -3.4028235e+38
        %vm6142 = vcmask 1046528
        %v6143 = vrot.slane %v6088, 1
        %v6144 = vrot.slane %v6089, 1
        %v6145 = vsel %vm6142, %v6143, %v6144
        %v6146 = vrot.slane %v6090, 1
        %v6147 = vsel %vm6142, %v6144, %v6146
        %v6148 = vrot.slane %v6091, 1
        %v6149 = vrot.slane %v6092, 1
        %v6150 = vsel %vm6142, %v6148, %v6149
        %v6151 = vrot.slane %v6093, 1
        %v6152 = vsel %vm6142, %v6149, %v6151
        %v6153 = vrot.slane %v6094, 1
        %v6154 = vrot.slane %v6095, 1
        %v6155 = vsel %vm6142, %v6153, %v6154
        %v6156 = vrot.slane %v6096, 1
        %v6157 = vsel %vm6142, %v6154, %v6156
        %v6158 = vrot.slane %v6097, 1
        %v6159 = vrot.slane %v6098, 1
        %v6160 = vsel %vm6142, %v6158, %v6159
        %v6161 = vrot.slane %v6099, 1
        %v6162 = vsel %vm6142, %v6159, %v6161
        %v6163 = vrot.slane %v6100, 1
        %v6164 = vrot.slane %v6101, 1
        %v6165 = vsel %vm6142, %v6163, %v6164
        %v6166 = vrot.slane %v6102, 1
        %v6167 = vsel %vm6142, %v6164, %v6166
        %v6168 = vrot.slane %v6103, 1
        %v6169 = vrot.slane %v6104, 1
        %v6170 = vsel %vm6142, %v6168, %v6169
        %v6171 = vrot.slane %v6105, 1
        %v6172 = vsel %vm6142, %v6169, %v6171
        %v6173 = vrot.slane %v6106, 1
        %v6174 = vrot.slane %v6107, 1
        %v6175 = vsel %vm6142, %v6173, %v6174
        %v6176 = vrot.slane %v6108, 1
        %v6177 = vsel %vm6142, %v6174, %v6176
        %v6178 = vrot.slane %v6109, 1
        %v6179 = vrot.slane %v6110, 1
        %v6180 = vsel %vm6142, %v6178, %v6179
        %v6181 = vrot.slane %v6111, 1
        %v6182 = vsel %vm6142, %v6179, %v6181
        %v6207 = vmax.f32 %v6088, %v6145
        %v6208 = vmax.f32 %v6089, %v6147
        %v6209 = vmax.f32 %v6090, %v6146
        %v6210 = vmax.f32 %v6091, %v6150
        %v6211 = vmax.f32 %v6092, %v6152
        %v6212 = vmax.f32 %v6093, %v6151
        %v6213 = vmax.f32 %v6094, %v6155
        %v6214 = vmax.f32 %v6095, %v6157
        %v6215 = vmax.f32 %v6096, %v6156
        %v6216 = vmax.f32 %v6097, %v6160
        %v6217 = vmax.f32 %v6098, %v6162
        %v6218 = vmax.f32 %v6099, %v6161
        %v6219 = vmax.f32 %v6100, %v6165
        %v6220 = vmax.f32 %v6101, %v6167
        %v6221 = vmax.f32 %v6102, %v6166
        %v6222 = vmax.f32 %v6103, %v6170
        %v6223 = vmax.f32 %v6104, %v6172
        %v6224 = vmax.f32 %v6105, %v6171
        %v6225 = vmax.f32 %v6106, %v6175
        %v6226 = vmax.f32 %v6107, %v6177
        %v6227 = vmax.f32 %v6108, %v6176
        %v6228 = vmax.f32 %v6109, %v6180
        %v6229 = vmax.f32 %v6110, %v6182
        %v6230 = vmax.f32 %v6111, %v6181
        %vm6231 = vcmask 1045504
        %v6232 = vrot.slane %v6088, 2
        %v6233 = vrot.slane %v6089, 2
        %v6234 = vsel %vm6231, %v6232, %v6233
        %v6235 = vrot.slane %v6090, 2
        %v6236 = vsel %vm6231, %v6233, %v6235
        %v6237 = vrot.slane %v6091, 2
        %v6238 = vrot.slane %v6092, 2
        %v6239 = vsel %vm6231, %v6237, %v6238
        %v6240 = vrot.slane %v6093, 2
        %v6241 = vsel %vm6231, %v6238, %v6240
        %v6242 = vrot.slane %v6094, 2
        %v6243 = vrot.slane %v6095, 2
        %v6244 = vsel %vm6231, %v6242, %v6243
        %v6245 = vrot.slane %v6096, 2
        %v6246 = vsel %vm6231, %v6243, %v6245
        %v6247 = vrot.slane %v6097, 2
        %v6248 = vrot.slane %v6098, 2
        %v6249 = vsel %vm6231, %v6247, %v6248
        %v6250 = vrot.slane %v6099, 2
        %v6251 = vsel %vm6231, %v6248, %v6250
        %v6252 = vrot.slane %v6100, 2
        %v6253 = vrot.slane %v6101, 2
        %v6254 = vsel %vm6231, %v6252, %v6253
        %v6255 = vrot.slane %v6102, 2
        %v6256 = vsel %vm6231, %v6253, %v6255
        %v6257 = vrot.slane %v6103, 2
        %v6258 = vrot.slane %v6104, 2
        %v6259 = vsel %vm6231, %v6257, %v6258
        %v6260 = vrot.slane %v6105, 2
        %v6261 = vsel %vm6231, %v6258, %v6260
        %v6262 = vrot.slane %v6106, 2
        %v6263 = vrot.slane %v6107, 2
        %v6264 = vsel %vm6231, %v6262, %v6263
        %v6265 = vrot.slane %v6108, 2
        %v6266 = vsel %vm6231, %v6263, %v6265
        %v6267 = vrot.slane %v6109, 2
        %v6268 = vrot.slane %v6110, 2
        %v6269 = vsel %vm6231, %v6267, %v6268
        %v6270 = vrot.slane %v6111, 2
        %v6271 = vsel %vm6231, %v6268, %v6270
        %v6296 = vmax.f32 %v6207, %v6234
        %v6297 = vmax.f32 %v6208, %v6236
        %v6298 = vmax.f32 %v6209, %v6235
        %v6299 = vmax.f32 %v6210, %v6239
        %v6300 = vmax.f32 %v6211, %v6241
        %v6301 = vmax.f32 %v6212, %v6240
        %v6302 = vmax.f32 %v6213, %v6244
        %v6303 = vmax.f32 %v6214, %v6246
        %v6304 = vmax.f32 %v6215, %v6245
        %v6305 = vmax.f32 %v6216, %v6249
        %v6306 = vmax.f32 %v6217, %v6251
        %v6307 = vmax.f32 %v6218, %v6250
        %v6308 = vmax.f32 %v6219, %v6254
        %v6309 = vmax.f32 %v6220, %v6256
        %v6310 = vmax.f32 %v6221, %v6255
        %v6311 = vmax.f32 %v6222, %v6259
        %v6312 = vmax.f32 %v6223, %v6261
        %v6313 = vmax.f32 %v6224, %v6260
        %v6314 = vmax.f32 %v6225, %v6264
        %v6315 = vmax.f32 %v6226, %v6266
        %v6316 = vmax.f32 %v6227, %v6265
        %v6317 = vmax.f32 %v6228, %v6269
        %v6318 = vmax.f32 %v6229, %v6271
        %v6319 = vmax.f32 %v6230, %v6270
        %v6320 = vmax.f32 %v6296, %v6091
        %v6321 = vmax.f32 %v6297, %v6092
        %v6322 = vmax.f32 %v6298, %v6093
        %v6323 = vmax.f32 %v6299, %v6094
        %v6324 = vmax.f32 %v6300, %v6095
        %v6325 = vmax.f32 %v6301, %v6096
        %v6326 = vmax.f32 %v6302, %v6097
        %v6327 = vmax.f32 %v6303, %v6098
        %v6328 = vmax.f32 %v6304, %v6099
        %v6329 = vmax.f32 %v6305, %v6100
        %v6330 = vmax.f32 %v6306, %v6101
        %v6331 = vmax.f32 %v6307, %v6102
        %v6332 = vmax.f32 %v6308, %v6103
        %v6333 = vmax.f32 %v6309, %v6104
        %v6334 = vmax.f32 %v6310, %v6105
        %v6335 = vmax.f32 %v6311, %v6106
        %v6336 = vmax.f32 %v6312, %v6107
        %v6337 = vmax.f32 %v6313, %v6108
        %v6338 = vmax.f32 %v6314, %v6109
        %v6339 = vmax.f32 %v6315, %v6110
        %v6340 = vmax.f32 %v6316, %v6111
        %v6341 = vmax.f32 %v6317, %v6112
        %v6342 = vmax.f32 %v6318, %v6113
        %v6343 = vmax.f32 %v6319, %v6114
        %v6347 = vrot.slane %v6112, 1
        %v6348 = vrot.slane %v6113, 1
        %v6349 = vsel %vm6142, %v6347, %v6348
        %v6350 = vrot.slane %v6114, 1
        %v6351 = vsel %vm6142, %v6348, %v6350
        %v6355 = vmax.f32 %v6320, %v6150
        %v6356 = vmax.f32 %v6321, %v6152
        %v6357 = vmax.f32 %v6322, %v6151
        %v6358 = vmax.f32 %v6323, %v6155
        %v6359 = vmax.f32 %v6324, %v6157
        %v6360 = vmax.f32 %v6325, %v6156
        %v6361 = vmax.f32 %v6326, %v6160
        %v6362 = vmax.f32 %v6327, %v6162
        %v6363 = vmax.f32 %v6328, %v6161
        %v6364 = vmax.f32 %v6329, %v6165
        %v6365 = vmax.f32 %v6330, %v6167
        %v6366 = vmax.f32 %v6331, %v6166
        %v6367 = vmax.f32 %v6332, %v6170
        %v6368 = vmax.f32 %v6333, %v6172
        %v6369 = vmax.f32 %v6334, %v6171
        %v6370 = vmax.f32 %v6335, %v6175
        %v6371 = vmax.f32 %v6336, %v6177
        %v6372 = vmax.f32 %v6337, %v6176
        %v6373 = vmax.f32 %v6338, %v6180
        %v6374 = vmax.f32 %v6339, %v6182
        %v6375 = vmax.f32 %v6340, %v6181
        %v6376 = vmax.f32 %v6341, %v6349
        %v6377 = vmax.f32 %v6342, %v6351
        %v6378 = vmax.f32 %v6343, %v6350
        %v6379 = vrot.slane %v6112, 2
        %v6380 = vrot.slane %v6113, 2
        %v6381 = vsel %vm6231, %v6379, %v6380
        %v6382 = vrot.slane %v6114, 2
        %v6383 = vsel %vm6231, %v6380, %v6382
        %v6387 = vmax.f32 %v6355, %v6239
        %v6388 = vmax.f32 %v6356, %v6241
        %v6389 = vmax.f32 %v6357, %v6240
        %v6390 = vmax.f32 %v6358, %v6244
        %v6391 = vmax.f32 %v6359, %v6246
        %v6392 = vmax.f32 %v6360, %v6245
        %v6393 = vmax.f32 %v6361, %v6249
        %v6394 = vmax.f32 %v6362, %v6251
        %v6395 = vmax.f32 %v6363, %v6250
        %v6396 = vmax.f32 %v6364, %v6254
        %v6397 = vmax.f32 %v6365, %v6256
        %v6398 = vmax.f32 %v6366, %v6255
        %v6399 = vmax.f32 %v6367, %v6259
        %v6400 = vmax.f32 %v6368, %v6261
        %v6401 = vmax.f32 %v6369, %v6260
        %v6402 = vmax.f32 %v6370, %v6264
        %v6403 = vmax.f32 %v6371, %v6266
        %v6404 = vmax.f32 %v6372, %v6265
        %v6405 = vmax.f32 %v6373, %v6269
        %v6406 = vmax.f32 %v6374, %v6271
        %v6407 = vmax.f32 %v6375, %v6270
        %v6408 = vmax.f32 %v6376, %v6381
        %v6409 = vmax.f32 %v6377, %v6383
        %v6410 = vmax.f32 %v6378, %v6382
        %v6411 = vmax.f32 %v6387, %v6094
        %v6412 = vmax.f32 %v6388, %v6095
        %v6413 = vmax.f32 %v6389, %v6096
        %v6414 = vmax.f32 %v6390, %v6097
        %v6415 = vmax.f32 %v6391, %v6098
        %v6416 = vmax.f32 %v6392, %v6099
        %v6417 = vmax.f32 %v6393, %v6100
        %v6418 = vmax.f32 %v6394, %v6101
        %v6419 = vmax.f32 %v6395, %v6102
        %v6420 = vmax.f32 %v6396, %v6103
        %v6421 = vmax.f32 %v6397, %v6104
        %v6422 = vmax.f32 %v6398, %v6105
        %v6423 = vmax.f32 %v6399, %v6106
        %v6424 = vmax.f32 %v6400, %v6107
        %v6425 = vmax.f32 %v6401, %v6108
        %v6426 = vmax.f32 %v6402, %v6109
        %v6427 = vmax.f32 %v6403, %v6110
        %v6428 = vmax.f32 %v6404, %v6111
        %v6429 = vmax.f32 %v6405, %v6112
        %v6430 = vmax.f32 %v6406, %v6113
        %v6431 = vmax.f32 %v6407, %v6114
        %v6432 = vmax.f32 %v6408, %v6115
        %v6433 = vmax.f32 %v6409, %v6116
        %v6434 = vmax.f32 %v6410, %v6117
        %v6438 = vrot.slane %v6115, 1
        %v6439 = vrot.slane %v6116, 1
        %v6440 = vsel %vm6142, %v6438, %v6439
        %v6441 = vrot.slane %v6117, 1
        %v6442 = vsel %vm6142, %v6439, %v6441
        %v6446 = vmax.f32 %v6411, %v6155
        %v6447 = vmax.f32 %v6412, %v6157
        %v6448 = vmax.f32 %v6413, %v6156
        %v6449 = vmax.f32 %v6414, %v6160
        %v6450 = vmax.f32 %v6415, %v6162
        %v6451 = vmax.f32 %v6416, %v6161
        %v6452 = vmax.f32 %v6417, %v6165
        %v6453 = vmax.f32 %v6418, %v6167
        %v6454 = vmax.f32 %v6419, %v6166
        %v6455 = vmax.f32 %v6420, %v6170
        %v6456 = vmax.f32 %v6421, %v6172
        %v6457 = vmax.f32 %v6422, %v6171
        %v6458 = vmax.f32 %v6423, %v6175
        %v6459 = vmax.f32 %v6424, %v6177
        %v6460 = vmax.f32 %v6425, %v6176
        %v6461 = vmax.f32 %v6426, %v6180
        %v6462 = vmax.f32 %v6427, %v6182
        %v6463 = vmax.f32 %v6428, %v6181
        %v6464 = vmax.f32 %v6429, %v6349
        %v6465 = vmax.f32 %v6430, %v6351
        %v6466 = vmax.f32 %v6431, %v6350
        %v6467 = vmax.f32 %v6432, %v6440
        %v6468 = vmax.f32 %v6433, %v6442
        %v6469 = vmax.f32 %v6434, %v6441
        %v6470 = vrot.slane %v6115, 2
        %v6471 = vrot.slane %v6116, 2
        %v6472 = vsel %vm6231, %v6470, %v6471
        %v6473 = vrot.slane %v6117, 2
        %v6474 = vsel %vm6231, %v6471, %v6473
        %v6478 = vmax.f32 %v6446, %v6244
        %v6479 = vmax.f32 %v6447, %v6246
        %v6480 = vmax.f32 %v6448, %v6245
        %v6481 = vmax.f32 %v6449, %v6249
        %v6482 = vmax.f32 %v6450, %v6251
        %v6483 = vmax.f32 %v6451, %v6250
        %v6484 = vmax.f32 %v6452, %v6254
        %v6485 = vmax.f32 %v6453, %v6256
        %v6486 = vmax.f32 %v6454, %v6255
        %v6487 = vmax.f32 %v6455, %v6259
        %v6488 = vmax.f32 %v6456, %v6261
        %v6489 = vmax.f32 %v6457, %v6260
        %v6490 = vmax.f32 %v6458, %v6264
        %v6491 = vmax.f32 %v6459, %v6266
        %v6492 = vmax.f32 %v6460, %v6265
        %v6493 = vmax.f32 %v6461, %v6269
        %v6494 = vmax.f32 %v6462, %v6271
        %v6495 = vmax.f32 %v6463, %v6270
        %v6496 = vmax.f32 %v6464, %v6381
        %v6497 = vmax.f32 %v6465, %v6383
        %v6498 = vmax.f32 %v6466, %v6382
        %v6499 = vmax.f32 %v6467, %v6472
        %v6500 = vmax.f32 %v6468, %v6474
        %v6501 = vmax.f32 %v6469, %v6473
        %v6502 = vpack.c.bf16 %v6479, %v6478
        %v6503 = vpack.c.bf16 %v6480, %v6480
        %v6504 = vpack.c.bf16 %v6482, %v6481
        %v6505 = vpack.c.bf16 %v6483, %v6483
        %v6506 = vpack.c.bf16 %v6485, %v6484
        %v6507 = vpack.c.bf16 %v6486, %v6486
        %v6508 = vpack.c.bf16 %v6488, %v6487
        %v6509 = vpack.c.bf16 %v6489, %v6489
        %v6510 = vpack.c.bf16 %v6491, %v6490
        %v6511 = vpack.c.bf16 %v6492, %v6492
        %v6512 = vpack.c.bf16 %v6494, %v6493
        %v6513 = vpack.c.bf16 %v6495, %v6495
        %v6514 = vpack.c.bf16 %v6497, %v6496
        %v6515 = vpack.c.bf16 %v6498, %v6498
        %v6516 = vpack.c.bf16 %v6500, %v6499
        %v6517 = vpack.c.bf16 %v6501, %v6501
        %v6519 = vshrl.u32 %v6502, 16
        %v6521 = vshll.u32 %v6502, 16
        %v6523 = vrot.slane %v6521, 1
        %v6524 = vor.u32 %v6519, %v6523
        %v6526 = vshll.u32 %v6503, 16
        %v6528 = vrot.slane %v6526, 1
        %v6529 = vsel %vm1212, %v6524, %v6528
        %v6531 = vshrl.u32 %v6504, 16
        %v6533 = vshll.u32 %v6504, 16
        %v6535 = vrot.slane %v6533, 1
        %v6536 = vor.u32 %v6531, %v6535
        %v6538 = vshll.u32 %v6505, 16
        %v6540 = vrot.slane %v6538, 1
        %v6541 = vsel %vm1212, %v6536, %v6540
        %v6543 = vshrl.u32 %v6506, 16
        %v6545 = vshll.u32 %v6506, 16
        %v6547 = vrot.slane %v6545, 1
        %v6548 = vor.u32 %v6543, %v6547
        %v6550 = vshll.u32 %v6507, 16
        %v6552 = vrot.slane %v6550, 1
        %v6553 = vsel %vm1212, %v6548, %v6552
        %v6555 = vshrl.u32 %v6508, 16
        %v6557 = vshll.u32 %v6508, 16
        %v6559 = vrot.slane %v6557, 1
        %v6560 = vor.u32 %v6555, %v6559
        %v6562 = vshll.u32 %v6509, 16
        %v6564 = vrot.slane %v6562, 1
        %v6565 = vsel %vm1212, %v6560, %v6564
        %v6567 = vshrl.u32 %v6510, 16
        %v6569 = vshll.u32 %v6510, 16
        %v6571 = vrot.slane %v6569, 1
        %v6572 = vor.u32 %v6567, %v6571
        %v6574 = vshll.u32 %v6511, 16
        %v6576 = vrot.slane %v6574, 1
        %v6577 = vsel %vm1212, %v6572, %v6576
        %v6579 = vshrl.u32 %v6512, 16
        %v6581 = vshll.u32 %v6512, 16
        %v6583 = vrot.slane %v6581, 1
        %v6584 = vor.u32 %v6579, %v6583
        %v6586 = vshll.u32 %v6513, 16
        %v6588 = vrot.slane %v6586, 1
        %v6589 = vsel %vm1212, %v6584, %v6588
        %v6591 = vshrl.u32 %v6514, 16
        %v6593 = vshll.u32 %v6514, 16
        %v6595 = vrot.slane %v6593, 1
        %v6596 = vor.u32 %v6591, %v6595
        %v6598 = vshll.u32 %v6515, 16
        %v6600 = vrot.slane %v6598, 1
        %v6601 = vsel %vm1212, %v6596, %v6600
        %v6603 = vshrl.u32 %v6516, 16
        %v6605 = vshll.u32 %v6516, 16
        %v6607 = vrot.slane %v6605, 1
        %v6608 = vor.u32 %v6603, %v6607
        %v6610 = vshll.u32 %v6517, 16
        %v6612 = vrot.slane %v6610, 1
        %v6613 = vsel %vm1212, %v6608, %v6612
        %v6614 = vld [vmem:[%s10] sm:$0x3]
        %v6616 = vsel %vm726, %v6529, 0
        %v6619 = vsel %vm726, %v6541, 0
        %v6622 = vsel %vm726, %v6553, 0
        %v6625 = vsel %vm726, %v6565, 0
        %v6628 = vsel %vm726, %v6577, 0
        %v6631 = vsel %vm726, %v6589, 0
        %v6634 = vsel %vm726, %v6601, 0
        %v6637 = vsel %vm726, %v6613, 0
        %v6640 = vsel %vm781, %v6614, 0
        %6642 = vmatprep.subr.bf16.mxu0 0
        %6643 = vmatpush1.bf16.msra.mxu0 0
        %6644 = vmatprep.subr.bf16.mxu0 0
        %6645 = vmatpush1.bf16.msra.mxu0 0
        %6646 = vmatprep.subr.bf16.mxu0 0
        %6647 = vmatpush1.bf16.msra.mxu0 0
        %6648 = vmatprep.subr.bf16.mxu0 0
        %6649 = vmatpush1.bf16.msra.mxu0 0
        %6650 = vmatprep.subr.bf16.mxu0 0
        %6651 = vmatpush1.bf16.msra.mxu0 0
        %6652 = vmatprep.subr.bf16.mxu0 0
        %6653 = vmatpush1.bf16.msra.mxu0 0
        %6654 = vmatprep.subr.bf16.mxu0 0
        %6655 = vmatpush1.bf16.msra.mxu0 0
        %6656 = vmatprep.subr.bf16.mxu0 0
        %6657 = vmatpush1.bf16.msra.mxu0 %v6640
        %6658 = vmatprep.subr.bf16.mxu0 0
        %6659 = vmatpush2.bf16.msra.mxu0 0
        %6660 = vmatprep.subr.bf16.mxu0 0
        %6661 = vmatpush2.bf16.msra.mxu0 0
        %6662 = vmatprep.subr.bf16.mxu0 0
        %6663 = vmatpush2.bf16.msra.mxu0 0
        %6664 = vmatprep.subr.bf16.mxu0 0
        %6665 = vmatpush2.bf16.msra.mxu0 0
        %6666 = vmatprep.subr.bf16.mxu0 0
        %6667 = vmatpush2.bf16.msra.mxu0 0
        %6668 = vmatprep.subr.bf16.mxu0 0
        %6669 = vmatpush2.bf16.msra.mxu0 0
        %6670 = vmatprep.subr.bf16.mxu0 0
        %6671 = vmatpush2.bf16.msra.mxu0 0
        %6672 = vmatprep.subr.bf16.mxu0 0
        %6673 = vmatpush2.bf16.msra.mxu0 0
        %6674 = vmatprep.mubr.bf16.mxu0 0
        %6675 = vmatmul.mubr.bf16.gmra.mxu0 %v6616
        %v6676 = vpop.f32.mrf.mxu0
        %v6677 = vadd.f32 0.0, %v6676
        %v6678 = vpop.f32.mrf.mxu0
        %v6679 = vpop.f32.mrf.mxu0
        %v6680 = vadd.f32 0.0, %v6679
        %v6681 = vpop.f32.mrf.mxu0
        %6682 = vmatprep.mubr.bf16.mxu0 0
        %6683 = vmatmul.mubr.bf16.gmra.mxu0 %v6619
        %v6684 = vpop.f32.mrf.mxu0
        %v6685 = vadd.f32 0.0, %v6684
        %v6686 = vpop.f32.mrf.mxu0
        %v6687 = vpop.f32.mrf.mxu0
        %v6688 = vadd.f32 0.0, %v6687
        %v6689 = vpop.f32.mrf.mxu0
        %6690 = vmatprep.mubr.bf16.mxu0 0
        %6691 = vmatmul.mubr.bf16.gmra.mxu0 %v6622
        %v6692 = vpop.f32.mrf.mxu0
        %v6693 = vadd.f32 0.0, %v6692
        %v6694 = vpop.f32.mrf.mxu0
        %v6695 = vpop.f32.mrf.mxu0
        %v6696 = vadd.f32 0.0, %v6695
        %v6697 = vpop.f32.mrf.mxu0
        %6698 = vmatprep.mubr.bf16.mxu0 0
        %6699 = vmatmul.mubr.bf16.gmra.mxu0 %v6625
        %v6700 = vpop.f32.mrf.mxu0
        %v6701 = vadd.f32 0.0, %v6700
        %v6702 = vpop.f32.mrf.mxu0
        %v6703 = vpop.f32.mrf.mxu0
        %v6704 = vadd.f32 0.0, %v6703
        %v6705 = vpop.f32.mrf.mxu0
        %6706 = vmatprep.mubr.bf16.mxu0 0
        %6707 = vmatmul.mubr.bf16.gmra.mxu0 %v6628
        %v6708 = vpop.f32.mrf.mxu0
        %v6709 = vadd.f32 0.0, %v6708
        %v6710 = vpop.f32.mrf.mxu0
        %v6711 = vpop.f32.mrf.mxu0
        %v6712 = vadd.f32 0.0, %v6711
        %v6713 = vpop.f32.mrf.mxu0
        %6714 = vmatprep.mubr.bf16.mxu0 0
        %6715 = vmatmul.mubr.bf16.gmra.mxu0 %v6631
        %v6716 = vpop.f32.mrf.mxu0
        %v6717 = vadd.f32 0.0, %v6716
        %v6718 = vpop.f32.mrf.mxu0
        %v6719 = vpop.f32.mrf.mxu0
        %v6720 = vadd.f32 0.0, %v6719
        %v6721 = vpop.f32.mrf.mxu0
        %6722 = vmatprep.mubr.bf16.mxu0 0
        %6723 = vmatmul.mubr.bf16.gmra.mxu0 %v6634
        %v6724 = vpop.f32.mrf.mxu0
        %v6725 = vadd.f32 0.0, %v6724
        %v6726 = vpop.f32.mrf.mxu0
        %v6727 = vpop.f32.mrf.mxu0
        %v6728 = vadd.f32 0.0, %v6727
        %v6729 = vpop.f32.mrf.mxu0
        %6730 = vmatprep.mubr.bf16.mxu0 0
        %6731 = vmatmul.mubr.bf16.gmra.mxu0 %v6637
        %v6732 = vpop.f32.mrf.mxu0
        %v6733 = vadd.f32 0.0, %v6732
        %v6734 = vpop.f32.mrf.mxu0
        %v6735 = vpop.f32.mrf.mxu0
        %v6736 = vadd.f32 0.0, %v6735
        %v6737 = vpop.f32.mrf.mxu0
        %6738 = vdwg.mxu0
        %v6739 = vld [vmem:[%s11] sm:$0x1]
        %v6741 = vlaneseq
        %v6742 = vshrl.u32 %v6741, 7
        %v6743 = vsub.s32 0, %v6742
        %v6744 = vrot.slane %v6739, %v6743
        %v6746 = vmul.f32 %v6677, %v6744
        %v6747 = vmul.f32 %v6680, %v6744
        %v6748 = vmul.f32 %v6685, %v6744
        %v6749 = vmul.f32 %v6688, %v6744
        %v6750 = vmul.f32 %v6693, %v6744
        %v6751 = vmul.f32 %v6696, %v6744
        %v6752 = vmul.f32 %v6701, %v6744
        %v6753 = vmul.f32 %v6704, %v6744
        %v6754 = vmul.f32 %v6709, %v6744
        %v6755 = vmul.f32 %v6712, %v6744
        %v6756 = vmul.f32 %v6717, %v6744
        %v6757 = vmul.f32 %v6720, %v6744
        %v6758 = vmul.f32 %v6725, %v6744
        %v6759 = vmul.f32 %v6728, %v6744
        %v6760 = vmul.f32 %v6733, %v6744
        %v6761 = vmul.f32 %v6736, %v6744
        %v6762 = vld [vmem:[%s12] sm:$0x1]
        %v6764 = vlaneseq
        %v6765 = vshrl.u32 %v6764, 7
        %v6766 = vsub.s32 0, %v6765
        %v6767 = vrot.slane %v6762, %v6766
        %v6769 = vadd.f32 %v6746, %v6767
        %v6770 = vadd.f32 %v6747, %v6767
        %v6771 = vadd.f32 %v6748, %v6767
        %v6772 = vadd.f32 %v6749, %v6767
        %v6773 = vadd.f32 %v6750, %v6767
        %v6774 = vadd.f32 %v6751, %v6767
        %v6775 = vadd.f32 %v6752, %v6767
        %v6776 = vadd.f32 %v6753, %v6767
        %v6777 = vadd.f32 %v6754, %v6767
        %v6778 = vadd.f32 %v6755, %v6767
        %v6779 = vadd.f32 %v6756, %v6767
        %v6780 = vadd.f32 %v6757, %v6767
        %v6781 = vadd.f32 %v6758, %v6767
        %v6782 = vadd.f32 %v6759, %v6767
        %v6783 = vadd.f32 %v6760, %v6767
        %v6784 = vadd.f32 %v6761, %v6767
        %v6785 = vmax.f32 %v6769, 0.0
        %v6786 = vmax.f32 %v6770, 0.0
        %v6787 = vmax.f32 %v6771, 0.0
        %v6788 = vmax.f32 %v6772, 0.0
        %v6789 = vmax.f32 %v6773, 0.0
        %v6790 = vmax.f32 %v6774, 0.0
        %v6791 = vmax.f32 %v6775, 0.0
        %v6792 = vmax.f32 %v6776, 0.0
        %v6793 = vmax.f32 %v6777, 0.0
        %v6794 = vmax.f32 %v6778, 0.0
        %v6795 = vmax.f32 %v6779, 0.0
        %v6796 = vmax.f32 %v6780, 0.0
        %v6797 = vmax.f32 %v6781, 0.0
        %v6798 = vmax.f32 %v6782, 0.0
        %v6799 = vmax.f32 %v6783, 0.0
        %v6800 = vmax.f32 %v6784, 0.0
        %v6817 = vrot.slane %v2700, 6
        %v6818 = vrot.slane %v2701, 6
        %v6819 = vsel %vm781, %v6817, %v6818
        %v6820 = vrot.slane %v2702, 6
        %v6821 = vrot.slane %v2703, 6
        %v6822 = vsel %vm781, %v6820, %v6821
        %v6823 = vrot.slane %v2704, 6
        %v6824 = vrot.slane %v2705, 6
        %v6825 = vsel %vm781, %v6823, %v6824
        %v6826 = vrot.slane %v2706, 6
        %v6827 = vrot.slane %v2707, 6
        %v6828 = vsel %vm781, %v6826, %v6827
        %v6829 = vrot.slane %v2708, 6
        %v6830 = vrot.slane %v2709, 6
        %v6831 = vsel %vm781, %v6829, %v6830
        %v6832 = vrot.slane %v2710, 6
        %v6833 = vrot.slane %v2711, 6
        %v6834 = vsel %vm781, %v6832, %v6833
        %v6835 = vrot.slane %v2712, 6
        %v6836 = vrot.slane %v2713, 6
        %v6837 = vsel %vm781, %v6835, %v6836
        %v6838 = vrot.slane %v2714, 6
        %v6839 = vrot.slane %v2715, 6
        %v6840 = vsel %vm781, %v6838, %v6839
        %6841 = vrot.lane.b32.xlu0 %v6817, 4
        %v6842 = vpop.permute.xlu0 %6841
        %6843 = vrot.lane.b32.xlu0 %v6819, 4
        %v6844 = vpop.permute.xlu0 %6843
        %6845 = vrot.lane.b32.xlu0 %v6818, 4
        %v6846 = vpop.permute.xlu0 %6845
        %6847 = vrot.lane.b32.xlu0 %v6820, 4
        %v6848 = vpop.permute.xlu0 %6847
        %6849 = vrot.lane.b32.xlu0 %v6822, 4
        %v6850 = vpop.permute.xlu0 %6849
        %6851 = vrot.lane.b32.xlu0 %v6821, 4
        %v6852 = vpop.permute.xlu0 %6851
        %6853 = vrot.lane.b32.xlu0 %v6823, 4
        %v6854 = vpop.permute.xlu0 %6853
        %6855 = vrot.lane.b32.xlu0 %v6825, 4
        %v6856 = vpop.permute.xlu0 %6855
        %6857 = vrot.lane.b32.xlu0 %v6824, 4
        %v6858 = vpop.permute.xlu0 %6857
        %6859 = vrot.lane.b32.xlu0 %v6826, 4
        %v6860 = vpop.permute.xlu0 %6859
        %6861 = vrot.lane.b32.xlu0 %v6828, 4
        %v6862 = vpop.permute.xlu0 %6861
        %6863 = vrot.lane.b32.xlu0 %v6827, 4
        %v6864 = vpop.permute.xlu0 %6863
        %6865 = vrot.lane.b32.xlu0 %v6829, 4
        %v6866 = vpop.permute.xlu0 %6865
        %6867 = vrot.lane.b32.xlu0 %v6831, 4
        %v6868 = vpop.permute.xlu0 %6867
        %6869 = vrot.lane.b32.xlu0 %v6830, 4
        %v6870 = vpop.permute.xlu0 %6869
        %6871 = vrot.lane.b32.xlu0 %v6832, 4
        %v6872 = vpop.permute.xlu0 %6871
        %6873 = vrot.lane.b32.xlu0 %v6834, 4
        %v6874 = vpop.permute.xlu0 %6873
        %6875 = vrot.lane.b32.xlu0 %v6833, 4
        %v6876 = vpop.permute.xlu0 %6875
        %6877 = vrot.lane.b32.xlu0 %v6835, 4
        %v6878 = vpop.permute.xlu0 %6877
        %6879 = vrot.lane.b32.xlu0 %v6837, 4
        %v6880 = vpop.permute.xlu0 %6879
        %6881 = vrot.lane.b32.xlu0 %v6836, 4
        %v6882 = vpop.permute.xlu0 %6881
        %6883 = vrot.lane.b32.xlu0 %v6838, 4
        %v6884 = vpop.permute.xlu0 %6883
        %6885 = vrot.lane.b32.xlu0 %v6840, 4
        %v6886 = vpop.permute.xlu0 %6885
        %6887 = vrot.lane.b32.xlu0 %v6839, 4
        %v6888 = vpop.permute.xlu0 %6887
        %v6929 = vrot.slane %v6072, 6
        %v6930 = vrot.slane %v6073, 6
        %v6931 = vsel %vm781, %v6929, %v6930
        %v6932 = vrot.slane %v6074, 6
        %v6933 = vrot.slane %v6075, 6
        %v6934 = vsel %vm781, %v6932, %v6933
        %v6935 = vrot.slane %v6076, 6
        %v6936 = vrot.slane %v6077, 6
        %v6937 = vsel %vm781, %v6935, %v6936
        %v6938 = vrot.slane %v6078, 6
        %v6939 = vrot.slane %v6079, 6
        %v6940 = vsel %vm781, %v6938, %v6939
        %v6941 = vrot.slane %v6080, 6
        %v6942 = vrot.slane %v6081, 6
        %v6943 = vsel %vm781, %v6941, %v6942
        %v6944 = vrot.slane %v6082, 6
        %v6945 = vrot.slane %v6083, 6
        %v6946 = vsel %vm781, %v6944, %v6945
        %v6947 = vrot.slane %v6084, 6
        %v6948 = vrot.slane %v6085, 6
        %v6949 = vsel %vm781, %v6947, %v6948
        %v6950 = vrot.slane %v6086, 6
        %v6951 = vrot.slane %v6087, 6
        %v6952 = vsel %vm781, %v6950, %v6951
        %6953 = vrot.lane.b32.xlu0 %v6929, 12
        %v6954 = vpop.permute.xlu0 %6953
        %6955 = vrot.lane.b32.xlu0 %v6931, 12
        %v6956 = vpop.permute.xlu0 %6955
        %6957 = vrot.lane.b32.xlu0 %v6930, 12
        %v6958 = vpop.permute.xlu0 %6957
        %6959 = vrot.lane.b32.xlu0 %v6932, 12
        %v6960 = vpop.permute.xlu0 %6959
        %6961 = vrot.lane.b32.xlu0 %v6934, 12
        %v6962 = vpop.permute.xlu0 %6961
        %6963 = vrot.lane.b32.xlu0 %v6933, 12
        %v6964 = vpop.permute.xlu0 %6963
        %6965 = vrot.lane.b32.xlu0 %v6935, 12
        %v6966 = vpop.permute.xlu0 %6965
        %6967 = vrot.lane.b32.xlu0 %v6937, 12
        %v6968 = vpop.permute.xlu0 %6967
        %6969 = vrot.lane.b32.xlu0 %v6936, 12
        %v6970 = vpop.permute.xlu0 %6969
        %6971 = vrot.lane.b32.xlu0 %v6938, 12
        %v6972 = vpop.permute.xlu0 %6971
        %6973 = vrot.lane.b32.xlu0 %v6940, 12
        %v6974 = vpop.permute.xlu0 %6973
        %6975 = vrot.lane.b32.xlu0 %v6939, 12
        %v6976 = vpop.permute.xlu0 %6975
        %6977 = vrot.lane.b32.xlu0 %v6941, 12
        %v6978 = vpop.permute.xlu0 %6977
        %6979 = vrot.lane.b32.xlu0 %v6943, 12
        %v6980 = vpop.permute.xlu0 %6979
        %6981 = vrot.lane.b32.xlu0 %v6942, 12
        %v6982 = vpop.permute.xlu0 %6981
        %6983 = vrot.lane.b32.xlu0 %v6944, 12
        %v6984 = vpop.permute.xlu0 %6983
        %6985 = vrot.lane.b32.xlu0 %v6946, 12
        %v6986 = vpop.permute.xlu0 %6985
        %6987 = vrot.lane.b32.xlu0 %v6945, 12
        %v6988 = vpop.permute.xlu0 %6987
        %6989 = vrot.lane.b32.xlu0 %v6947, 12
        %v6990 = vpop.permute.xlu0 %6989
        %6991 = vrot.lane.b32.xlu0 %v6949, 12
        %v6992 = vpop.permute.xlu0 %6991
        %6993 = vrot.lane.b32.xlu0 %v6948, 12
        %v6994 = vpop.permute.xlu0 %6993
        %6995 = vrot.lane.b32.xlu0 %v6950, 12
        %v6996 = vpop.permute.xlu0 %6995
        %6997 = vrot.lane.b32.xlu0 %v6952, 12
        %v6998 = vpop.permute.xlu0 %6997
        %6999 = vrot.lane.b32.xlu0 %v6951, 12
        %v7000 = vpop.permute.xlu0 %6999
        %v7041 = vrot.slane %v6785, 6
        %v7042 = vrot.slane %v6786, 6
        %v7043 = vsel %vm781, %v7041, %v7042
        %v7044 = vrot.slane %v6787, 6
        %v7045 = vrot.slane %v6788, 6
        %v7046 = vsel %vm781, %v7044, %v7045
        %v7047 = vrot.slane %v6789, 6
        %v7048 = vrot.slane %v6790, 6
        %v7049 = vsel %vm781, %v7047, %v7048
        %v7050 = vrot.slane %v6791, 6
        %v7051 = vrot.slane %v6792, 6
        %v7052 = vsel %vm781, %v7050, %v7051
        %v7053 = vrot.slane %v6793, 6
        %v7054 = vrot.slane %v6794, 6
        %v7055 = vsel %vm781, %v7053, %v7054
        %v7056 = vrot.slane %v6795, 6
        %v7057 = vrot.slane %v6796, 6
        %v7058 = vsel %vm781, %v7056, %v7057
        %v7059 = vrot.slane %v6797, 6
        %v7060 = vrot.slane %v6798, 6
        %v7061 = vsel %vm781, %v7059, %v7060
        %v7062 = vrot.slane %v6799, 6
        %v7063 = vrot.slane %v6800, 6
        %v7064 = vsel %vm781, %v7062, %v7063
        %7065 = vrot.lane.b32.xlu0 %v7041, 16
        %v7066 = vpop.permute.xlu0 %7065
        %7067 = vrot.lane.b32.xlu0 %v7043, 16
        %v7068 = vpop.permute.xlu0 %7067
        %7069 = vrot.lane.b32.xlu0 %v7042, 16
        %v7070 = vpop.permute.xlu0 %7069
        %7071 = vrot.lane.b32.xlu0 %v7044, 16
        %v7072 = vpop.permute.xlu0 %7071
        %7073 = vrot.lane.b32.xlu0 %v7046, 16
        %v7074 = vpop.permute.xlu0 %7073
        %7075 = vrot.lane.b32.xlu0 %v7045, 16
        %v7076 = vpop.permute.xlu0 %7075
        %7077 = vrot.lane.b32.xlu0 %v7047, 16
        %v7078 = vpop.permute.xlu0 %7077
        %7079 = vrot.lane.b32.xlu0 %v7049, 16
        %v7080 = vpop.permute.xlu0 %7079
        %7081 = vrot.lane.b32.xlu0 %v7048, 16
        %v7082 = vpop.permute.xlu0 %7081
        %7083 = vrot.lane.b32.xlu0 %v7050, 16
        %v7084 = vpop.permute.xlu0 %7083
        %7085 = vrot.lane.b32.xlu0 %v7052, 16
        %v7086 = vpop.permute.xlu0 %7085
        %7087 = vrot.lane.b32.xlu0 %v7051, 16
        %v7088 = vpop.permute.xlu0 %7087
        %7089 = vrot.lane.b32.xlu0 %v7053, 16
        %v7090 = vpop.permute.xlu0 %7089
        %7091 = vrot.lane.b32.xlu0 %v7055, 16
        %v7092 = vpop.permute.xlu0 %7091
        %7093 = vrot.lane.b32.xlu0 %v7054, 16
        %v7094 = vpop.permute.xlu0 %7093
        %7095 = vrot.lane.b32.xlu0 %v7056, 16
        %v7096 = vpop.permute.xlu0 %7095
        %7097 = vrot.lane.b32.xlu0 %v7058, 16
        %v7098 = vpop.permute.xlu0 %7097
        %7099 = vrot.lane.b32.xlu0 %v7057, 16
        %v7100 = vpop.permute.xlu0 %7099
        %7101 = vrot.lane.b32.xlu0 %v7059, 16
        %v7102 = vpop.permute.xlu0 %7101
        %7103 = vrot.lane.b32.xlu0 %v7061, 16
        %v7104 = vpop.permute.xlu0 %7103
        %7105 = vrot.lane.b32.xlu0 %v7060, 16
        %v7106 = vpop.permute.xlu0 %7105
        %7107 = vrot.lane.b32.xlu0 %v7062, 16
        %v7108 = vpop.permute.xlu0 %7107
        %7109 = vrot.lane.b32.xlu0 %v7064, 16
        %v7110 = vpop.permute.xlu0 %7109
        %7111 = vrot.lane.b32.xlu0 %v7063, 16
        %v7112 = vpop.permute.xlu0 %7111
        %v7137 = vsel %vm726, %v1162, %v6842
        %v7138 = vsel %vm726, %v1163, %v6844
        %v7139 = vsel %vm726, %v1164, %v6846
        %v7140 = vsel %vm726, %v1165, %v6848
        %v7141 = vsel %vm726, %v1166, %v6850
        %v7142 = vsel %vm726, %v1167, %v6852
        %v7143 = vsel %vm726, %v1168, %v6854
        %v7144 = vsel %vm726, %v1169, %v6856
        %v7145 = vsel %vm726, %v1170, %v6858
        %v7146 = vsel %vm726, %v1171, %v6860
        %v7147 = vsel %vm726, %v1172, %v6862
        %v7148 = vsel %vm726, %v1173, %v6864
        %v7149 = vsel %vm726, %v1174, %v6866
        %v7150 = vsel %vm726, %v1175, %v6868
        %v7151 = vsel %vm726, %v1176, %v6870
        %v7152 = vsel %vm726, %v1177, %v6872
        %v7153 = vsel %vm726, %v1178, %v6874
        %v7154 = vsel %vm726, %v1179, %v6876
        %v7155 = vsel %vm726, %v1180, %v6878
        %v7156 = vsel %vm726, %v1181, %v6880
        %v7157 = vsel %vm726, %v1182, %v6882
        %v7158 = vsel %vm726, %v1183, %v6884
        %v7159 = vsel %vm726, %v1184, %v6886
        %v7160 = vsel %vm726, %v1185, %v6888
        %vm7161 = vcmask 97280
        %v7162 = vsel %vm7161, %v7137, %v6954
        %v7163 = vsel %vm7161, %v7138, %v6956
        %v7164 = vsel %vm7161, %v7139, %v6958
        %v7165 = vsel %vm7161, %v7140, %v6960
        %v7166 = vsel %vm7161, %v7141, %v6962
        %v7167 = vsel %vm7161, %v7142, %v6964
        %v7168 = vsel %vm7161, %v7143, %v6966
        %v7169 = vsel %vm7161, %v7144, %v6968
        %v7170 = vsel %vm7161, %v7145, %v6970
        %v7171 = vsel %vm7161, %v7146, %v6972
        %v7172 = vsel %vm7161, %v7147, %v6974
        %v7173 = vsel %vm7161, %v7148, %v6976
        %v7174 = vsel %vm7161, %v7149, %v6978
        %v7175 = vsel %vm7161, %v7150, %v6980
        %v7176 = vsel %vm7161, %v7151, %v6982
        %v7177 = vsel %vm7161, %v7152, %v6984
        %v7178 = vsel %vm7161, %v7153, %v6986
        %v7179 = vsel %vm7161, %v7154, %v6988
        %v7180 = vsel %vm7161, %v7155, %v6990
        %v7181 = vsel %vm7161, %v7156, %v6992
        %v7182 = vsel %vm7161, %v7157, %v6994
        %v7183 = vsel %vm7161, %v7158, %v6996
        %v7184 = vsel %vm7161, %v7159, %v6998
        %v7185 = vsel %vm7161, %v7160, %v7000
        %vm7186 = vcmask 130048
        %v7187 = vsel %vm7186, %v7162, %v7066
        %v7188 = vsel %vm7186, %v7163, %v7068
        %v7189 = vsel %vm7186, %v7164, %v7070
        %v7190 = vsel %vm7186, %v7165, %v7072
        %v7191 = vsel %vm7186, %v7166, %v7074
        %v7192 = vsel %vm7186, %v7167, %v7076
        %v7193 = vsel %vm7186, %v7168, %v7078
        %v7194 = vsel %vm7186, %v7169, %v7080
        %v7195 = vsel %vm7186, %v7170, %v7082
        %v7196 = vsel %vm7186, %v7171, %v7084
        %v7197 = vsel %vm7186, %v7172, %v7086
        %v7198 = vsel %vm7186, %v7173, %v7088
        %v7199 = vsel %vm7186, %v7174, %v7090
        %v7200 = vsel %vm7186, %v7175, %v7092
        %v7201 = vsel %vm7186, %v7176, %v7094
        %v7202 = vsel %vm7186, %v7177, %v7096
        %v7203 = vsel %vm7186, %v7178, %v7098
        %v7204 = vsel %vm7186, %v7179, %v7100
        %v7205 = vsel %vm7186, %v7180, %v7102
        %v7206 = vsel %vm7186, %v7181, %v7104
        %v7207 = vsel %vm7186, %v7182, %v7106
        %v7208 = vsel %vm7186, %v7183, %v7108
        %v7209 = vsel %vm7186, %v7184, %v7110
        %v7210 = vsel %vm7186, %v7185, %v7112
        %vm7211 = vcmask 162818
        %7212 = vst.msk [vmem:[%s433 - $0x2] sm:$0xfc] %vm7211, %v7187
        %vm7213 = vcmask 162816
        %7214 = vst.msk [vmem:[%s433 + $0x6] sm:$0xff] %vm7213, %v7188
        %vm7215 = vcmask 156672
        %7216 = vst.msk [vmem:[%s433 + $0xe] sm:$0x3] %vm7215, %v7189
        %7217 = vst.msk [vmem:[%s433 + $0xe] sm:$0xfc] %vm7211, %v7190
        %7218 = vst.msk [vmem:[%s433 + $0x16] sm:$0xff] %vm7213, %v7191
        %7219 = vst.msk [vmem:[%s433 + $0x1e] sm:$0x3] %vm7215, %v7192
        %7220 = vst.msk [vmem:[%s433 + $0x1e] sm:$0xfc] %vm7211, %v7193
        %7221 = vst.msk [vmem:[%s433 + $0x26] sm:$0xff] %vm7213, %v7194
        %7222 = vst.msk [vmem:[%s433 + $0x2e] sm:$0x3] %vm7215, %v7195
        %7223 = vst.msk [vmem:[%s433 + $0x2e] sm:$0xfc] %vm7211, %v7196
        %7224 = vst.msk [vmem:[%s433 + $0x36] sm:$0xff] %vm7213, %v7197
        %7225 = vst.msk [vmem:[%s433 + $0x3e] sm:$0x3] %vm7215, %v7198
        %7226 = vst.msk [vmem:[%s433 + $0x3e] sm:$0xfc] %vm7211, %v7199
        %7227 = vst.msk [vmem:[%s433 + $0x46] sm:$0xff] %vm7213, %v7200
        %7228 = vst.msk [vmem:[%s433 + $0x4e] sm:$0x3] %vm7215, %v7201
        %7229 = vst.msk [vmem:[%s433 + $0x4e] sm:$0xfc] %vm7211, %v7202
        %7230 = vst.msk [vmem:[%s433 + $0x56] sm:$0xff] %vm7213, %v7203
        %7231 = vst.msk [vmem:[%s433 + $0x5e] sm:$0x3] %vm7215, %v7204
        %7232 = vst.msk [vmem:[%s433 + $0x5e] sm:$0xfc] %vm7211, %v7205
        %7233 = vst.msk [vmem:[%s433 + $0x66] sm:$0xff] %vm7213, %v7206
        %7234 = vst.msk [vmem:[%s433 + $0x6e] sm:$0x3] %vm7215, %v7207
        %7235 = vst.msk [vmem:[%s433 + $0x6e] sm:$0xfc] %vm7211, %v7208
        %7236 = vst.msk [vmem:[%s433 + $0x76] sm:$0xff] %vm7213, %v7209
        %7237 = vst.msk [vmem:[%s433 + $0x7e] sm:$0x3] %vm7215, %v7210
        %s7238 = sand.u32 %s313, 1
        %s7239 = scalar_lea.sflag [#allocation3], %s7238
        %s7240 = sand.u32 %s313, 1
        %s7241 = smul.addr %s7240, 128
        %s7242 = scalar_lea.vmem [#allocation2], %s7241
        // Predicated region
        $region73: #{inception_block.1} parent=71 // pred_check
          %p7243 = pneg %p323
        $region74: #{inception_block.1} parent=71 // pred_check_branch
          %7245 = sbr.rel (%p7243) target = $region76
        $region75: #{inception_block.1} parent=71 // pred_region
          %s7247 = ssub.s32 2048, 2048
          %7248 = vsyncadd %s7239, %s7247
          %s7249 = smul.addr %s27, 16
          %s7250 = smul.addr %s7249, 128
          %s7251 = scalar_lea.hbm %s13, %s7250
          %s7252 = sshll.u32 %s7242, 4
          %s7253 = int_to_ptr.vmem [resolvable:$true] %s7252
          %7258 = dma.vmem_to_hbm [thread:$0]  %s7253, 2048, %s7251, %s7239, 128, 128, 8
        $region76: #{inception_block.1} parent=71 // pred_fallthru
          _
      $region72: #{inception_block.1} parent=5 // pred_fallthru
        _
      %p7259 = scmp.le.s32.totalorder 2, %s22
      // Predicated region
      $region77: #{inception_block.1} parent=5 // pred_check
        %p7260 = pneg %p7259
      $region78: #{inception_block.1} parent=5 // pred_check_branch
        %7262 = sbr.rel (%p7260) target = $region80
      $region79: #{inception_block.1} parent=5 // pred_region
        %s7263 = ssub.s32 %s22, 2
        // Predicated region
        $region81: #{inception_block.1} parent=79 // pred_check
          %p7264 = pneg %p329
        $region82: #{inception_block.1} parent=79 // pred_check_branch
          %7266 = sbr.rel (%p7264) target = $region84
        $region83: #{inception_block.1} parent=79 // pred_region
          %s7267 = sand.u32 %s314, 1
          %s7268 = scalar_lea.sflag [#allocation3], %s7267
          %s7269 = sand.u32 %s314, 1
          %s7270 = smul.addr %s7269, 128
          %s7271 = scalar_lea.vmem [#allocation2], %s7270
          %7272 = dma.done %s7268, 2048
        $region84: #{inception_block.1} parent=79 // pred_fallthru
          _
      $region80: #{inception_block.1} parent=5 // pred_fallthru
        _
    $region6: #{inception_block.1} parent=1 // loop_footer
      %s26 = sadd.s32 1, %s22
    $region7: #{inception_block.1} parent=1 // loop_footer_branch
      %21 = sbr.rel target = $region3
    $region8: #{inception_block.1} parent=1 // loop_exit
      _
    %7273 = vsyncpa [#allocation3], 1
    %s7274 = scalar_lea.sflag [#allocation3], 1
    %7275 = vsyncpa %s7274, 1

</llo_original>
